<compile_context>
chip_gen: v6e
topology: v6e:2x2x1
jax: 0.10.0
libtpu: 0.0.40
codegen_flags: <defaults>
</compile_context>

<pallas_src>
import math

import jax
import jax.numpy as jnp
from jax.experimental import pallas as pl
from jax.experimental.pallas import tpu as pltpu


# ----------------------------- in-kernel helpers ---------------------------- #

def _zero_halo(ref):
    """Zero only the 1-pixel halo ring of a (Hp, Wp, C) padded scratch buffer."""
    Hp, Wp, C = ref.shape
    zrow = jnp.zeros((1, Wp, C), jnp.float32)
    zcol = jnp.zeros((Hp, 1, C), jnp.float32)
    ref[0:1, :, :] = zrow
    ref[Hp - 1:Hp, :, :] = zrow
    ref[:, 0:1, :] = zcol
    ref[:, Wp - 1:Wp, :] = zcol


def _conv3x3_9dot(xpad_ref, w_ref, b_ref):
    """3x3 stride-1 SAME conv + bias + ReLU as 9 accumulated MXU dots.

    xpad_ref: (Hh+2, Wh+2, Cin)  zero-halo padded input (VMEM scratch)
    w_ref   : (9, Cin, Cout)     per-tap weight slabs, t = 3*dy + dx
    b_ref   : (1, Cout)
    returns : (Hh, Wh, Cout) float32
    """
    Hp, Wp, Cin = xpad_ref.shape
    Hh, Wh = Hp - 2, Wp - 2
    Cout = w_ref.shape[2]
    acc = jnp.zeros((Hh * Wh, Cout), jnp.float32)
    for t in range(9):
        dy, dx = divmod(t, 3)
        # (Hh, Wh, Cin) -> (Hh*Wh, Cin): merge leading dims only (lane dim unchanged).
        slab = xpad_ref[dy:dy + Hh, dx:dx + Wh, :].reshape(Hh * Wh, Cin)
        acc = acc + jnp.dot(slab, w_ref[t], preferred_element_type=jnp.float32)
    y = jnp.maximum(acc + b_ref[...], 0.0)
    return y.reshape(Hh, Wh, Cout)


def fused_autoencoder_kernel(xt_ref, w1_ref, b1_ref, w2_ref, b2_ref,
                             w3_ref, b3_ref, w4_ref, b4_ref, o_ref,
                             p1t, t1, p2, p3, p4):
    """Entire AutoEncoder forward for one batch sample, fully VMEM-resident.

    xt_ref : (1, W, H)   input sample, transposed so the DMA is lane-dense
    o_ref  : (1, H, W)   output sample (Cout=1, W on the lane axis)
    p1t    : (W+2, H+2)  2-D padded conv1 input (no (...,1) lane padding)
    t1     : (H, W, C1)  conv1 output
    p2/p3  : padded conv2/conv3 inputs (halo-only zeroed)
    p4     : (H+2, W+2, C3) padded upsampled conv4 input (halo-only zeroed)
    """
    H, W = o_ref.shape[1], o_ref.shape[2]
    Hh, Wh = H // 2, W // 2
    C1 = w1_ref.shape[1]          # 32
    C3 = w4_ref.shape[1]          # 32

    # ---- conv1 (Cin=1) + bn1 + relu -------------------------------------------
    # Padded input kept 2-D (W on sublanes, H on lanes); each output row is built
    # from nine (W, 1) column reads broadcast against the 32 output channels.
    p1t[...] = jnp.zeros_like(p1t)          # tiny 2-D buffer (~12 KiB physical)
    p1t[1:W + 1, 1:H + 1] = xt_ref[0]
    b1 = b1_ref[...]                                     # (1, C1), hoisted
    w1_rows = [w1_ref[t, :] for t in range(9)]           # 9 x (C1,), hoisted
    for i in range(H):                                   # static, unrolled
        acc = jnp.zeros((W, C1), jnp.float32)
        for t in range(9):
            dy, dx = divmod(t, 3)
            col = p1t[dx:dx + W, i + dy:i + dy + 1]      # (W, 1)
            acc = acc + col * w1_rows[t]                 # -> (W, C1)
        t1[i, :, :] = jnp.maximum(acc + b1, 0.0)

    # ---- 2x2 / stride-2 max pool (strided VMEM reads, no HBM round trip) ------
    x00 = t1[pl.ds(0, Hh, stride=2), pl.ds(0, Wh, stride=2), :]
    x01 = t1[pl.ds(0, Hh, stride=2), pl.ds(1, Wh, stride=2), :]
    x10 = t1[pl.ds(1, Hh, stride=2), pl.ds(0, Wh, stride=2), :]
    x11 = t1[pl.ds(1, Hh, stride=2), pl.ds(1, Wh, stride=2), :]
    pooled = jnp.maximum(jnp.maximum(x00, x01), jnp.maximum(x10, x11))

    # ---- conv2 + bn2 + relu : 9 accumulated MXU dots ---------------------------
    _zero_halo(p2)
    p2[1:Hh + 1, 1:Wh + 1, :] = pooled
    y2 = _conv3x3_9dot(p2, w2_ref, b2_ref)               # (Hh, Wh, 64)

    # ---- conv3 + bn3 + relu : 9 accumulated MXU dots ---------------------------
    _zero_halo(p3)
    p3[1:Hh + 1, 1:Wh + 1, :] = y2
    y3 = _conv3x3_9dot(p3, w3_ref, b3_ref)               # (Hh, Wh, 32)

    # ---- nearest upsample x2 into zero-halo p4 ---------------------------------
    # Row doubling via a leading-dim broadcast; column doubling via TWO stride-2
    # sublane stores (replaces the 8-iteration unrolled masked-store loop).
    _zero_halo(p4)
    yh = jnp.broadcast_to(y3[:, None, :, :], (Hh, 2, Wh, C3)).reshape(H, Wh, C3)
    p4[1:H + 1, pl.ds(1, Wh, stride=2), :] = yh          # odd interior columns
    p4[1:H + 1, pl.ds(2, Wh, stride=2), :] = yh          # even interior columns

    # ---- conv4 (Cout=1) + relu : VPU taps + channel (lane) reduce --------------
    acc4 = jnp.zeros((H, W, C3), jnp.float32)
    for t in range(9):
        dy, dx = divmod(t, 3)
        acc4 = acc4 + p4[dy:dy + H, dx:dx + W, :] * w4_ref[t, :]
    y4 = jnp.maximum(jnp.sum(acc4, axis=-1) + b4_ref[...], 0.0)     # (H, W)
    o_ref[...] = y4[None, :, :].astype(o_ref.dtype)


# ------------------------------ host-side wrapper --------------------------- #

def fold_bn(w, b, gamma, beta, mean, var, eps=1e-5):
    """Fold eval-mode BatchNorm2d into the preceding conv's weight/bias."""
    scale = gamma / jnp.sqrt(var + eps)            # (Cout,)
    return w * scale, (b - mean) * scale + beta


def autoencoder_forward(x_nchw, p):
    N, Cin, H, W = x_nchw.shape
    assert Cin == 1, "conv1 expects a single input channel"
    assert H % 2 == 0 and W % 2 == 0

    # Cin == 1: NCHW -> (N, W, H) is pure layout plumbing; gives a dense input DMA.
    xt = jnp.transpose(x_nchw.reshape(N, H, W), (0, 2, 1)).astype(jnp.float32)

    # Fold BN + pre-shape weights (loop-invariant work hoisted out of the kernel).
    w1, b1 = fold_bn(p["w1"], p["b1"], *p["bn1"])
    w2, b2 = fold_bn(p["w2"], p["b2"], *p["bn2"])
    w3, b3 = fold_bn(p["w3"], p["b3"], *p["bn3"])
    w4, b4 = p["w4"], p["b4"]

    C1 = w1.shape[-1]                       # 32
    C2 = w2.shape[-1]                       # 64
    C3 = w3.shape[-1]                       # 32
    assert w4.shape[-1] == 1
    Hh, Wh = H // 2, W // 2

    w1r = w1.reshape(9, C1)                 # (3,3,1,32)  -> (9, 32)
    w2r = w2.reshape(9, C1, C2)             # (3,3,32,64) -> (9, 32, 64)
    w3r = w3.reshape(9, C2, C3)             # (3,3,64,32) -> (9, 64, 32)
    w4r = w4.reshape(9, C3)                 # (3,3,32,1)  -> (9, 32)

    out = pl.pallas_call(
        fused_autoencoder_kernel,
        out_shape=jax.ShapeDtypeStruct((N, H, W), jnp.float32),
        grid_spec=pltpu.PrefetchScalarGridSpec(
            num_scalar_prefetch=0,
            grid=(N,),
            in_specs=[
                pl.BlockSpec((1, W, H), lambda n: (n, 0, 0)),          # x (transposed)
                pl.BlockSpec((9, C1), lambda n: (0, 0)),               # w1
                pl.BlockSpec((1, C1), lambda n: (0, 0)),               # b1
                pl.BlockSpec((9, C1, C2), lambda n: (0, 0, 0)),        # w2
                pl.BlockSpec((1, C2), lambda n: (0, 0)),               # b2
                pl.BlockSpec((9, C2, C3), lambda n: (0, 0, 0)),        # w3
                pl.BlockSpec((1, C3), lambda n: (0, 0)),               # b3
                pl.BlockSpec((9, C3), lambda n: (0, 0)),               # w4
                pl.BlockSpec((1, 1), lambda n: (0, 0)),                # b4
            ],
            out_specs=pl.BlockSpec((1, H, W), lambda n: (n, 0, 0)),
            scratch_shapes=[
                pltpu.VMEM((W + 2, H + 2), jnp.float32),               # p1t (2-D)
                pltpu.VMEM((H, W, C1), jnp.float32),                   # t1
                pltpu.VMEM((Hh + 2, Wh + 2, C1), jnp.float32),         # p2
                pltpu.VMEM((Hh + 2, Wh + 2, C2), jnp.float32),         # p3
                pltpu.VMEM((H + 2, W + 2, C3), jnp.float32),           # p4
            ],
        ),
        compiler_params=pltpu.CompilerParams(
            dimension_semantics=("parallel",),        # v7x: batch split over 2 TCs
            vmem_limit_bytes=32 * 1024 * 1024),       # explicit, valid on v5e/v6e/v7x
    )(xt, w1r, b1.reshape(1, C1), w2r, b2.reshape(1, C2),
      w3r, b3.reshape(1, C3), w4r, b4.reshape(1, 1))

    # Cout == 1: (N, H, W) -> NCHW is a free reshape.
    return out.reshape(N, 1, H, W)


# ------------------------------ reference (pure JAX) ------------------------ #

def reference_forward(x, p):
    def conv(x, w, b):
        y = jax.lax.conv_general_dilated(
            x, w, (1, 1), [(1, 1), (1, 1)],
            dimension_numbers=("NCHW", "HWIO", "NCHW"))
        return y + b[None, :, None, None]

    def bn(x, g, bt, m, v, eps=1e-5):
        s = (g / jnp.sqrt(v + eps))[None, :, None, None]
        return (x - m[None, :, None, None]) * s + bt[None, :, None, None]

    x = jnp.maximum(bn(conv(x, p["w1"], p["b1"]), *p["bn1"]), 0.0)
    x = jax.lax.reduce_window(x, -jnp.inf, jax.lax.max,
                              (1, 1, 2, 2), (1, 1, 2, 2), "VALID")
    x = jnp.maximum(bn(conv(x, p["w2"], p["b2"]), *p["bn2"]), 0.0)
    x = jnp.maximum(bn(conv(x, p["w3"], p["b3"]), *p["bn3"]), 0.0)
    x = jnp.repeat(jnp.repeat(x, 2, axis=2), 2, axis=3)
    x = jnp.maximum(conv(x, p["w4"], p["b4"]), 0.0)
    return x


# ------------------------------ params -------------------------------------- #

def init_params(key):
    ks = jax.random.split(key, 11)

    def conv_init(kw, kb, cin, cout):
        bound = 1.0 / math.sqrt(cin * 9)
        w = jax.random.uniform(kw, (3, 3, cin, cout), jnp.float32, -bound, bound)
        b = jax.random.uniform(kb, (cout,), jnp.float32, -bound, bound)
        return w, b

    def bn_init(k, c):
        k1, k2, k3, k4 = jax.random.split(k, 4)
        gamma = 1.0 + 0.1 * jax.random.normal(k1, (c,), jnp.float32)
        beta = 0.1 * jax.random.normal(k2, (c,), jnp.float32)
        mean = 0.1 * jax.random.normal(k3, (c,), jnp.float32)
        var = 1.0 + 0.1 * jnp.abs(jax.random.normal(k4, (c,), jnp.float32))
        return (gamma, beta, mean, var)

    p = {}
    p["w1"], p["b1"] = conv_init(ks[0], ks[1], 1, 32)
    p["bn1"] = bn_init(ks[2], 32)
    p["w2"], p["b2"] = conv_init(ks[3], ks[4], 32, 64)
    p["bn2"] = bn_init(ks[5], 64)
    p["w3"], p["b3"] = conv_init(ks[6], ks[7], 64, 32)
    p["bn3"] = bn_init(ks[8], 32)
    p["w4"], p["b4"] = conv_init(ks[9], ks[10], 32, 1)
    return p


# ------------------------------ main ----------------------------------------- #

if __name__ == "__main__":
    key = jax.random.PRNGKey(0)
    kx, kp = jax.random.split(key)

    # PyTorch conv1 expects 1 input channel: NCHW = (2, 1, 16, 16)
    x = jax.random.normal(kx, (2, 1, 16, 16), jnp.float32)
    params = init_params(kp)

    out = jax.block_until_ready(jax.jit(autoencoder_forward)(x, params))

    ref = jax.block_until_ready(reference_forward(x, params))
    assert out.shape == (2, 1, 16, 16), out.shape
    max_err = float(jnp.max(jnp.abs(out - ref)))
    assert max_err < 1e-3, f"mismatch vs pure-JAX reference: {max_err}"

    print("KERNEL_OK")
</pallas_src>

<mosaic_0001>
module attributes {stable_mosaic.version = 11 : i64} {
  func.func @fused_autoencoder_kernel(%arg0: i32, %arg1: memref<1x16x16xf32, #tpu.memory_space<vmem>>, %arg2: memref<9x32xf32, #tpu.memory_space<vmem>>, %arg3: memref<1x32xf32, #tpu.memory_space<vmem>>, %arg4: memref<9x32x64xf32, #tpu.memory_space<vmem>>, %arg5: memref<1x64xf32, #tpu.memory_space<vmem>>, %arg6: memref<9x64x32xf32, #tpu.memory_space<vmem>>, %arg7: memref<1x32xf32, #tpu.memory_space<vmem>>, %arg8: memref<9x32xf32, #tpu.memory_space<vmem>>, %arg9: memref<1x1xf32, #tpu.memory_space<vmem>>, %arg10: memref<1x16x16xf32, #tpu.memory_space<vmem>>, %arg11: memref<18x18xf32, #tpu.memory_space<vmem>>, %arg12: memref<16x16x32xf32, #tpu.memory_space<vmem>>, %arg13: memref<10x10x32xf32, #tpu.memory_space<vmem>>, %arg14: memref<10x10x64xf32, #tpu.memory_space<vmem>>, %arg15: memref<18x18x32xf32, #tpu.memory_space<vmem>>) attributes {dimension_semantics = [#tpu.dimension_semantics<parallel>], iteration_bounds = array<i64: 2>, scalar_prefetch = 0 : i64, scratch_operands = 5 : i64, tpu.core_type = #tpu.core_type<tc>, window_params = [{transform_indices = @transform_0, window_bounds = array<i64: 1, 16, 16>}, {pipeline_mode = #tpu.pipeline_mode<synchronous>, transform_indices = @transform_1, window_bounds = array<i64: 9, 32>}, {pipeline_mode = #tpu.pipeline_mode<synchronous>, transform_indices = @transform_2, window_bounds = array<i64: 1, 32>}, {pipeline_mode = #tpu.pipeline_mode<synchronous>, transform_indices = @transform_3, window_bounds = array<i64: 9, 32, 64>}, {pipeline_mode = #tpu.pipeline_mode<synchronous>, transform_indices = @transform_4, window_bounds = array<i64: 1, 64>}, {pipeline_mode = #tpu.pipeline_mode<synchronous>, transform_indices = @transform_5, window_bounds = array<i64: 9, 64, 32>}, {pipeline_mode = #tpu.pipeline_mode<synchronous>, transform_indices = @transform_6, window_bounds = array<i64: 1, 32>}, {pipeline_mode = #tpu.pipeline_mode<synchronous>, transform_indices = @transform_7, window_bounds = array<i64: 9, 32>}, {pipeline_mode = #tpu.pipeline_mode<synchronous>, transform_indices = @transform_8, window_bounds = array<i64: 1, 1>}, {transform_indices = @transform_9, window_bounds = array<i64: 1, 16, 16>}]} {
    %cst = arith.constant 0.000000e+00 : f32
    %0 = vector.broadcast %cst : f32 to vector<18x18xf32>
    %c0 = arith.constant 0 : index
    %c0_0 = arith.constant 0 : index
    %1 = vector.load %arg11[%c0, %c0_0] : memref<18x18xf32, #tpu.memory_space<vmem>>, vector<18x18xf32>
    tpu.vector_store %arg11[%c0, %c0_0], %0 {strides = array<i32>} : memref<18x18xf32, #tpu.memory_space<vmem>>, vector<18x18xf32>,
    %c0_1 = arith.constant 0 : index
    %c0_2 = arith.constant 0 : index
    %c0_3 = arith.constant 0 : index
    %2 = vector.load %arg1[%c0_1, %c0_2, %c0_3] : memref<1x16x16xf32, #tpu.memory_space<vmem>>, vector<1x16x16xf32>
    %3 = vector.shape_cast %2 : vector<1x16x16xf32> to vector<16x16xf32>
    %c1 = arith.constant 1 : index
    %c1_4 = arith.constant 1 : index
    %4 = vector.load %arg11[%c1, %c1_4] : memref<18x18xf32, #tpu.memory_space<vmem>>, vector<16x16xf32>
    tpu.vector_store %arg11[%c1, %c1_4], %3 {strides = array<i32>} : memref<18x18xf32, #tpu.memory_space<vmem>>, vector<16x16xf32>,
    %c0_5 = arith.constant 0 : index
    %c0_6 = arith.constant 0 : index
    %5 = vector.load %arg3[%c0_5, %c0_6] : memref<1x32xf32, #tpu.memory_space<vmem>>, vector<1x32xf32>
    %c0_7 = arith.constant 0 : index
    %c0_8 = arith.constant 0 : index
    %6 = vector.load %arg2[%c0_7, %c0_8] : memref<9x32xf32, #tpu.memory_space<vmem>>, vector<1x32xf32>
    %7 = vector.shape_cast %6 : vector<1x32xf32> to vector<32xf32>
    %c1_9 = arith.constant 1 : index
    %c0_10 = arith.constant 0 : index
    %8 = vector.load %arg2[%c1_9, %c0_10] : memref<9x32xf32, #tpu.memory_space<vmem>>, vector<1x32xf32>
    %9 = vector.shape_cast %8 : vector<1x32xf32> to vector<32xf32>
    %c2 = arith.constant 2 : index
    %c0_11 = arith.constant 0 : index
    %10 = vector.load %arg2[%c2, %c0_11] : memref<9x32xf32, #tpu.memory_space<vmem>>, vector<1x32xf32>
    %11 = vector.shape_cast %10 : vector<1x32xf32> to vector<32xf32>
    %c3 = arith.constant 3 : index
    %c0_12 = arith.constant 0 : index
    %12 = vector.load %arg2[%c3, %c0_12] : memref<9x32xf32, #tpu.memory_space<vmem>>, vector<1x32xf32>
    %13 = vector.shape_cast %12 : vector<1x32xf32> to vector<32xf32>
    %c4 = arith.constant 4 : index
    %c0_13 = arith.constant 0 : index
    %14 = vector.load %arg2[%c4, %c0_13] : memref<9x32xf32, #tpu.memory_space<vmem>>, vector<1x32xf32>
    %15 = vector.shape_cast %14 : vector<1x32xf32> to vector<32xf32>
    %c5 = arith.constant 5 : index
    %c0_14 = arith.constant 0 : index
    %16 = vector.load %arg2[%c5, %c0_14] : memref<9x32xf32, #tpu.memory_space<vmem>>, vector<1x32xf32>
    %17 = vector.shape_cast %16 : vector<1x32xf32> to vector<32xf32>
    %c6 = arith.constant 6 : index
    %c0_15 = arith.constant 0 : index
    %18 = vector.load %arg2[%c6, %c0_15] : memref<9x32xf32, #tpu.memory_space<vmem>>, vector<1x32xf32>
    %19 = vector.shape_cast %18 : vector<1x32xf32> to vector<32xf32>
    %c7 = arith.constant 7 : index
    %c0_16 = arith.constant 0 : index
    %20 = vector.load %arg2[%c7, %c0_16] : memref<9x32xf32, #tpu.memory_space<vmem>>, vector<1x32xf32>
    %21 = vector.shape_cast %20 : vector<1x32xf32> to vector<32xf32>
    %c8 = arith.constant 8 : index
    %c0_17 = arith.constant 0 : index
    %22 = vector.load %arg2[%c8, %c0_17] : memref<9x32xf32, #tpu.memory_space<vmem>>, vector<1x32xf32>
    %23 = vector.shape_cast %22 : vector<1x32xf32> to vector<32xf32>
    %cst_18 = arith.constant 0.000000e+00 : f32
    %24 = vector.broadcast %cst_18 : f32 to vector<16x32xf32>
    %c0_19 = arith.constant 0 : index
    %c0_20 = arith.constant 0 : index
    %25 = vector.load %arg11[%c0_19, %c0_20] : memref<18x18xf32, #tpu.memory_space<vmem>>, vector<16x1xf32>
    %26 = vector.shape_cast %7 : vector<32xf32> to vector<1x32xf32>
    %27 = vector.broadcast %25 : vector<16x1xf32> to vector<16x32xf32>
    %28 = vector.broadcast %26 : vector<1x32xf32> to vector<16x32xf32>
    %29 = arith.mulf %27, %28 : vector<16x32xf32>
    %30 = arith.addf %24, %29 : vector<16x32xf32>
    %c1_21 = arith.constant 1 : index
    %c0_22 = arith.constant 0 : index
    %31 = vector.load %arg11[%c1_21, %c0_22] : memref<18x18xf32, #tpu.memory_space<vmem>>, vector<16x1xf32>
    %32 = vector.shape_cast %9 : vector<32xf32> to vector<1x32xf32>
    %33 = vector.broadcast %31 : vector<16x1xf32> to vector<16x32xf32>
    %34 = vector.broadcast %32 : vector<1x32xf32> to vector<16x32xf32>
    %35 = arith.mulf %33, %34 : vector<16x32xf32>
    %36 = arith.addf %30, %35 : vector<16x32xf32>
    %c2_23 = arith.constant 2 : index
    %c0_24 = arith.constant 0 : index
    %37 = vector.load %arg11[%c2_23, %c0_24] : memref<18x18xf32, #tpu.memory_space<vmem>>, vector<16x1xf32>
    %38 = vector.shape_cast %11 : vector<32xf32> to vector<1x32xf32>
    %39 = vector.broadcast %37 : vector<16x1xf32> to vector<16x32xf32>
    %40 = vector.broadcast %38 : vector<1x32xf32> to vector<16x32xf32>
    %41 = arith.mulf %39, %40 : vector<16x32xf32>
    %42 = arith.addf %36, %41 : vector<16x32xf32>
    %c0_25 = arith.constant 0 : index
    %c1_26 = arith.constant 1 : index
    %43 = vector.load %arg11[%c0_25, %c1_26] : memref<18x18xf32, #tpu.memory_space<vmem>>, vector<16x1xf32>
    %44 = vector.shape_cast %13 : vector<32xf32> to vector<1x32xf32>
    %45 = vector.broadcast %43 : vector<16x1xf32> to vector<16x32xf32>
    %46 = vector.broadcast %44 : vector<1x32xf32> to vector<16x32xf32>
    %47 = arith.mulf %45, %46 : vector<16x32xf32>
    %48 = arith.addf %42, %47 : vector<16x32xf32>
    %c1_27 = arith.constant 1 : index
    %c1_28 = arith.constant 1 : index
    %49 = vector.load %arg11[%c1_27, %c1_28] : memref<18x18xf32, #tpu.memory_space<vmem>>, vector<16x1xf32>
    %50 = vector.shape_cast %15 : vector<32xf32> to vector<1x32xf32>
    %51 = vector.broadcast %49 : vector<16x1xf32> to vector<16x32xf32>
    %52 = vector.broadcast %50 : vector<1x32xf32> to vector<16x32xf32>
    %53 = arith.mulf %51, %52 : vector<16x32xf32>
    %54 = arith.addf %48, %53 : vector<16x32xf32>
    %c2_29 = arith.constant 2 : index
    %c1_30 = arith.constant 1 : index
    %55 = vector.load %arg11[%c2_29, %c1_30] : memref<18x18xf32, #tpu.memory_space<vmem>>, vector<16x1xf32>
    %56 = vector.shape_cast %17 : vector<32xf32> to vector<1x32xf32>
    %57 = vector.broadcast %55 : vector<16x1xf32> to vector<16x32xf32>
    %58 = vector.broadcast %56 : vector<1x32xf32> to vector<16x32xf32>
    %59 = arith.mulf %57, %58 : vector<16x32xf32>
    %60 = arith.addf %54, %59 : vector<16x32xf32>
    %c0_31 = arith.constant 0 : index
    %c2_32 = arith.constant 2 : index
    %61 = vector.load %arg11[%c0_31, %c2_32] : memref<18x18xf32, #tpu.memory_space<vmem>>, vector<16x1xf32>
    %62 = vector.shape_cast %19 : vector<32xf32> to vector<1x32xf32>
    %63 = vector.broadcast %61 : vector<16x1xf32> to vector<16x32xf32>
    %64 = vector.broadcast %62 : vector<1x32xf32> to vector<16x32xf32>
    %65 = arith.mulf %63, %64 : vector<16x32xf32>
    %66 = arith.addf %60, %65 : vector<16x32xf32>
    %c1_33 = arith.constant 1 : index
    %c2_34 = arith.constant 2 : index
    %67 = vector.load %arg11[%c1_33, %c2_34] : memref<18x18xf32, #tpu.memory_space<vmem>>, vector<16x1xf32>
    %68 = vector.shape_cast %21 : vector<32xf32> to vector<1x32xf32>
    %69 = vector.broadcast %67 : vector<16x1xf32> to vector<16x32xf32>
    %70 = vector.broadcast %68 : vector<1x32xf32> to vector<16x32xf32>
    %71 = arith.mulf %69, %70 : vector<16x32xf32>
    %72 = arith.addf %66, %71 : vector<16x32xf32>
    %c2_35 = arith.constant 2 : index
    %c2_36 = arith.constant 2 : index
    %73 = vector.load %arg11[%c2_35, %c2_36] : memref<18x18xf32, #tpu.memory_space<vmem>>, vector<16x1xf32>
    %74 = vector.shape_cast %23 : vector<32xf32> to vector<1x32xf32>
    %75 = vector.broadcast %73 : vector<16x1xf32> to vector<16x32xf32>
    %76 = vector.broadcast %74 : vector<1x32xf32> to vector<16x32xf32>
    %77 = arith.mulf %75, %76 : vector<16x32xf32>
    %78 = arith.addf %72, %77 : vector<16x32xf32>
    %79 = vector.broadcast %5 : vector<1x32xf32> to vector<16x32xf32>
    %80 = arith.addf %78, %79 : vector<16x32xf32>
    %cst_37 = arith.constant 0.000000e+00 : f32
    %81 = vector.broadcast %cst_37 : f32 to vector<16x32xf32>
    %82 = arith.maximumf %80, %81 : vector<16x32xf32>
    %c0_38 = arith.constant 0 : index
    %c0_39 = arith.constant 0 : index
    %c0_40 = arith.constant 0 : index
    %83 = vector.load %arg12[%c0_38, %c0_39, %c0_40] : memref<16x16x32xf32, #tpu.memory_space<vmem>>, vector<1x16x32xf32>
    %84 = vector.shape_cast %83 : vector<1x16x32xf32> to vector<16x32xf32>
    %85 = vector.shape_cast %82 : vector<16x32xf32> to vector<1x16x32xf32>
    tpu.vector_store %arg12[%c0_38, %c0_39, %c0_40], %85 {strides = array<i32>} : memref<16x16x32xf32, #tpu.memory_space<vmem>>, vector<1x16x32xf32>,
    %cst_41 = arith.constant 0.000000e+00 : f32
    %86 = vector.broadcast %cst_41 : f32 to vector<16x32xf32>
    %c0_42 = arith.constant 0 : index
    %c1_43 = arith.constant 1 : index
    %87 = vector.load %arg11[%c0_42, %c1_43] : memref<18x18xf32, #tpu.memory_space<vmem>>, vector<16x1xf32>
    %88 = vector.shape_cast %7 : vector<32xf32> to vector<1x32xf32>
    %89 = vector.broadcast %87 : vector<16x1xf32> to vector<16x32xf32>
    %90 = vector.broadcast %88 : vector<1x32xf32> to vector<16x32xf32>
    %91 = arith.mulf %89, %90 : vector<16x32xf32>
    %92 = arith.addf %86, %91 : vector<16x32xf32>
    %c1_44 = arith.constant 1 : index
    %c1_45 = arith.constant 1 : index
    %93 = vector.load %arg11[%c1_44, %c1_45] : memref<18x18xf32, #tpu.memory_space<vmem>>, vector<16x1xf32>
    %94 = vector.shape_cast %9 : vector<32xf32> to vector<1x32xf32>
    %95 = vector.broadcast %93 : vector<16x1xf32> to vector<16x32xf32>
    %96 = vector.broadcast %94 : vector<1x32xf32> to vector<16x32xf32>
    %97 = arith.mulf %95, %96 : vector<16x32xf32>
    %98 = arith.addf %92, %97 : vector<16x32xf32>
    %c2_46 = arith.constant 2 : index
    %c1_47 = arith.constant 1 : index
    %99 = vector.load %arg11[%c2_46, %c1_47] : memref<18x18xf32, #tpu.memory_space<vmem>>, vector<16x1xf32>
    %100 = vector.shape_cast %11 : vector<32xf32> to vector<1x32xf32>
    %101 = vector.broadcast %99 : vector<16x1xf32> to vector<16x32xf32>
    %102 = vector.broadcast %100 : vector<1x32xf32> to vector<16x32xf32>
    %103 = arith.mulf %101, %102 : vector<16x32xf32>
    %104 = arith.addf %98, %103 : vector<16x32xf32>
    %c0_48 = arith.constant 0 : index
    %c2_49 = arith.constant 2 : index
    %105 = vector.load %arg11[%c0_48, %c2_49] : memref<18x18xf32, #tpu.memory_space<vmem>>, vector<16x1xf32>
    %106 = vector.shape_cast %13 : vector<32xf32> to vector<1x32xf32>
    %107 = vector.broadcast %105 : vector<16x1xf32> to vector<16x32xf32>
    %108 = vector.broadcast %106 : vector<1x32xf32> to vector<16x32xf32>
    %109 = arith.mulf %107, %108 : vector<16x32xf32>
    %110 = arith.addf %104, %109 : vector<16x32xf32>
    %c1_50 = arith.constant 1 : index
    %c2_51 = arith.constant 2 : index
    %111 = vector.load %arg11[%c1_50, %c2_51] : memref<18x18xf32, #tpu.memory_space<vmem>>, vector<16x1xf32>
    %112 = vector.shape_cast %15 : vector<32xf32> to vector<1x32xf32>
    %113 = vector.broadcast %111 : vector<16x1xf32> to vector<16x32xf32>
    %114 = vector.broadcast %112 : vector<1x32xf32> to vector<16x32xf32>
    %115 = arith.mulf %113, %114 : vector<16x32xf32>
    %116 = arith.addf %110, %115 : vector<16x32xf32>
    %c2_52 = arith.constant 2 : index
    %c2_53 = arith.constant 2 : index
    %117 = vector.load %arg11[%c2_52, %c2_53] : memref<18x18xf32, #tpu.memory_space<vmem>>, vector<16x1xf32>
    %118 = vector.shape_cast %17 : vector<32xf32> to vector<1x32xf32>
    %119 = vector.broadcast %117 : vector<16x1xf32> to vector<16x32xf32>
    %120 = vector.broadcast %118 : vector<1x32xf32> to vector<16x32xf32>
    %121 = arith.mulf %119, %120 : vector<16x32xf32>
    %122 = arith.addf %116, %121 : vector<16x32xf32>
    %c0_54 = arith.constant 0 : index
    %c3_55 = arith.constant 3 : index
    %123 = vector.load %arg11[%c0_54, %c3_55] : memref<18x18xf32, #tpu.memory_space<vmem>>, vector<16x1xf32>
    %124 = vector.shape_cast %19 : vector<32xf32> to vector<1x32xf32>
    %125 = vector.broadcast %123 : vector<16x1xf32> to vector<16x32xf32>
    %126 = vector.broadcast %124 : vector<1x32xf32> to vector<16x32xf32>
    %127 = arith.mulf %125, %126 : vector<16x32xf32>
    %128 = arith.addf %122, %127 : vector<16x32xf32>
    %c1_56 = arith.constant 1 : index
    %c3_57 = arith.constant 3 : index
    %129 = vector.load %arg11[%c1_56, %c3_57] : memref<18x18xf32, #tpu.memory_space<vmem>>, vector<16x1xf32>
    %130 = vector.shape_cast %21 : vector<32xf32> to vector<1x32xf32>
    %131 = vector.broadcast %129 : vector<16x1xf32> to vector<16x32xf32>
    %132 = vector.broadcast %130 : vector<1x32xf32> to vector<16x32xf32>
    %133 = arith.mulf %131, %132 : vector<16x32xf32>
    %134 = arith.addf %128, %133 : vector<16x32xf32>
    %c2_58 = arith.constant 2 : index
    %c3_59 = arith.constant 3 : index
    %135 = vector.load %arg11[%c2_58, %c3_59] : memref<18x18xf32, #tpu.memory_space<vmem>>, vector<16x1xf32>
    %136 = vector.shape_cast %23 : vector<32xf32> to vector<1x32xf32>
    %137 = vector.broadcast %135 : vector<16x1xf32> to vector<16x32xf32>
    %138 = vector.broadcast %136 : vector<1x32xf32> to vector<16x32xf32>
    %139 = arith.mulf %137, %138 : vector<16x32xf32>
    %140 = arith.addf %134, %139 : vector<16x32xf32>
    %141 = vector.broadcast %5 : vector<1x32xf32> to vector<16x32xf32>
    %142 = arith.addf %140, %141 : vector<16x32xf32>
    %cst_60 = arith.constant 0.000000e+00 : f32
    %143 = vector.broadcast %cst_60 : f32 to vector<16x32xf32>
    %144 = arith.maximumf %142, %143 : vector<16x32xf32>
    %c1_61 = arith.constant 1 : index
    %c0_62 = arith.constant 0 : index
    %c0_63 = arith.constant 0 : index
    %145 = vector.load %arg12[%c1_61, %c0_62, %c0_63] : memref<16x16x32xf32, #tpu.memory_space<vmem>>, vector<1x16x32xf32>
    %146 = vector.shape_cast %145 : vector<1x16x32xf32> to vector<16x32xf32>
    %147 = vector.shape_cast %144 : vector<16x32xf32> to vector<1x16x32xf32>
    tpu.vector_store %arg12[%c1_61, %c0_62, %c0_63], %147 {strides = array<i32>} : memref<16x16x32xf32, #tpu.memory_space<vmem>>, vector<1x16x32xf32>,
    %cst_64 = arith.constant 0.000000e+00 : f32
    %148 = vector.broadcast %cst_64 : f32 to vector<16x32xf32>
    %c0_65 = arith.constant 0 : index
    %c2_66 = arith.constant 2 : index
    %149 = vector.load %arg11[%c0_65, %c2_66] : memref<18x18xf32, #tpu.memory_space<vmem>>, vector<16x1xf32>
    %150 = vector.shape_cast %7 : vector<32xf32> to vector<1x32xf32>
    %151 = vector.broadcast %149 : vector<16x1xf32> to vector<16x32xf32>
    %152 = vector.broadcast %150 : vector<1x32xf32> to vector<16x32xf32>
    %153 = arith.mulf %151, %152 : vector<16x32xf32>
    %154 = arith.addf %148, %153 : vector<16x32xf32>
    %c1_67 = arith.constant 1 : index
    %c2_68 = arith.constant 2 : index
    %155 = vector.load %arg11[%c1_67, %c2_68] : memref<18x18xf32, #tpu.memory_space<vmem>>, vector<16x1xf32>
    %156 = vector.shape_cast %9 : vector<32xf32> to vector<1x32xf32>
    %157 = vector.broadcast %155 : vector<16x1xf32> to vector<16x32xf32>
    %158 = vector.broadcast %156 : vector<1x32xf32> to vector<16x32xf32>
    %159 = arith.mulf %157, %158 : vector<16x32xf32>
    %160 = arith.addf %154, %159 : vector<16x32xf32>
    %c2_69 = arith.constant 2 : index
    %c2_70 = arith.constant 2 : index
    %161 = vector.load %arg11[%c2_69, %c2_70] : memref<18x18xf32, #tpu.memory_space<vmem>>, vector<16x1xf32>
    %162 = vector.shape_cast %11 : vector<32xf32> to vector<1x32xf32>
    %163 = vector.broadcast %161 : vector<16x1xf32> to vector<16x32xf32>
    %164 = vector.broadcast %162 : vector<1x32xf32> to vector<16x32xf32>
    %165 = arith.mulf %163, %164 : vector<16x32xf32>
    %166 = arith.addf %160, %165 : vector<16x32xf32>
    %c0_71 = arith.constant 0 : index
    %c3_72 = arith.constant 3 : index
    %167 = vector.load %arg11[%c0_71, %c3_72] : memref<18x18xf32, #tpu.memory_space<vmem>>, vector<16x1xf32>
    %168 = vector.shape_cast %13 : vector<32xf32> to vector<1x32xf32>
    %169 = vector.broadcast %167 : vector<16x1xf32> to vector<16x32xf32>
    %170 = vector.broadcast %168 : vector<1x32xf32> to vector<16x32xf32>
    %171 = arith.mulf %169, %170 : vector<16x32xf32>
    %172 = arith.addf %166, %171 : vector<16x32xf32>
    %c1_73 = arith.constant 1 : index
    %c3_74 = arith.constant 3 : index
    %173 = vector.load %arg11[%c1_73, %c3_74] : memref<18x18xf32, #tpu.memory_space<vmem>>, vector<16x1xf32>
    %174 = vector.shape_cast %15 : vector<32xf32> to vector<1x32xf32>
    %175 = vector.broadcast %173 : vector<16x1xf32> to vector<16x32xf32>
    %176 = vector.broadcast %174 : vector<1x32xf32> to vector<16x32xf32>
    %177 = arith.mulf %175, %176 : vector<16x32xf32>
    %178 = arith.addf %172, %177 : vector<16x32xf32>
    %c2_75 = arith.constant 2 : index
    %c3_76 = arith.constant 3 : index
    %179 = vector.load %arg11[%c2_75, %c3_76] : memref<18x18xf32, #tpu.memory_space<vmem>>, vector<16x1xf32>
    %180 = vector.shape_cast %17 : vector<32xf32> to vector<1x32xf32>
    %181 = vector.broadcast %179 : vector<16x1xf32> to vector<16x32xf32>
    %182 = vector.broadcast %180 : vector<1x32xf32> to vector<16x32xf32>
    %183 = arith.mulf %181, %182 : vector<16x32xf32>
    %184 = arith.addf %178, %183 : vector<16x32xf32>
    %c0_77 = arith.constant 0 : index
    %c4_78 = arith.constant 4 : index
    %185 = vector.load %arg11[%c0_77, %c4_78] : memref<18x18xf32, #tpu.memory_space<vmem>>, vector<16x1xf32>
    %186 = vector.shape_cast %19 : vector<32xf32> to vector<1x32xf32>
    %187 = vector.broadcast %185 : vector<16x1xf32> to vector<16x32xf32>
    %188 = vector.broadcast %186 : vector<1x32xf32> to vector<16x32xf32>
    %189 = arith.mulf %187, %188 : vector<16x32xf32>
    %190 = arith.addf %184, %189 : vector<16x32xf32>
    %c1_79 = arith.constant 1 : index
    %c4_80 = arith.constant 4 : index
    %191 = vector.load %arg11[%c1_79, %c4_80] : memref<18x18xf32, #tpu.memory_space<vmem>>, vector<16x1xf32>
    %192 = vector.shape_cast %21 : vector<32xf32> to vector<1x32xf32>
    %193 = vector.broadcast %191 : vector<16x1xf32> to vector<16x32xf32>
    %194 = vector.broadcast %192 : vector<1x32xf32> to vector<16x32xf32>
    %195 = arith.mulf %193, %194 : vector<16x32xf32>
    %196 = arith.addf %190, %195 : vector<16x32xf32>
    %c2_81 = arith.constant 2 : index
    %c4_82 = arith.constant 4 : index
    %197 = vector.load %arg11[%c2_81, %c4_82] : memref<18x18xf32, #tpu.memory_space<vmem>>, vector<16x1xf32>
    %198 = vector.shape_cast %23 : vector<32xf32> to vector<1x32xf32>
    %199 = vector.broadcast %197 : vector<16x1xf32> to vector<16x32xf32>
    %200 = vector.broadcast %198 : vector<1x32xf32> to vector<16x32xf32>
    %201 = arith.mulf %199, %200 : vector<16x32xf32>
    %202 = arith.addf %196, %201 : vector<16x32xf32>
    %203 = vector.broadcast %5 : vector<1x32xf32> to vector<16x32xf32>
    %204 = arith.addf %202, %203 : vector<16x32xf32>
    %cst_83 = arith.constant 0.000000e+00 : f32
    %205 = vector.broadcast %cst_83 : f32 to vector<16x32xf32>
    %206 = arith.maximumf %204, %205 : vector<16x32xf32>
    %c2_84 = arith.constant 2 : index
    %c0_85 = arith.constant 0 : index
    %c0_86 = arith.constant 0 : index
    %207 = vector.load %arg12[%c2_84, %c0_85, %c0_86] : memref<16x16x32xf32, #tpu.memory_space<vmem>>, vector<1x16x32xf32>
    %208 = vector.shape_cast %207 : vector<1x16x32xf32> to vector<16x32xf32>
    %209 = vector.shape_cast %206 : vector<16x32xf32> to vector<1x16x32xf32>
    tpu.vector_store %arg12[%c2_84, %c0_85, %c0_86], %209 {strides = array<i32>} : memref<16x16x32xf32, #tpu.memory_space<vmem>>, vector<1x16x32xf32>,
    %cst_87 = arith.constant 0.000000e+00 : f32
    %210 = vector.broadcast %cst_87 : f32 to vector<16x32xf32>
    %c0_88 = arith.constant 0 : index
    %c3_89 = arith.constant 3 : index
    %211 = vector.load %arg11[%c0_88, %c3_89] : memref<18x18xf32, #tpu.memory_space<vmem>>, vector<16x1xf32>
    %212 = vector.shape_cast %7 : vector<32xf32> to vector<1x32xf32>
    %213 = vector.broadcast %211 : vector<16x1xf32> to vector<16x32xf32>
    %214 = vector.broadcast %212 : vector<1x32xf32> to vector<16x32xf32>
    %215 = arith.mulf %213, %214 : vector<16x32xf32>
    %216 = arith.addf %210, %215 : vector<16x32xf32>
    %c1_90 = arith.constant 1 : index
    %c3_91 = arith.constant 3 : index
    %217 = vector.load %arg11[%c1_90, %c3_91] : memref<18x18xf32, #tpu.memory_space<vmem>>, vector<16x1xf32>
    %218 = vector.shape_cast %9 : vector<32xf32> to vector<1x32xf32>
    %219 = vector.broadcast %217 : vector<16x1xf32> to vector<16x32xf32>
    %220 = vector.broadcast %218 : vector<1x32xf32> to vector<16x32xf32>
    %221 = arith.mulf %219, %220 : vector<16x32xf32>
    %222 = arith.addf %216, %221 : vector<16x32xf32>
    %c2_92 = arith.constant 2 : index
    %c3_93 = arith.constant 3 : index
    %223 = vector.load %arg11[%c2_92, %c3_93] : memref<18x18xf32, #tpu.memory_space<vmem>>, vector<16x1xf32>
    %224 = vector.shape_cast %11 : vector<32xf32> to vector<1x32xf32>
    %225 = vector.broadcast %223 : vector<16x1xf32> to vector<16x32xf32>
    %226 = vector.broadcast %224 : vector<1x32xf32> to vector<16x32xf32>
    %227 = arith.mulf %225, %226 : vector<16x32xf32>
    %228 = arith.addf %222, %227 : vector<16x32xf32>
    %c0_94 = arith.constant 0 : index
    %c4_95 = arith.constant 4 : index
    %229 = vector.load %arg11[%c0_94, %c4_95] : memref<18x18xf32, #tpu.memory_space<vmem>>, vector<16x1xf32>
    %230 = vector.shape_cast %13 : vector<32xf32> to vector<1x32xf32>
    %231 = vector.broadcast %229 : vector<16x1xf32> to vector<16x32xf32>
    %232 = vector.broadcast %230 : vector<1x32xf32> to vector<16x32xf32>
    %233 = arith.mulf %231, %232 : vector<16x32xf32>
    %234 = arith.addf %228, %233 : vector<16x32xf32>
    %c1_96 = arith.constant 1 : index
    %c4_97 = arith.constant 4 : index
    %235 = vector.load %arg11[%c1_96, %c4_97] : memref<18x18xf32, #tpu.memory_space<vmem>>, vector<16x1xf32>
    %236 = vector.shape_cast %15 : vector<32xf32> to vector<1x32xf32>
    %237 = vector.broadcast %235 : vector<16x1xf32> to vector<16x32xf32>
    %238 = vector.broadcast %236 : vector<1x32xf32> to vector<16x32xf32>
    %239 = arith.mulf %237, %238 : vector<16x32xf32>
    %240 = arith.addf %234, %239 : vector<16x32xf32>
    %c2_98 = arith.constant 2 : index
    %c4_99 = arith.constant 4 : index
    %241 = vector.load %arg11[%c2_98, %c4_99] : memref<18x18xf32, #tpu.memory_space<vmem>>, vector<16x1xf32>
    %242 = vector.shape_cast %17 : vector<32xf32> to vector<1x32xf32>
    %243 = vector.broadcast %241 : vector<16x1xf32> to vector<16x32xf32>
    %244 = vector.broadcast %242 : vector<1x32xf32> to vector<16x32xf32>
    %245 = arith.mulf %243, %244 : vector<16x32xf32>
    %246 = arith.addf %240, %245 : vector<16x32xf32>
    %c0_100 = arith.constant 0 : index
    %c5_101 = arith.constant 5 : index
    %247 = vector.load %arg11[%c0_100, %c5_101] : memref<18x18xf32, #tpu.memory_space<vmem>>, vector<16x1xf32>
    %248 = vector.shape_cast %19 : vector<32xf32> to vector<1x32xf32>
    %249 = vector.broadcast %247 : vector<16x1xf32> to vector<16x32xf32>
    %250 = vector.broadcast %248 : vector<1x32xf32> to vector<16x32xf32>
    %251 = arith.mulf %249, %250 : vector<16x32xf32>
    %252 = arith.addf %246, %251 : vector<16x32xf32>
    %c1_102 = arith.constant 1 : index
    %c5_103 = arith.constant 5 : index
    %253 = vector.load %arg11[%c1_102, %c5_103] : memref<18x18xf32, #tpu.memory_space<vmem>>, vector<16x1xf32>
    %254 = vector.shape_cast %21 : vector<32xf32> to vector<1x32xf32>
    %255 = vector.broadcast %253 : vector<16x1xf32> to vector<16x32xf32>
    %256 = vector.broadcast %254 : vector<1x32xf32> to vector<16x32xf32>
    %257 = arith.mulf %255, %256 : vector<16x32xf32>
    %258 = arith.addf %252, %257 : vector<16x32xf32>
    %c2_104 = arith.constant 2 : index
    %c5_105 = arith.constant 5 : index
    %259 = vector.load %arg11[%c2_104, %c5_105] : memref<18x18xf32, #tpu.memory_space<vmem>>, vector<16x1xf32>
    %260 = vector.shape_cast %23 : vector<32xf32> to vector<1x32xf32>
    %261 = vector.broadcast %259 : vector<16x1xf32> to vector<16x32xf32>
    %262 = vector.broadcast %260 : vector<1x32xf32> to vector<16x32xf32>
    %263 = arith.mulf %261, %262 : vector<16x32xf32>
    %264 = arith.addf %258, %263 : vector<16x32xf32>
    %265 = vector.broadcast %5 : vector<1x32xf32> to vector<16x32xf32>
    %266 = arith.addf %264, %265 : vector<16x32xf32>
    %cst_106 = arith.constant 0.000000e+00 : f32
    %267 = vector.broadcast %cst_106 : f32 to vector<16x32xf32>
    %268 = arith.maximumf %266, %267 : vector<16x32xf32>
    %c3_107 = arith.constant 3 : index
    %c0_108 = arith.constant 0 : index
    %c0_109 = arith.constant 0 : index
    %269 = vector.load %arg12[%c3_107, %c0_108, %c0_109] : memref<16x16x32xf32, #tpu.memory_space<vmem>>, vector<1x16x32xf32>
    %270 = vector.shape_cast %269 : vector<1x16x32xf32> to vector<16x32xf32>
    %271 = vector.shape_cast %268 : vector<16x32xf32> to vector<1x16x32xf32>
    tpu.vector_store %arg12[%c3_107, %c0_108, %c0_109], %271 {strides = array<i32>} : memref<16x16x32xf32, #tpu.memory_space<vmem>>, vector<1x16x32xf32>,
    %cst_110 = arith.constant 0.000000e+00 : f32
    %272 = vector.broadcast %cst_110 : f32 to vector<16x32xf32>
    %c0_111 = arith.constant 0 : index
    %c4_112 = arith.constant 4 : index
    %273 = vector.load %arg11[%c0_111, %c4_112] : memref<18x18xf32, #tpu.memory_space<vmem>>, vector<16x1xf32>
    %274 = vector.shape_cast %7 : vector<32xf32> to vector<1x32xf32>
    %275 = vector.broadcast %273 : vector<16x1xf32> to vector<16x32xf32>
    %276 = vector.broadcast %274 : vector<1x32xf32> to vector<16x32xf32>
    %277 = arith.mulf %275, %276 : vector<16x32xf32>
    %278 = arith.addf %272, %277 : vector<16x32xf32>
    %c1_113 = arith.constant 1 : index
    %c4_114 = arith.constant 4 : index
    %279 = vector.load %arg11[%c1_113, %c4_114] : memref<18x18xf32, #tpu.memory_space<vmem>>, vector<16x1xf32>
    %280 = vector.shape_cast %9 : vector<32xf32> to vector<1x32xf32>
    %281 = vector.broadcast %279 : vector<16x1xf32> to vector<16x32xf32>
    %282 = vector.broadcast %280 : vector<1x32xf32> to vector<16x32xf32>
    %283 = arith.mulf %281, %282 : vector<16x32xf32>
    %284 = arith.addf %278, %283 : vector<16x32xf32>
    %c2_115 = arith.constant 2 : index
    %c4_116 = arith.constant 4 : index
    %285 = vector.load %arg11[%c2_115, %c4_116] : memref<18x18xf32, #tpu.memory_space<vmem>>, vector<16x1xf32>
    %286 = vector.shape_cast %11 : vector<32xf32> to vector<1x32xf32>
    %287 = vector.broadcast %285 : vector<16x1xf32> to vector<16x32xf32>
    %288 = vector.broadcast %286 : vector<1x32xf32> to vector<16x32xf32>
    %289 = arith.mulf %287, %288 : vector<16x32xf32>
    %290 = arith.addf %284, %289 : vector<16x32xf32>
    %c0_117 = arith.constant 0 : index
    %c5_118 = arith.constant 5 : index
    %291 = vector.load %arg11[%c0_117, %c5_118] : memref<18x18xf32, #tpu.memory_space<vmem>>, vector<16x1xf32>
    %292 = vector.shape_cast %13 : vector<32xf32> to vector<1x32xf32>
    %293 = vector.broadcast %291 : vector<16x1xf32> to vector<16x32xf32>
    %294 = vector.broadcast %292 : vector<1x32xf32> to vector<16x32xf32>
    %295 = arith.mulf %293, %294 : vector<16x32xf32>
    %296 = arith.addf %290, %295 : vector<16x32xf32>
    %c1_119 = arith.constant 1 : index
    %c5_120 = arith.constant 5 : index
    %297 = vector.load %arg11[%c1_119, %c5_120] : memref<18x18xf32, #tpu.memory_space<vmem>>, vector<16x1xf32>
    %298 = vector.shape_cast %15 : vector<32xf32> to vector<1x32xf32>
    %299 = vector.broadcast %297 : vector<16x1xf32> to vector<16x32xf32>
    %300 = vector.broadcast %298 : vector<1x32xf32> to vector<16x32xf32>
    %301 = arith.mulf %299, %300 : vector<16x32xf32>
    %302 = arith.addf %296, %301 : vector<16x32xf32>
    %c2_121 = arith.constant 2 : index
    %c5_122 = arith.constant 5 : index
    %303 = vector.load %arg11[%c2_121, %c5_122] : memref<18x18xf32, #tpu.memory_space<vmem>>, vector<16x1xf32>
    %304 = vector.shape_cast %17 : vector<32xf32> to vector<1x32xf32>
    %305 = vector.broadcast %303 : vector<16x1xf32> to vector<16x32xf32>
    %306 = vector.broadcast %304 : vector<1x32xf32> to vector<16x32xf32>
    %307 = arith.mulf %305, %306 : vector<16x32xf32>
    %308 = arith.addf %302, %307 : vector<16x32xf32>
    %c0_123 = arith.constant 0 : index
    %c6_124 = arith.constant 6 : index
    %309 = vector.load %arg11[%c0_123, %c6_124] : memref<18x18xf32, #tpu.memory_space<vmem>>, vector<16x1xf32>
    %310 = vector.shape_cast %19 : vector<32xf32> to vector<1x32xf32>
    %311 = vector.broadcast %309 : vector<16x1xf32> to vector<16x32xf32>
    %312 = vector.broadcast %310 : vector<1x32xf32> to vector<16x32xf32>
    %313 = arith.mulf %311, %312 : vector<16x32xf32>
    %314 = arith.addf %308, %313 : vector<16x32xf32>
    %c1_125 = arith.constant 1 : index
    %c6_126 = arith.constant 6 : index
    %315 = vector.load %arg11[%c1_125, %c6_126] : memref<18x18xf32, #tpu.memory_space<vmem>>, vector<16x1xf32>
    %316 = vector.shape_cast %21 : vector<32xf32> to vector<1x32xf32>
    %317 = vector.broadcast %315 : vector<16x1xf32> to vector<16x32xf32>
    %318 = vector.broadcast %316 : vector<1x32xf32> to vector<16x32xf32>
    %319 = arith.mulf %317, %318 : vector<16x32xf32>
    %320 = arith.addf %314, %319 : vector<16x32xf32>
    %c2_127 = arith.constant 2 : index
    %c6_128 = arith.constant 6 : index
    %321 = vector.load %arg11[%c2_127, %c6_128] : memref<18x18xf32, #tpu.memory_space<vmem>>, vector<16x1xf32>
    %322 = vector.shape_cast %23 : vector<32xf32> to vector<1x32xf32>
    %323 = vector.broadcast %321 : vector<16x1xf32> to vector<16x32xf32>
    %324 = vector.broadcast %322 : vector<1x32xf32> to vector<16x32xf32>
    %325 = arith.mulf %323, %324 : vector<16x32xf32>
    %326 = arith.addf %320, %325 : vector<16x32xf32>
    %327 = vector.broadcast %5 : vector<1x32xf32> to vector<16x32xf32>
    %328 = arith.addf %326, %327 : vector<16x32xf32>
    %cst_129 = arith.constant 0.000000e+00 : f32
    %329 = vector.broadcast %cst_129 : f32 to vector<16x32xf32>
    %330 = arith.maximumf %328, %329 : vector<16x32xf32>
    %c4_130 = arith.constant 4 : index
    %c0_131 = arith.constant 0 : index
    %c0_132 = arith.constant 0 : index
    %331 = vector.load %arg12[%c4_130, %c0_131, %c0_132] : memref<16x16x32xf32, #tpu.memory_space<vmem>>, vector<1x16x32xf32>
    %332 = vector.shape_cast %331 : vector<1x16x32xf32> to vector<16x32xf32>
    %333 = vector.shape_cast %330 : vector<16x32xf32> to vector<1x16x32xf32>
    tpu.vector_store %arg12[%c4_130, %c0_131, %c0_132], %333 {strides = array<i32>} : memref<16x16x32xf32, #tpu.memory_space<vmem>>, vector<1x16x32xf32>,
    %cst_133 = arith.constant 0.000000e+00 : f32
    %334 = vector.broadcast %cst_133 : f32 to vector<16x32xf32>
    %c0_134 = arith.constant 0 : index
    %c5_135 = arith.constant 5 : index
    %335 = vector.load %arg11[%c0_134, %c5_135] : memref<18x18xf32, #tpu.memory_space<vmem>>, vector<16x1xf32>
    %336 = vector.shape_cast %7 : vector<32xf32> to vector<1x32xf32>
    %337 = vector.broadcast %335 : vector<16x1xf32> to vector<16x32xf32>
    %338 = vector.broadcast %336 : vector<1x32xf32> to vector<16x32xf32>
    %339 = arith.mulf %337, %338 : vector<16x32xf32>
    %340 = arith.addf %334, %339 : vector<16x32xf32>
    %c1_136 = arith.constant 1 : index
    %c5_137 = arith.constant 5 : index
    %341 = vector.load %arg11[%c1_136, %c5_137] : memref<18x18xf32, #tpu.memory_space<vmem>>, vector<16x1xf32>
    %342 = vector.shape_cast %9 : vector<32xf32> to vector<1x32xf32>
    %343 = vector.broadcast %341 : vector<16x1xf32> to vector<16x32xf32>
    %344 = vector.broadcast %342 : vector<1x32xf32> to vector<16x32xf32>
    %345 = arith.mulf %343, %344 : vector<16x32xf32>
    %346 = arith.addf %340, %345 : vector<16x32xf32>
    %c2_138 = arith.constant 2 : index
    %c5_139 = arith.constant 5 : index
    %347 = vector.load %arg11[%c2_138, %c5_139] : memref<18x18xf32, #tpu.memory_space<vmem>>, vector<16x1xf32>
    %348 = vector.shape_cast %11 : vector<32xf32> to vector<1x32xf32>
    %349 = vector.broadcast %347 : vector<16x1xf32> to vector<16x32xf32>
    %350 = vector.broadcast %348 : vector<1x32xf32> to vector<16x32xf32>
    %351 = arith.mulf %349, %350 : vector<16x32xf32>
    %352 = arith.addf %346, %351 : vector<16x32xf32>
    %c0_140 = arith.constant 0 : index
    %c6_141 = arith.constant 6 : index
    %353 = vector.load %arg11[%c0_140, %c6_141] : memref<18x18xf32, #tpu.memory_space<vmem>>, vector<16x1xf32>
    %354 = vector.shape_cast %13 : vector<32xf32> to vector<1x32xf32>
    %355 = vector.broadcast %353 : vector<16x1xf32> to vector<16x32xf32>
    %356 = vector.broadcast %354 : vector<1x32xf32> to vector<16x32xf32>
    %357 = arith.mulf %355, %356 : vector<16x32xf32>
    %358 = arith.addf %352, %357 : vector<16x32xf32>
    %c1_142 = arith.constant 1 : index
    %c6_143 = arith.constant 6 : index
    %359 = vector.load %arg11[%c1_142, %c6_143] : memref<18x18xf32, #tpu.memory_space<vmem>>, vector<16x1xf32>
    %360 = vector.shape_cast %15 : vector<32xf32> to vector<1x32xf32>
    %361 = vector.broadcast %359 : vector<16x1xf32> to vector<16x32xf32>
    %362 = vector.broadcast %360 : vector<1x32xf32> to vector<16x32xf32>
    %363 = arith.mulf %361, %362 : vector<16x32xf32>
    %364 = arith.addf %358, %363 : vector<16x32xf32>
    %c2_144 = arith.constant 2 : index
    %c6_145 = arith.constant 6 : index
    %365 = vector.load %arg11[%c2_144, %c6_145] : memref<18x18xf32, #tpu.memory_space<vmem>>, vector<16x1xf32>
    %366 = vector.shape_cast %17 : vector<32xf32> to vector<1x32xf32>
    %367 = vector.broadcast %365 : vector<16x1xf32> to vector<16x32xf32>
    %368 = vector.broadcast %366 : vector<1x32xf32> to vector<16x32xf32>
    %369 = arith.mulf %367, %368 : vector<16x32xf32>
    %370 = arith.addf %364, %369 : vector<16x32xf32>
    %c0_146 = arith.constant 0 : index
    %c7_147 = arith.constant 7 : index
    %371 = vector.load %arg11[%c0_146, %c7_147] : memref<18x18xf32, #tpu.memory_space<vmem>>, vector<16x1xf32>
    %372 = vector.shape_cast %19 : vector<32xf32> to vector<1x32xf32>
    %373 = vector.broadcast %371 : vector<16x1xf32> to vector<16x32xf32>
    %374 = vector.broadcast %372 : vector<1x32xf32> to vector<16x32xf32>
    %375 = arith.mulf %373, %374 : vector<16x32xf32>
    %376 = arith.addf %370, %375 : vector<16x32xf32>
    %c1_148 = arith.constant 1 : index
    %c7_149 = arith.constant 7 : index
    %377 = vector.load %arg11[%c1_148, %c7_149] : memref<18x18xf32, #tpu.memory_space<vmem>>, vector<16x1xf32>
    %378 = vector.shape_cast %21 : vector<32xf32> to vector<1x32xf32>
    %379 = vector.broadcast %377 : vector<16x1xf32> to vector<16x32xf32>
    %380 = vector.broadcast %378 : vector<1x32xf32> to vector<16x32xf32>
    %381 = arith.mulf %379, %380 : vector<16x32xf32>
    %382 = arith.addf %376, %381 : vector<16x32xf32>
    %c2_150 = arith.constant 2 : index
    %c7_151 = arith.constant 7 : index
    %383 = vector.load %arg11[%c2_150, %c7_151] : memref<18x18xf32, #tpu.memory_space<vmem>>, vector<16x1xf32>
    %384 = vector.shape_cast %23 : vector<32xf32> to vector<1x32xf32>
    %385 = vector.broadcast %383 : vector<16x1xf32> to vector<16x32xf32>
    %386 = vector.broadcast %384 : vector<1x32xf32> to vector<16x32xf32>
    %387 = arith.mulf %385, %386 : vector<16x32xf32>
    %388 = arith.addf %382, %387 : vector<16x32xf32>
    %389 = vector.broadcast %5 : vector<1x32xf32> to vector<16x32xf32>
    %390 = arith.addf %388, %389 : vector<16x32xf32>
    %cst_152 = arith.constant 0.000000e+00 : f32
    %391 = vector.broadcast %cst_152 : f32 to vector<16x32xf32>
    %392 = arith.maximumf %390, %391 : vector<16x32xf32>
    %c5_153 = arith.constant 5 : index
    %c0_154 = arith.constant 0 : index
    %c0_155 = arith.constant 0 : index
    %393 = vector.load %arg12[%c5_153, %c0_154, %c0_155] : memref<16x16x32xf32, #tpu.memory_space<vmem>>, vector<1x16x32xf32>
    %394 = vector.shape_cast %393 : vector<1x16x32xf32> to vector<16x32xf32>
    %395 = vector.shape_cast %392 : vector<16x32xf32> to vector<1x16x32xf32>
    tpu.vector_store %arg12[%c5_153, %c0_154, %c0_155], %395 {strides = array<i32>} : memref<16x16x32xf32, #tpu.memory_space<vmem>>, vector<1x16x32xf32>,
    %cst_156 = arith.constant 0.000000e+00 : f32
    %396 = vector.broadcast %cst_156 : f32 to vector<16x32xf32>
    %c0_157 = arith.constant 0 : index
    %c6_158 = arith.constant 6 : index
    %397 = vector.load %arg11[%c0_157, %c6_158] : memref<18x18xf32, #tpu.memory_space<vmem>>, vector<16x1xf32>
    %398 = vector.shape_cast %7 : vector<32xf32> to vector<1x32xf32>
    %399 = vector.broadcast %397 : vector<16x1xf32> to vector<16x32xf32>
    %400 = vector.broadcast %398 : vector<1x32xf32> to vector<16x32xf32>
    %401 = arith.mulf %399, %400 : vector<16x32xf32>
    %402 = arith.addf %396, %401 : vector<16x32xf32>
    %c1_159 = arith.constant 1 : index
    %c6_160 = arith.constant 6 : index
    %403 = vector.load %arg11[%c1_159, %c6_160] : memref<18x18xf32, #tpu.memory_space<vmem>>, vector<16x1xf32>
    %404 = vector.shape_cast %9 : vector<32xf32> to vector<1x32xf32>
    %405 = vector.broadcast %403 : vector<16x1xf32> to vector<16x32xf32>
    %406 = vector.broadcast %404 : vector<1x32xf32> to vector<16x32xf32>
    %407 = arith.mulf %405, %406 : vector<16x32xf32>
    %408 = arith.addf %402, %407 : vector<16x32xf32>
    %c2_161 = arith.constant 2 : index
    %c6_162 = arith.constant 6 : index
    %409 = vector.load %arg11[%c2_161, %c6_162] : memref<18x18xf32, #tpu.memory_space<vmem>>, vector<16x1xf32>
    %410 = vector.shape_cast %11 : vector<32xf32> to vector<1x32xf32>
    %411 = vector.broadcast %409 : vector<16x1xf32> to vector<16x32xf32>
    %412 = vector.broadcast %410 : vector<1x32xf32> to vector<16x32xf32>
    %413 = arith.mulf %411, %412 : vector<16x32xf32>
    %414 = arith.addf %408, %413 : vector<16x32xf32>
    %c0_163 = arith.constant 0 : index
    %c7_164 = arith.constant 7 : index
    %415 = vector.load %arg11[%c0_163, %c7_164] : memref<18x18xf32, #tpu.memory_space<vmem>>, vector<16x1xf32>
    %416 = vector.shape_cast %13 : vector<32xf32> to vector<1x32xf32>
    %417 = vector.broadcast %415 : vector<16x1xf32> to vector<16x32xf32>
    %418 = vector.broadcast %416 : vector<1x32xf32> to vector<16x32xf32>
    %419 = arith.mulf %417, %418 : vector<16x32xf32>
    %420 = arith.addf %414, %419 : vector<16x32xf32>
    %c1_165 = arith.constant 1 : index
    %c7_166 = arith.constant 7 : index
    %421 = vector.load %arg11[%c1_165, %c7_166] : memref<18x18xf32, #tpu.memory_space<vmem>>, vector<16x1xf32>
    %422 = vector.shape_cast %15 : vector<32xf32> to vector<1x32xf32>
    %423 = vector.broadcast %421 : vector<16x1xf32> to vector<16x32xf32>
    %424 = vector.broadcast %422 : vector<1x32xf32> to vector<16x32xf32>
    %425 = arith.mulf %423, %424 : vector<16x32xf32>
    %426 = arith.addf %420, %425 : vector<16x32xf32>
    %c2_167 = arith.constant 2 : index
    %c7_168 = arith.constant 7 : index
    %427 = vector.load %arg11[%c2_167, %c7_168] : memref<18x18xf32, #tpu.memory_space<vmem>>, vector<16x1xf32>
    %428 = vector.shape_cast %17 : vector<32xf32> to vector<1x32xf32>
    %429 = vector.broadcast %427 : vector<16x1xf32> to vector<16x32xf32>
    %430 = vector.broadcast %428 : vector<1x32xf32> to vector<16x32xf32>
    %431 = arith.mulf %429, %430 : vector<16x32xf32>
    %432 = arith.addf %426, %431 : vector<16x32xf32>
    %c0_169 = arith.constant 0 : index
    %c8_170 = arith.constant 8 : index
    %433 = vector.load %arg11[%c0_169, %c8_170] : memref<18x18xf32, #tpu.memory_space<vmem>>, vector<16x1xf32>
    %434 = vector.shape_cast %19 : vector<32xf32> to vector<1x32xf32>
    %435 = vector.broadcast %433 : vector<16x1xf32> to vector<16x32xf32>
    %436 = vector.broadcast %434 : vector<1x32xf32> to vector<16x32xf32>
    %437 = arith.mulf %435, %436 : vector<16x32xf32>
    %438 = arith.addf %432, %437 : vector<16x32xf32>
    %c1_171 = arith.constant 1 : index
    %c8_172 = arith.constant 8 : index
    %439 = vector.load %arg11[%c1_171, %c8_172] : memref<18x18xf32, #tpu.memory_space<vmem>>, vector<16x1xf32>
    %440 = vector.shape_cast %21 : vector<32xf32> to vector<1x32xf32>
    %441 = vector.broadcast %439 : vector<16x1xf32> to vector<16x32xf32>
    %442 = vector.broadcast %440 : vector<1x32xf32> to vector<16x32xf32>
    %443 = arith.mulf %441, %442 : vector<16x32xf32>
    %444 = arith.addf %438, %443 : vector<16x32xf32>
    %c2_173 = arith.constant 2 : index
    %c8_174 = arith.constant 8 : index
    %445 = vector.load %arg11[%c2_173, %c8_174] : memref<18x18xf32, #tpu.memory_space<vmem>>, vector<16x1xf32>
    %446 = vector.shape_cast %23 : vector<32xf32> to vector<1x32xf32>
    %447 = vector.broadcast %445 : vector<16x1xf32> to vector<16x32xf32>
    %448 = vector.broadcast %446 : vector<1x32xf32> to vector<16x32xf32>
    %449 = arith.mulf %447, %448 : vector<16x32xf32>
    %450 = arith.addf %444, %449 : vector<16x32xf32>
    %451 = vector.broadcast %5 : vector<1x32xf32> to vector<16x32xf32>
    %452 = arith.addf %450, %451 : vector<16x32xf32>
    %cst_175 = arith.constant 0.000000e+00 : f32
    %453 = vector.broadcast %cst_175 : f32 to vector<16x32xf32>
    %454 = arith.maximumf %452, %453 : vector<16x32xf32>
    %c6_176 = arith.constant 6 : index
    %c0_177 = arith.constant 0 : index
    %c0_178 = arith.constant 0 : index
    %455 = vector.load %arg12[%c6_176, %c0_177, %c0_178] : memref<16x16x32xf32, #tpu.memory_space<vmem>>, vector<1x16x32xf32>
    %456 = vector.shape_cast %455 : vector<1x16x32xf32> to vector<16x32xf32>
    %457 = vector.shape_cast %454 : vector<16x32xf32> to vector<1x16x32xf32>
    tpu.vector_store %arg12[%c6_176, %c0_177, %c0_178], %457 {strides = array<i32>} : memref<16x16x32xf32, #tpu.memory_space<vmem>>, vector<1x16x32xf32>,
    %cst_179 = arith.constant 0.000000e+00 : f32
    %458 = vector.broadcast %cst_179 : f32 to vector<16x32xf32>
    %c0_180 = arith.constant 0 : index
    %c7_181 = arith.constant 7 : index
    %459 = vector.load %arg11[%c0_180, %c7_181] : memref<18x18xf32, #tpu.memory_space<vmem>>, vector<16x1xf32>
    %460 = vector.shape_cast %7 : vector<32xf32> to vector<1x32xf32>
    %461 = vector.broadcast %459 : vector<16x1xf32> to vector<16x32xf32>
    %462 = vector.broadcast %460 : vector<1x32xf32> to vector<16x32xf32>
    %463 = arith.mulf %461, %462 : vector<16x32xf32>
    %464 = arith.addf %458, %463 : vector<16x32xf32>
    %c1_182 = arith.constant 1 : index
    %c7_183 = arith.constant 7 : index
    %465 = vector.load %arg11[%c1_182, %c7_183] : memref<18x18xf32, #tpu.memory_space<vmem>>, vector<16x1xf32>
    %466 = vector.shape_cast %9 : vector<32xf32> to vector<1x32xf32>
    %467 = vector.broadcast %465 : vector<16x1xf32> to vector<16x32xf32>
    %468 = vector.broadcast %466 : vector<1x32xf32> to vector<16x32xf32>
    %469 = arith.mulf %467, %468 : vector<16x32xf32>
    %470 = arith.addf %464, %469 : vector<16x32xf32>
    %c2_184 = arith.constant 2 : index
    %c7_185 = arith.constant 7 : index
    %471 = vector.load %arg11[%c2_184, %c7_185] : memref<18x18xf32, #tpu.memory_space<vmem>>, vector<16x1xf32>
    %472 = vector.shape_cast %11 : vector<32xf32> to vector<1x32xf32>
    %473 = vector.broadcast %471 : vector<16x1xf32> to vector<16x32xf32>
    %474 = vector.broadcast %472 : vector<1x32xf32> to vector<16x32xf32>
    %475 = arith.mulf %473, %474 : vector<16x32xf32>
    %476 = arith.addf %470, %475 : vector<16x32xf32>
    %c0_186 = arith.constant 0 : index
    %c8_187 = arith.constant 8 : index
    %477 = vector.load %arg11[%c0_186, %c8_187] : memref<18x18xf32, #tpu.memory_space<vmem>>, vector<16x1xf32>
    %478 = vector.shape_cast %13 : vector<32xf32> to vector<1x32xf32>
    %479 = vector.broadcast %477 : vector<16x1xf32> to vector<16x32xf32>
    %480 = vector.broadcast %478 : vector<1x32xf32> to vector<16x32xf32>
    %481 = arith.mulf %479, %480 : vector<16x32xf32>
    %482 = arith.addf %476, %481 : vector<16x32xf32>
    %c1_188 = arith.constant 1 : index
    %c8_189 = arith.constant 8 : index
    %483 = vector.load %arg11[%c1_188, %c8_189] : memref<18x18xf32, #tpu.memory_space<vmem>>, vector<16x1xf32>
    %484 = vector.shape_cast %15 : vector<32xf32> to vector<1x32xf32>
    %485 = vector.broadcast %483 : vector<16x1xf32> to vector<16x32xf32>
    %486 = vector.broadcast %484 : vector<1x32xf32> to vector<16x32xf32>
    %487 = arith.mulf %485, %486 : vector<16x32xf32>
    %488 = arith.addf %482, %487 : vector<16x32xf32>
    %c2_190 = arith.constant 2 : index
    %c8_191 = arith.constant 8 : index
    %489 = vector.load %arg11[%c2_190, %c8_191] : memref<18x18xf32, #tpu.memory_space<vmem>>, vector<16x1xf32>
    %490 = vector.shape_cast %17 : vector<32xf32> to vector<1x32xf32>
    %491 = vector.broadcast %489 : vector<16x1xf32> to vector<16x32xf32>
    %492 = vector.broadcast %490 : vector<1x32xf32> to vector<16x32xf32>
    %493 = arith.mulf %491, %492 : vector<16x32xf32>
    %494 = arith.addf %488, %493 : vector<16x32xf32>
    %c0_192 = arith.constant 0 : index
    %c9 = arith.constant 9 : index
    %495 = vector.load %arg11[%c0_192, %c9] : memref<18x18xf32, #tpu.memory_space<vmem>>, vector<16x1xf32>
    %496 = vector.shape_cast %19 : vector<32xf32> to vector<1x32xf32>
    %497 = vector.broadcast %495 : vector<16x1xf32> to vector<16x32xf32>
    %498 = vector.broadcast %496 : vector<1x32xf32> to vector<16x32xf32>
    %499 = arith.mulf %497, %498 : vector<16x32xf32>
    %500 = arith.addf %494, %499 : vector<16x32xf32>
    %c1_193 = arith.constant 1 : index
    %c9_194 = arith.constant 9 : index
    %501 = vector.load %arg11[%c1_193, %c9_194] : memref<18x18xf32, #tpu.memory_space<vmem>>, vector<16x1xf32>
    %502 = vector.shape_cast %21 : vector<32xf32> to vector<1x32xf32>
    %503 = vector.broadcast %501 : vector<16x1xf32> to vector<16x32xf32>
    %504 = vector.broadcast %502 : vector<1x32xf32> to vector<16x32xf32>
    %505 = arith.mulf %503, %504 : vector<16x32xf32>
    %506 = arith.addf %500, %505 : vector<16x32xf32>
    %c2_195 = arith.constant 2 : index
    %c9_196 = arith.constant 9 : index
    %507 = vector.load %arg11[%c2_195, %c9_196] : memref<18x18xf32, #tpu.memory_space<vmem>>, vector<16x1xf32>
    %508 = vector.shape_cast %23 : vector<32xf32> to vector<1x32xf32>
    %509 = vector.broadcast %507 : vector<16x1xf32> to vector<16x32xf32>
    %510 = vector.broadcast %508 : vector<1x32xf32> to vector<16x32xf32>
    %511 = arith.mulf %509, %510 : vector<16x32xf32>
    %512 = arith.addf %506, %511 : vector<16x32xf32>
    %513 = vector.broadcast %5 : vector<1x32xf32> to vector<16x32xf32>
    %514 = arith.addf %512, %513 : vector<16x32xf32>
    %cst_197 = arith.constant 0.000000e+00 : f32
    %515 = vector.broadcast %cst_197 : f32 to vector<16x32xf32>
    %516 = arith.maximumf %514, %515 : vector<16x32xf32>
    %c7_198 = arith.constant 7 : index
    %c0_199 = arith.constant 0 : index
    %c0_200 = arith.constant 0 : index
    %517 = vector.load %arg12[%c7_198, %c0_199, %c0_200] : memref<16x16x32xf32, #tpu.memory_space<vmem>>, vector<1x16x32xf32>
    %518 = vector.shape_cast %517 : vector<1x16x32xf32> to vector<16x32xf32>
    %519 = vector.shape_cast %516 : vector<16x32xf32> to vector<1x16x32xf32>
    tpu.vector_store %arg12[%c7_198, %c0_199, %c0_200], %519 {strides = array<i32>} : memref<16x16x32xf32, #tpu.memory_space<vmem>>, vector<1x16x32xf32>,
    %cst_201 = arith.constant 0.000000e+00 : f32
    %520 = vector.broadcast %cst_201 : f32 to vector<16x32xf32>
    %c0_202 = arith.constant 0 : index
    %c8_203 = arith.constant 8 : index
    %521 = vector.load %arg11[%c0_202, %c8_203] : memref<18x18xf32, #tpu.memory_space<vmem>>, vector<16x1xf32>
    %522 = vector.shape_cast %7 : vector<32xf32> to vector<1x32xf32>
    %523 = vector.broadcast %521 : vector<16x1xf32> to vector<16x32xf32>
    %524 = vector.broadcast %522 : vector<1x32xf32> to vector<16x32xf32>
    %525 = arith.mulf %523, %524 : vector<16x32xf32>
    %526 = arith.addf %520, %525 : vector<16x32xf32>
    %c1_204 = arith.constant 1 : index
    %c8_205 = arith.constant 8 : index
    %527 = vector.load %arg11[%c1_204, %c8_205] : memref<18x18xf32, #tpu.memory_space<vmem>>, vector<16x1xf32>
    %528 = vector.shape_cast %9 : vector<32xf32> to vector<1x32xf32>
    %529 = vector.broadcast %527 : vector<16x1xf32> to vector<16x32xf32>
    %530 = vector.broadcast %528 : vector<1x32xf32> to vector<16x32xf32>
    %531 = arith.mulf %529, %530 : vector<16x32xf32>
    %532 = arith.addf %526, %531 : vector<16x32xf32>
    %c2_206 = arith.constant 2 : index
    %c8_207 = arith.constant 8 : index
    %533 = vector.load %arg11[%c2_206, %c8_207] : memref<18x18xf32, #tpu.memory_space<vmem>>, vector<16x1xf32>
    %534 = vector.shape_cast %11 : vector<32xf32> to vector<1x32xf32>
    %535 = vector.broadcast %533 : vector<16x1xf32> to vector<16x32xf32>
    %536 = vector.broadcast %534 : vector<1x32xf32> to vector<16x32xf32>
    %537 = arith.mulf %535, %536 : vector<16x32xf32>
    %538 = arith.addf %532, %537 : vector<16x32xf32>
    %c0_208 = arith.constant 0 : index
    %c9_209 = arith.constant 9 : index
    %539 = vector.load %arg11[%c0_208, %c9_209] : memref<18x18xf32, #tpu.memory_space<vmem>>, vector<16x1xf32>
    %540 = vector.shape_cast %13 : vector<32xf32> to vector<1x32xf32>
    %541 = vector.broadcast %539 : vector<16x1xf32> to vector<16x32xf32>
    %542 = vector.broadcast %540 : vector<1x32xf32> to vector<16x32xf32>
    %543 = arith.mulf %541, %542 : vector<16x32xf32>
    %544 = arith.addf %538, %543 : vector<16x32xf32>
    %c1_210 = arith.constant 1 : index
    %c9_211 = arith.constant 9 : index
    %545 = vector.load %arg11[%c1_210, %c9_211] : memref<18x18xf32, #tpu.memory_space<vmem>>, vector<16x1xf32>
    %546 = vector.shape_cast %15 : vector<32xf32> to vector<1x32xf32>
    %547 = vector.broadcast %545 : vector<16x1xf32> to vector<16x32xf32>
    %548 = vector.broadcast %546 : vector<1x32xf32> to vector<16x32xf32>
    %549 = arith.mulf %547, %548 : vector<16x32xf32>
    %550 = arith.addf %544, %549 : vector<16x32xf32>
    %c2_212 = arith.constant 2 : index
    %c9_213 = arith.constant 9 : index
    %551 = vector.load %arg11[%c2_212, %c9_213] : memref<18x18xf32, #tpu.memory_space<vmem>>, vector<16x1xf32>
    %552 = vector.shape_cast %17 : vector<32xf32> to vector<1x32xf32>
    %553 = vector.broadcast %551 : vector<16x1xf32> to vector<16x32xf32>
    %554 = vector.broadcast %552 : vector<1x32xf32> to vector<16x32xf32>
    %555 = arith.mulf %553, %554 : vector<16x32xf32>
    %556 = arith.addf %550, %555 : vector<16x32xf32>
    %c0_214 = arith.constant 0 : index
    %c10 = arith.constant 10 : index
    %557 = vector.load %arg11[%c0_214, %c10] : memref<18x18xf32, #tpu.memory_space<vmem>>, vector<16x1xf32>
    %558 = vector.shape_cast %19 : vector<32xf32> to vector<1x32xf32>
    %559 = vector.broadcast %557 : vector<16x1xf32> to vector<16x32xf32>
    %560 = vector.broadcast %558 : vector<1x32xf32> to vector<16x32xf32>
    %561 = arith.mulf %559, %560 : vector<16x32xf32>
    %562 = arith.addf %556, %561 : vector<16x32xf32>
    %c1_215 = arith.constant 1 : index
    %c10_216 = arith.constant 10 : index
    %563 = vector.load %arg11[%c1_215, %c10_216] : memref<18x18xf32, #tpu.memory_space<vmem>>, vector<16x1xf32>
    %564 = vector.shape_cast %21 : vector<32xf32> to vector<1x32xf32>
    %565 = vector.broadcast %563 : vector<16x1xf32> to vector<16x32xf32>
    %566 = vector.broadcast %564 : vector<1x32xf32> to vector<16x32xf32>
    %567 = arith.mulf %565, %566 : vector<16x32xf32>
    %568 = arith.addf %562, %567 : vector<16x32xf32>
    %c2_217 = arith.constant 2 : index
    %c10_218 = arith.constant 10 : index
    %569 = vector.load %arg11[%c2_217, %c10_218] : memref<18x18xf32, #tpu.memory_space<vmem>>, vector<16x1xf32>
    %570 = vector.shape_cast %23 : vector<32xf32> to vector<1x32xf32>
    %571 = vector.broadcast %569 : vector<16x1xf32> to vector<16x32xf32>
    %572 = vector.broadcast %570 : vector<1x32xf32> to vector<16x32xf32>
    %573 = arith.mulf %571, %572 : vector<16x32xf32>
    %574 = arith.addf %568, %573 : vector<16x32xf32>
    %575 = vector.broadcast %5 : vector<1x32xf32> to vector<16x32xf32>
    %576 = arith.addf %574, %575 : vector<16x32xf32>
    %cst_219 = arith.constant 0.000000e+00 : f32
    %577 = vector.broadcast %cst_219 : f32 to vector<16x32xf32>
    %578 = arith.maximumf %576, %577 : vector<16x32xf32>
    %c8_220 = arith.constant 8 : index
    %c0_221 = arith.constant 0 : index
    %c0_222 = arith.constant 0 : index
    %579 = vector.load %arg12[%c8_220, %c0_221, %c0_222] : memref<16x16x32xf32, #tpu.memory_space<vmem>>, vector<1x16x32xf32>
    %580 = vector.shape_cast %579 : vector<1x16x32xf32> to vector<16x32xf32>
    %581 = vector.shape_cast %578 : vector<16x32xf32> to vector<1x16x32xf32>
    tpu.vector_store %arg12[%c8_220, %c0_221, %c0_222], %581 {strides = array<i32>} : memref<16x16x32xf32, #tpu.memory_space<vmem>>, vector<1x16x32xf32>,
    %cst_223 = arith.constant 0.000000e+00 : f32
    %582 = vector.broadcast %cst_223 : f32 to vector<16x32xf32>
    %c0_224 = arith.constant 0 : index
    %c9_225 = arith.constant 9 : index
    %583 = vector.load %arg11[%c0_224, %c9_225] : memref<18x18xf32, #tpu.memory_space<vmem>>, vector<16x1xf32>
    %584 = vector.shape_cast %7 : vector<32xf32> to vector<1x32xf32>
    %585 = vector.broadcast %583 : vector<16x1xf32> to vector<16x32xf32>
    %586 = vector.broadcast %584 : vector<1x32xf32> to vector<16x32xf32>
    %587 = arith.mulf %585, %586 : vector<16x32xf32>
    %588 = arith.addf %582, %587 : vector<16x32xf32>
    %c1_226 = arith.constant 1 : index
    %c9_227 = arith.constant 9 : index
    %589 = vector.load %arg11[%c1_226, %c9_227] : memref<18x18xf32, #tpu.memory_space<vmem>>, vector<16x1xf32>
    %590 = vector.shape_cast %9 : vector<32xf32> to vector<1x32xf32>
    %591 = vector.broadcast %589 : vector<16x1xf32> to vector<16x32xf32>
    %592 = vector.broadcast %590 : vector<1x32xf32> to vector<16x32xf32>
    %593 = arith.mulf %591, %592 : vector<16x32xf32>
    %594 = arith.addf %588, %593 : vector<16x32xf32>
    %c2_228 = arith.constant 2 : index
    %c9_229 = arith.constant 9 : index
    %595 = vector.load %arg11[%c2_228, %c9_229] : memref<18x18xf32, #tpu.memory_space<vmem>>, vector<16x1xf32>
    %596 = vector.shape_cast %11 : vector<32xf32> to vector<1x32xf32>
    %597 = vector.broadcast %595 : vector<16x1xf32> to vector<16x32xf32>
    %598 = vector.broadcast %596 : vector<1x32xf32> to vector<16x32xf32>
    %599 = arith.mulf %597, %598 : vector<16x32xf32>
    %600 = arith.addf %594, %599 : vector<16x32xf32>
    %c0_230 = arith.constant 0 : index
    %c10_231 = arith.constant 10 : index
    %601 = vector.load %arg11[%c0_230, %c10_231] : memref<18x18xf32, #tpu.memory_space<vmem>>, vector<16x1xf32>
    %602 = vector.shape_cast %13 : vector<32xf32> to vector<1x32xf32>
    %603 = vector.broadcast %601 : vector<16x1xf32> to vector<16x32xf32>
    %604 = vector.broadcast %602 : vector<1x32xf32> to vector<16x32xf32>
    %605 = arith.mulf %603, %604 : vector<16x32xf32>
    %606 = arith.addf %600, %605 : vector<16x32xf32>
    %c1_232 = arith.constant 1 : index
    %c10_233 = arith.constant 10 : index
    %607 = vector.load %arg11[%c1_232, %c10_233] : memref<18x18xf32, #tpu.memory_space<vmem>>, vector<16x1xf32>
    %608 = vector.shape_cast %15 : vector<32xf32> to vector<1x32xf32>
    %609 = vector.broadcast %607 : vector<16x1xf32> to vector<16x32xf32>
    %610 = vector.broadcast %608 : vector<1x32xf32> to vector<16x32xf32>
    %611 = arith.mulf %609, %610 : vector<16x32xf32>
    %612 = arith.addf %606, %611 : vector<16x32xf32>
    %c2_234 = arith.constant 2 : index
    %c10_235 = arith.constant 10 : index
    %613 = vector.load %arg11[%c2_234, %c10_235] : memref<18x18xf32, #tpu.memory_space<vmem>>, vector<16x1xf32>
    %614 = vector.shape_cast %17 : vector<32xf32> to vector<1x32xf32>
    %615 = vector.broadcast %613 : vector<16x1xf32> to vector<16x32xf32>
    %616 = vector.broadcast %614 : vector<1x32xf32> to vector<16x32xf32>
    %617 = arith.mulf %615, %616 : vector<16x32xf32>
    %618 = arith.addf %612, %617 : vector<16x32xf32>
    %c0_236 = arith.constant 0 : index
    %c11 = arith.constant 11 : index
    %619 = vector.load %arg11[%c0_236, %c11] : memref<18x18xf32, #tpu.memory_space<vmem>>, vector<16x1xf32>
    %620 = vector.shape_cast %19 : vector<32xf32> to vector<1x32xf32>
    %621 = vector.broadcast %619 : vector<16x1xf32> to vector<16x32xf32>
    %622 = vector.broadcast %620 : vector<1x32xf32> to vector<16x32xf32>
    %623 = arith.mulf %621, %622 : vector<16x32xf32>
    %624 = arith.addf %618, %623 : vector<16x32xf32>
    %c1_237 = arith.constant 1 : index
    %c11_238 = arith.constant 11 : index
    %625 = vector.load %arg11[%c1_237, %c11_238] : memref<18x18xf32, #tpu.memory_space<vmem>>, vector<16x1xf32>
    %626 = vector.shape_cast %21 : vector<32xf32> to vector<1x32xf32>
    %627 = vector.broadcast %625 : vector<16x1xf32> to vector<16x32xf32>
    %628 = vector.broadcast %626 : vector<1x32xf32> to vector<16x32xf32>
    %629 = arith.mulf %627, %628 : vector<16x32xf32>
    %630 = arith.addf %624, %629 : vector<16x32xf32>
    %c2_239 = arith.constant 2 : index
    %c11_240 = arith.constant 11 : index
    %631 = vector.load %arg11[%c2_239, %c11_240] : memref<18x18xf32, #tpu.memory_space<vmem>>, vector<16x1xf32>
    %632 = vector.shape_cast %23 : vector<32xf32> to vector<1x32xf32>
    %633 = vector.broadcast %631 : vector<16x1xf32> to vector<16x32xf32>
    %634 = vector.broadcast %632 : vector<1x32xf32> to vector<16x32xf32>
    %635 = arith.mulf %633, %634 : vector<16x32xf32>
    %636 = arith.addf %630, %635 : vector<16x32xf32>
    %637 = vector.broadcast %5 : vector<1x32xf32> to vector<16x32xf32>
    %638 = arith.addf %636, %637 : vector<16x32xf32>
    %cst_241 = arith.constant 0.000000e+00 : f32
    %639 = vector.broadcast %cst_241 : f32 to vector<16x32xf32>
    %640 = arith.maximumf %638, %639 : vector<16x32xf32>
    %c9_242 = arith.constant 9 : index
    %c0_243 = arith.constant 0 : index
    %c0_244 = arith.constant 0 : index
    %641 = vector.load %arg12[%c9_242, %c0_243, %c0_244] : memref<16x16x32xf32, #tpu.memory_space<vmem>>, vector<1x16x32xf32>
    %642 = vector.shape_cast %641 : vector<1x16x32xf32> to vector<16x32xf32>
    %643 = vector.shape_cast %640 : vector<16x32xf32> to vector<1x16x32xf32>
    tpu.vector_store %arg12[%c9_242, %c0_243, %c0_244], %643 {strides = array<i32>} : memref<16x16x32xf32, #tpu.memory_space<vmem>>, vector<1x16x32xf32>,
    %cst_245 = arith.constant 0.000000e+00 : f32
    %644 = vector.broadcast %cst_245 : f32 to vector<16x32xf32>
    %c0_246 = arith.constant 0 : index
    %c10_247 = arith.constant 10 : index
    %645 = vector.load %arg11[%c0_246, %c10_247] : memref<18x18xf32, #tpu.memory_space<vmem>>, vector<16x1xf32>
    %646 = vector.shape_cast %7 : vector<32xf32> to vector<1x32xf32>
    %647 = vector.broadcast %645 : vector<16x1xf32> to vector<16x32xf32>
    %648 = vector.broadcast %646 : vector<1x32xf32> to vector<16x32xf32>
    %649 = arith.mulf %647, %648 : vector<16x32xf32>
    %650 = arith.addf %644, %649 : vector<16x32xf32>
    %c1_248 = arith.constant 1 : index
    %c10_249 = arith.constant 10 : index
    %651 = vector.load %arg11[%c1_248, %c10_249] : memref<18x18xf32, #tpu.memory_space<vmem>>, vector<16x1xf32>
    %652 = vector.shape_cast %9 : vector<32xf32> to vector<1x32xf32>
    %653 = vector.broadcast %651 : vector<16x1xf32> to vector<16x32xf32>
    %654 = vector.broadcast %652 : vector<1x32xf32> to vector<16x32xf32>
    %655 = arith.mulf %653, %654 : vector<16x32xf32>
    %656 = arith.addf %650, %655 : vector<16x32xf32>
    %c2_250 = arith.constant 2 : index
    %c10_251 = arith.constant 10 : index
    %657 = vector.load %arg11[%c2_250, %c10_251] : memref<18x18xf32, #tpu.memory_space<vmem>>, vector<16x1xf32>
    %658 = vector.shape_cast %11 : vector<32xf32> to vector<1x32xf32>
    %659 = vector.broadcast %657 : vector<16x1xf32> to vector<16x32xf32>
    %660 = vector.broadcast %658 : vector<1x32xf32> to vector<16x32xf32>
    %661 = arith.mulf %659, %660 : vector<16x32xf32>
    %662 = arith.addf %656, %661 : vector<16x32xf32>
    %c0_252 = arith.constant 0 : index
    %c11_253 = arith.constant 11 : index
    %663 = vector.load %arg11[%c0_252, %c11_253] : memref<18x18xf32, #tpu.memory_space<vmem>>, vector<16x1xf32>
    %664 = vector.shape_cast %13 : vector<32xf32> to vector<1x32xf32>
    %665 = vector.broadcast %663 : vector<16x1xf32> to vector<16x32xf32>
    %666 = vector.broadcast %664 : vector<1x32xf32> to vector<16x32xf32>
    %667 = arith.mulf %665, %666 : vector<16x32xf32>
    %668 = arith.addf %662, %667 : vector<16x32xf32>
    %c1_254 = arith.constant 1 : index
    %c11_255 = arith.constant 11 : index
    %669 = vector.load %arg11[%c1_254, %c11_255] : memref<18x18xf32, #tpu.memory_space<vmem>>, vector<16x1xf32>
    %670 = vector.shape_cast %15 : vector<32xf32> to vector<1x32xf32>
    %671 = vector.broadcast %669 : vector<16x1xf32> to vector<16x32xf32>
    %672 = vector.broadcast %670 : vector<1x32xf32> to vector<16x32xf32>
    %673 = arith.mulf %671, %672 : vector<16x32xf32>
    %674 = arith.addf %668, %673 : vector<16x32xf32>
    %c2_256 = arith.constant 2 : index
    %c11_257 = arith.constant 11 : index
    %675 = vector.load %arg11[%c2_256, %c11_257] : memref<18x18xf32, #tpu.memory_space<vmem>>, vector<16x1xf32>
    %676 = vector.shape_cast %17 : vector<32xf32> to vector<1x32xf32>
    %677 = vector.broadcast %675 : vector<16x1xf32> to vector<16x32xf32>
    %678 = vector.broadcast %676 : vector<1x32xf32> to vector<16x32xf32>
    %679 = arith.mulf %677, %678 : vector<16x32xf32>
    %680 = arith.addf %674, %679 : vector<16x32xf32>
    %c0_258 = arith.constant 0 : index
    %c12 = arith.constant 12 : index
    %681 = vector.load %arg11[%c0_258, %c12] : memref<18x18xf32, #tpu.memory_space<vmem>>, vector<16x1xf32>
    %682 = vector.shape_cast %19 : vector<32xf32> to vector<1x32xf32>
    %683 = vector.broadcast %681 : vector<16x1xf32> to vector<16x32xf32>
    %684 = vector.broadcast %682 : vector<1x32xf32> to vector<16x32xf32>
    %685 = arith.mulf %683, %684 : vector<16x32xf32>
    %686 = arith.addf %680, %685 : vector<16x32xf32>
    %c1_259 = arith.constant 1 : index
    %c12_260 = arith.constant 12 : index
    %687 = vector.load %arg11[%c1_259, %c12_260] : memref<18x18xf32, #tpu.memory_space<vmem>>, vector<16x1xf32>
    %688 = vector.shape_cast %21 : vector<32xf32> to vector<1x32xf32>
    %689 = vector.broadcast %687 : vector<16x1xf32> to vector<16x32xf32>
    %690 = vector.broadcast %688 : vector<1x32xf32> to vector<16x32xf32>
    %691 = arith.mulf %689, %690 : vector<16x32xf32>
    %692 = arith.addf %686, %691 : vector<16x32xf32>
    %c2_261 = arith.constant 2 : index
    %c12_262 = arith.constant 12 : index
    %693 = vector.load %arg11[%c2_261, %c12_262] : memref<18x18xf32, #tpu.memory_space<vmem>>, vector<16x1xf32>
    %694 = vector.shape_cast %23 : vector<32xf32> to vector<1x32xf32>
    %695 = vector.broadcast %693 : vector<16x1xf32> to vector<16x32xf32>
    %696 = vector.broadcast %694 : vector<1x32xf32> to vector<16x32xf32>
    %697 = arith.mulf %695, %696 : vector<16x32xf32>
    %698 = arith.addf %692, %697 : vector<16x32xf32>
    %699 = vector.broadcast %5 : vector<1x32xf32> to vector<16x32xf32>
    %700 = arith.addf %698, %699 : vector<16x32xf32>
    %cst_263 = arith.constant 0.000000e+00 : f32
    %701 = vector.broadcast %cst_263 : f32 to vector<16x32xf32>
    %702 = arith.maximumf %700, %701 : vector<16x32xf32>
    %c10_264 = arith.constant 10 : index
    %c0_265 = arith.constant 0 : index
    %c0_266 = arith.constant 0 : index
    %703 = vector.load %arg12[%c10_264, %c0_265, %c0_266] : memref<16x16x32xf32, #tpu.memory_space<vmem>>, vector<1x16x32xf32>
    %704 = vector.shape_cast %703 : vector<1x16x32xf32> to vector<16x32xf32>
    %705 = vector.shape_cast %702 : vector<16x32xf32> to vector<1x16x32xf32>
    tpu.vector_store %arg12[%c10_264, %c0_265, %c0_266], %705 {strides = array<i32>} : memref<16x16x32xf32, #tpu.memory_space<vmem>>, vector<1x16x32xf32>,
    %cst_267 = arith.constant 0.000000e+00 : f32
    %706 = vector.broadcast %cst_267 : f32 to vector<16x32xf32>
    %c0_268 = arith.constant 0 : index
    %c11_269 = arith.constant 11 : index
    %707 = vector.load %arg11[%c0_268, %c11_269] : memref<18x18xf32, #tpu.memory_space<vmem>>, vector<16x1xf32>
    %708 = vector.shape_cast %7 : vector<32xf32> to vector<1x32xf32>
    %709 = vector.broadcast %707 : vector<16x1xf32> to vector<16x32xf32>
    %710 = vector.broadcast %708 : vector<1x32xf32> to vector<16x32xf32>
    %711 = arith.mulf %709, %710 : vector<16x32xf32>
    %712 = arith.addf %706, %711 : vector<16x32xf32>
    %c1_270 = arith.constant 1 : index
    %c11_271 = arith.constant 11 : index
    %713 = vector.load %arg11[%c1_270, %c11_271] : memref<18x18xf32, #tpu.memory_space<vmem>>, vector<16x1xf32>
    %714 = vector.shape_cast %9 : vector<32xf32> to vector<1x32xf32>
    %715 = vector.broadcast %713 : vector<16x1xf32> to vector<16x32xf32>
    %716 = vector.broadcast %714 : vector<1x32xf32> to vector<16x32xf32>
    %717 = arith.mulf %715, %716 : vector<16x32xf32>
    %718 = arith.addf %712, %717 : vector<16x32xf32>
    %c2_272 = arith.constant 2 : index
    %c11_273 = arith.constant 11 : index
    %719 = vector.load %arg11[%c2_272, %c11_273] : memref<18x18xf32, #tpu.memory_space<vmem>>, vector<16x1xf32>
    %720 = vector.shape_cast %11 : vector<32xf32> to vector<1x32xf32>
    %721 = vector.broadcast %719 : vector<16x1xf32> to vector<16x32xf32>
    %722 = vector.broadcast %720 : vector<1x32xf32> to vector<16x32xf32>
    %723 = arith.mulf %721, %722 : vector<16x32xf32>
    %724 = arith.addf %718, %723 : vector<16x32xf32>
    %c0_274 = arith.constant 0 : index
    %c12_275 = arith.constant 12 : index
    %725 = vector.load %arg11[%c0_274, %c12_275] : memref<18x18xf32, #tpu.memory_space<vmem>>, vector<16x1xf32>
    %726 = vector.shape_cast %13 : vector<32xf32> to vector<1x32xf32>
    %727 = vector.broadcast %725 : vector<16x1xf32> to vector<16x32xf32>
    %728 = vector.broadcast %726 : vector<1x32xf32> to vector<16x32xf32>
    %729 = arith.mulf %727, %728 : vector<16x32xf32>
    %730 = arith.addf %724, %729 : vector<16x32xf32>
    %c1_276 = arith.constant 1 : index
    %c12_277 = arith.constant 12 : index
    %731 = vector.load %arg11[%c1_276, %c12_277] : memref<18x18xf32, #tpu.memory_space<vmem>>, vector<16x1xf32>
    %732 = vector.shape_cast %15 : vector<32xf32> to vector<1x32xf32>
    %733 = vector.broadcast %731 : vector<16x1xf32> to vector<16x32xf32>
    %734 = vector.broadcast %732 : vector<1x32xf32> to vector<16x32xf32>
    %735 = arith.mulf %733, %734 : vector<16x32xf32>
    %736 = arith.addf %730, %735 : vector<16x32xf32>
    %c2_278 = arith.constant 2 : index
    %c12_279 = arith.constant 12 : index
    %737 = vector.load %arg11[%c2_278, %c12_279] : memref<18x18xf32, #tpu.memory_space<vmem>>, vector<16x1xf32>
    %738 = vector.shape_cast %17 : vector<32xf32> to vector<1x32xf32>
    %739 = vector.broadcast %737 : vector<16x1xf32> to vector<16x32xf32>
    %740 = vector.broadcast %738 : vector<1x32xf32> to vector<16x32xf32>
    %741 = arith.mulf %739, %740 : vector<16x32xf32>
    %742 = arith.addf %736, %741 : vector<16x32xf32>
    %c0_280 = arith.constant 0 : index
    %c13 = arith.constant 13 : index
    %743 = vector.load %arg11[%c0_280, %c13] : memref<18x18xf32, #tpu.memory_space<vmem>>, vector<16x1xf32>
    %744 = vector.shape_cast %19 : vector<32xf32> to vector<1x32xf32>
    %745 = vector.broadcast %743 : vector<16x1xf32> to vector<16x32xf32>
    %746 = vector.broadcast %744 : vector<1x32xf32> to vector<16x32xf32>
    %747 = arith.mulf %745, %746 : vector<16x32xf32>
    %748 = arith.addf %742, %747 : vector<16x32xf32>
    %c1_281 = arith.constant 1 : index
    %c13_282 = arith.constant 13 : index
    %749 = vector.load %arg11[%c1_281, %c13_282] : memref<18x18xf32, #tpu.memory_space<vmem>>, vector<16x1xf32>
    %750 = vector.shape_cast %21 : vector<32xf32> to vector<1x32xf32>
    %751 = vector.broadcast %749 : vector<16x1xf32> to vector<16x32xf32>
    %752 = vector.broadcast %750 : vector<1x32xf32> to vector<16x32xf32>
    %753 = arith.mulf %751, %752 : vector<16x32xf32>
    %754 = arith.addf %748, %753 : vector<16x32xf32>
    %c2_283 = arith.constant 2 : index
    %c13_284 = arith.constant 13 : index
    %755 = vector.load %arg11[%c2_283, %c13_284] : memref<18x18xf32, #tpu.memory_space<vmem>>, vector<16x1xf32>
    %756 = vector.shape_cast %23 : vector<32xf32> to vector<1x32xf32>
    %757 = vector.broadcast %755 : vector<16x1xf32> to vector<16x32xf32>
    %758 = vector.broadcast %756 : vector<1x32xf32> to vector<16x32xf32>
    %759 = arith.mulf %757, %758 : vector<16x32xf32>
    %760 = arith.addf %754, %759 : vector<16x32xf32>
    %761 = vector.broadcast %5 : vector<1x32xf32> to vector<16x32xf32>
    %762 = arith.addf %760, %761 : vector<16x32xf32>
    %cst_285 = arith.constant 0.000000e+00 : f32
    %763 = vector.broadcast %cst_285 : f32 to vector<16x32xf32>
    %764 = arith.maximumf %762, %763 : vector<16x32xf32>
    %c11_286 = arith.constant 11 : index
    %c0_287 = arith.constant 0 : index
    %c0_288 = arith.constant 0 : index
    %765 = vector.load %arg12[%c11_286, %c0_287, %c0_288] : memref<16x16x32xf32, #tpu.memory_space<vmem>>, vector<1x16x32xf32>
    %766 = vector.shape_cast %765 : vector<1x16x32xf32> to vector<16x32xf32>
    %767 = vector.shape_cast %764 : vector<16x32xf32> to vector<1x16x32xf32>
    tpu.vector_store %arg12[%c11_286, %c0_287, %c0_288], %767 {strides = array<i32>} : memref<16x16x32xf32, #tpu.memory_space<vmem>>, vector<1x16x32xf32>,
    %cst_289 = arith.constant 0.000000e+00 : f32
    %768 = vector.broadcast %cst_289 : f32 to vector<16x32xf32>
    %c0_290 = arith.constant 0 : index
    %c12_291 = arith.constant 12 : index
    %769 = vector.load %arg11[%c0_290, %c12_291] : memref<18x18xf32, #tpu.memory_space<vmem>>, vector<16x1xf32>
    %770 = vector.shape_cast %7 : vector<32xf32> to vector<1x32xf32>
    %771 = vector.broadcast %769 : vector<16x1xf32> to vector<16x32xf32>
    %772 = vector.broadcast %770 : vector<1x32xf32> to vector<16x32xf32>
    %773 = arith.mulf %771, %772 : vector<16x32xf32>
    %774 = arith.addf %768, %773 : vector<16x32xf32>
    %c1_292 = arith.constant 1 : index
    %c12_293 = arith.constant 12 : index
    %775 = vector.load %arg11[%c1_292, %c12_293] : memref<18x18xf32, #tpu.memory_space<vmem>>, vector<16x1xf32>
    %776 = vector.shape_cast %9 : vector<32xf32> to vector<1x32xf32>
    %777 = vector.broadcast %775 : vector<16x1xf32> to vector<16x32xf32>
    %778 = vector.broadcast %776 : vector<1x32xf32> to vector<16x32xf32>
    %779 = arith.mulf %777, %778 : vector<16x32xf32>
    %780 = arith.addf %774, %779 : vector<16x32xf32>
    %c2_294 = arith.constant 2 : index
    %c12_295 = arith.constant 12 : index
    %781 = vector.load %arg11[%c2_294, %c12_295] : memref<18x18xf32, #tpu.memory_space<vmem>>, vector<16x1xf32>
    %782 = vector.shape_cast %11 : vector<32xf32> to vector<1x32xf32>
    %783 = vector.broadcast %781 : vector<16x1xf32> to vector<16x32xf32>
    %784 = vector.broadcast %782 : vector<1x32xf32> to vector<16x32xf32>
    %785 = arith.mulf %783, %784 : vector<16x32xf32>
    %786 = arith.addf %780, %785 : vector<16x32xf32>
    %c0_296 = arith.constant 0 : index
    %c13_297 = arith.constant 13 : index
    %787 = vector.load %arg11[%c0_296, %c13_297] : memref<18x18xf32, #tpu.memory_space<vmem>>, vector<16x1xf32>
    %788 = vector.shape_cast %13 : vector<32xf32> to vector<1x32xf32>
    %789 = vector.broadcast %787 : vector<16x1xf32> to vector<16x32xf32>
    %790 = vector.broadcast %788 : vector<1x32xf32> to vector<16x32xf32>
    %791 = arith.mulf %789, %790 : vector<16x32xf32>
    %792 = arith.addf %786, %791 : vector<16x32xf32>
    %c1_298 = arith.constant 1 : index
    %c13_299 = arith.constant 13 : index
    %793 = vector.load %arg11[%c1_298, %c13_299] : memref<18x18xf32, #tpu.memory_space<vmem>>, vector<16x1xf32>
    %794 = vector.shape_cast %15 : vector<32xf32> to vector<1x32xf32>
    %795 = vector.broadcast %793 : vector<16x1xf32> to vector<16x32xf32>
    %796 = vector.broadcast %794 : vector<1x32xf32> to vector<16x32xf32>
    %797 = arith.mulf %795, %796 : vector<16x32xf32>
    %798 = arith.addf %792, %797 : vector<16x32xf32>
    %c2_300 = arith.constant 2 : index
    %c13_301 = arith.constant 13 : index
    %799 = vector.load %arg11[%c2_300, %c13_301] : memref<18x18xf32, #tpu.memory_space<vmem>>, vector<16x1xf32>
    %800 = vector.shape_cast %17 : vector<32xf32> to vector<1x32xf32>
    %801 = vector.broadcast %799 : vector<16x1xf32> to vector<16x32xf32>
    %802 = vector.broadcast %800 : vector<1x32xf32> to vector<16x32xf32>
    %803 = arith.mulf %801, %802 : vector<16x32xf32>
    %804 = arith.addf %798, %803 : vector<16x32xf32>
    %c0_302 = arith.constant 0 : index
    %c14 = arith.constant 14 : index
    %805 = vector.load %arg11[%c0_302, %c14] : memref<18x18xf32, #tpu.memory_space<vmem>>, vector<16x1xf32>
    %806 = vector.shape_cast %19 : vector<32xf32> to vector<1x32xf32>
    %807 = vector.broadcast %805 : vector<16x1xf32> to vector<16x32xf32>
    %808 = vector.broadcast %806 : vector<1x32xf32> to vector<16x32xf32>
    %809 = arith.mulf %807, %808 : vector<16x32xf32>
    %810 = arith.addf %804, %809 : vector<16x32xf32>
    %c1_303 = arith.constant 1 : index
    %c14_304 = arith.constant 14 : index
    %811 = vector.load %arg11[%c1_303, %c14_304] : memref<18x18xf32, #tpu.memory_space<vmem>>, vector<16x1xf32>
    %812 = vector.shape_cast %21 : vector<32xf32> to vector<1x32xf32>
    %813 = vector.broadcast %811 : vector<16x1xf32> to vector<16x32xf32>
    %814 = vector.broadcast %812 : vector<1x32xf32> to vector<16x32xf32>
    %815 = arith.mulf %813, %814 : vector<16x32xf32>
    %816 = arith.addf %810, %815 : vector<16x32xf32>
    %c2_305 = arith.constant 2 : index
    %c14_306 = arith.constant 14 : index
    %817 = vector.load %arg11[%c2_305, %c14_306] : memref<18x18xf32, #tpu.memory_space<vmem>>, vector<16x1xf32>
    %818 = vector.shape_cast %23 : vector<32xf32> to vector<1x32xf32>
    %819 = vector.broadcast %817 : vector<16x1xf32> to vector<16x32xf32>
    %820 = vector.broadcast %818 : vector<1x32xf32> to vector<16x32xf32>
    %821 = arith.mulf %819, %820 : vector<16x32xf32>
    %822 = arith.addf %816, %821 : vector<16x32xf32>
    %823 = vector.broadcast %5 : vector<1x32xf32> to vector<16x32xf32>
    %824 = arith.addf %822, %823 : vector<16x32xf32>
    %cst_307 = arith.constant 0.000000e+00 : f32
    %825 = vector.broadcast %cst_307 : f32 to vector<16x32xf32>
    %826 = arith.maximumf %824, %825 : vector<16x32xf32>
    %c12_308 = arith.constant 12 : index
    %c0_309 = arith.constant 0 : index
    %c0_310 = arith.constant 0 : index
    %827 = vector.load %arg12[%c12_308, %c0_309, %c0_310] : memref<16x16x32xf32, #tpu.memory_space<vmem>>, vector<1x16x32xf32>
    %828 = vector.shape_cast %827 : vector<1x16x32xf32> to vector<16x32xf32>
    %829 = vector.shape_cast %826 : vector<16x32xf32> to vector<1x16x32xf32>
    tpu.vector_store %arg12[%c12_308, %c0_309, %c0_310], %829 {strides = array<i32>} : memref<16x16x32xf32, #tpu.memory_space<vmem>>, vector<1x16x32xf32>,
    %cst_311 = arith.constant 0.000000e+00 : f32
    %830 = vector.broadcast %cst_311 : f32 to vector<16x32xf32>
    %c0_312 = arith.constant 0 : index
    %c13_313 = arith.constant 13 : index
    %831 = vector.load %arg11[%c0_312, %c13_313] : memref<18x18xf32, #tpu.memory_space<vmem>>, vector<16x1xf32>
    %832 = vector.shape_cast %7 : vector<32xf32> to vector<1x32xf32>
    %833 = vector.broadcast %831 : vector<16x1xf32> to vector<16x32xf32>
    %834 = vector.broadcast %832 : vector<1x32xf32> to vector<16x32xf32>
    %835 = arith.mulf %833, %834 : vector<16x32xf32>
    %836 = arith.addf %830, %835 : vector<16x32xf32>
    %c1_314 = arith.constant 1 : index
    %c13_315 = arith.constant 13 : index
    %837 = vector.load %arg11[%c1_314, %c13_315] : memref<18x18xf32, #tpu.memory_space<vmem>>, vector<16x1xf32>
    %838 = vector.shape_cast %9 : vector<32xf32> to vector<1x32xf32>
    %839 = vector.broadcast %837 : vector<16x1xf32> to vector<16x32xf32>
    %840 = vector.broadcast %838 : vector<1x32xf32> to vector<16x32xf32>
    %841 = arith.mulf %839, %840 : vector<16x32xf32>
    %842 = arith.addf %836, %841 : vector<16x32xf32>
    %c2_316 = arith.constant 2 : index
    %c13_317 = arith.constant 13 : index
    %843 = vector.load %arg11[%c2_316, %c13_317] : memref<18x18xf32, #tpu.memory_space<vmem>>, vector<16x1xf32>
    %844 = vector.shape_cast %11 : vector<32xf32> to vector<1x32xf32>
    %845 = vector.broadcast %843 : vector<16x1xf32> to vector<16x32xf32>
    %846 = vector.broadcast %844 : vector<1x32xf32> to vector<16x32xf32>
    %847 = arith.mulf %845, %846 : vector<16x32xf32>
    %848 = arith.addf %842, %847 : vector<16x32xf32>
    %c0_318 = arith.constant 0 : index
    %c14_319 = arith.constant 14 : index
    %849 = vector.load %arg11[%c0_318, %c14_319] : memref<18x18xf32, #tpu.memory_space<vmem>>, vector<16x1xf32>
    %850 = vector.shape_cast %13 : vector<32xf32> to vector<1x32xf32>
    %851 = vector.broadcast %849 : vector<16x1xf32> to vector<16x32xf32>
    %852 = vector.broadcast %850 : vector<1x32xf32> to vector<16x32xf32>
    %853 = arith.mulf %851, %852 : vector<16x32xf32>
    %854 = arith.addf %848, %853 : vector<16x32xf32>
    %c1_320 = arith.constant 1 : index
    %c14_321 = arith.constant 14 : index
    %855 = vector.load %arg11[%c1_320, %c14_321] : memref<18x18xf32, #tpu.memory_space<vmem>>, vector<16x1xf32>
    %856 = vector.shape_cast %15 : vector<32xf32> to vector<1x32xf32>
    %857 = vector.broadcast %855 : vector<16x1xf32> to vector<16x32xf32>
    %858 = vector.broadcast %856 : vector<1x32xf32> to vector<16x32xf32>
    %859 = arith.mulf %857, %858 : vector<16x32xf32>
    %860 = arith.addf %854, %859 : vector<16x32xf32>
    %c2_322 = arith.constant 2 : index
    %c14_323 = arith.constant 14 : index
    %861 = vector.load %arg11[%c2_322, %c14_323] : memref<18x18xf32, #tpu.memory_space<vmem>>, vector<16x1xf32>
    %862 = vector.shape_cast %17 : vector<32xf32> to vector<1x32xf32>
    %863 = vector.broadcast %861 : vector<16x1xf32> to vector<16x32xf32>
    %864 = vector.broadcast %862 : vector<1x32xf32> to vector<16x32xf32>
    %865 = arith.mulf %863, %864 : vector<16x32xf32>
    %866 = arith.addf %860, %865 : vector<16x32xf32>
    %c0_324 = arith.constant 0 : index
    %c15 = arith.constant 15 : index
    %867 = vector.load %arg11[%c0_324, %c15] : memref<18x18xf32, #tpu.memory_space<vmem>>, vector<16x1xf32>
    %868 = vector.shape_cast %19 : vector<32xf32> to vector<1x32xf32>
    %869 = vector.broadcast %867 : vector<16x1xf32> to vector<16x32xf32>
    %870 = vector.broadcast %868 : vector<1x32xf32> to vector<16x32xf32>
    %871 = arith.mulf %869, %870 : vector<16x32xf32>
    %872 = arith.addf %866, %871 : vector<16x32xf32>
    %c1_325 = arith.constant 1 : index
    %c15_326 = arith.constant 15 : index
    %873 = vector.load %arg11[%c1_325, %c15_326] : memref<18x18xf32, #tpu.memory_space<vmem>>, vector<16x1xf32>
    %874 = vector.shape_cast %21 : vector<32xf32> to vector<1x32xf32>
    %875 = vector.broadcast %873 : vector<16x1xf32> to vector<16x32xf32>
    %876 = vector.broadcast %874 : vector<1x32xf32> to vector<16x32xf32>
    %877 = arith.mulf %875, %876 : vector<16x32xf32>
    %878 = arith.addf %872, %877 : vector<16x32xf32>
    %c2_327 = arith.constant 2 : index
    %c15_328 = arith.constant 15 : index
    %879 = vector.load %arg11[%c2_327, %c15_328] : memref<18x18xf32, #tpu.memory_space<vmem>>, vector<16x1xf32>
    %880 = vector.shape_cast %23 : vector<32xf32> to vector<1x32xf32>
    %881 = vector.broadcast %879 : vector<16x1xf32> to vector<16x32xf32>
    %882 = vector.broadcast %880 : vector<1x32xf32> to vector<16x32xf32>
    %883 = arith.mulf %881, %882 : vector<16x32xf32>
    %884 = arith.addf %878, %883 : vector<16x32xf32>
    %885 = vector.broadcast %5 : vector<1x32xf32> to vector<16x32xf32>
    %886 = arith.addf %884, %885 : vector<16x32xf32>
    %cst_329 = arith.constant 0.000000e+00 : f32
    %887 = vector.broadcast %cst_329 : f32 to vector<16x32xf32>
    %888 = arith.maximumf %886, %887 : vector<16x32xf32>
    %c13_330 = arith.constant 13 : index
    %c0_331 = arith.constant 0 : index
    %c0_332 = arith.constant 0 : index
    %889 = vector.load %arg12[%c13_330, %c0_331, %c0_332] : memref<16x16x32xf32, #tpu.memory_space<vmem>>, vector<1x16x32xf32>
    %890 = vector.shape_cast %889 : vector<1x16x32xf32> to vector<16x32xf32>
    %891 = vector.shape_cast %888 : vector<16x32xf32> to vector<1x16x32xf32>
    tpu.vector_store %arg12[%c13_330, %c0_331, %c0_332], %891 {strides = array<i32>} : memref<16x16x32xf32, #tpu.memory_space<vmem>>, vector<1x16x32xf32>,
    %cst_333 = arith.constant 0.000000e+00 : f32
    %892 = vector.broadcast %cst_333 : f32 to vector<16x32xf32>
    %c0_334 = arith.constant 0 : index
    %c14_335 = arith.constant 14 : index
    %893 = vector.load %arg11[%c0_334, %c14_335] : memref<18x18xf32, #tpu.memory_space<vmem>>, vector<16x1xf32>
    %894 = vector.shape_cast %7 : vector<32xf32> to vector<1x32xf32>
    %895 = vector.broadcast %893 : vector<16x1xf32> to vector<16x32xf32>
    %896 = vector.broadcast %894 : vector<1x32xf32> to vector<16x32xf32>
    %897 = arith.mulf %895, %896 : vector<16x32xf32>
    %898 = arith.addf %892, %897 : vector<16x32xf32>
    %c1_336 = arith.constant 1 : index
    %c14_337 = arith.constant 14 : index
    %899 = vector.load %arg11[%c1_336, %c14_337] : memref<18x18xf32, #tpu.memory_space<vmem>>, vector<16x1xf32>
    %900 = vector.shape_cast %9 : vector<32xf32> to vector<1x32xf32>
    %901 = vector.broadcast %899 : vector<16x1xf32> to vector<16x32xf32>
    %902 = vector.broadcast %900 : vector<1x32xf32> to vector<16x32xf32>
    %903 = arith.mulf %901, %902 : vector<16x32xf32>
    %904 = arith.addf %898, %903 : vector<16x32xf32>
    %c2_338 = arith.constant 2 : index
    %c14_339 = arith.constant 14 : index
    %905 = vector.load %arg11[%c2_338, %c14_339] : memref<18x18xf32, #tpu.memory_space<vmem>>, vector<16x1xf32>
    %906 = vector.shape_cast %11 : vector<32xf32> to vector<1x32xf32>
    %907 = vector.broadcast %905 : vector<16x1xf32> to vector<16x32xf32>
    %908 = vector.broadcast %906 : vector<1x32xf32> to vector<16x32xf32>
    %909 = arith.mulf %907, %908 : vector<16x32xf32>
    %910 = arith.addf %904, %909 : vector<16x32xf32>
    %c0_340 = arith.constant 0 : index
    %c15_341 = arith.constant 15 : index
    %911 = vector.load %arg11[%c0_340, %c15_341] : memref<18x18xf32, #tpu.memory_space<vmem>>, vector<16x1xf32>
    %912 = vector.shape_cast %13 : vector<32xf32> to vector<1x32xf32>
    %913 = vector.broadcast %911 : vector<16x1xf32> to vector<16x32xf32>
    %914 = vector.broadcast %912 : vector<1x32xf32> to vector<16x32xf32>
    %915 = arith.mulf %913, %914 : vector<16x32xf32>
    %916 = arith.addf %910, %915 : vector<16x32xf32>
    %c1_342 = arith.constant 1 : index
    %c15_343 = arith.constant 15 : index
    %917 = vector.load %arg11[%c1_342, %c15_343] : memref<18x18xf32, #tpu.memory_space<vmem>>, vector<16x1xf32>
    %918 = vector.shape_cast %15 : vector<32xf32> to vector<1x32xf32>
    %919 = vector.broadcast %917 : vector<16x1xf32> to vector<16x32xf32>
    %920 = vector.broadcast %918 : vector<1x32xf32> to vector<16x32xf32>
    %921 = arith.mulf %919, %920 : vector<16x32xf32>
    %922 = arith.addf %916, %921 : vector<16x32xf32>
    %c2_344 = arith.constant 2 : index
    %c15_345 = arith.constant 15 : index
    %923 = vector.load %arg11[%c2_344, %c15_345] : memref<18x18xf32, #tpu.memory_space<vmem>>, vector<16x1xf32>
    %924 = vector.shape_cast %17 : vector<32xf32> to vector<1x32xf32>
    %925 = vector.broadcast %923 : vector<16x1xf32> to vector<16x32xf32>
    %926 = vector.broadcast %924 : vector<1x32xf32> to vector<16x32xf32>
    %927 = arith.mulf %925, %926 : vector<16x32xf32>
    %928 = arith.addf %922, %927 : vector<16x32xf32>
    %c0_346 = arith.constant 0 : index
    %c16 = arith.constant 16 : index
    %929 = vector.load %arg11[%c0_346, %c16] : memref<18x18xf32, #tpu.memory_space<vmem>>, vector<16x1xf32>
    %930 = vector.shape_cast %19 : vector<32xf32> to vector<1x32xf32>
    %931 = vector.broadcast %929 : vector<16x1xf32> to vector<16x32xf32>
    %932 = vector.broadcast %930 : vector<1x32xf32> to vector<16x32xf32>
    %933 = arith.mulf %931, %932 : vector<16x32xf32>
    %934 = arith.addf %928, %933 : vector<16x32xf32>
    %c1_347 = arith.constant 1 : index
    %c16_348 = arith.constant 16 : index
    %935 = vector.load %arg11[%c1_347, %c16_348] : memref<18x18xf32, #tpu.memory_space<vmem>>, vector<16x1xf32>
    %936 = vector.shape_cast %21 : vector<32xf32> to vector<1x32xf32>
    %937 = vector.broadcast %935 : vector<16x1xf32> to vector<16x32xf32>
    %938 = vector.broadcast %936 : vector<1x32xf32> to vector<16x32xf32>
    %939 = arith.mulf %937, %938 : vector<16x32xf32>
    %940 = arith.addf %934, %939 : vector<16x32xf32>
    %c2_349 = arith.constant 2 : index
    %c16_350 = arith.constant 16 : index
    %941 = vector.load %arg11[%c2_349, %c16_350] : memref<18x18xf32, #tpu.memory_space<vmem>>, vector<16x1xf32>
    %942 = vector.shape_cast %23 : vector<32xf32> to vector<1x32xf32>
    %943 = vector.broadcast %941 : vector<16x1xf32> to vector<16x32xf32>
    %944 = vector.broadcast %942 : vector<1x32xf32> to vector<16x32xf32>
    %945 = arith.mulf %943, %944 : vector<16x32xf32>
    %946 = arith.addf %940, %945 : vector<16x32xf32>
    %947 = vector.broadcast %5 : vector<1x32xf32> to vector<16x32xf32>
    %948 = arith.addf %946, %947 : vector<16x32xf32>
    %cst_351 = arith.constant 0.000000e+00 : f32
    %949 = vector.broadcast %cst_351 : f32 to vector<16x32xf32>
    %950 = arith.maximumf %948, %949 : vector<16x32xf32>
    %c14_352 = arith.constant 14 : index
    %c0_353 = arith.constant 0 : index
    %c0_354 = arith.constant 0 : index
    %951 = vector.load %arg12[%c14_352, %c0_353, %c0_354] : memref<16x16x32xf32, #tpu.memory_space<vmem>>, vector<1x16x32xf32>
    %952 = vector.shape_cast %951 : vector<1x16x32xf32> to vector<16x32xf32>
    %953 = vector.shape_cast %950 : vector<16x32xf32> to vector<1x16x32xf32>
    tpu.vector_store %arg12[%c14_352, %c0_353, %c0_354], %953 {strides = array<i32>} : memref<16x16x32xf32, #tpu.memory_space<vmem>>, vector<1x16x32xf32>,
    %cst_355 = arith.constant 0.000000e+00 : f32
    %954 = vector.broadcast %cst_355 : f32 to vector<16x32xf32>
    %c0_356 = arith.constant 0 : index
    %c15_357 = arith.constant 15 : index
    %955 = vector.load %arg11[%c0_356, %c15_357] : memref<18x18xf32, #tpu.memory_space<vmem>>, vector<16x1xf32>
    %956 = vector.shape_cast %7 : vector<32xf32> to vector<1x32xf32>
    %957 = vector.broadcast %955 : vector<16x1xf32> to vector<16x32xf32>
    %958 = vector.broadcast %956 : vector<1x32xf32> to vector<16x32xf32>
    %959 = arith.mulf %957, %958 : vector<16x32xf32>
    %960 = arith.addf %954, %959 : vector<16x32xf32>
    %c1_358 = arith.constant 1 : index
    %c15_359 = arith.constant 15 : index
    %961 = vector.load %arg11[%c1_358, %c15_359] : memref<18x18xf32, #tpu.memory_space<vmem>>, vector<16x1xf32>
    %962 = vector.shape_cast %9 : vector<32xf32> to vector<1x32xf32>
    %963 = vector.broadcast %961 : vector<16x1xf32> to vector<16x32xf32>
    %964 = vector.broadcast %962 : vector<1x32xf32> to vector<16x32xf32>
    %965 = arith.mulf %963, %964 : vector<16x32xf32>
    %966 = arith.addf %960, %965 : vector<16x32xf32>
    %c2_360 = arith.constant 2 : index
    %c15_361 = arith.constant 15 : index
    %967 = vector.load %arg11[%c2_360, %c15_361] : memref<18x18xf32, #tpu.memory_space<vmem>>, vector<16x1xf32>
    %968 = vector.shape_cast %11 : vector<32xf32> to vector<1x32xf32>
    %969 = vector.broadcast %967 : vector<16x1xf32> to vector<16x32xf32>
    %970 = vector.broadcast %968 : vector<1x32xf32> to vector<16x32xf32>
    %971 = arith.mulf %969, %970 : vector<16x32xf32>
    %972 = arith.addf %966, %971 : vector<16x32xf32>
    %c0_362 = arith.constant 0 : index
    %c16_363 = arith.constant 16 : index
    %973 = vector.load %arg11[%c0_362, %c16_363] : memref<18x18xf32, #tpu.memory_space<vmem>>, vector<16x1xf32>
    %974 = vector.shape_cast %13 : vector<32xf32> to vector<1x32xf32>
    %975 = vector.broadcast %973 : vector<16x1xf32> to vector<16x32xf32>
    %976 = vector.broadcast %974 : vector<1x32xf32> to vector<16x32xf32>
    %977 = arith.mulf %975, %976 : vector<16x32xf32>
    %978 = arith.addf %972, %977 : vector<16x32xf32>
    %c1_364 = arith.constant 1 : index
    %c16_365 = arith.constant 16 : index
    %979 = vector.load %arg11[%c1_364, %c16_365] : memref<18x18xf32, #tpu.memory_space<vmem>>, vector<16x1xf32>
    %980 = vector.shape_cast %15 : vector<32xf32> to vector<1x32xf32>
    %981 = vector.broadcast %979 : vector<16x1xf32> to vector<16x32xf32>
    %982 = vector.broadcast %980 : vector<1x32xf32> to vector<16x32xf32>
    %983 = arith.mulf %981, %982 : vector<16x32xf32>
    %984 = arith.addf %978, %983 : vector<16x32xf32>
    %c2_366 = arith.constant 2 : index
    %c16_367 = arith.constant 16 : index
    %985 = vector.load %arg11[%c2_366, %c16_367] : memref<18x18xf32, #tpu.memory_space<vmem>>, vector<16x1xf32>
    %986 = vector.shape_cast %17 : vector<32xf32> to vector<1x32xf32>
    %987 = vector.broadcast %985 : vector<16x1xf32> to vector<16x32xf32>
    %988 = vector.broadcast %986 : vector<1x32xf32> to vector<16x32xf32>
    %989 = arith.mulf %987, %988 : vector<16x32xf32>
    %990 = arith.addf %984, %989 : vector<16x32xf32>
    %c0_368 = arith.constant 0 : index
    %c17 = arith.constant 17 : index
    %991 = vector.load %arg11[%c0_368, %c17] : memref<18x18xf32, #tpu.memory_space<vmem>>, vector<16x1xf32>
    %992 = vector.shape_cast %19 : vector<32xf32> to vector<1x32xf32>
    %993 = vector.broadcast %991 : vector<16x1xf32> to vector<16x32xf32>
    %994 = vector.broadcast %992 : vector<1x32xf32> to vector<16x32xf32>
    %995 = arith.mulf %993, %994 : vector<16x32xf32>
    %996 = arith.addf %990, %995 : vector<16x32xf32>
    %c1_369 = arith.constant 1 : index
    %c17_370 = arith.constant 17 : index
    %997 = vector.load %arg11[%c1_369, %c17_370] : memref<18x18xf32, #tpu.memory_space<vmem>>, vector<16x1xf32>
    %998 = vector.shape_cast %21 : vector<32xf32> to vector<1x32xf32>
    %999 = vector.broadcast %997 : vector<16x1xf32> to vector<16x32xf32>
    %1000 = vector.broadcast %998 : vector<1x32xf32> to vector<16x32xf32>
    %1001 = arith.mulf %999, %1000 : vector<16x32xf32>
    %1002 = arith.addf %996, %1001 : vector<16x32xf32>
    %c2_371 = arith.constant 2 : index
    %c17_372 = arith.constant 17 : index
    %1003 = vector.load %arg11[%c2_371, %c17_372] : memref<18x18xf32, #tpu.memory_space<vmem>>, vector<16x1xf32>
    %1004 = vector.shape_cast %23 : vector<32xf32> to vector<1x32xf32>
    %1005 = vector.broadcast %1003 : vector<16x1xf32> to vector<16x32xf32>
    %1006 = vector.broadcast %1004 : vector<1x32xf32> to vector<16x32xf32>
    %1007 = arith.mulf %1005, %1006 : vector<16x32xf32>
    %1008 = arith.addf %1002, %1007 : vector<16x32xf32>
    %1009 = vector.broadcast %5 : vector<1x32xf32> to vector<16x32xf32>
    %1010 = arith.addf %1008, %1009 : vector<16x32xf32>
    %cst_373 = arith.constant 0.000000e+00 : f32
    %1011 = vector.broadcast %cst_373 : f32 to vector<16x32xf32>
    %1012 = arith.maximumf %1010, %1011 : vector<16x32xf32>
    %c15_374 = arith.constant 15 : index
    %c0_375 = arith.constant 0 : index
    %c0_376 = arith.constant 0 : index
    %1013 = vector.load %arg12[%c15_374, %c0_375, %c0_376] : memref<16x16x32xf32, #tpu.memory_space<vmem>>, vector<1x16x32xf32>
    %1014 = vector.shape_cast %1013 : vector<1x16x32xf32> to vector<16x32xf32>
    %1015 = vector.shape_cast %1012 : vector<16x32xf32> to vector<1x16x32xf32>
    tpu.vector_store %arg12[%c15_374, %c0_375, %c0_376], %1015 {strides = array<i32>} : memref<16x16x32xf32, #tpu.memory_space<vmem>>, vector<1x16x32xf32>,
    %c0_377 = arith.constant 0 : index
    %c0_378 = arith.constant 0 : index
    %c0_379 = arith.constant 0 : index
    %1016 = tpu.strided_load %arg12[%c0_377, %c0_378, %c0_379] {strides = array<i32: 2, 2, 1>} : memref<16x16x32xf32, #tpu.memory_space<vmem>>, vector<8x8x32xf32>
    %c0_380 = arith.constant 0 : index
    %c1_381 = arith.constant 1 : index
    %c0_382 = arith.constant 0 : index
    %1017 = tpu.strided_load %arg12[%c0_380, %c1_381, %c0_382] {strides = array<i32: 2, 2, 1>} : memref<16x16x32xf32, #tpu.memory_space<vmem>>, vector<8x8x32xf32>
    %c1_383 = arith.constant 1 : index
    %c0_384 = arith.constant 0 : index
    %c0_385 = arith.constant 0 : index
    %1018 = tpu.strided_load %arg12[%c1_383, %c0_384, %c0_385] {strides = array<i32: 2, 2, 1>} : memref<16x16x32xf32, #tpu.memory_space<vmem>>, vector<8x8x32xf32>
    %c1_386 = arith.constant 1 : index
    %c1_387 = arith.constant 1 : index
    %c0_388 = arith.constant 0 : index
    %1019 = tpu.strided_load %arg12[%c1_386, %c1_387, %c0_388] {strides = array<i32: 2, 2, 1>} : memref<16x16x32xf32, #tpu.memory_space<vmem>>, vector<8x8x32xf32>
    %1020 = arith.maximumf %1016, %1017 : vector<8x8x32xf32>
    %1021 = arith.maximumf %1018, %1019 : vector<8x8x32xf32>
    %1022 = arith.maximumf %1020, %1021 : vector<8x8x32xf32>
    %cst_389 = arith.constant 0.000000e+00 : f32
    %1023 = vector.broadcast %cst_389 : f32 to vector<1x10x32xf32>
    %cst_390 = arith.constant 0.000000e+00 : f32
    %1024 = vector.broadcast %cst_390 : f32 to vector<10x1x32xf32>
    %c0_391 = arith.constant 0 : index
    %c0_392 = arith.constant 0 : index
    %c0_393 = arith.constant 0 : index
    %1025 = vector.load %arg13[%c0_391, %c0_392, %c0_393] : memref<10x10x32xf32, #tpu.memory_space<vmem>>, vector<1x10x32xf32>
    tpu.vector_store %arg13[%c0_391, %c0_392, %c0_393], %1023 {strides = array<i32>} : memref<10x10x32xf32, #tpu.memory_space<vmem>>, vector<1x10x32xf32>,
    %c9_394 = arith.constant 9 : index
    %c0_395 = arith.constant 0 : index
    %c0_396 = arith.constant 0 : index
    %1026 = vector.load %arg13[%c9_394, %c0_395, %c0_396] : memref<10x10x32xf32, #tpu.memory_space<vmem>>, vector<1x10x32xf32>
    tpu.vector_store %arg13[%c9_394, %c0_395, %c0_396], %1023 {strides = array<i32>} : memref<10x10x32xf32, #tpu.memory_space<vmem>>, vector<1x10x32xf32>,
    %c0_397 = arith.constant 0 : index
    %c0_398 = arith.constant 0 : index
    %c0_399 = arith.constant 0 : index
    %1027 = vector.load %arg13[%c0_397, %c0_398, %c0_399] : memref<10x10x32xf32, #tpu.memory_space<vmem>>, vector<10x1x32xf32>
    tpu.vector_store %arg13[%c0_397, %c0_398, %c0_399], %1024 {strides = array<i32>} : memref<10x10x32xf32, #tpu.memory_space<vmem>>, vector<10x1x32xf32>,
    %c0_400 = arith.constant 0 : index
    %c9_401 = arith.constant 9 : index
    %c0_402 = arith.constant 0 : index
    %1028 = vector.load %arg13[%c0_400, %c9_401, %c0_402] : memref<10x10x32xf32, #tpu.memory_space<vmem>>, vector<10x1x32xf32>
    tpu.vector_store %arg13[%c0_400, %c9_401, %c0_402], %1024 {strides = array<i32>} : memref<10x10x32xf32, #tpu.memory_space<vmem>>, vector<10x1x32xf32>,
    %c1_403 = arith.constant 1 : index
    %c1_404 = arith.constant 1 : index
    %c0_405 = arith.constant 0 : index
    %1029 = vector.load %arg13[%c1_403, %c1_404, %c0_405] : memref<10x10x32xf32, #tpu.memory_space<vmem>>, vector<8x8x32xf32>
    tpu.vector_store %arg13[%c1_403, %c1_404, %c0_405], %1022 {strides = array<i32>} : memref<10x10x32xf32, #tpu.memory_space<vmem>>, vector<8x8x32xf32>,
    %cst_406 = arith.constant 0.000000e+00 : f32
    %1030 = vector.broadcast %cst_406 : f32 to vector<64x64xf32>
    %c0_407 = arith.constant 0 : index
    %c0_408 = arith.constant 0 : index
    %c0_409 = arith.constant 0 : index
    %1031 = vector.load %arg13[%c0_407, %c0_408, %c0_409] : memref<10x10x32xf32, #tpu.memory_space<vmem>>, vector<8x8x32xf32>
    %1032 = vector.shape_cast %1031 : vector<8x8x32xf32> to vector<64x32xf32>
    %c0_410 = arith.constant 0 : index
    %c0_411 = arith.constant 0 : index
    %c0_412 = arith.constant 0 : index
    %1033 = vector.load %arg4[%c0_410, %c0_411, %c0_412] : memref<9x32x64xf32, #tpu.memory_space<vmem>>, vector<1x32x64xf32>
    %1034 = vector.shape_cast %1033 : vector<1x32x64xf32> to vector<32x64xf32>
    %cst_413 = arith.constant dense<0.000000e+00> : vector<64x64xf32>
    %1035 = tpu.matmul %1032, %1034, %cst_413 {dimension_numbers = #tpu.dot_dimension_numbers<[1], [0], [0], [1], [0, 0, 1, 1], [], []>} : vector<64x32xf32>, vector<32x64xf32>, vector<64x64xf32> -> vector<64x64xf32>
    %1036 = arith.addf %1030, %1035 : vector<64x64xf32>
    %c0_414 = arith.constant 0 : index
    %c1_415 = arith.constant 1 : index
    %c0_416 = arith.constant 0 : index
    %1037 = vector.load %arg13[%c0_414, %c1_415, %c0_416] : memref<10x10x32xf32, #tpu.memory_space<vmem>>, vector<8x8x32xf32>
    %1038 = vector.shape_cast %1037 : vector<8x8x32xf32> to vector<64x32xf32>
    %c1_417 = arith.constant 1 : index
    %c0_418 = arith.constant 0 : index
    %c0_419 = arith.constant 0 : index
    %1039 = vector.load %arg4[%c1_417, %c0_418, %c0_419] : memref<9x32x64xf32, #tpu.memory_space<vmem>>, vector<1x32x64xf32>
    %1040 = vector.shape_cast %1039 : vector<1x32x64xf32> to vector<32x64xf32>
    %cst_420 = arith.constant dense<0.000000e+00> : vector<64x64xf32>
    %1041 = tpu.matmul %1038, %1040, %cst_420 {dimension_numbers = #tpu.dot_dimension_numbers<[1], [0], [0], [1], [0, 0, 1, 1], [], []>} : vector<64x32xf32>, vector<32x64xf32>, vector<64x64xf32> -> vector<64x64xf32>
    %1042 = arith.addf %1036, %1041 : vector<64x64xf32>
    %c0_421 = arith.constant 0 : index
    %c2_422 = arith.constant 2 : index
    %c0_423 = arith.constant 0 : index
    %1043 = vector.load %arg13[%c0_421, %c2_422, %c0_423] : memref<10x10x32xf32, #tpu.memory_space<vmem>>, vector<8x8x32xf32>
    %1044 = vector.shape_cast %1043 : vector<8x8x32xf32> to vector<64x32xf32>
    %c2_424 = arith.constant 2 : index
    %c0_425 = arith.constant 0 : index
    %c0_426 = arith.constant 0 : index
    %1045 = vector.load %arg4[%c2_424, %c0_425, %c0_426] : memref<9x32x64xf32, #tpu.memory_space<vmem>>, vector<1x32x64xf32>
    %1046 = vector.shape_cast %1045 : vector<1x32x64xf32> to vector<32x64xf32>
    %cst_427 = arith.constant dense<0.000000e+00> : vector<64x64xf32>
    %1047 = tpu.matmul %1044, %1046, %cst_427 {dimension_numbers = #tpu.dot_dimension_numbers<[1], [0], [0], [1], [0, 0, 1, 1], [], []>} : vector<64x32xf32>, vector<32x64xf32>, vector<64x64xf32> -> vector<64x64xf32>
    %1048 = arith.addf %1042, %1047 : vector<64x64xf32>
    %c1_428 = arith.constant 1 : index
    %c0_429 = arith.constant 0 : index
    %c0_430 = arith.constant 0 : index
    %1049 = vector.load %arg13[%c1_428, %c0_429, %c0_430] : memref<10x10x32xf32, #tpu.memory_space<vmem>>, vector<8x8x32xf32>
    %1050 = vector.shape_cast %1049 : vector<8x8x32xf32> to vector<64x32xf32>
    %c3_431 = arith.constant 3 : index
    %c0_432 = arith.constant 0 : index
    %c0_433 = arith.constant 0 : index
    %1051 = vector.load %arg4[%c3_431, %c0_432, %c0_433] : memref<9x32x64xf32, #tpu.memory_space<vmem>>, vector<1x32x64xf32>
    %1052 = vector.shape_cast %1051 : vector<1x32x64xf32> to vector<32x64xf32>
    %cst_434 = arith.constant dense<0.000000e+00> : vector<64x64xf32>
    %1053 = tpu.matmul %1050, %1052, %cst_434 {dimension_numbers = #tpu.dot_dimension_numbers<[1], [0], [0], [1], [0, 0, 1, 1], [], []>} : vector<64x32xf32>, vector<32x64xf32>, vector<64x64xf32> -> vector<64x64xf32>
    %1054 = arith.addf %1048, %1053 : vector<64x64xf32>
    %c1_435 = arith.constant 1 : index
    %c1_436 = arith.constant 1 : index
    %c0_437 = arith.constant 0 : index
    %1055 = vector.load %arg13[%c1_435, %c1_436, %c0_437] : memref<10x10x32xf32, #tpu.memory_space<vmem>>, vector<8x8x32xf32>
    %1056 = vector.shape_cast %1055 : vector<8x8x32xf32> to vector<64x32xf32>
    %c4_438 = arith.constant 4 : index
    %c0_439 = arith.constant 0 : index
    %c0_440 = arith.constant 0 : index
    %1057 = vector.load %arg4[%c4_438, %c0_439, %c0_440] : memref<9x32x64xf32, #tpu.memory_space<vmem>>, vector<1x32x64xf32>
    %1058 = vector.shape_cast %1057 : vector<1x32x64xf32> to vector<32x64xf32>
    %cst_441 = arith.constant dense<0.000000e+00> : vector<64x64xf32>
    %1059 = tpu.matmul %1056, %1058, %cst_441 {dimension_numbers = #tpu.dot_dimension_numbers<[1], [0], [0], [1], [0, 0, 1, 1], [], []>} : vector<64x32xf32>, vector<32x64xf32>, vector<64x64xf32> -> vector<64x64xf32>
    %1060 = arith.addf %1054, %1059 : vector<64x64xf32>
    %c1_442 = arith.constant 1 : index
    %c2_443 = arith.constant 2 : index
    %c0_444 = arith.constant 0 : index
    %1061 = vector.load %arg13[%c1_442, %c2_443, %c0_444] : memref<10x10x32xf32, #tpu.memory_space<vmem>>, vector<8x8x32xf32>
    %1062 = vector.shape_cast %1061 : vector<8x8x32xf32> to vector<64x32xf32>
    %c5_445 = arith.constant 5 : index
    %c0_446 = arith.constant 0 : index
    %c0_447 = arith.constant 0 : index
    %1063 = vector.load %arg4[%c5_445, %c0_446, %c0_447] : memref<9x32x64xf32, #tpu.memory_space<vmem>>, vector<1x32x64xf32>
    %1064 = vector.shape_cast %1063 : vector<1x32x64xf32> to vector<32x64xf32>
    %cst_448 = arith.constant dense<0.000000e+00> : vector<64x64xf32>
    %1065 = tpu.matmul %1062, %1064, %cst_448 {dimension_numbers = #tpu.dot_dimension_numbers<[1], [0], [0], [1], [0, 0, 1, 1], [], []>} : vector<64x32xf32>, vector<32x64xf32>, vector<64x64xf32> -> vector<64x64xf32>
    %1066 = arith.addf %1060, %1065 : vector<64x64xf32>
    %c2_449 = arith.constant 2 : index
    %c0_450 = arith.constant 0 : index
    %c0_451 = arith.constant 0 : index
    %1067 = vector.load %arg13[%c2_449, %c0_450, %c0_451] : memref<10x10x32xf32, #tpu.memory_space<vmem>>, vector<8x8x32xf32>
    %1068 = vector.shape_cast %1067 : vector<8x8x32xf32> to vector<64x32xf32>
    %c6_452 = arith.constant 6 : index
    %c0_453 = arith.constant 0 : index
    %c0_454 = arith.constant 0 : index
    %1069 = vector.load %arg4[%c6_452, %c0_453, %c0_454] : memref<9x32x64xf32, #tpu.memory_space<vmem>>, vector<1x32x64xf32>
    %1070 = vector.shape_cast %1069 : vector<1x32x64xf32> to vector<32x64xf32>
    %cst_455 = arith.constant dense<0.000000e+00> : vector<64x64xf32>
    %1071 = tpu.matmul %1068, %1070, %cst_455 {dimension_numbers = #tpu.dot_dimension_numbers<[1], [0], [0], [1], [0, 0, 1, 1], [], []>} : vector<64x32xf32>, vector<32x64xf32>, vector<64x64xf32> -> vector<64x64xf32>
    %1072 = arith.addf %1066, %1071 : vector<64x64xf32>
    %c2_456 = arith.constant 2 : index
    %c1_457 = arith.constant 1 : index
    %c0_458 = arith.constant 0 : index
    %1073 = vector.load %arg13[%c2_456, %c1_457, %c0_458] : memref<10x10x32xf32, #tpu.memory_space<vmem>>, vector<8x8x32xf32>
    %1074 = vector.shape_cast %1073 : vector<8x8x32xf32> to vector<64x32xf32>
    %c7_459 = arith.constant 7 : index
    %c0_460 = arith.constant 0 : index
    %c0_461 = arith.constant 0 : index
    %1075 = vector.load %arg4[%c7_459, %c0_460, %c0_461] : memref<9x32x64xf32, #tpu.memory_space<vmem>>, vector<1x32x64xf32>
    %1076 = vector.shape_cast %1075 : vector<1x32x64xf32> to vector<32x64xf32>
    %cst_462 = arith.constant dense<0.000000e+00> : vector<64x64xf32>
    %1077 = tpu.matmul %1074, %1076, %cst_462 {dimension_numbers = #tpu.dot_dimension_numbers<[1], [0], [0], [1], [0, 0, 1, 1], [], []>} : vector<64x32xf32>, vector<32x64xf32>, vector<64x64xf32> -> vector<64x64xf32>
    %1078 = arith.addf %1072, %1077 : vector<64x64xf32>
    %c2_463 = arith.constant 2 : index
    %c2_464 = arith.constant 2 : index
    %c0_465 = arith.constant 0 : index
    %1079 = vector.load %arg13[%c2_463, %c2_464, %c0_465] : memref<10x10x32xf32, #tpu.memory_space<vmem>>, vector<8x8x32xf32>
    %1080 = vector.shape_cast %1079 : vector<8x8x32xf32> to vector<64x32xf32>
    %c8_466 = arith.constant 8 : index
    %c0_467 = arith.constant 0 : index
    %c0_468 = arith.constant 0 : index
    %1081 = vector.load %arg4[%c8_466, %c0_467, %c0_468] : memref<9x32x64xf32, #tpu.memory_space<vmem>>, vector<1x32x64xf32>
    %1082 = vector.shape_cast %1081 : vector<1x32x64xf32> to vector<32x64xf32>
    %cst_469 = arith.constant dense<0.000000e+00> : vector<64x64xf32>
    %1083 = tpu.matmul %1080, %1082, %cst_469 {dimension_numbers = #tpu.dot_dimension_numbers<[1], [0], [0], [1], [0, 0, 1, 1], [], []>} : vector<64x32xf32>, vector<32x64xf32>, vector<64x64xf32> -> vector<64x64xf32>
    %1084 = arith.addf %1078, %1083 : vector<64x64xf32>
    %c0_470 = arith.constant 0 : index
    %c0_471 = arith.constant 0 : index
    %1085 = vector.load %arg5[%c0_470, %c0_471] : memref<1x64xf32, #tpu.memory_space<vmem>>, vector<1x64xf32>
    %1086 = vector.broadcast %1085 : vector<1x64xf32> to vector<64x64xf32>
    %1087 = arith.addf %1084, %1086 : vector<64x64xf32>
    %cst_472 = arith.constant 0.000000e+00 : f32
    %1088 = vector.broadcast %cst_472 : f32 to vector<64x64xf32>
    %1089 = arith.maximumf %1087, %1088 : vector<64x64xf32>
    %1090 = vector.shape_cast %1089 : vector<64x64xf32> to vector<8x8x64xf32>
    %cst_473 = arith.constant 0.000000e+00 : f32
    %1091 = vector.broadcast %cst_473 : f32 to vector<1x10x64xf32>
    %cst_474 = arith.constant 0.000000e+00 : f32
    %1092 = vector.broadcast %cst_474 : f32 to vector<10x1x64xf32>
    %c0_475 = arith.constant 0 : index
    %c0_476 = arith.constant 0 : index
    %c0_477 = arith.constant 0 : index
    %1093 = vector.load %arg14[%c0_475, %c0_476, %c0_477] : memref<10x10x64xf32, #tpu.memory_space<vmem>>, vector<1x10x64xf32>
    tpu.vector_store %arg14[%c0_475, %c0_476, %c0_477], %1091 {strides = array<i32>} : memref<10x10x64xf32, #tpu.memory_space<vmem>>, vector<1x10x64xf32>,
    %c9_478 = arith.constant 9 : index
    %c0_479 = arith.constant 0 : index
    %c0_480 = arith.constant 0 : index
    %1094 = vector.load %arg14[%c9_478, %c0_479, %c0_480] : memref<10x10x64xf32, #tpu.memory_space<vmem>>, vector<1x10x64xf32>
    tpu.vector_store %arg14[%c9_478, %c0_479, %c0_480], %1091 {strides = array<i32>} : memref<10x10x64xf32, #tpu.memory_space<vmem>>, vector<1x10x64xf32>,
    %c0_481 = arith.constant 0 : index
    %c0_482 = arith.constant 0 : index
    %c0_483 = arith.constant 0 : index
    %1095 = vector.load %arg14[%c0_481, %c0_482, %c0_483] : memref<10x10x64xf32, #tpu.memory_space<vmem>>, vector<10x1x64xf32>
    tpu.vector_store %arg14[%c0_481, %c0_482, %c0_483], %1092 {strides = array<i32>} : memref<10x10x64xf32, #tpu.memory_space<vmem>>, vector<10x1x64xf32>,
    %c0_484 = arith.constant 0 : index
    %c9_485 = arith.constant 9 : index
    %c0_486 = arith.constant 0 : index
    %1096 = vector.load %arg14[%c0_484, %c9_485, %c0_486] : memref<10x10x64xf32, #tpu.memory_space<vmem>>, vector<10x1x64xf32>
    tpu.vector_store %arg14[%c0_484, %c9_485, %c0_486], %1092 {strides = array<i32>} : memref<10x10x64xf32, #tpu.memory_space<vmem>>, vector<10x1x64xf32>,
    %c1_487 = arith.constant 1 : index
    %c1_488 = arith.constant 1 : index
    %c0_489 = arith.constant 0 : index
    %1097 = vector.load %arg14[%c1_487, %c1_488, %c0_489] : memref<10x10x64xf32, #tpu.memory_space<vmem>>, vector<8x8x64xf32>
    tpu.vector_store %arg14[%c1_487, %c1_488, %c0_489], %1090 {strides = array<i32>} : memref<10x10x64xf32, #tpu.memory_space<vmem>>, vector<8x8x64xf32>,
    %cst_490 = arith.constant 0.000000e+00 : f32
    %1098 = vector.broadcast %cst_490 : f32 to vector<64x32xf32>
    %c0_491 = arith.constant 0 : index
    %c0_492 = arith.constant 0 : index
    %c0_493 = arith.constant 0 : index
    %1099 = vector.load %arg14[%c0_491, %c0_492, %c0_493] : memref<10x10x64xf32, #tpu.memory_space<vmem>>, vector<8x8x64xf32>
    %1100 = vector.shape_cast %1099 : vector<8x8x64xf32> to vector<64x64xf32>
    %c0_494 = arith.constant 0 : index
    %c0_495 = arith.constant 0 : index
    %c0_496 = arith.constant 0 : index
    %1101 = vector.load %arg6[%c0_494, %c0_495, %c0_496] : memref<9x64x32xf32, #tpu.memory_space<vmem>>, vector<1x64x32xf32>
    %1102 = vector.shape_cast %1101 : vector<1x64x32xf32> to vector<64x32xf32>
    %cst_497 = arith.constant dense<0.000000e+00> : vector<64x32xf32>
    %1103 = tpu.matmul %1100, %1102, %cst_497 {dimension_numbers = #tpu.dot_dimension_numbers<[1], [0], [0], [1], [0, 0, 1, 1], [], []>} : vector<64x64xf32>, vector<64x32xf32>, vector<64x32xf32> -> vector<64x32xf32>
    %1104 = arith.addf %1098, %1103 : vector<64x32xf32>
    %c0_498 = arith.constant 0 : index
    %c1_499 = arith.constant 1 : index
    %c0_500 = arith.constant 0 : index
    %1105 = vector.load %arg14[%c0_498, %c1_499, %c0_500] : memref<10x10x64xf32, #tpu.memory_space<vmem>>, vector<8x8x64xf32>
    %1106 = vector.shape_cast %1105 : vector<8x8x64xf32> to vector<64x64xf32>
    %c1_501 = arith.constant 1 : index
    %c0_502 = arith.constant 0 : index
    %c0_503 = arith.constant 0 : index
    %1107 = vector.load %arg6[%c1_501, %c0_502, %c0_503] : memref<9x64x32xf32, #tpu.memory_space<vmem>>, vector<1x64x32xf32>
    %1108 = vector.shape_cast %1107 : vector<1x64x32xf32> to vector<64x32xf32>
    %cst_504 = arith.constant dense<0.000000e+00> : vector<64x32xf32>
    %1109 = tpu.matmul %1106, %1108, %cst_504 {dimension_numbers = #tpu.dot_dimension_numbers<[1], [0], [0], [1], [0, 0, 1, 1], [], []>} : vector<64x64xf32>, vector<64x32xf32>, vector<64x32xf32> -> vector<64x32xf32>
    %1110 = arith.addf %1104, %1109 : vector<64x32xf32>
    %c0_505 = arith.constant 0 : index
    %c2_506 = arith.constant 2 : index
    %c0_507 = arith.constant 0 : index
    %1111 = vector.load %arg14[%c0_505, %c2_506, %c0_507] : memref<10x10x64xf32, #tpu.memory_space<vmem>>, vector<8x8x64xf32>
    %1112 = vector.shape_cast %1111 : vector<8x8x64xf32> to vector<64x64xf32>
    %c2_508 = arith.constant 2 : index
    %c0_509 = arith.constant 0 : index
    %c0_510 = arith.constant 0 : index
    %1113 = vector.load %arg6[%c2_508, %c0_509, %c0_510] : memref<9x64x32xf32, #tpu.memory_space<vmem>>, vector<1x64x32xf32>
    %1114 = vector.shape_cast %1113 : vector<1x64x32xf32> to vector<64x32xf32>
    %cst_511 = arith.constant dense<0.000000e+00> : vector<64x32xf32>
    %1115 = tpu.matmul %1112, %1114, %cst_511 {dimension_numbers = #tpu.dot_dimension_numbers<[1], [0], [0], [1], [0, 0, 1, 1], [], []>} : vector<64x64xf32>, vector<64x32xf32>, vector<64x32xf32> -> vector<64x32xf32>
    %1116 = arith.addf %1110, %1115 : vector<64x32xf32>
    %c1_512 = arith.constant 1 : index
    %c0_513 = arith.constant 0 : index
    %c0_514 = arith.constant 0 : index
    %1117 = vector.load %arg14[%c1_512, %c0_513, %c0_514] : memref<10x10x64xf32, #tpu.memory_space<vmem>>, vector<8x8x64xf32>
    %1118 = vector.shape_cast %1117 : vector<8x8x64xf32> to vector<64x64xf32>
    %c3_515 = arith.constant 3 : index
    %c0_516 = arith.constant 0 : index
    %c0_517 = arith.constant 0 : index
    %1119 = vector.load %arg6[%c3_515, %c0_516, %c0_517] : memref<9x64x32xf32, #tpu.memory_space<vmem>>, vector<1x64x32xf32>
    %1120 = vector.shape_cast %1119 : vector<1x64x32xf32> to vector<64x32xf32>
    %cst_518 = arith.constant dense<0.000000e+00> : vector<64x32xf32>
    %1121 = tpu.matmul %1118, %1120, %cst_518 {dimension_numbers = #tpu.dot_dimension_numbers<[1], [0], [0], [1], [0, 0, 1, 1], [], []>} : vector<64x64xf32>, vector<64x32xf32>, vector<64x32xf32> -> vector<64x32xf32>
    %1122 = arith.addf %1116, %1121 : vector<64x32xf32>
    %c1_519 = arith.constant 1 : index
    %c1_520 = arith.constant 1 : index
    %c0_521 = arith.constant 0 : index
    %1123 = vector.load %arg14[%c1_519, %c1_520, %c0_521] : memref<10x10x64xf32, #tpu.memory_space<vmem>>, vector<8x8x64xf32>
    %1124 = vector.shape_cast %1123 : vector<8x8x64xf32> to vector<64x64xf32>
    %c4_522 = arith.constant 4 : index
    %c0_523 = arith.constant 0 : index
    %c0_524 = arith.constant 0 : index
    %1125 = vector.load %arg6[%c4_522, %c0_523, %c0_524] : memref<9x64x32xf32, #tpu.memory_space<vmem>>, vector<1x64x32xf32>
    %1126 = vector.shape_cast %1125 : vector<1x64x32xf32> to vector<64x32xf32>
    %cst_525 = arith.constant dense<0.000000e+00> : vector<64x32xf32>
    %1127 = tpu.matmul %1124, %1126, %cst_525 {dimension_numbers = #tpu.dot_dimension_numbers<[1], [0], [0], [1], [0, 0, 1, 1], [], []>} : vector<64x64xf32>, vector<64x32xf32>, vector<64x32xf32> -> vector<64x32xf32>
    %1128 = arith.addf %1122, %1127 : vector<64x32xf32>
    %c1_526 = arith.constant 1 : index
    %c2_527 = arith.constant 2 : index
    %c0_528 = arith.constant 0 : index
    %1129 = vector.load %arg14[%c1_526, %c2_527, %c0_528] : memref<10x10x64xf32, #tpu.memory_space<vmem>>, vector<8x8x64xf32>
    %1130 = vector.shape_cast %1129 : vector<8x8x64xf32> to vector<64x64xf32>
    %c5_529 = arith.constant 5 : index
    %c0_530 = arith.constant 0 : index
    %c0_531 = arith.constant 0 : index
    %1131 = vector.load %arg6[%c5_529, %c0_530, %c0_531] : memref<9x64x32xf32, #tpu.memory_space<vmem>>, vector<1x64x32xf32>
    %1132 = vector.shape_cast %1131 : vector<1x64x32xf32> to vector<64x32xf32>
    %cst_532 = arith.constant dense<0.000000e+00> : vector<64x32xf32>
    %1133 = tpu.matmul %1130, %1132, %cst_532 {dimension_numbers = #tpu.dot_dimension_numbers<[1], [0], [0], [1], [0, 0, 1, 1], [], []>} : vector<64x64xf32>, vector<64x32xf32>, vector<64x32xf32> -> vector<64x32xf32>
    %1134 = arith.addf %1128, %1133 : vector<64x32xf32>
    %c2_533 = arith.constant 2 : index
    %c0_534 = arith.constant 0 : index
    %c0_535 = arith.constant 0 : index
    %1135 = vector.load %arg14[%c2_533, %c0_534, %c0_535] : memref<10x10x64xf32, #tpu.memory_space<vmem>>, vector<8x8x64xf32>
    %1136 = vector.shape_cast %1135 : vector<8x8x64xf32> to vector<64x64xf32>
    %c6_536 = arith.constant 6 : index
    %c0_537 = arith.constant 0 : index
    %c0_538 = arith.constant 0 : index
    %1137 = vector.load %arg6[%c6_536, %c0_537, %c0_538] : memref<9x64x32xf32, #tpu.memory_space<vmem>>, vector<1x64x32xf32>
    %1138 = vector.shape_cast %1137 : vector<1x64x32xf32> to vector<64x32xf32>
    %cst_539 = arith.constant dense<0.000000e+00> : vector<64x32xf32>
    %1139 = tpu.matmul %1136, %1138, %cst_539 {dimension_numbers = #tpu.dot_dimension_numbers<[1], [0], [0], [1], [0, 0, 1, 1], [], []>} : vector<64x64xf32>, vector<64x32xf32>, vector<64x32xf32> -> vector<64x32xf32>
    %1140 = arith.addf %1134, %1139 : vector<64x32xf32>
    %c2_540 = arith.constant 2 : index
    %c1_541 = arith.constant 1 : index
    %c0_542 = arith.constant 0 : index
    %1141 = vector.load %arg14[%c2_540, %c1_541, %c0_542] : memref<10x10x64xf32, #tpu.memory_space<vmem>>, vector<8x8x64xf32>
    %1142 = vector.shape_cast %1141 : vector<8x8x64xf32> to vector<64x64xf32>
    %c7_543 = arith.constant 7 : index
    %c0_544 = arith.constant 0 : index
    %c0_545 = arith.constant 0 : index
    %1143 = vector.load %arg6[%c7_543, %c0_544, %c0_545] : memref<9x64x32xf32, #tpu.memory_space<vmem>>, vector<1x64x32xf32>
    %1144 = vector.shape_cast %1143 : vector<1x64x32xf32> to vector<64x32xf32>
    %cst_546 = arith.constant dense<0.000000e+00> : vector<64x32xf32>
    %1145 = tpu.matmul %1142, %1144, %cst_546 {dimension_numbers = #tpu.dot_dimension_numbers<[1], [0], [0], [1], [0, 0, 1, 1], [], []>} : vector<64x64xf32>, vector<64x32xf32>, vector<64x32xf32> -> vector<64x32xf32>
    %1146 = arith.addf %1140, %1145 : vector<64x32xf32>
    %c2_547 = arith.constant 2 : index
    %c2_548 = arith.constant 2 : index
    %c0_549 = arith.constant 0 : index
    %1147 = vector.load %arg14[%c2_547, %c2_548, %c0_549] : memref<10x10x64xf32, #tpu.memory_space<vmem>>, vector<8x8x64xf32>
    %1148 = vector.shape_cast %1147 : vector<8x8x64xf32> to vector<64x64xf32>
    %c8_550 = arith.constant 8 : index
    %c0_551 = arith.constant 0 : index
    %c0_552 = arith.constant 0 : index
    %1149 = vector.load %arg6[%c8_550, %c0_551, %c0_552] : memref<9x64x32xf32, #tpu.memory_space<vmem>>, vector<1x64x32xf32>
    %1150 = vector.shape_cast %1149 : vector<1x64x32xf32> to vector<64x32xf32>
    %cst_553 = arith.constant dense<0.000000e+00> : vector<64x32xf32>
    %1151 = tpu.matmul %1148, %1150, %cst_553 {dimension_numbers = #tpu.dot_dimension_numbers<[1], [0], [0], [1], [0, 0, 1, 1], [], []>} : vector<64x64xf32>, vector<64x32xf32>, vector<64x32xf32> -> vector<64x32xf32>
    %1152 = arith.addf %1146, %1151 : vector<64x32xf32>
    %c0_554 = arith.constant 0 : index
    %c0_555 = arith.constant 0 : index
    %1153 = vector.load %arg7[%c0_554, %c0_555] : memref<1x32xf32, #tpu.memory_space<vmem>>, vector<1x32xf32>
    %1154 = vector.broadcast %1153 : vector<1x32xf32> to vector<64x32xf32>
    %1155 = arith.addf %1152, %1154 : vector<64x32xf32>
    %cst_556 = arith.constant 0.000000e+00 : f32
    %1156 = vector.broadcast %cst_556 : f32 to vector<64x32xf32>
    %1157 = arith.maximumf %1155, %1156 : vector<64x32xf32>
    %1158 = vector.shape_cast %1157 : vector<64x32xf32> to vector<8x8x32xf32>
    %cst_557 = arith.constant 0.000000e+00 : f32
    %1159 = vector.broadcast %cst_557 : f32 to vector<1x18x32xf32>
    %cst_558 = arith.constant 0.000000e+00 : f32
    %1160 = vector.broadcast %cst_558 : f32 to vector<18x1x32xf32>
    %c0_559 = arith.constant 0 : index
    %c0_560 = arith.constant 0 : index
    %c0_561 = arith.constant 0 : index
    %1161 = vector.load %arg15[%c0_559, %c0_560, %c0_561] : memref<18x18x32xf32, #tpu.memory_space<vmem>>, vector<1x18x32xf32>
    tpu.vector_store %arg15[%c0_559, %c0_560, %c0_561], %1159 {strides = array<i32>} : memref<18x18x32xf32, #tpu.memory_space<vmem>>, vector<1x18x32xf32>,
    %c17_562 = arith.constant 17 : index
    %c0_563 = arith.constant 0 : index
    %c0_564 = arith.constant 0 : index
    %1162 = vector.load %arg15[%c17_562, %c0_563, %c0_564] : memref<18x18x32xf32, #tpu.memory_space<vmem>>, vector<1x18x32xf32>
    tpu.vector_store %arg15[%c17_562, %c0_563, %c0_564], %1159 {strides = array<i32>} : memref<18x18x32xf32, #tpu.memory_space<vmem>>, vector<1x18x32xf32>,
    %c0_565 = arith.constant 0 : index
    %c0_566 = arith.constant 0 : index
    %c0_567 = arith.constant 0 : index
    %1163 = vector.load %arg15[%c0_565, %c0_566, %c0_567] : memref<18x18x32xf32, #tpu.memory_space<vmem>>, vector<18x1x32xf32>
    tpu.vector_store %arg15[%c0_565, %c0_566, %c0_567], %1160 {strides = array<i32>} : memref<18x18x32xf32, #tpu.memory_space<vmem>>, vector<18x1x32xf32>,
    %c0_568 = arith.constant 0 : index
    %c17_569 = arith.constant 17 : index
    %c0_570 = arith.constant 0 : index
    %1164 = vector.load %arg15[%c0_568, %c17_569, %c0_570] : memref<18x18x32xf32, #tpu.memory_space<vmem>>, vector<18x1x32xf32>
    tpu.vector_store %arg15[%c0_568, %c17_569, %c0_570], %1160 {strides = array<i32>} : memref<18x18x32xf32, #tpu.memory_space<vmem>>, vector<18x1x32xf32>,
    %1165 = vector.shape_cast %1158 : vector<8x8x32xf32> to vector<8x1x8x32xf32>
    %1166 = vector.shape_cast %1165 : vector<8x1x8x32xf32> to vector<8x1x8x32xf32>
    %1167 = vector.broadcast %1166 : vector<8x1x8x32xf32> to vector<8x2x8x32xf32>
    %1168 = vector.shape_cast %1167 : vector<8x2x8x32xf32> to vector<16x8x32xf32>
    %c1_571 = arith.constant 1 : index
    %c1_572 = arith.constant 1 : index
    %c0_573 = arith.constant 0 : index
    %1169 = tpu.strided_load %arg15[%c1_571, %c1_572, %c0_573] {strides = array<i32: 1, 2, 1>} : memref<18x18x32xf32, #tpu.memory_space<vmem>>, vector<16x8x32xf32>
    tpu.strided_store %arg15[%c1_571, %c1_572, %c0_573], %1168 {strides = array<i32: 1, 2, 1>} : memref<18x18x32xf32, #tpu.memory_space<vmem>>, vector<16x8x32xf32>
    %c1_574 = arith.constant 1 : index
    %c2_575 = arith.constant 2 : index
    %c0_576 = arith.constant 0 : index
    %1170 = tpu.strided_load %arg15[%c1_574, %c2_575, %c0_576] {strides = array<i32: 1, 2, 1>} : memref<18x18x32xf32, #tpu.memory_space<vmem>>, vector<16x8x32xf32>
    tpu.strided_store %arg15[%c1_574, %c2_575, %c0_576], %1168 {strides = array<i32: 1, 2, 1>} : memref<18x18x32xf32, #tpu.memory_space<vmem>>, vector<16x8x32xf32>
    %cst_577 = arith.constant 0.000000e+00 : f32
    %1171 = vector.broadcast %cst_577 : f32 to vector<16x16x32xf32>
    %c0_578 = arith.constant 0 : index
    %c0_579 = arith.constant 0 : index
    %c0_580 = arith.constant 0 : index
    %1172 = vector.load %arg15[%c0_578, %c0_579, %c0_580] : memref<18x18x32xf32, #tpu.memory_space<vmem>>, vector<16x16x32xf32>
    %c0_581 = arith.constant 0 : index
    %c0_582 = arith.constant 0 : index
    %1173 = vector.load %arg8[%c0_581, %c0_582] : memref<9x32xf32, #tpu.memory_space<vmem>>, vector<1x32xf32>
    %1174 = vector.shape_cast %1173 : vector<1x32xf32> to vector<32xf32>
    %1175 = vector.shape_cast %1174 : vector<32xf32> to vector<1x1x32xf32>
    %1176 = vector.broadcast %1175 : vector<1x1x32xf32> to vector<16x16x32xf32>
    %1177 = arith.mulf %1172, %1176 : vector<16x16x32xf32>
    %1178 = arith.addf %1171, %1177 : vector<16x16x32xf32>
    %c0_583 = arith.constant 0 : index
    %c1_584 = arith.constant 1 : index
    %c0_585 = arith.constant 0 : index
    %1179 = vector.load %arg15[%c0_583, %c1_584, %c0_585] : memref<18x18x32xf32, #tpu.memory_space<vmem>>, vector<16x16x32xf32>
    %c1_586 = arith.constant 1 : index
    %c0_587 = arith.constant 0 : index
    %1180 = vector.load %arg8[%c1_586, %c0_587] : memref<9x32xf32, #tpu.memory_space<vmem>>, vector<1x32xf32>
    %1181 = vector.shape_cast %1180 : vector<1x32xf32> to vector<32xf32>
    %1182 = vector.shape_cast %1181 : vector<32xf32> to vector<1x1x32xf32>
    %1183 = vector.broadcast %1182 : vector<1x1x32xf32> to vector<16x16x32xf32>
    %1184 = arith.mulf %1179, %1183 : vector<16x16x32xf32>
    %1185 = arith.addf %1178, %1184 : vector<16x16x32xf32>
    %c0_588 = arith.constant 0 : index
    %c2_589 = arith.constant 2 : index
    %c0_590 = arith.constant 0 : index
    %1186 = vector.load %arg15[%c0_588, %c2_589, %c0_590] : memref<18x18x32xf32, #tpu.memory_space<vmem>>, vector<16x16x32xf32>
    %c2_591 = arith.constant 2 : index
    %c0_592 = arith.constant 0 : index
    %1187 = vector.load %arg8[%c2_591, %c0_592] : memref<9x32xf32, #tpu.memory_space<vmem>>, vector<1x32xf32>
    %1188 = vector.shape_cast %1187 : vector<1x32xf32> to vector<32xf32>
    %1189 = vector.shape_cast %1188 : vector<32xf32> to vector<1x1x32xf32>
    %1190 = vector.broadcast %1189 : vector<1x1x32xf32> to vector<16x16x32xf32>
    %1191 = arith.mulf %1186, %1190 : vector<16x16x32xf32>
    %1192 = arith.addf %1185, %1191 : vector<16x16x32xf32>
    %c1_593 = arith.constant 1 : index
    %c0_594 = arith.constant 0 : index
    %c0_595 = arith.constant 0 : index
    %1193 = vector.load %arg15[%c1_593, %c0_594, %c0_595] : memref<18x18x32xf32, #tpu.memory_space<vmem>>, vector<16x16x32xf32>
    %c3_596 = arith.constant 3 : index
    %c0_597 = arith.constant 0 : index
    %1194 = vector.load %arg8[%c3_596, %c0_597] : memref<9x32xf32, #tpu.memory_space<vmem>>, vector<1x32xf32>
    %1195 = vector.shape_cast %1194 : vector<1x32xf32> to vector<32xf32>
    %1196 = vector.shape_cast %1195 : vector<32xf32> to vector<1x1x32xf32>
    %1197 = vector.broadcast %1196 : vector<1x1x32xf32> to vector<16x16x32xf32>
    %1198 = arith.mulf %1193, %1197 : vector<16x16x32xf32>
    %1199 = arith.addf %1192, %1198 : vector<16x16x32xf32>
    %c1_598 = arith.constant 1 : index
    %c1_599 = arith.constant 1 : index
    %c0_600 = arith.constant 0 : index
    %1200 = vector.load %arg15[%c1_598, %c1_599, %c0_600] : memref<18x18x32xf32, #tpu.memory_space<vmem>>, vector<16x16x32xf32>
    %c4_601 = arith.constant 4 : index
    %c0_602 = arith.constant 0 : index
    %1201 = vector.load %arg8[%c4_601, %c0_602] : memref<9x32xf32, #tpu.memory_space<vmem>>, vector<1x32xf32>
    %1202 = vector.shape_cast %1201 : vector<1x32xf32> to vector<32xf32>
    %1203 = vector.shape_cast %1202 : vector<32xf32> to vector<1x1x32xf32>
    %1204 = vector.broadcast %1203 : vector<1x1x32xf32> to vector<16x16x32xf32>
    %1205 = arith.mulf %1200, %1204 : vector<16x16x32xf32>
    %1206 = arith.addf %1199, %1205 : vector<16x16x32xf32>
    %c1_603 = arith.constant 1 : index
    %c2_604 = arith.constant 2 : index
    %c0_605 = arith.constant 0 : index
    %1207 = vector.load %arg15[%c1_603, %c2_604, %c0_605] : memref<18x18x32xf32, #tpu.memory_space<vmem>>, vector<16x16x32xf32>
    %c5_606 = arith.constant 5 : index
    %c0_607 = arith.constant 0 : index
    %1208 = vector.load %arg8[%c5_606, %c0_607] : memref<9x32xf32, #tpu.memory_space<vmem>>, vector<1x32xf32>
    %1209 = vector.shape_cast %1208 : vector<1x32xf32> to vector<32xf32>
    %1210 = vector.shape_cast %1209 : vector<32xf32> to vector<1x1x32xf32>
    %1211 = vector.broadcast %1210 : vector<1x1x32xf32> to vector<16x16x32xf32>
    %1212 = arith.mulf %1207, %1211 : vector<16x16x32xf32>
    %1213 = arith.addf %1206, %1212 : vector<16x16x32xf32>
    %c2_608 = arith.constant 2 : index
    %c0_609 = arith.constant 0 : index
    %c0_610 = arith.constant 0 : index
    %1214 = vector.load %arg15[%c2_608, %c0_609, %c0_610] : memref<18x18x32xf32, #tpu.memory_space<vmem>>, vector<16x16x32xf32>
    %c6_611 = arith.constant 6 : index
    %c0_612 = arith.constant 0 : index
    %1215 = vector.load %arg8[%c6_611, %c0_612] : memref<9x32xf32, #tpu.memory_space<vmem>>, vector<1x32xf32>
    %1216 = vector.shape_cast %1215 : vector<1x32xf32> to vector<32xf32>
    %1217 = vector.shape_cast %1216 : vector<32xf32> to vector<1x1x32xf32>
    %1218 = vector.broadcast %1217 : vector<1x1x32xf32> to vector<16x16x32xf32>
    %1219 = arith.mulf %1214, %1218 : vector<16x16x32xf32>
    %1220 = arith.addf %1213, %1219 : vector<16x16x32xf32>
    %c2_613 = arith.constant 2 : index
    %c1_614 = arith.constant 1 : index
    %c0_615 = arith.constant 0 : index
    %1221 = vector.load %arg15[%c2_613, %c1_614, %c0_615] : memref<18x18x32xf32, #tpu.memory_space<vmem>>, vector<16x16x32xf32>
    %c7_616 = arith.constant 7 : index
    %c0_617 = arith.constant 0 : index
    %1222 = vector.load %arg8[%c7_616, %c0_617] : memref<9x32xf32, #tpu.memory_space<vmem>>, vector<1x32xf32>
    %1223 = vector.shape_cast %1222 : vector<1x32xf32> to vector<32xf32>
    %1224 = vector.shape_cast %1223 : vector<32xf32> to vector<1x1x32xf32>
    %1225 = vector.broadcast %1224 : vector<1x1x32xf32> to vector<16x16x32xf32>
    %1226 = arith.mulf %1221, %1225 : vector<16x16x32xf32>
    %1227 = arith.addf %1220, %1226 : vector<16x16x32xf32>
    %c2_618 = arith.constant 2 : index
    %c2_619 = arith.constant 2 : index
    %c0_620 = arith.constant 0 : index
    %1228 = vector.load %arg15[%c2_618, %c2_619, %c0_620] : memref<18x18x32xf32, #tpu.memory_space<vmem>>, vector<16x16x32xf32>
    %c8_621 = arith.constant 8 : index
    %c0_622 = arith.constant 0 : index
    %1229 = vector.load %arg8[%c8_621, %c0_622] : memref<9x32xf32, #tpu.memory_space<vmem>>, vector<1x32xf32>
    %1230 = vector.shape_cast %1229 : vector<1x32xf32> to vector<32xf32>
    %1231 = vector.shape_cast %1230 : vector<32xf32> to vector<1x1x32xf32>
    %1232 = vector.broadcast %1231 : vector<1x1x32xf32> to vector<16x16x32xf32>
    %1233 = arith.mulf %1228, %1232 : vector<16x16x32xf32>
    %1234 = arith.addf %1227, %1233 : vector<16x16x32xf32>
    %cst_623 = arith.constant dense<0.000000e+00> : vector<16x16xf32>
    %1235 = vector.multi_reduction <add>, %1234, %cst_623 [2] : vector<16x16x32xf32> to vector<16x16xf32>
    %c0_624 = arith.constant 0 : index
    %c0_625 = arith.constant 0 : index
    %1236 = vector.load %arg9[%c0_624, %c0_625] : memref<1x1xf32, #tpu.memory_space<vmem>>, vector<1x1xf32>
    %1237 = vector.broadcast %1236 : vector<1x1xf32> to vector<16x16xf32>
    %1238 = arith.addf %1235, %1237 : vector<16x16xf32>
    %cst_626 = arith.constant 0.000000e+00 : f32
    %1239 = vector.broadcast %cst_626 : f32 to vector<16x16xf32>
    %1240 = arith.maximumf %1238, %1239 : vector<16x16xf32>
    %1241 = vector.shape_cast %1240 : vector<16x16xf32> to vector<1x16x16xf32>
    %c0_627 = arith.constant 0 : index
    %c0_628 = arith.constant 0 : index
    %c0_629 = arith.constant 0 : index
    %1242 = vector.load %arg10[%c0_627, %c0_628, %c0_629] : memref<1x16x16xf32, #tpu.memory_space<vmem>>, vector<1x16x16xf32>
    tpu.vector_store %arg10[%c0_627, %c0_628, %c0_629], %1241 {strides = array<i32>} : memref<1x16x16xf32, #tpu.memory_space<vmem>>, vector<1x16x16xf32>,
    return
  }
  func.func @transform_0(%arg0: i32) -> (i32, i32, i32) {
    %c0_i32 = arith.constant 0 : i32
    %c0_i32_0 = arith.constant 0 : i32
    %c0_i32_1 = arith.constant 0 : i32
    return %arg0, %c0_i32, %c0_i32_0 : i32, i32, i32
  }
  func.func @transform_1(%arg0: i32) -> (i32, i32) {
    %c0_i32 = arith.constant 0 : i32
    %c0_i32_0 = arith.constant 0 : i32
    %c0_i32_1 = arith.constant 0 : i32
    return %c0_i32, %c0_i32_0 : i32, i32
  }
  func.func @transform_2(%arg0: i32) -> (i32, i32) {
    %c0_i32 = arith.constant 0 : i32
    %c0_i32_0 = arith.constant 0 : i32
    %c0_i32_1 = arith.constant 0 : i32
    return %c0_i32, %c0_i32_0 : i32, i32
  }
  func.func @transform_3(%arg0: i32) -> (i32, i32, i32) {
    %c0_i32 = arith.constant 0 : i32
    %c0_i32_0 = arith.constant 0 : i32
    %c0_i32_1 = arith.constant 0 : i32
    %c0_i32_2 = arith.constant 0 : i32
    return %c0_i32, %c0_i32_0, %c0_i32_1 : i32, i32, i32
  }
  func.func @transform_4(%arg0: i32) -> (i32, i32) {
    %c0_i32 = arith.constant 0 : i32
    %c0_i32_0 = arith.constant 0 : i32
    %c0_i32_1 = arith.constant 0 : i32
    return %c0_i32, %c0_i32_0 : i32, i32
  }
  func.func @transform_5(%arg0: i32) -> (i32, i32, i32) {
    %c0_i32 = arith.constant 0 : i32
    %c0_i32_0 = arith.constant 0 : i32
    %c0_i32_1 = arith.constant 0 : i32
    %c0_i32_2 = arith.constant 0 : i32
    return %c0_i32, %c0_i32_0, %c0_i32_1 : i32, i32, i32
  }
  func.func @transform_6(%arg0: i32) -> (i32, i32) {
    %c0_i32 = arith.constant 0 : i32
    %c0_i32_0 = arith.constant 0 : i32
    %c0_i32_1 = arith.constant 0 : i32
    return %c0_i32, %c0_i32_0 : i32, i32
  }
  func.func @transform_7(%arg0: i32) -> (i32, i32) {
    %c0_i32 = arith.constant 0 : i32
    %c0_i32_0 = arith.constant 0 : i32
    %c0_i32_1 = arith.constant 0 : i32
    return %c0_i32, %c0_i32_0 : i32, i32
  }
  func.func @transform_8(%arg0: i32) -> (i32, i32) {
    %c0_i32 = arith.constant 0 : i32
    %c0_i32_0 = arith.constant 0 : i32
    %c0_i32_1 = arith.constant 0 : i32
    return %c0_i32, %c0_i32_0 : i32, i32
  }
  func.func @transform_9(%arg0: i32) -> (i32, i32, i32) {
    %c0_i32 = arith.constant 0 : i32
    %c0_i32_0 = arith.constant 0 : i32
    %c0_i32_1 = arith.constant 0 : i32
    return %arg0, %c0_i32, %c0_i32_0 : i32, i32, i32
  }
}

</mosaic_0001>

<llo_original>
// kernel: autoencoder_forward.1
$region0: #{autoencoder_forward.1}
  #allocation0 [shape = 'u32[]', space=smem, size = 0x4, offset = 0x4, fixed_abs, tag = 'smem constant byte address 0x4 - core index']
  #allocation1 [shape = 'u32[144,128]{1,0:T(1,128)}', space=vmem, size = 0x12000, scoped, tag = 'internal scratch']
  #allocation2 [shape = 'f32[18,18]{1,0:T(8,128)}', space=vmem, size = 0x3000, scoped, tag = 'scratch operand']
  #allocation3 [shape = 'f32[16,16,32]{2,1,0:T(8,128)}', space=vmem, size = 0x20000, scoped, tag = 'scratch operand']
  #allocation4 [shape = 'f32[10,10,32]{2,1,0:T(8,128)}', space=vmem, size = 0x14000, scoped, tag = 'scratch operand']
  #allocation5 [shape = 'f32[10,10,64]{2,1,0:T(8,128)}', space=vmem, size = 0x14000, scoped, tag = 'scratch operand']
  #allocation6 [shape = 'f32[18,18,32]{2,1,0:T(8,128)}', space=vmem, size = 0x36000, scoped, tag = 'scratch operand']
  #allocation7 [shape = 'f32[1,1]{1,0:T(1,128)S(1)}', space=vmem, size = 0x200, scoped, tag = 'scoped memory for autoencoder_forward.1']
  %s0 = inlined_call_operand.vmem [shape: f32[2,16,16], index: 0, kind: input, shape index: {}]
  %s1 = inlined_call_operand.vmem [shape: f32[9,32], index: 1, kind: input, shape index: {}]
  %s2 = inlined_call_operand.vmem [shape: f32[1,32], index: 2, kind: input, shape index: {}]
  %s3 = inlined_call_operand.vmem [shape: f32[9,32,64], index: 3, kind: input, shape index: {}]
  %s4 = inlined_call_operand.vmem [shape: f32[1,64], index: 4, kind: input, shape index: {}]
  %s5 = inlined_call_operand.vmem [shape: f32[9,64,32], index: 5, kind: input, shape index: {}]
  %s6 = inlined_call_operand.vmem [shape: f32[1,32], index: 6, kind: input, shape index: {}]
  %s7 = inlined_call_operand.vmem [shape: f32[9,32], index: 7, kind: input, shape index: {}]
  %s8 = inlined_call_operand.<no memory space> [shape: f32[1,1], index: 8, kind: input, shape index: {}]
  %s9 = inlined_call_operand.hbm [shape: f32[2,16,16], index: 9, kind: output, shape index: {}]
  %s10 = sld [smem:[#allocation0]]
  $region69: #{autoencoder_forward.1} parent=0
    _
  %s12 = ssub.s32 1, %s10
  %s13 = scalar_select 0, %s12, %s10
  %v14 = vstv %s8
  %15 = vst [vmem:[#allocation7] sm:$0x1] %v14
  $region1: #{autoencoder_forward.1} parent=0
    #allocation8 [shape = 'u8[16384]{0}', space=vmem, size = 0x4000, scoped, tag = 'output window, operand 0']
    #allocation9 [shape = 's32[2]{0}', space=sflag, size = 0x8, scoped, tag = 'scoped memory for autoencoder_forward.1']
    %16 = vsyncpa [#allocation9], 0
    %s17 = scalar_lea.sflag [#allocation9], 1
    %18 = vsyncpa %s17, 0
    loop: start=0, step=1, limit=4
    $region2: #{autoencoder_forward.1} parent=1 // loop_pre_header
      _
    $region3: #{autoencoder_forward.1} parent=1 // loop_header
      %s20 = sphi 0, %s24
      %p21 = scmp.ge.s32.totalorder %s20, 4
      %s30 = sphi 0, %s32
      %s33 = sphi 0, %s30
      %s34 = sphi 0, %s33
      %s50 = sphi 0, %s34
      %s54 = sphi 0, %s54
      %s56 = sphi 0, %s54
      %s57 = sphi 0, %s56
      %s71 = sphi 0, %s57
      %s75 = sphi 0, %s75
      %s77 = sphi 0, %s75
      %s78 = sphi 0, %s77
      %s92 = sphi 0, %s78
      %s96 = sphi 0, %s96
      %s98 = sphi 0, %s96
      %s99 = sphi 0, %s98
      %s113 = sphi 0, %s99
      %s117 = sphi 0, %s117
      %s119 = sphi 0, %s117
      %s120 = sphi 0, %s119
      %s134 = sphi 0, %s120
      %s138 = sphi 0, %s138
      %s140 = sphi 0, %s138
      %s141 = sphi 0, %s140
      %s155 = sphi 0, %s141
      %s159 = sphi 0, %s159
      %s161 = sphi 0, %s159
      %s162 = sphi 0, %s161
      %s176 = sphi 0, %s162
      %s180 = sphi 0, %s180
      %s182 = sphi 0, %s180
      %s183 = sphi 0, %s182
      %s197 = sphi 0, %s183
      %s201 = sphi 0, %s201
      %s203 = sphi 0, %s201
      %s204 = sphi 0, %s203
      %s218 = sphi 0, %s204
      %s224 = sphi 0, %s226
      %s227 = sphi 0, %s224
      %s228 = sphi 0, %s227
      %s244 = sphi 0, %s228
    $region4: #{autoencoder_forward.1} parent=1 // loop_header_branch
      %23 = sbr.rel (%p21) target = $region8
    $region5: #{autoencoder_forward.1} parent=1 // loop_body
      %s25 = ssub.s32 %s20, 1
      %s26 = ssub.s32 %s20, 2
      %s27 = sadd.s32 %s20, 1
      %s28 = ssub.s32 %s20, %s27
      %p29 = scmp.eq.s32.totalorder %s28, 0
      %s31 = sadd.s32 %s30, 1
      %s32 = scalar_select %p29, %s30, %s31
      %p35 = pneg %p29
      %p36 = scmp.eq.s32.totalorder %s20, 1
      %p37 = por %p35, %p36
      %p38 = scmp.ne.s32.totalorder %s30, %s33
      %p39 = scmp.eq.s32.totalorder %s20, 0
      %p40 = por %p38, %p39
      %p41 = scmp.ne.s32.totalorder %s30, %s33
      %p42 = scmp.eq.s32.totalorder %s25, 1
      %p43 = por %p41, %p42
      %p44 = scmp.ne.s32.totalorder %s33, %s34
      %p45 = scmp.eq.s32.totalorder %s25, 0
      %p46 = por %p44, %p45
      %p47 = scmp.ne.s32.totalorder %s33, %s34
      %p48 = scmp.eq.s32.totalorder %s26, 1
      %p49 = por %p47, %p48
      %p51 = scmp.ne.s32.totalorder %s34, %s50
      %p52 = scmp.eq.s32.totalorder %s26, 0
      %p53 = por %p51, %p52
      %s55 = sadd.s32 %s54, 1
      %p58 = scmp.eq.s32.totalorder %s20, 1
      %p59 = scmp.ne.s32.totalorder %s54, %s56
      %p60 = scmp.eq.s32.totalorder %s20, 0
      %p61 = por %p59, %p60
      %p62 = scmp.ne.s32.totalorder %s54, %s56
      %p63 = scmp.eq.s32.totalorder %s25, 1
      %p64 = por %p62, %p63
      %p65 = scmp.ne.s32.totalorder %s56, %s57
      %p66 = scmp.eq.s32.totalorder %s25, 0
      %p67 = por %p65, %p66
      %p68 = scmp.ne.s32.totalorder %s56, %s57
      %p69 = scmp.eq.s32.totalorder %s26, 1
      %p70 = por %p68, %p69
      %p72 = scmp.ne.s32.totalorder %s57, %s71
      %p73 = scmp.eq.s32.totalorder %s26, 0
      %p74 = por %p72, %p73
      %s76 = sadd.s32 %s75, 1
      %p79 = scmp.eq.s32.totalorder %s20, 1
      %p80 = scmp.ne.s32.totalorder %s75, %s77
      %p81 = scmp.eq.s32.totalorder %s20, 0
      %p82 = por %p80, %p81
      %p83 = scmp.ne.s32.totalorder %s75, %s77
      %p84 = scmp.eq.s32.totalorder %s25, 1
      %p85 = por %p83, %p84
      %p86 = scmp.ne.s32.totalorder %s77, %s78
      %p87 = scmp.eq.s32.totalorder %s25, 0
      %p88 = por %p86, %p87
      %p89 = scmp.ne.s32.totalorder %s77, %s78
      %p90 = scmp.eq.s32.totalorder %s26, 1
      %p91 = por %p89, %p90
      %p93 = scmp.ne.s32.totalorder %s78, %s92
      %p94 = scmp.eq.s32.totalorder %s26, 0
      %p95 = por %p93, %p94
      %s97 = sadd.s32 %s96, 1
      %p100 = scmp.eq.s32.totalorder %s20, 1
      %p101 = scmp.ne.s32.totalorder %s96, %s98
      %p102 = scmp.eq.s32.totalorder %s20, 0
      %p103 = por %p101, %p102
      %p104 = scmp.ne.s32.totalorder %s96, %s98
      %p105 = scmp.eq.s32.totalorder %s25, 1
      %p106 = por %p104, %p105
      %p107 = scmp.ne.s32.totalorder %s98, %s99
      %p108 = scmp.eq.s32.totalorder %s25, 0
      %p109 = por %p107, %p108
      %p110 = scmp.ne.s32.totalorder %s98, %s99
      %p111 = scmp.eq.s32.totalorder %s26, 1
      %p112 = por %p110, %p111
      %p114 = scmp.ne.s32.totalorder %s99, %s113
      %p115 = scmp.eq.s32.totalorder %s26, 0
      %p116 = por %p114, %p115
      %s118 = sadd.s32 %s117, 1
      %p121 = scmp.eq.s32.totalorder %s20, 1
      %p122 = scmp.ne.s32.totalorder %s117, %s119
      %p123 = scmp.eq.s32.totalorder %s20, 0
      %p124 = por %p122, %p123
      %p125 = scmp.ne.s32.totalorder %s117, %s119
      %p126 = scmp.eq.s32.totalorder %s25, 1
      %p127 = por %p125, %p126
      %p128 = scmp.ne.s32.totalorder %s119, %s120
      %p129 = scmp.eq.s32.totalorder %s25, 0
      %p130 = por %p128, %p129
      %p131 = scmp.ne.s32.totalorder %s119, %s120
      %p132 = scmp.eq.s32.totalorder %s26, 1
      %p133 = por %p131, %p132
      %p135 = scmp.ne.s32.totalorder %s120, %s134
      %p136 = scmp.eq.s32.totalorder %s26, 0
      %p137 = por %p135, %p136
      %s139 = sadd.s32 %s138, 1
      %p142 = scmp.eq.s32.totalorder %s20, 1
      %p143 = scmp.ne.s32.totalorder %s138, %s140
      %p144 = scmp.eq.s32.totalorder %s20, 0
      %p145 = por %p143, %p144
      %p146 = scmp.ne.s32.totalorder %s138, %s140
      %p147 = scmp.eq.s32.totalorder %s25, 1
      %p148 = por %p146, %p147
      %p149 = scmp.ne.s32.totalorder %s140, %s141
      %p150 = scmp.eq.s32.totalorder %s25, 0
      %p151 = por %p149, %p150
      %p152 = scmp.ne.s32.totalorder %s140, %s141
      %p153 = scmp.eq.s32.totalorder %s26, 1
      %p154 = por %p152, %p153
      %p156 = scmp.ne.s32.totalorder %s141, %s155
      %p157 = scmp.eq.s32.totalorder %s26, 0
      %p158 = por %p156, %p157
      %s160 = sadd.s32 %s159, 1
      %p163 = scmp.eq.s32.totalorder %s20, 1
      %p164 = scmp.ne.s32.totalorder %s159, %s161
      %p165 = scmp.eq.s32.totalorder %s20, 0
      %p166 = por %p164, %p165
      %p167 = scmp.ne.s32.totalorder %s159, %s161
      %p168 = scmp.eq.s32.totalorder %s25, 1
      %p169 = por %p167, %p168
      %p170 = scmp.ne.s32.totalorder %s161, %s162
      %p171 = scmp.eq.s32.totalorder %s25, 0
      %p172 = por %p170, %p171
      %p173 = scmp.ne.s32.totalorder %s161, %s162
      %p174 = scmp.eq.s32.totalorder %s26, 1
      %p175 = por %p173, %p174
      %p177 = scmp.ne.s32.totalorder %s162, %s176
      %p178 = scmp.eq.s32.totalorder %s26, 0
      %p179 = por %p177, %p178
      %s181 = sadd.s32 %s180, 1
      %p184 = scmp.eq.s32.totalorder %s20, 1
      %p185 = scmp.ne.s32.totalorder %s180, %s182
      %p186 = scmp.eq.s32.totalorder %s20, 0
      %p187 = por %p185, %p186
      %p188 = scmp.ne.s32.totalorder %s180, %s182
      %p189 = scmp.eq.s32.totalorder %s25, 1
      %p190 = por %p188, %p189
      %p191 = scmp.ne.s32.totalorder %s182, %s183
      %p192 = scmp.eq.s32.totalorder %s25, 0
      %p193 = por %p191, %p192
      %p194 = scmp.ne.s32.totalorder %s182, %s183
      %p195 = scmp.eq.s32.totalorder %s26, 1
      %p196 = por %p194, %p195
      %p198 = scmp.ne.s32.totalorder %s183, %s197
      %p199 = scmp.eq.s32.totalorder %s26, 0
      %p200 = por %p198, %p199
      %s202 = sadd.s32 %s201, 1
      %p205 = scmp.eq.s32.totalorder %s20, 1
      %p206 = scmp.ne.s32.totalorder %s201, %s203
      %p207 = scmp.eq.s32.totalorder %s20, 0
      %p208 = por %p206, %p207
      %p209 = scmp.ne.s32.totalorder %s201, %s203
      %p210 = scmp.eq.s32.totalorder %s25, 1
      %p211 = por %p209, %p210
      %p212 = scmp.ne.s32.totalorder %s203, %s204
      %p213 = scmp.eq.s32.totalorder %s25, 0
      %p214 = por %p212, %p213
      %p215 = scmp.ne.s32.totalorder %s203, %s204
      %p216 = scmp.eq.s32.totalorder %s26, 1
      %p217 = por %p215, %p216
      %p219 = scmp.ne.s32.totalorder %s204, %s218
      %p220 = scmp.eq.s32.totalorder %s26, 0
      %p221 = por %p219, %p220
      %s222 = ssub.s32 %s20, %s27
      %p223 = scmp.eq.s32.totalorder %s222, 0
      %s225 = sadd.s32 %s224, 1
      %s226 = scalar_select %p223, %s224, %s225
      %p229 = pneg %p223
      %p230 = scmp.eq.s32.totalorder %s20, 1
      %p231 = por %p229, %p230
      %p232 = scmp.ne.s32.totalorder %s224, %s227
      %p233 = scmp.eq.s32.totalorder %s20, 0
      %p234 = por %p232, %p233
      %p235 = scmp.ne.s32.totalorder %s224, %s227
      %p236 = scmp.eq.s32.totalorder %s25, 1
      %p237 = por %p235, %p236
      %p238 = scmp.ne.s32.totalorder %s227, %s228
      %p239 = scmp.eq.s32.totalorder %s25, 0
      %p240 = por %p238, %p239
      %p241 = scmp.ne.s32.totalorder %s227, %s228
      %p242 = scmp.eq.s32.totalorder %s26, 1
      %p243 = por %p241, %p242
      %p245 = scmp.ne.s32.totalorder %s228, %s244
      %p246 = scmp.eq.s32.totalorder %s26, 0
      %p247 = por %p245, %p246
      %p248 = scmp.le.s32.totalorder 1, %s20
      %p249 = scmp.lt.s32.totalorder %s20, 3
      %p250 = pnand %p248, %p249
      %p251 = pneg %p250
      // Predicated region
      $region9: #{autoencoder_forward.1} parent=5 // pred_check
        _
      $region10: #{autoencoder_forward.1} parent=5 // pred_check_branch
        %253 = sbr.rel (%p250) target = $region12
      $region11: #{autoencoder_forward.1} parent=5 // pred_region
        %s254 = ssub.s32 %s20, 1
        // Predicated region
        $region13: #{autoencoder_forward.1} parent=11 // pred_check
          %p255 = pneg %p67
        $region14: #{autoencoder_forward.1} parent=11 // pred_check_branch
          %257 = sbr.rel (%p255) target = $region16
        $region15: #{autoencoder_forward.1} parent=11 // pred_region
          _
        $region16: #{autoencoder_forward.1} parent=11 // pred_fallthru
          _
        // Predicated region
        $region17: #{autoencoder_forward.1} parent=11 // pred_check
          %p258 = pneg %p88
        $region18: #{autoencoder_forward.1} parent=11 // pred_check_branch
          %260 = sbr.rel (%p258) target = $region20
        $region19: #{autoencoder_forward.1} parent=11 // pred_region
          _
        $region20: #{autoencoder_forward.1} parent=11 // pred_fallthru
          _
        // Predicated region
        $region21: #{autoencoder_forward.1} parent=11 // pred_check
          %p261 = pneg %p109
        $region22: #{autoencoder_forward.1} parent=11 // pred_check_branch
          %263 = sbr.rel (%p261) target = $region24
        $region23: #{autoencoder_forward.1} parent=11 // pred_region
          _
        $region24: #{autoencoder_forward.1} parent=11 // pred_fallthru
          _
        // Predicated region
        $region25: #{autoencoder_forward.1} parent=11 // pred_check
          %p264 = pneg %p130
        $region26: #{autoencoder_forward.1} parent=11 // pred_check_branch
          %266 = sbr.rel (%p264) target = $region28
        $region27: #{autoencoder_forward.1} parent=11 // pred_region
          _
        $region28: #{autoencoder_forward.1} parent=11 // pred_fallthru
          _
        // Predicated region
        $region29: #{autoencoder_forward.1} parent=11 // pred_check
          %p267 = pneg %p151
        $region30: #{autoencoder_forward.1} parent=11 // pred_check_branch
          %269 = sbr.rel (%p267) target = $region32
        $region31: #{autoencoder_forward.1} parent=11 // pred_region
          _
        $region32: #{autoencoder_forward.1} parent=11 // pred_fallthru
          _
        // Predicated region
        $region33: #{autoencoder_forward.1} parent=11 // pred_check
          %p270 = pneg %p172
        $region34: #{autoencoder_forward.1} parent=11 // pred_check_branch
          %272 = sbr.rel (%p270) target = $region36
        $region35: #{autoencoder_forward.1} parent=11 // pred_region
          _
        $region36: #{autoencoder_forward.1} parent=11 // pred_fallthru
          _
        // Predicated region
        $region37: #{autoencoder_forward.1} parent=11 // pred_check
          %p273 = pneg %p193
        $region38: #{autoencoder_forward.1} parent=11 // pred_check_branch
          %275 = sbr.rel (%p273) target = $region40
        $region39: #{autoencoder_forward.1} parent=11 // pred_region
          _
        $region40: #{autoencoder_forward.1} parent=11 // pred_fallthru
          _
        // Predicated region
        $region41: #{autoencoder_forward.1} parent=11 // pred_check
          %p276 = pneg %p214
        $region42: #{autoencoder_forward.1} parent=11 // pred_check_branch
          %278 = sbr.rel (%p276) target = $region44
        $region43: #{autoencoder_forward.1} parent=11 // pred_region
          _
        $region44: #{autoencoder_forward.1} parent=11 // pred_fallthru
          _
      $region12: #{autoencoder_forward.1} parent=5 // pred_fallthru
        _
      %p279 = scmp.lt.s32.totalorder %s20, 2
      // Predicated region
      $region45: #{autoencoder_forward.1} parent=5 // pred_check
        %p280 = pneg %p279
      $region46: #{autoencoder_forward.1} parent=5 // pred_check_branch
        %282 = sbr.rel (%p280) target = $region48
      $region47: #{autoencoder_forward.1} parent=5 // pred_region
        // Predicated region
        $region49: #{autoencoder_forward.1} parent=47 // pred_check
          %p283 = pneg %p40
        $region50: #{autoencoder_forward.1} parent=47 // pred_check_branch
          %285 = sbr.rel (%p283) target = $region52
        $region51: #{autoencoder_forward.1} parent=47 // pred_region
          %p286 = scmp.lt.s32.totalorder %s20, 1
          %s287 = scalar_select %p286, %s20, 1
          %s288 = smul.addr %s287, 2
          %s289 = smul.addr %s288, 8
          %s290 = scalar_lea.vmem %s0, %s289
        $region52: #{autoencoder_forward.1} parent=47 // pred_fallthru
          _
      $region48: #{autoencoder_forward.1} parent=5 // pred_fallthru
        _
      %p291 = scmp.le.s32.totalorder 1, %s20
      %p292 = scmp.lt.s32.totalorder %s20, 3
      %p293 = pnand %p291, %p292
      %p294 = pneg %p293
      // Predicated region
      $region53: #{autoencoder_forward.1} parent=5 // pred_check
        _
      $region54: #{autoencoder_forward.1} parent=5 // pred_check_branch
        %296 = sbr.rel (%p293) target = $region56
      $region55: #{autoencoder_forward.1} parent=5 // pred_region
        %s297 = ssub.s32 %s20, 1
        %p298 = scmp.lt.s32.totalorder %s25, 1
        %s299 = scalar_select %p298, %s25, 1
        %s300 = smul.addr %s299, 2
        %s301 = smul.addr %s300, 8
        %s302 = scalar_lea.vmem %s0, %s301
        %p303 = pneg %p46
        %p304 = pneg %p43
        %p305 = pneg %p67
        %p306 = pneg %p64
        %p307 = pneg %p88
        %p308 = pneg %p85
        %p309 = pneg %p109
        %p310 = pneg %p106
        %p311 = pneg %p130
        %p312 = pneg %p127
        %p313 = pneg %p151
        %p314 = pneg %p148
        %p315 = pneg %p172
        %p316 = pneg %p169
        %p317 = pneg %p193
        %p318 = pneg %p190
        %p319 = pneg %p214
        %p320 = pneg %p211
        %p321 = pneg %p240
        %p322 = pneg %p237
        %s323 = sand.u32 %s227, 1
        %s324 = scalar_lea.sflag [#allocation9], %s323
        %s325 = sand.u32 %s227, 1
        %s326 = smul.addr %s325, 16
        %s327 = scalar_lea.vmem [#allocation8], %s326
        %p328 = scmp.lt.s32.totalorder %s25, 1
        %s329 = scalar_select %p328, %s25, 1
        %s330 = smul.addr %s329, 2
        %s331 = smul.addr %s330, 8
        %s332 = scalar_lea.vmem %s0, %s331
        %vm333 = vcmask 146432
        %334 = vst.msk [vmem:[#allocation2] sm:$0xff] %vm333, 0.0
        %335 = vst.msk [vmem:[#allocation2 + $0x8] sm:$0xff] %vm333, 0.0
        %vm336 = vcmask 140288
        %337 = vst.msk [vmem:[#allocation2 + $0x10] sm:$0x3] %vm336, 0.0
        %v338 = vld [vmem:[%s332] sm:$0xff]
        %v339 = vld [vmem:[%s332 + $0x8] sm:$0xff]
        %342 = vrot.lane.b32.xlu0 %v338, 1
        %v343 = vpop.permute.xlu0 %342
        %344 = vrot.lane.b32.xlu0 %v339, 1
        %v345 = vpop.permute.xlu0 %344
        %vm348 = vcmask 138248
        %349 = vst.msk [vmem:[#allocation2 + $0x1] sm:$0xff] %vm348, %v343
        %350 = vst.msk [vmem:[#allocation2 + $0x9] sm:$0xff] %vm348, %v345
        %v351 = vld [vmem:[%s2] sm:$0x1]
        %v352 = vld [vmem:[%s1] sm:$0x1]
        %v353 = vld [vmem:[%s1 + $0x1] sm:$0x1]
        %v354 = vld [vmem:[%s1 + $0x2] sm:$0x1]
        %v355 = vld [vmem:[%s1 + $0x3] sm:$0x1]
        %v356 = vld [vmem:[%s1 + $0x4] sm:$0x1]
        %v357 = vld [vmem:[%s1 + $0x5] sm:$0x1]
        %v358 = vld [vmem:[%s1 + $0x6] sm:$0x1]
        %v359 = vld [vmem:[%s1 + $0x7] sm:$0x1]
        %v360 = vld [vmem:[%s1 + $0x8] sm:$0x1]
        %v361 = vld [vmem:[#allocation2] sm:$0xff]
        %v362 = vld [vmem:[#allocation2 + $0x8] sm:$0xff]
        %364 = vset.pattern.permute.xlu0 0
        %365 = vperm.xlu0 %364, %v361
        %v366 = vpop.permute.xlu0 %365
        %369 = vset.pattern.permute.xlu0 0
        %370 = vperm.xlu0 %369, %v362
        %v371 = vpop.permute.xlu0 %370
        %v373 = vlaneseq
        %v374 = vshrl.u32 %v373, 7
        %v375 = vsub.s32 0, %v374
        %v376 = vrot.slane %v352, %v375
        %v377 = vmul.f32 %v366, %v376
        %v378 = vmul.f32 %v371, %v376
        %v379 = vadd.f32 %v377, 0.0
        %v380 = vadd.f32 %v378, 0.0
        %v381 = vld [vmem:[#allocation2 + $0x1] sm:$0xff]
        %v382 = vld [vmem:[#allocation2 + $0x9] sm:$0xff]
        %384 = vset.pattern.permute.xlu0 0
        %385 = vperm.xlu0 %384, %v381
        %v386 = vpop.permute.xlu0 %385
        %389 = vset.pattern.permute.xlu0 0
        %390 = vperm.xlu0 %389, %v382
        %v391 = vpop.permute.xlu0 %390
        %v393 = vlaneseq
        %v394 = vshrl.u32 %v393, 7
        %v395 = vsub.s32 0, %v394
        %v396 = vrot.slane %v353, %v395
        %v397 = vmul.f32 %v386, %v396
        %v398 = vmul.f32 %v391, %v396
        %v399 = vadd.f32 %v379, %v397
        %v400 = vadd.f32 %v380, %v398
        %v401 = vld [vmem:[#allocation2 + $0x2] sm:$0xff]
        %v402 = vld [vmem:[#allocation2 + $0xa] sm:$0xff]
        %404 = vset.pattern.permute.xlu0 0
        %405 = vperm.xlu0 %404, %v401
        %v406 = vpop.permute.xlu0 %405
        %409 = vset.pattern.permute.xlu0 0
        %410 = vperm.xlu0 %409, %v402
        %v411 = vpop.permute.xlu0 %410
        %v413 = vlaneseq
        %v414 = vshrl.u32 %v413, 7
        %v415 = vsub.s32 0, %v414
        %v416 = vrot.slane %v354, %v415
        %v417 = vmul.f32 %v406, %v416
        %v418 = vmul.f32 %v411, %v416
        %v419 = vadd.f32 %v399, %v417
        %v420 = vadd.f32 %v400, %v418
        %421 = vset.pattern.permute.xlu0 1
        %422 = vperm.xlu0 %421, %v361
        %v423 = vpop.permute.xlu0 %422
        %425 = vset.pattern.permute.xlu0 1
        %426 = vperm.xlu0 %425, %v362
        %v427 = vpop.permute.xlu0 %426
        %v429 = vlaneseq
        %v430 = vshrl.u32 %v429, 7
        %v431 = vsub.s32 0, %v430
        %v432 = vrot.slane %v355, %v431
        %v433 = vmul.f32 %v423, %v432
        %v434 = vmul.f32 %v427, %v432
        %v435 = vadd.f32 %v419, %v433
        %v436 = vadd.f32 %v420, %v434
        %437 = vset.pattern.permute.xlu0 1
        %438 = vperm.xlu0 %437, %v381
        %v439 = vpop.permute.xlu0 %438
        %441 = vset.pattern.permute.xlu0 1
        %442 = vperm.xlu0 %441, %v382
        %v443 = vpop.permute.xlu0 %442
        %v445 = vlaneseq
        %v446 = vshrl.u32 %v445, 7
        %v447 = vsub.s32 0, %v446
        %v448 = vrot.slane %v356, %v447
        %v449 = vmul.f32 %v439, %v448
        %v450 = vmul.f32 %v443, %v448
        %v451 = vadd.f32 %v435, %v449
        %v452 = vadd.f32 %v436, %v450
        %453 = vset.pattern.permute.xlu0 1
        %454 = vperm.xlu0 %453, %v401
        %v455 = vpop.permute.xlu0 %454
        %457 = vset.pattern.permute.xlu0 1
        %458 = vperm.xlu0 %457, %v402
        %v459 = vpop.permute.xlu0 %458
        %v461 = vlaneseq
        %v462 = vshrl.u32 %v461, 7
        %v463 = vsub.s32 0, %v462
        %v464 = vrot.slane %v357, %v463
        %v465 = vmul.f32 %v455, %v464
        %v466 = vmul.f32 %v459, %v464
        %v467 = vadd.f32 %v451, %v465
        %v468 = vadd.f32 %v452, %v466
        %469 = vset.pattern.permute.xlu0 2
        %470 = vperm.xlu0 %469, %v361
        %v471 = vpop.permute.xlu0 %470
        %473 = vset.pattern.permute.xlu0 2
        %474 = vperm.xlu0 %473, %v362
        %v475 = vpop.permute.xlu0 %474
        %v477 = vlaneseq
        %v478 = vshrl.u32 %v477, 7
        %v479 = vsub.s32 0, %v478
        %v480 = vrot.slane %v358, %v479
        %v481 = vmul.f32 %v471, %v480
        %v482 = vmul.f32 %v475, %v480
        %v483 = vadd.f32 %v467, %v481
        %v484 = vadd.f32 %v468, %v482
        %485 = vset.pattern.permute.xlu0 2
        %486 = vperm.xlu0 %485, %v381
        %v487 = vpop.permute.xlu0 %486
        %489 = vset.pattern.permute.xlu0 2
        %490 = vperm.xlu0 %489, %v382
        %v491 = vpop.permute.xlu0 %490
        %v493 = vlaneseq
        %v494 = vshrl.u32 %v493, 7
        %v495 = vsub.s32 0, %v494
        %v496 = vrot.slane %v359, %v495
        %v497 = vmul.f32 %v487, %v496
        %v498 = vmul.f32 %v491, %v496
        %v499 = vadd.f32 %v483, %v497
        %v500 = vadd.f32 %v484, %v498
        %501 = vset.pattern.permute.xlu0 2
        %502 = vperm.xlu0 %501, %v401
        %v503 = vpop.permute.xlu0 %502
        %505 = vset.pattern.permute.xlu0 2
        %506 = vperm.xlu0 %505, %v402
        %v507 = vpop.permute.xlu0 %506
        %v509 = vlaneseq
        %v510 = vshrl.u32 %v509, 7
        %v511 = vsub.s32 0, %v510
        %v512 = vrot.slane %v360, %v511
        %v513 = vmul.f32 %v503, %v512
        %v514 = vmul.f32 %v507, %v512
        %v515 = vadd.f32 %v499, %v513
        %v516 = vadd.f32 %v500, %v514
        %v518 = vlaneseq
        %v519 = vshrl.u32 %v518, 7
        %v520 = vsub.s32 0, %v519
        %v521 = vrot.slane %v351, %v520
        %v523 = vadd.f32 %v515, %v521
        %v524 = vadd.f32 %v516, %v521
        %v525 = vmax.f32 %v523, 0.0
        %v526 = vmax.f32 %v524, 0.0
        %vm527 = vcmask 261120
        %528 = vst.msk [vmem:[#allocation3] sm:$0xff] %vm527, %v525
        %529 = vst.msk [vmem:[#allocation3 + $0x8] sm:$0xff] %vm527, %v526
        %v530 = vld [vmem:[#allocation2] sm:$0xff]
        %v531 = vld [vmem:[#allocation2 + $0x8] sm:$0xff]
        %533 = vset.pattern.permute.xlu0 1
        %534 = vperm.xlu0 %533, %v530
        %v535 = vpop.permute.xlu0 %534
        %538 = vset.pattern.permute.xlu0 1
        %539 = vperm.xlu0 %538, %v531
        %v540 = vpop.permute.xlu0 %539
        %v542 = vmul.f32 %v535, %v376
        %v543 = vmul.f32 %v540, %v376
        %v544 = vadd.f32 %v542, 0.0
        %v545 = vadd.f32 %v543, 0.0
        %v546 = vld [vmem:[#allocation2 + $0x1] sm:$0xff]
        %v547 = vld [vmem:[#allocation2 + $0x9] sm:$0xff]
        %549 = vset.pattern.permute.xlu0 1
        %550 = vperm.xlu0 %549, %v546
        %v551 = vpop.permute.xlu0 %550
        %554 = vset.pattern.permute.xlu0 1
        %555 = vperm.xlu0 %554, %v547
        %v556 = vpop.permute.xlu0 %555
        %v558 = vmul.f32 %v551, %v396
        %v559 = vmul.f32 %v556, %v396
        %v560 = vadd.f32 %v544, %v558
        %v561 = vadd.f32 %v545, %v559
        %v562 = vld [vmem:[#allocation2 + $0x2] sm:$0xff]
        %v563 = vld [vmem:[#allocation2 + $0xa] sm:$0xff]
        %565 = vset.pattern.permute.xlu0 1
        %566 = vperm.xlu0 %565, %v562
        %v567 = vpop.permute.xlu0 %566
        %570 = vset.pattern.permute.xlu0 1
        %571 = vperm.xlu0 %570, %v563
        %v572 = vpop.permute.xlu0 %571
        %v574 = vmul.f32 %v567, %v416
        %v575 = vmul.f32 %v572, %v416
        %v576 = vadd.f32 %v560, %v574
        %v577 = vadd.f32 %v561, %v575
        %578 = vset.pattern.permute.xlu0 2
        %579 = vperm.xlu0 %578, %v530
        %v580 = vpop.permute.xlu0 %579
        %582 = vset.pattern.permute.xlu0 2
        %583 = vperm.xlu0 %582, %v531
        %v584 = vpop.permute.xlu0 %583
        %v586 = vmul.f32 %v580, %v432
        %v587 = vmul.f32 %v584, %v432
        %v588 = vadd.f32 %v576, %v586
        %v589 = vadd.f32 %v577, %v587
        %590 = vset.pattern.permute.xlu0 2
        %591 = vperm.xlu0 %590, %v546
        %v592 = vpop.permute.xlu0 %591
        %594 = vset.pattern.permute.xlu0 2
        %595 = vperm.xlu0 %594, %v547
        %v596 = vpop.permute.xlu0 %595
        %v598 = vmul.f32 %v592, %v448
        %v599 = vmul.f32 %v596, %v448
        %v600 = vadd.f32 %v588, %v598
        %v601 = vadd.f32 %v589, %v599
        %602 = vset.pattern.permute.xlu0 2
        %603 = vperm.xlu0 %602, %v562
        %v604 = vpop.permute.xlu0 %603
        %606 = vset.pattern.permute.xlu0 2
        %607 = vperm.xlu0 %606, %v563
        %v608 = vpop.permute.xlu0 %607
        %v610 = vmul.f32 %v604, %v464
        %v611 = vmul.f32 %v608, %v464
        %v612 = vadd.f32 %v600, %v610
        %v613 = vadd.f32 %v601, %v611
        %614 = vset.pattern.permute.xlu0 3
        %615 = vperm.xlu0 %614, %v530
        %v616 = vpop.permute.xlu0 %615
        %618 = vset.pattern.permute.xlu0 3
        %619 = vperm.xlu0 %618, %v531
        %v620 = vpop.permute.xlu0 %619
        %v622 = vmul.f32 %v616, %v480
        %v623 = vmul.f32 %v620, %v480
        %v624 = vadd.f32 %v612, %v622
        %v625 = vadd.f32 %v613, %v623
        %626 = vset.pattern.permute.xlu0 3
        %627 = vperm.xlu0 %626, %v546
        %v628 = vpop.permute.xlu0 %627
        %630 = vset.pattern.permute.xlu0 3
        %631 = vperm.xlu0 %630, %v547
        %v632 = vpop.permute.xlu0 %631
        %v634 = vmul.f32 %v628, %v496
        %v635 = vmul.f32 %v632, %v496
        %v636 = vadd.f32 %v624, %v634
        %v637 = vadd.f32 %v625, %v635
        %638 = vset.pattern.permute.xlu0 3
        %639 = vperm.xlu0 %638, %v562
        %v640 = vpop.permute.xlu0 %639
        %642 = vset.pattern.permute.xlu0 3
        %643 = vperm.xlu0 %642, %v563
        %v644 = vpop.permute.xlu0 %643
        %v646 = vmul.f32 %v640, %v512
        %v647 = vmul.f32 %v644, %v512
        %v648 = vadd.f32 %v636, %v646
        %v649 = vadd.f32 %v637, %v647
        %v650 = vadd.f32 %v648, %v521
        %v651 = vadd.f32 %v649, %v521
        %v652 = vmax.f32 %v650, 0.0
        %v653 = vmax.f32 %v651, 0.0
        %s654 = scalar_lea.vmem [#allocation3], 16
        %655 = vst.msk [vmem:[%s654] sm:$0xff] %vm527, %v652
        %656 = vst.msk [vmem:[%s654 + $0x8] sm:$0xff] %vm527, %v653
        %v657 = vld [vmem:[#allocation2] sm:$0xff]
        %v658 = vld [vmem:[#allocation2 + $0x8] sm:$0xff]
        %660 = vset.pattern.permute.xlu0 2
        %661 = vperm.xlu0 %660, %v657
        %v662 = vpop.permute.xlu0 %661
        %665 = vset.pattern.permute.xlu0 2
        %666 = vperm.xlu0 %665, %v658
        %v667 = vpop.permute.xlu0 %666
        %v669 = vmul.f32 %v662, %v376
        %v670 = vmul.f32 %v667, %v376
        %v671 = vadd.f32 %v669, 0.0
        %v672 = vadd.f32 %v670, 0.0
        %v673 = vld [vmem:[#allocation2 + $0x1] sm:$0xff]
        %v674 = vld [vmem:[#allocation2 + $0x9] sm:$0xff]
        %676 = vset.pattern.permute.xlu0 2
        %677 = vperm.xlu0 %676, %v673
        %v678 = vpop.permute.xlu0 %677
        %681 = vset.pattern.permute.xlu0 2
        %682 = vperm.xlu0 %681, %v674
        %v683 = vpop.permute.xlu0 %682
        %v685 = vmul.f32 %v678, %v396
        %v686 = vmul.f32 %v683, %v396
        %v687 = vadd.f32 %v671, %v685
        %v688 = vadd.f32 %v672, %v686
        %v689 = vld [vmem:[#allocation2 + $0x2] sm:$0xff]
        %v690 = vld [vmem:[#allocation2 + $0xa] sm:$0xff]
        %692 = vset.pattern.permute.xlu0 2
        %693 = vperm.xlu0 %692, %v689
        %v694 = vpop.permute.xlu0 %693
        %697 = vset.pattern.permute.xlu0 2
        %698 = vperm.xlu0 %697, %v690
        %v699 = vpop.permute.xlu0 %698
        %v701 = vmul.f32 %v694, %v416
        %v702 = vmul.f32 %v699, %v416
        %v703 = vadd.f32 %v687, %v701
        %v704 = vadd.f32 %v688, %v702
        %705 = vset.pattern.permute.xlu0 3
        %706 = vperm.xlu0 %705, %v657
        %v707 = vpop.permute.xlu0 %706
        %709 = vset.pattern.permute.xlu0 3
        %710 = vperm.xlu0 %709, %v658
        %v711 = vpop.permute.xlu0 %710
        %v713 = vmul.f32 %v707, %v432
        %v714 = vmul.f32 %v711, %v432
        %v715 = vadd.f32 %v703, %v713
        %v716 = vadd.f32 %v704, %v714
        %717 = vset.pattern.permute.xlu0 3
        %718 = vperm.xlu0 %717, %v673
        %v719 = vpop.permute.xlu0 %718
        %721 = vset.pattern.permute.xlu0 3
        %722 = vperm.xlu0 %721, %v674
        %v723 = vpop.permute.xlu0 %722
        %v725 = vmul.f32 %v719, %v448
        %v726 = vmul.f32 %v723, %v448
        %v727 = vadd.f32 %v715, %v725
        %v728 = vadd.f32 %v716, %v726
        %729 = vset.pattern.permute.xlu0 3
        %730 = vperm.xlu0 %729, %v689
        %v731 = vpop.permute.xlu0 %730
        %733 = vset.pattern.permute.xlu0 3
        %734 = vperm.xlu0 %733, %v690
        %v735 = vpop.permute.xlu0 %734
        %v737 = vmul.f32 %v731, %v464
        %v738 = vmul.f32 %v735, %v464
        %v739 = vadd.f32 %v727, %v737
        %v740 = vadd.f32 %v728, %v738
        %741 = vset.pattern.permute.xlu0 4
        %742 = vperm.xlu0 %741, %v657
        %v743 = vpop.permute.xlu0 %742
        %745 = vset.pattern.permute.xlu0 4
        %746 = vperm.xlu0 %745, %v658
        %v747 = vpop.permute.xlu0 %746
        %v749 = vmul.f32 %v743, %v480
        %v750 = vmul.f32 %v747, %v480
        %v751 = vadd.f32 %v739, %v749
        %v752 = vadd.f32 %v740, %v750
        %753 = vset.pattern.permute.xlu0 4
        %754 = vperm.xlu0 %753, %v673
        %v755 = vpop.permute.xlu0 %754
        %757 = vset.pattern.permute.xlu0 4
        %758 = vperm.xlu0 %757, %v674
        %v759 = vpop.permute.xlu0 %758
        %v761 = vmul.f32 %v755, %v496
        %v762 = vmul.f32 %v759, %v496
        %v763 = vadd.f32 %v751, %v761
        %v764 = vadd.f32 %v752, %v762
        %765 = vset.pattern.permute.xlu0 4
        %766 = vperm.xlu0 %765, %v689
        %v767 = vpop.permute.xlu0 %766
        %769 = vset.pattern.permute.xlu0 4
        %770 = vperm.xlu0 %769, %v690
        %v771 = vpop.permute.xlu0 %770
        %v773 = vmul.f32 %v767, %v512
        %v774 = vmul.f32 %v771, %v512
        %v775 = vadd.f32 %v763, %v773
        %v776 = vadd.f32 %v764, %v774
        %v777 = vadd.f32 %v775, %v521
        %v778 = vadd.f32 %v776, %v521
        %v779 = vmax.f32 %v777, 0.0
        %v780 = vmax.f32 %v778, 0.0
        %s781 = scalar_lea.vmem [#allocation3], 32
        %782 = vst.msk [vmem:[%s781] sm:$0xff] %vm527, %v779
        %783 = vst.msk [vmem:[%s781 + $0x8] sm:$0xff] %vm527, %v780
        %v784 = vld [vmem:[#allocation2] sm:$0xff]
        %v785 = vld [vmem:[#allocation2 + $0x8] sm:$0xff]
        %787 = vset.pattern.permute.xlu0 3
        %788 = vperm.xlu0 %787, %v784
        %v789 = vpop.permute.xlu0 %788
        %792 = vset.pattern.permute.xlu0 3
        %793 = vperm.xlu0 %792, %v785
        %v794 = vpop.permute.xlu0 %793
        %v796 = vmul.f32 %v789, %v376
        %v797 = vmul.f32 %v794, %v376
        %v798 = vadd.f32 %v796, 0.0
        %v799 = vadd.f32 %v797, 0.0
        %v800 = vld [vmem:[#allocation2 + $0x1] sm:$0xff]
        %v801 = vld [vmem:[#allocation2 + $0x9] sm:$0xff]
        %803 = vset.pattern.permute.xlu0 3
        %804 = vperm.xlu0 %803, %v800
        %v805 = vpop.permute.xlu0 %804
        %808 = vset.pattern.permute.xlu0 3
        %809 = vperm.xlu0 %808, %v801
        %v810 = vpop.permute.xlu0 %809
        %v812 = vmul.f32 %v805, %v396
        %v813 = vmul.f32 %v810, %v396
        %v814 = vadd.f32 %v798, %v812
        %v815 = vadd.f32 %v799, %v813
        %v816 = vld [vmem:[#allocation2 + $0x2] sm:$0xff]
        %v817 = vld [vmem:[#allocation2 + $0xa] sm:$0xff]
        %819 = vset.pattern.permute.xlu0 3
        %820 = vperm.xlu0 %819, %v816
        %v821 = vpop.permute.xlu0 %820
        %824 = vset.pattern.permute.xlu0 3
        %825 = vperm.xlu0 %824, %v817
        %v826 = vpop.permute.xlu0 %825
        %v828 = vmul.f32 %v821, %v416
        %v829 = vmul.f32 %v826, %v416
        %v830 = vadd.f32 %v814, %v828
        %v831 = vadd.f32 %v815, %v829
        %832 = vset.pattern.permute.xlu0 4
        %833 = vperm.xlu0 %832, %v784
        %v834 = vpop.permute.xlu0 %833
        %836 = vset.pattern.permute.xlu0 4
        %837 = vperm.xlu0 %836, %v785
        %v838 = vpop.permute.xlu0 %837
        %v840 = vmul.f32 %v834, %v432
        %v841 = vmul.f32 %v838, %v432
        %v842 = vadd.f32 %v830, %v840
        %v843 = vadd.f32 %v831, %v841
        %844 = vset.pattern.permute.xlu0 4
        %845 = vperm.xlu0 %844, %v800
        %v846 = vpop.permute.xlu0 %845
        %848 = vset.pattern.permute.xlu0 4
        %849 = vperm.xlu0 %848, %v801
        %v850 = vpop.permute.xlu0 %849
        %v852 = vmul.f32 %v846, %v448
        %v853 = vmul.f32 %v850, %v448
        %v854 = vadd.f32 %v842, %v852
        %v855 = vadd.f32 %v843, %v853
        %856 = vset.pattern.permute.xlu0 4
        %857 = vperm.xlu0 %856, %v816
        %v858 = vpop.permute.xlu0 %857
        %860 = vset.pattern.permute.xlu0 4
        %861 = vperm.xlu0 %860, %v817
        %v862 = vpop.permute.xlu0 %861
        %v864 = vmul.f32 %v858, %v464
        %v865 = vmul.f32 %v862, %v464
        %v866 = vadd.f32 %v854, %v864
        %v867 = vadd.f32 %v855, %v865
        %868 = vset.pattern.permute.xlu0 5
        %869 = vperm.xlu0 %868, %v784
        %v870 = vpop.permute.xlu0 %869
        %872 = vset.pattern.permute.xlu0 5
        %873 = vperm.xlu0 %872, %v785
        %v874 = vpop.permute.xlu0 %873
        %v876 = vmul.f32 %v870, %v480
        %v877 = vmul.f32 %v874, %v480
        %v878 = vadd.f32 %v866, %v876
        %v879 = vadd.f32 %v867, %v877
        %880 = vset.pattern.permute.xlu0 5
        %881 = vperm.xlu0 %880, %v800
        %v882 = vpop.permute.xlu0 %881
        %884 = vset.pattern.permute.xlu0 5
        %885 = vperm.xlu0 %884, %v801
        %v886 = vpop.permute.xlu0 %885
        %v888 = vmul.f32 %v882, %v496
        %v889 = vmul.f32 %v886, %v496
        %v890 = vadd.f32 %v878, %v888
        %v891 = vadd.f32 %v879, %v889
        %892 = vset.pattern.permute.xlu0 5
        %893 = vperm.xlu0 %892, %v816
        %v894 = vpop.permute.xlu0 %893
        %896 = vset.pattern.permute.xlu0 5
        %897 = vperm.xlu0 %896, %v817
        %v898 = vpop.permute.xlu0 %897
        %v900 = vmul.f32 %v894, %v512
        %v901 = vmul.f32 %v898, %v512
        %v902 = vadd.f32 %v890, %v900
        %v903 = vadd.f32 %v891, %v901
        %v904 = vadd.f32 %v902, %v521
        %v905 = vadd.f32 %v903, %v521
        %v906 = vmax.f32 %v904, 0.0
        %v907 = vmax.f32 %v905, 0.0
        %s908 = scalar_lea.vmem [#allocation3], 48
        %909 = vst.msk [vmem:[%s908] sm:$0xff] %vm527, %v906
        %910 = vst.msk [vmem:[%s908 + $0x8] sm:$0xff] %vm527, %v907
        %v911 = vld [vmem:[#allocation2] sm:$0xff]
        %v912 = vld [vmem:[#allocation2 + $0x8] sm:$0xff]
        %914 = vset.pattern.permute.xlu0 4
        %915 = vperm.xlu0 %914, %v911
        %v916 = vpop.permute.xlu0 %915
        %919 = vset.pattern.permute.xlu0 4
        %920 = vperm.xlu0 %919, %v912
        %v921 = vpop.permute.xlu0 %920
        %v923 = vmul.f32 %v916, %v376
        %v924 = vmul.f32 %v921, %v376
        %v925 = vadd.f32 %v923, 0.0
        %v926 = vadd.f32 %v924, 0.0
        %v927 = vld [vmem:[#allocation2 + $0x1] sm:$0xff]
        %v928 = vld [vmem:[#allocation2 + $0x9] sm:$0xff]
        %930 = vset.pattern.permute.xlu0 4
        %931 = vperm.xlu0 %930, %v927
        %v932 = vpop.permute.xlu0 %931
        %935 = vset.pattern.permute.xlu0 4
        %936 = vperm.xlu0 %935, %v928
        %v937 = vpop.permute.xlu0 %936
        %v939 = vmul.f32 %v932, %v396
        %v940 = vmul.f32 %v937, %v396
        %v941 = vadd.f32 %v925, %v939
        %v942 = vadd.f32 %v926, %v940
        %v943 = vld [vmem:[#allocation2 + $0x2] sm:$0xff]
        %v944 = vld [vmem:[#allocation2 + $0xa] sm:$0xff]
        %946 = vset.pattern.permute.xlu0 4
        %947 = vperm.xlu0 %946, %v943
        %v948 = vpop.permute.xlu0 %947
        %951 = vset.pattern.permute.xlu0 4
        %952 = vperm.xlu0 %951, %v944
        %v953 = vpop.permute.xlu0 %952
        %v955 = vmul.f32 %v948, %v416
        %v956 = vmul.f32 %v953, %v416
        %v957 = vadd.f32 %v941, %v955
        %v958 = vadd.f32 %v942, %v956
        %959 = vset.pattern.permute.xlu0 5
        %960 = vperm.xlu0 %959, %v911
        %v961 = vpop.permute.xlu0 %960
        %963 = vset.pattern.permute.xlu0 5
        %964 = vperm.xlu0 %963, %v912
        %v965 = vpop.permute.xlu0 %964
        %v967 = vmul.f32 %v961, %v432
        %v968 = vmul.f32 %v965, %v432
        %v969 = vadd.f32 %v957, %v967
        %v970 = vadd.f32 %v958, %v968
        %971 = vset.pattern.permute.xlu0 5
        %972 = vperm.xlu0 %971, %v927
        %v973 = vpop.permute.xlu0 %972
        %975 = vset.pattern.permute.xlu0 5
        %976 = vperm.xlu0 %975, %v928
        %v977 = vpop.permute.xlu0 %976
        %v979 = vmul.f32 %v973, %v448
        %v980 = vmul.f32 %v977, %v448
        %v981 = vadd.f32 %v969, %v979
        %v982 = vadd.f32 %v970, %v980
        %983 = vset.pattern.permute.xlu0 5
        %984 = vperm.xlu0 %983, %v943
        %v985 = vpop.permute.xlu0 %984
        %987 = vset.pattern.permute.xlu0 5
        %988 = vperm.xlu0 %987, %v944
        %v989 = vpop.permute.xlu0 %988
        %v991 = vmul.f32 %v985, %v464
        %v992 = vmul.f32 %v989, %v464
        %v993 = vadd.f32 %v981, %v991
        %v994 = vadd.f32 %v982, %v992
        %995 = vset.pattern.permute.xlu0 6
        %996 = vperm.xlu0 %995, %v911
        %v997 = vpop.permute.xlu0 %996
        %999 = vset.pattern.permute.xlu0 6
        %1000 = vperm.xlu0 %999, %v912
        %v1001 = vpop.permute.xlu0 %1000
        %v1003 = vmul.f32 %v997, %v480
        %v1004 = vmul.f32 %v1001, %v480
        %v1005 = vadd.f32 %v993, %v1003
        %v1006 = vadd.f32 %v994, %v1004
        %1007 = vset.pattern.permute.xlu0 6
        %1008 = vperm.xlu0 %1007, %v927
        %v1009 = vpop.permute.xlu0 %1008
        %1011 = vset.pattern.permute.xlu0 6
        %1012 = vperm.xlu0 %1011, %v928
        %v1013 = vpop.permute.xlu0 %1012
        %v1015 = vmul.f32 %v1009, %v496
        %v1016 = vmul.f32 %v1013, %v496
        %v1017 = vadd.f32 %v1005, %v1015
        %v1018 = vadd.f32 %v1006, %v1016
        %1019 = vset.pattern.permute.xlu0 6
        %1020 = vperm.xlu0 %1019, %v943
        %v1021 = vpop.permute.xlu0 %1020
        %1023 = vset.pattern.permute.xlu0 6
        %1024 = vperm.xlu0 %1023, %v944
        %v1025 = vpop.permute.xlu0 %1024
        %v1027 = vmul.f32 %v1021, %v512
        %v1028 = vmul.f32 %v1025, %v512
        %v1029 = vadd.f32 %v1017, %v1027
        %v1030 = vadd.f32 %v1018, %v1028
        %v1031 = vadd.f32 %v1029, %v521
        %v1032 = vadd.f32 %v1030, %v521
        %v1033 = vmax.f32 %v1031, 0.0
        %v1034 = vmax.f32 %v1032, 0.0
        %s1035 = scalar_lea.vmem [#allocation3], 64
        %1036 = vst.msk [vmem:[%s1035] sm:$0xff] %vm527, %v1033
        %1037 = vst.msk [vmem:[%s1035 + $0x8] sm:$0xff] %vm527, %v1034
        %v1038 = vld [vmem:[#allocation2] sm:$0xff]
        %v1039 = vld [vmem:[#allocation2 + $0x8] sm:$0xff]
        %1041 = vset.pattern.permute.xlu0 5
        %1042 = vperm.xlu0 %1041, %v1038
        %v1043 = vpop.permute.xlu0 %1042
        %1046 = vset.pattern.permute.xlu0 5
        %1047 = vperm.xlu0 %1046, %v1039
        %v1048 = vpop.permute.xlu0 %1047
        %v1050 = vmul.f32 %v1043, %v376
        %v1051 = vmul.f32 %v1048, %v376
        %v1052 = vadd.f32 %v1050, 0.0
        %v1053 = vadd.f32 %v1051, 0.0
        %v1054 = vld [vmem:[#allocation2 + $0x1] sm:$0xff]
        %v1055 = vld [vmem:[#allocation2 + $0x9] sm:$0xff]
        %1057 = vset.pattern.permute.xlu0 5
        %1058 = vperm.xlu0 %1057, %v1054
        %v1059 = vpop.permute.xlu0 %1058
        %1062 = vset.pattern.permute.xlu0 5
        %1063 = vperm.xlu0 %1062, %v1055
        %v1064 = vpop.permute.xlu0 %1063
        %v1066 = vmul.f32 %v1059, %v396
        %v1067 = vmul.f32 %v1064, %v396
        %v1068 = vadd.f32 %v1052, %v1066
        %v1069 = vadd.f32 %v1053, %v1067
        %v1070 = vld [vmem:[#allocation2 + $0x2] sm:$0xff]
        %v1071 = vld [vmem:[#allocation2 + $0xa] sm:$0xff]
        %1073 = vset.pattern.permute.xlu0 5
        %1074 = vperm.xlu0 %1073, %v1070
        %v1075 = vpop.permute.xlu0 %1074
        %1078 = vset.pattern.permute.xlu0 5
        %1079 = vperm.xlu0 %1078, %v1071
        %v1080 = vpop.permute.xlu0 %1079
        %v1082 = vmul.f32 %v1075, %v416
        %v1083 = vmul.f32 %v1080, %v416
        %v1084 = vadd.f32 %v1068, %v1082
        %v1085 = vadd.f32 %v1069, %v1083
        %1086 = vset.pattern.permute.xlu0 6
        %1087 = vperm.xlu0 %1086, %v1038
        %v1088 = vpop.permute.xlu0 %1087
        %1090 = vset.pattern.permute.xlu0 6
        %1091 = vperm.xlu0 %1090, %v1039
        %v1092 = vpop.permute.xlu0 %1091
        %v1094 = vmul.f32 %v1088, %v432
        %v1095 = vmul.f32 %v1092, %v432
        %v1096 = vadd.f32 %v1084, %v1094
        %v1097 = vadd.f32 %v1085, %v1095
        %1098 = vset.pattern.permute.xlu0 6
        %1099 = vperm.xlu0 %1098, %v1054
        %v1100 = vpop.permute.xlu0 %1099
        %1102 = vset.pattern.permute.xlu0 6
        %1103 = vperm.xlu0 %1102, %v1055
        %v1104 = vpop.permute.xlu0 %1103
        %v1106 = vmul.f32 %v1100, %v448
        %v1107 = vmul.f32 %v1104, %v448
        %v1108 = vadd.f32 %v1096, %v1106
        %v1109 = vadd.f32 %v1097, %v1107
        %1110 = vset.pattern.permute.xlu0 6
        %1111 = vperm.xlu0 %1110, %v1070
        %v1112 = vpop.permute.xlu0 %1111
        %1114 = vset.pattern.permute.xlu0 6
        %1115 = vperm.xlu0 %1114, %v1071
        %v1116 = vpop.permute.xlu0 %1115
        %v1118 = vmul.f32 %v1112, %v464
        %v1119 = vmul.f32 %v1116, %v464
        %v1120 = vadd.f32 %v1108, %v1118
        %v1121 = vadd.f32 %v1109, %v1119
        %1122 = vset.pattern.permute.xlu0 7
        %1123 = vperm.xlu0 %1122, %v1038
        %v1124 = vpop.permute.xlu0 %1123
        %1126 = vset.pattern.permute.xlu0 7
        %1127 = vperm.xlu0 %1126, %v1039
        %v1128 = vpop.permute.xlu0 %1127
        %v1130 = vmul.f32 %v1124, %v480
        %v1131 = vmul.f32 %v1128, %v480
        %v1132 = vadd.f32 %v1120, %v1130
        %v1133 = vadd.f32 %v1121, %v1131
        %1134 = vset.pattern.permute.xlu0 7
        %1135 = vperm.xlu0 %1134, %v1054
        %v1136 = vpop.permute.xlu0 %1135
        %1138 = vset.pattern.permute.xlu0 7
        %1139 = vperm.xlu0 %1138, %v1055
        %v1140 = vpop.permute.xlu0 %1139
        %v1142 = vmul.f32 %v1136, %v496
        %v1143 = vmul.f32 %v1140, %v496
        %v1144 = vadd.f32 %v1132, %v1142
        %v1145 = vadd.f32 %v1133, %v1143
        %1146 = vset.pattern.permute.xlu0 7
        %1147 = vperm.xlu0 %1146, %v1070
        %v1148 = vpop.permute.xlu0 %1147
        %1150 = vset.pattern.permute.xlu0 7
        %1151 = vperm.xlu0 %1150, %v1071
        %v1152 = vpop.permute.xlu0 %1151
        %v1154 = vmul.f32 %v1148, %v512
        %v1155 = vmul.f32 %v1152, %v512
        %v1156 = vadd.f32 %v1144, %v1154
        %v1157 = vadd.f32 %v1145, %v1155
        %v1158 = vadd.f32 %v1156, %v521
        %v1159 = vadd.f32 %v1157, %v521
        %v1160 = vmax.f32 %v1158, 0.0
        %v1161 = vmax.f32 %v1159, 0.0
        %s1162 = scalar_lea.vmem [#allocation3], 80
        %1163 = vst.msk [vmem:[%s1162] sm:$0xff] %vm527, %v1160
        %1164 = vst.msk [vmem:[%s1162 + $0x8] sm:$0xff] %vm527, %v1161
        %v1165 = vld [vmem:[#allocation2] sm:$0xff]
        %v1166 = vld [vmem:[#allocation2 + $0x8] sm:$0xff]
        %1168 = vset.pattern.permute.xlu0 6
        %1169 = vperm.xlu0 %1168, %v1165
        %v1170 = vpop.permute.xlu0 %1169
        %1173 = vset.pattern.permute.xlu0 6
        %1174 = vperm.xlu0 %1173, %v1166
        %v1175 = vpop.permute.xlu0 %1174
        %v1177 = vmul.f32 %v1170, %v376
        %v1178 = vmul.f32 %v1175, %v376
        %v1179 = vadd.f32 %v1177, 0.0
        %v1180 = vadd.f32 %v1178, 0.0
        %v1181 = vld [vmem:[#allocation2 + $0x1] sm:$0xff]
        %v1182 = vld [vmem:[#allocation2 + $0x9] sm:$0xff]
        %1184 = vset.pattern.permute.xlu0 6
        %1185 = vperm.xlu0 %1184, %v1181
        %v1186 = vpop.permute.xlu0 %1185
        %1189 = vset.pattern.permute.xlu0 6
        %1190 = vperm.xlu0 %1189, %v1182
        %v1191 = vpop.permute.xlu0 %1190
        %v1193 = vmul.f32 %v1186, %v396
        %v1194 = vmul.f32 %v1191, %v396
        %v1195 = vadd.f32 %v1179, %v1193
        %v1196 = vadd.f32 %v1180, %v1194
        %v1197 = vld [vmem:[#allocation2 + $0x2] sm:$0xff]
        %v1198 = vld [vmem:[#allocation2 + $0xa] sm:$0xff]
        %1200 = vset.pattern.permute.xlu0 6
        %1201 = vperm.xlu0 %1200, %v1197
        %v1202 = vpop.permute.xlu0 %1201
        %1205 = vset.pattern.permute.xlu0 6
        %1206 = vperm.xlu0 %1205, %v1198
        %v1207 = vpop.permute.xlu0 %1206
        %v1209 = vmul.f32 %v1202, %v416
        %v1210 = vmul.f32 %v1207, %v416
        %v1211 = vadd.f32 %v1195, %v1209
        %v1212 = vadd.f32 %v1196, %v1210
        %1213 = vset.pattern.permute.xlu0 7
        %1214 = vperm.xlu0 %1213, %v1165
        %v1215 = vpop.permute.xlu0 %1214
        %1217 = vset.pattern.permute.xlu0 7
        %1218 = vperm.xlu0 %1217, %v1166
        %v1219 = vpop.permute.xlu0 %1218
        %v1221 = vmul.f32 %v1215, %v432
        %v1222 = vmul.f32 %v1219, %v432
        %v1223 = vadd.f32 %v1211, %v1221
        %v1224 = vadd.f32 %v1212, %v1222
        %1225 = vset.pattern.permute.xlu0 7
        %1226 = vperm.xlu0 %1225, %v1181
        %v1227 = vpop.permute.xlu0 %1226
        %1229 = vset.pattern.permute.xlu0 7
        %1230 = vperm.xlu0 %1229, %v1182
        %v1231 = vpop.permute.xlu0 %1230
        %v1233 = vmul.f32 %v1227, %v448
        %v1234 = vmul.f32 %v1231, %v448
        %v1235 = vadd.f32 %v1223, %v1233
        %v1236 = vadd.f32 %v1224, %v1234
        %1237 = vset.pattern.permute.xlu0 7
        %1238 = vperm.xlu0 %1237, %v1197
        %v1239 = vpop.permute.xlu0 %1238
        %1241 = vset.pattern.permute.xlu0 7
        %1242 = vperm.xlu0 %1241, %v1198
        %v1243 = vpop.permute.xlu0 %1242
        %v1245 = vmul.f32 %v1239, %v464
        %v1246 = vmul.f32 %v1243, %v464
        %v1247 = vadd.f32 %v1235, %v1245
        %v1248 = vadd.f32 %v1236, %v1246
        %1249 = vset.pattern.permute.xlu0 8
        %1250 = vperm.xlu0 %1249, %v1165
        %v1251 = vpop.permute.xlu0 %1250
        %1253 = vset.pattern.permute.xlu0 8
        %1254 = vperm.xlu0 %1253, %v1166
        %v1255 = vpop.permute.xlu0 %1254
        %v1257 = vmul.f32 %v1251, %v480
        %v1258 = vmul.f32 %v1255, %v480
        %v1259 = vadd.f32 %v1247, %v1257
        %v1260 = vadd.f32 %v1248, %v1258
        %1261 = vset.pattern.permute.xlu0 8
        %1262 = vperm.xlu0 %1261, %v1181
        %v1263 = vpop.permute.xlu0 %1262
        %1265 = vset.pattern.permute.xlu0 8
        %1266 = vperm.xlu0 %1265, %v1182
        %v1267 = vpop.permute.xlu0 %1266
        %v1269 = vmul.f32 %v1263, %v496
        %v1270 = vmul.f32 %v1267, %v496
        %v1271 = vadd.f32 %v1259, %v1269
        %v1272 = vadd.f32 %v1260, %v1270
        %1273 = vset.pattern.permute.xlu0 8
        %1274 = vperm.xlu0 %1273, %v1197
        %v1275 = vpop.permute.xlu0 %1274
        %1277 = vset.pattern.permute.xlu0 8
        %1278 = vperm.xlu0 %1277, %v1198
        %v1279 = vpop.permute.xlu0 %1278
        %v1281 = vmul.f32 %v1275, %v512
        %v1282 = vmul.f32 %v1279, %v512
        %v1283 = vadd.f32 %v1271, %v1281
        %v1284 = vadd.f32 %v1272, %v1282
        %v1285 = vadd.f32 %v1283, %v521
        %v1286 = vadd.f32 %v1284, %v521
        %v1287 = vmax.f32 %v1285, 0.0
        %v1288 = vmax.f32 %v1286, 0.0
        %s1289 = scalar_lea.vmem [#allocation3], 96
        %1290 = vst.msk [vmem:[%s1289] sm:$0xff] %vm527, %v1287
        %1291 = vst.msk [vmem:[%s1289 + $0x8] sm:$0xff] %vm527, %v1288
        %v1292 = vld [vmem:[#allocation2] sm:$0xff]
        %v1293 = vld [vmem:[#allocation2 + $0x8] sm:$0xff]
        %1295 = vset.pattern.permute.xlu0 7
        %1296 = vperm.xlu0 %1295, %v1292
        %v1297 = vpop.permute.xlu0 %1296
        %1300 = vset.pattern.permute.xlu0 7
        %1301 = vperm.xlu0 %1300, %v1293
        %v1302 = vpop.permute.xlu0 %1301
        %v1304 = vmul.f32 %v1297, %v376
        %v1305 = vmul.f32 %v1302, %v376
        %v1306 = vadd.f32 %v1304, 0.0
        %v1307 = vadd.f32 %v1305, 0.0
        %v1308 = vld [vmem:[#allocation2 + $0x1] sm:$0xff]
        %v1309 = vld [vmem:[#allocation2 + $0x9] sm:$0xff]
        %1311 = vset.pattern.permute.xlu0 7
        %1312 = vperm.xlu0 %1311, %v1308
        %v1313 = vpop.permute.xlu0 %1312
        %1316 = vset.pattern.permute.xlu0 7
        %1317 = vperm.xlu0 %1316, %v1309
        %v1318 = vpop.permute.xlu0 %1317
        %v1320 = vmul.f32 %v1313, %v396
        %v1321 = vmul.f32 %v1318, %v396
        %v1322 = vadd.f32 %v1306, %v1320
        %v1323 = vadd.f32 %v1307, %v1321
        %v1324 = vld [vmem:[#allocation2 + $0x2] sm:$0xff]
        %v1325 = vld [vmem:[#allocation2 + $0xa] sm:$0xff]
        %1327 = vset.pattern.permute.xlu0 7
        %1328 = vperm.xlu0 %1327, %v1324
        %v1329 = vpop.permute.xlu0 %1328
        %1332 = vset.pattern.permute.xlu0 7
        %1333 = vperm.xlu0 %1332, %v1325
        %v1334 = vpop.permute.xlu0 %1333
        %v1336 = vmul.f32 %v1329, %v416
        %v1337 = vmul.f32 %v1334, %v416
        %v1338 = vadd.f32 %v1322, %v1336
        %v1339 = vadd.f32 %v1323, %v1337
        %1340 = vset.pattern.permute.xlu0 8
        %1341 = vperm.xlu0 %1340, %v1292
        %v1342 = vpop.permute.xlu0 %1341
        %1344 = vset.pattern.permute.xlu0 8
        %1345 = vperm.xlu0 %1344, %v1293
        %v1346 = vpop.permute.xlu0 %1345
        %v1348 = vmul.f32 %v1342, %v432
        %v1349 = vmul.f32 %v1346, %v432
        %v1350 = vadd.f32 %v1338, %v1348
        %v1351 = vadd.f32 %v1339, %v1349
        %1352 = vset.pattern.permute.xlu0 8
        %1353 = vperm.xlu0 %1352, %v1308
        %v1354 = vpop.permute.xlu0 %1353
        %1356 = vset.pattern.permute.xlu0 8
        %1357 = vperm.xlu0 %1356, %v1309
        %v1358 = vpop.permute.xlu0 %1357
        %v1360 = vmul.f32 %v1354, %v448
        %v1361 = vmul.f32 %v1358, %v448
        %v1362 = vadd.f32 %v1350, %v1360
        %v1363 = vadd.f32 %v1351, %v1361
        %1364 = vset.pattern.permute.xlu0 8
        %1365 = vperm.xlu0 %1364, %v1324
        %v1366 = vpop.permute.xlu0 %1365
        %1368 = vset.pattern.permute.xlu0 8
        %1369 = vperm.xlu0 %1368, %v1325
        %v1370 = vpop.permute.xlu0 %1369
        %v1372 = vmul.f32 %v1366, %v464
        %v1373 = vmul.f32 %v1370, %v464
        %v1374 = vadd.f32 %v1362, %v1372
        %v1375 = vadd.f32 %v1363, %v1373
        %1376 = vset.pattern.permute.xlu0 9
        %1377 = vperm.xlu0 %1376, %v1292
        %v1378 = vpop.permute.xlu0 %1377
        %1380 = vset.pattern.permute.xlu0 9
        %1381 = vperm.xlu0 %1380, %v1293
        %v1382 = vpop.permute.xlu0 %1381
        %v1384 = vmul.f32 %v1378, %v480
        %v1385 = vmul.f32 %v1382, %v480
        %v1386 = vadd.f32 %v1374, %v1384
        %v1387 = vadd.f32 %v1375, %v1385
        %1388 = vset.pattern.permute.xlu0 9
        %1389 = vperm.xlu0 %1388, %v1308
        %v1390 = vpop.permute.xlu0 %1389
        %1392 = vset.pattern.permute.xlu0 9
        %1393 = vperm.xlu0 %1392, %v1309
        %v1394 = vpop.permute.xlu0 %1393
        %v1396 = vmul.f32 %v1390, %v496
        %v1397 = vmul.f32 %v1394, %v496
        %v1398 = vadd.f32 %v1386, %v1396
        %v1399 = vadd.f32 %v1387, %v1397
        %1400 = vset.pattern.permute.xlu0 9
        %1401 = vperm.xlu0 %1400, %v1324
        %v1402 = vpop.permute.xlu0 %1401
        %1404 = vset.pattern.permute.xlu0 9
        %1405 = vperm.xlu0 %1404, %v1325
        %v1406 = vpop.permute.xlu0 %1405
        %v1408 = vmul.f32 %v1402, %v512
        %v1409 = vmul.f32 %v1406, %v512
        %v1410 = vadd.f32 %v1398, %v1408
        %v1411 = vadd.f32 %v1399, %v1409
        %v1412 = vadd.f32 %v1410, %v521
        %v1413 = vadd.f32 %v1411, %v521
        %v1414 = vmax.f32 %v1412, 0.0
        %v1415 = vmax.f32 %v1413, 0.0
        %s1416 = scalar_lea.vmem [#allocation3], 112
        %1417 = vst.msk [vmem:[%s1416] sm:$0xff] %vm527, %v1414
        %1418 = vst.msk [vmem:[%s1416 + $0x8] sm:$0xff] %vm527, %v1415
        %v1419 = vld [vmem:[#allocation2] sm:$0xff]
        %v1420 = vld [vmem:[#allocation2 + $0x8] sm:$0xff]
        %1422 = vset.pattern.permute.xlu0 8
        %1423 = vperm.xlu0 %1422, %v1419
        %v1424 = vpop.permute.xlu0 %1423
        %1427 = vset.pattern.permute.xlu0 8
        %1428 = vperm.xlu0 %1427, %v1420
        %v1429 = vpop.permute.xlu0 %1428
        %v1431 = vmul.f32 %v1424, %v376
        %v1432 = vmul.f32 %v1429, %v376
        %v1433 = vadd.f32 %v1431, 0.0
        %v1434 = vadd.f32 %v1432, 0.0
        %v1435 = vld [vmem:[#allocation2 + $0x1] sm:$0xff]
        %v1436 = vld [vmem:[#allocation2 + $0x9] sm:$0xff]
        %1438 = vset.pattern.permute.xlu0 8
        %1439 = vperm.xlu0 %1438, %v1435
        %v1440 = vpop.permute.xlu0 %1439
        %1443 = vset.pattern.permute.xlu0 8
        %1444 = vperm.xlu0 %1443, %v1436
        %v1445 = vpop.permute.xlu0 %1444
        %v1447 = vmul.f32 %v1440, %v396
        %v1448 = vmul.f32 %v1445, %v396
        %v1449 = vadd.f32 %v1433, %v1447
        %v1450 = vadd.f32 %v1434, %v1448
        %v1451 = vld [vmem:[#allocation2 + $0x2] sm:$0xff]
        %v1452 = vld [vmem:[#allocation2 + $0xa] sm:$0xff]
        %1454 = vset.pattern.permute.xlu0 8
        %1455 = vperm.xlu0 %1454, %v1451
        %v1456 = vpop.permute.xlu0 %1455
        %1459 = vset.pattern.permute.xlu0 8
        %1460 = vperm.xlu0 %1459, %v1452
        %v1461 = vpop.permute.xlu0 %1460
        %v1463 = vmul.f32 %v1456, %v416
        %v1464 = vmul.f32 %v1461, %v416
        %v1465 = vadd.f32 %v1449, %v1463
        %v1466 = vadd.f32 %v1450, %v1464
        %1467 = vset.pattern.permute.xlu0 9
        %1468 = vperm.xlu0 %1467, %v1419
        %v1469 = vpop.permute.xlu0 %1468
        %1471 = vset.pattern.permute.xlu0 9
        %1472 = vperm.xlu0 %1471, %v1420
        %v1473 = vpop.permute.xlu0 %1472
        %v1475 = vmul.f32 %v1469, %v432
        %v1476 = vmul.f32 %v1473, %v432
        %v1477 = vadd.f32 %v1465, %v1475
        %v1478 = vadd.f32 %v1466, %v1476
        %1479 = vset.pattern.permute.xlu0 9
        %1480 = vperm.xlu0 %1479, %v1435
        %v1481 = vpop.permute.xlu0 %1480
        %1483 = vset.pattern.permute.xlu0 9
        %1484 = vperm.xlu0 %1483, %v1436
        %v1485 = vpop.permute.xlu0 %1484
        %v1487 = vmul.f32 %v1481, %v448
        %v1488 = vmul.f32 %v1485, %v448
        %v1489 = vadd.f32 %v1477, %v1487
        %v1490 = vadd.f32 %v1478, %v1488
        %1491 = vset.pattern.permute.xlu0 9
        %1492 = vperm.xlu0 %1491, %v1451
        %v1493 = vpop.permute.xlu0 %1492
        %1495 = vset.pattern.permute.xlu0 9
        %1496 = vperm.xlu0 %1495, %v1452
        %v1497 = vpop.permute.xlu0 %1496
        %v1499 = vmul.f32 %v1493, %v464
        %v1500 = vmul.f32 %v1497, %v464
        %v1501 = vadd.f32 %v1489, %v1499
        %v1502 = vadd.f32 %v1490, %v1500
        %1503 = vset.pattern.permute.xlu0 10
        %1504 = vperm.xlu0 %1503, %v1419
        %v1505 = vpop.permute.xlu0 %1504
        %1507 = vset.pattern.permute.xlu0 10
        %1508 = vperm.xlu0 %1507, %v1420
        %v1509 = vpop.permute.xlu0 %1508
        %v1511 = vmul.f32 %v1505, %v480
        %v1512 = vmul.f32 %v1509, %v480
        %v1513 = vadd.f32 %v1501, %v1511
        %v1514 = vadd.f32 %v1502, %v1512
        %1515 = vset.pattern.permute.xlu0 10
        %1516 = vperm.xlu0 %1515, %v1435
        %v1517 = vpop.permute.xlu0 %1516
        %1519 = vset.pattern.permute.xlu0 10
        %1520 = vperm.xlu0 %1519, %v1436
        %v1521 = vpop.permute.xlu0 %1520
        %v1523 = vmul.f32 %v1517, %v496
        %v1524 = vmul.f32 %v1521, %v496
        %v1525 = vadd.f32 %v1513, %v1523
        %v1526 = vadd.f32 %v1514, %v1524
        %1527 = vset.pattern.permute.xlu0 10
        %1528 = vperm.xlu0 %1527, %v1451
        %v1529 = vpop.permute.xlu0 %1528
        %1531 = vset.pattern.permute.xlu0 10
        %1532 = vperm.xlu0 %1531, %v1452
        %v1533 = vpop.permute.xlu0 %1532
        %v1535 = vmul.f32 %v1529, %v512
        %v1536 = vmul.f32 %v1533, %v512
        %v1537 = vadd.f32 %v1525, %v1535
        %v1538 = vadd.f32 %v1526, %v1536
        %v1539 = vadd.f32 %v1537, %v521
        %v1540 = vadd.f32 %v1538, %v521
        %v1541 = vmax.f32 %v1539, 0.0
        %v1542 = vmax.f32 %v1540, 0.0
        %s1543 = scalar_lea.vmem [#allocation3], 128
        %1544 = vst.msk [vmem:[%s1543] sm:$0xff] %vm527, %v1541
        %1545 = vst.msk [vmem:[%s1543 + $0x8] sm:$0xff] %vm527, %v1542
        %v1546 = vld [vmem:[#allocation2] sm:$0xff]
        %v1547 = vld [vmem:[#allocation2 + $0x8] sm:$0xff]
        %1549 = vset.pattern.permute.xlu0 9
        %1550 = vperm.xlu0 %1549, %v1546
        %v1551 = vpop.permute.xlu0 %1550
        %1554 = vset.pattern.permute.xlu0 9
        %1555 = vperm.xlu0 %1554, %v1547
        %v1556 = vpop.permute.xlu0 %1555
        %v1558 = vmul.f32 %v1551, %v376
        %v1559 = vmul.f32 %v1556, %v376
        %v1560 = vadd.f32 %v1558, 0.0
        %v1561 = vadd.f32 %v1559, 0.0
        %v1562 = vld [vmem:[#allocation2 + $0x1] sm:$0xff]
        %v1563 = vld [vmem:[#allocation2 + $0x9] sm:$0xff]
        %1565 = vset.pattern.permute.xlu0 9
        %1566 = vperm.xlu0 %1565, %v1562
        %v1567 = vpop.permute.xlu0 %1566
        %1570 = vset.pattern.permute.xlu0 9
        %1571 = vperm.xlu0 %1570, %v1563
        %v1572 = vpop.permute.xlu0 %1571
        %v1574 = vmul.f32 %v1567, %v396
        %v1575 = vmul.f32 %v1572, %v396
        %v1576 = vadd.f32 %v1560, %v1574
        %v1577 = vadd.f32 %v1561, %v1575
        %v1578 = vld [vmem:[#allocation2 + $0x2] sm:$0xff]
        %v1579 = vld [vmem:[#allocation2 + $0xa] sm:$0xff]
        %1581 = vset.pattern.permute.xlu0 9
        %1582 = vperm.xlu0 %1581, %v1578
        %v1583 = vpop.permute.xlu0 %1582
        %1586 = vset.pattern.permute.xlu0 9
        %1587 = vperm.xlu0 %1586, %v1579
        %v1588 = vpop.permute.xlu0 %1587
        %v1590 = vmul.f32 %v1583, %v416
        %v1591 = vmul.f32 %v1588, %v416
        %v1592 = vadd.f32 %v1576, %v1590
        %v1593 = vadd.f32 %v1577, %v1591
        %1594 = vset.pattern.permute.xlu0 10
        %1595 = vperm.xlu0 %1594, %v1546
        %v1596 = vpop.permute.xlu0 %1595
        %1598 = vset.pattern.permute.xlu0 10
        %1599 = vperm.xlu0 %1598, %v1547
        %v1600 = vpop.permute.xlu0 %1599
        %v1602 = vmul.f32 %v1596, %v432
        %v1603 = vmul.f32 %v1600, %v432
        %v1604 = vadd.f32 %v1592, %v1602
        %v1605 = vadd.f32 %v1593, %v1603
        %1606 = vset.pattern.permute.xlu0 10
        %1607 = vperm.xlu0 %1606, %v1562
        %v1608 = vpop.permute.xlu0 %1607
        %1610 = vset.pattern.permute.xlu0 10
        %1611 = vperm.xlu0 %1610, %v1563
        %v1612 = vpop.permute.xlu0 %1611
        %v1614 = vmul.f32 %v1608, %v448
        %v1615 = vmul.f32 %v1612, %v448
        %v1616 = vadd.f32 %v1604, %v1614
        %v1617 = vadd.f32 %v1605, %v1615
        %1618 = vset.pattern.permute.xlu0 10
        %1619 = vperm.xlu0 %1618, %v1578
        %v1620 = vpop.permute.xlu0 %1619
        %1622 = vset.pattern.permute.xlu0 10
        %1623 = vperm.xlu0 %1622, %v1579
        %v1624 = vpop.permute.xlu0 %1623
        %v1626 = vmul.f32 %v1620, %v464
        %v1627 = vmul.f32 %v1624, %v464
        %v1628 = vadd.f32 %v1616, %v1626
        %v1629 = vadd.f32 %v1617, %v1627
        %1630 = vset.pattern.permute.xlu0 11
        %1631 = vperm.xlu0 %1630, %v1546
        %v1632 = vpop.permute.xlu0 %1631
        %1634 = vset.pattern.permute.xlu0 11
        %1635 = vperm.xlu0 %1634, %v1547
        %v1636 = vpop.permute.xlu0 %1635
        %v1638 = vmul.f32 %v1632, %v480
        %v1639 = vmul.f32 %v1636, %v480
        %v1640 = vadd.f32 %v1628, %v1638
        %v1641 = vadd.f32 %v1629, %v1639
        %1642 = vset.pattern.permute.xlu0 11
        %1643 = vperm.xlu0 %1642, %v1562
        %v1644 = vpop.permute.xlu0 %1643
        %1646 = vset.pattern.permute.xlu0 11
        %1647 = vperm.xlu0 %1646, %v1563
        %v1648 = vpop.permute.xlu0 %1647
        %v1650 = vmul.f32 %v1644, %v496
        %v1651 = vmul.f32 %v1648, %v496
        %v1652 = vadd.f32 %v1640, %v1650
        %v1653 = vadd.f32 %v1641, %v1651
        %1654 = vset.pattern.permute.xlu0 11
        %1655 = vperm.xlu0 %1654, %v1578
        %v1656 = vpop.permute.xlu0 %1655
        %1658 = vset.pattern.permute.xlu0 11
        %1659 = vperm.xlu0 %1658, %v1579
        %v1660 = vpop.permute.xlu0 %1659
        %v1662 = vmul.f32 %v1656, %v512
        %v1663 = vmul.f32 %v1660, %v512
        %v1664 = vadd.f32 %v1652, %v1662
        %v1665 = vadd.f32 %v1653, %v1663
        %v1666 = vadd.f32 %v1664, %v521
        %v1667 = vadd.f32 %v1665, %v521
        %v1668 = vmax.f32 %v1666, 0.0
        %v1669 = vmax.f32 %v1667, 0.0
        %s1670 = scalar_lea.vmem [#allocation3], 144
        %1671 = vst.msk [vmem:[%s1670] sm:$0xff] %vm527, %v1668
        %1672 = vst.msk [vmem:[%s1670 + $0x8] sm:$0xff] %vm527, %v1669
        %v1673 = vld [vmem:[#allocation2] sm:$0xff]
        %v1674 = vld [vmem:[#allocation2 + $0x8] sm:$0xff]
        %1676 = vset.pattern.permute.xlu0 10
        %1677 = vperm.xlu0 %1676, %v1673
        %v1678 = vpop.permute.xlu0 %1677
        %1681 = vset.pattern.permute.xlu0 10
        %1682 = vperm.xlu0 %1681, %v1674
        %v1683 = vpop.permute.xlu0 %1682
        %v1685 = vmul.f32 %v1678, %v376
        %v1686 = vmul.f32 %v1683, %v376
        %v1687 = vadd.f32 %v1685, 0.0
        %v1688 = vadd.f32 %v1686, 0.0
        %v1689 = vld [vmem:[#allocation2 + $0x1] sm:$0xff]
        %v1690 = vld [vmem:[#allocation2 + $0x9] sm:$0xff]
        %1692 = vset.pattern.permute.xlu0 10
        %1693 = vperm.xlu0 %1692, %v1689
        %v1694 = vpop.permute.xlu0 %1693
        %1697 = vset.pattern.permute.xlu0 10
        %1698 = vperm.xlu0 %1697, %v1690
        %v1699 = vpop.permute.xlu0 %1698
        %v1701 = vmul.f32 %v1694, %v396
        %v1702 = vmul.f32 %v1699, %v396
        %v1703 = vadd.f32 %v1687, %v1701
        %v1704 = vadd.f32 %v1688, %v1702
        %v1705 = vld [vmem:[#allocation2 + $0x2] sm:$0xff]
        %v1706 = vld [vmem:[#allocation2 + $0xa] sm:$0xff]
        %1708 = vset.pattern.permute.xlu0 10
        %1709 = vperm.xlu0 %1708, %v1705
        %v1710 = vpop.permute.xlu0 %1709
        %1713 = vset.pattern.permute.xlu0 10
        %1714 = vperm.xlu0 %1713, %v1706
        %v1715 = vpop.permute.xlu0 %1714
        %v1717 = vmul.f32 %v1710, %v416
        %v1718 = vmul.f32 %v1715, %v416
        %v1719 = vadd.f32 %v1703, %v1717
        %v1720 = vadd.f32 %v1704, %v1718
        %1721 = vset.pattern.permute.xlu0 11
        %1722 = vperm.xlu0 %1721, %v1673
        %v1723 = vpop.permute.xlu0 %1722
        %1725 = vset.pattern.permute.xlu0 11
        %1726 = vperm.xlu0 %1725, %v1674
        %v1727 = vpop.permute.xlu0 %1726
        %v1729 = vmul.f32 %v1723, %v432
        %v1730 = vmul.f32 %v1727, %v432
        %v1731 = vadd.f32 %v1719, %v1729
        %v1732 = vadd.f32 %v1720, %v1730
        %1733 = vset.pattern.permute.xlu0 11
        %1734 = vperm.xlu0 %1733, %v1689
        %v1735 = vpop.permute.xlu0 %1734
        %1737 = vset.pattern.permute.xlu0 11
        %1738 = vperm.xlu0 %1737, %v1690
        %v1739 = vpop.permute.xlu0 %1738
        %v1741 = vmul.f32 %v1735, %v448
        %v1742 = vmul.f32 %v1739, %v448
        %v1743 = vadd.f32 %v1731, %v1741
        %v1744 = vadd.f32 %v1732, %v1742
        %1745 = vset.pattern.permute.xlu0 11
        %1746 = vperm.xlu0 %1745, %v1705
        %v1747 = vpop.permute.xlu0 %1746
        %1749 = vset.pattern.permute.xlu0 11
        %1750 = vperm.xlu0 %1749, %v1706
        %v1751 = vpop.permute.xlu0 %1750
        %v1753 = vmul.f32 %v1747, %v464
        %v1754 = vmul.f32 %v1751, %v464
        %v1755 = vadd.f32 %v1743, %v1753
        %v1756 = vadd.f32 %v1744, %v1754
        %1757 = vset.pattern.permute.xlu0 12
        %1758 = vperm.xlu0 %1757, %v1673
        %v1759 = vpop.permute.xlu0 %1758
        %1761 = vset.pattern.permute.xlu0 12
        %1762 = vperm.xlu0 %1761, %v1674
        %v1763 = vpop.permute.xlu0 %1762
        %v1765 = vmul.f32 %v1759, %v480
        %v1766 = vmul.f32 %v1763, %v480
        %v1767 = vadd.f32 %v1755, %v1765
        %v1768 = vadd.f32 %v1756, %v1766
        %1769 = vset.pattern.permute.xlu0 12
        %1770 = vperm.xlu0 %1769, %v1689
        %v1771 = vpop.permute.xlu0 %1770
        %1773 = vset.pattern.permute.xlu0 12
        %1774 = vperm.xlu0 %1773, %v1690
        %v1775 = vpop.permute.xlu0 %1774
        %v1777 = vmul.f32 %v1771, %v496
        %v1778 = vmul.f32 %v1775, %v496
        %v1779 = vadd.f32 %v1767, %v1777
        %v1780 = vadd.f32 %v1768, %v1778
        %1781 = vset.pattern.permute.xlu0 12
        %1782 = vperm.xlu0 %1781, %v1705
        %v1783 = vpop.permute.xlu0 %1782
        %1785 = vset.pattern.permute.xlu0 12
        %1786 = vperm.xlu0 %1785, %v1706
        %v1787 = vpop.permute.xlu0 %1786
        %v1789 = vmul.f32 %v1783, %v512
        %v1790 = vmul.f32 %v1787, %v512
        %v1791 = vadd.f32 %v1779, %v1789
        %v1792 = vadd.f32 %v1780, %v1790
        %v1793 = vadd.f32 %v1791, %v521
        %v1794 = vadd.f32 %v1792, %v521
        %v1795 = vmax.f32 %v1793, 0.0
        %v1796 = vmax.f32 %v1794, 0.0
        %s1797 = scalar_lea.vmem [#allocation3], 160
        %1798 = vst.msk [vmem:[%s1797] sm:$0xff] %vm527, %v1795
        %1799 = vst.msk [vmem:[%s1797 + $0x8] sm:$0xff] %vm527, %v1796
        %v1800 = vld [vmem:[#allocation2] sm:$0xff]
        %v1801 = vld [vmem:[#allocation2 + $0x8] sm:$0xff]
        %1803 = vset.pattern.permute.xlu0 11
        %1804 = vperm.xlu0 %1803, %v1800
        %v1805 = vpop.permute.xlu0 %1804
        %1808 = vset.pattern.permute.xlu0 11
        %1809 = vperm.xlu0 %1808, %v1801
        %v1810 = vpop.permute.xlu0 %1809
        %v1812 = vmul.f32 %v1805, %v376
        %v1813 = vmul.f32 %v1810, %v376
        %v1814 = vadd.f32 %v1812, 0.0
        %v1815 = vadd.f32 %v1813, 0.0
        %v1816 = vld [vmem:[#allocation2 + $0x1] sm:$0xff]
        %v1817 = vld [vmem:[#allocation2 + $0x9] sm:$0xff]
        %1819 = vset.pattern.permute.xlu0 11
        %1820 = vperm.xlu0 %1819, %v1816
        %v1821 = vpop.permute.xlu0 %1820
        %1824 = vset.pattern.permute.xlu0 11
        %1825 = vperm.xlu0 %1824, %v1817
        %v1826 = vpop.permute.xlu0 %1825
        %v1828 = vmul.f32 %v1821, %v396
        %v1829 = vmul.f32 %v1826, %v396
        %v1830 = vadd.f32 %v1814, %v1828
        %v1831 = vadd.f32 %v1815, %v1829
        %v1832 = vld [vmem:[#allocation2 + $0x2] sm:$0xff]
        %v1833 = vld [vmem:[#allocation2 + $0xa] sm:$0xff]
        %1835 = vset.pattern.permute.xlu0 11
        %1836 = vperm.xlu0 %1835, %v1832
        %v1837 = vpop.permute.xlu0 %1836
        %1840 = vset.pattern.permute.xlu0 11
        %1841 = vperm.xlu0 %1840, %v1833
        %v1842 = vpop.permute.xlu0 %1841
        %v1844 = vmul.f32 %v1837, %v416
        %v1845 = vmul.f32 %v1842, %v416
        %v1846 = vadd.f32 %v1830, %v1844
        %v1847 = vadd.f32 %v1831, %v1845
        %1848 = vset.pattern.permute.xlu0 12
        %1849 = vperm.xlu0 %1848, %v1800
        %v1850 = vpop.permute.xlu0 %1849
        %1852 = vset.pattern.permute.xlu0 12
        %1853 = vperm.xlu0 %1852, %v1801
        %v1854 = vpop.permute.xlu0 %1853
        %v1856 = vmul.f32 %v1850, %v432
        %v1857 = vmul.f32 %v1854, %v432
        %v1858 = vadd.f32 %v1846, %v1856
        %v1859 = vadd.f32 %v1847, %v1857
        %1860 = vset.pattern.permute.xlu0 12
        %1861 = vperm.xlu0 %1860, %v1816
        %v1862 = vpop.permute.xlu0 %1861
        %1864 = vset.pattern.permute.xlu0 12
        %1865 = vperm.xlu0 %1864, %v1817
        %v1866 = vpop.permute.xlu0 %1865
        %v1868 = vmul.f32 %v1862, %v448
        %v1869 = vmul.f32 %v1866, %v448
        %v1870 = vadd.f32 %v1858, %v1868
        %v1871 = vadd.f32 %v1859, %v1869
        %1872 = vset.pattern.permute.xlu0 12
        %1873 = vperm.xlu0 %1872, %v1832
        %v1874 = vpop.permute.xlu0 %1873
        %1876 = vset.pattern.permute.xlu0 12
        %1877 = vperm.xlu0 %1876, %v1833
        %v1878 = vpop.permute.xlu0 %1877
        %v1880 = vmul.f32 %v1874, %v464
        %v1881 = vmul.f32 %v1878, %v464
        %v1882 = vadd.f32 %v1870, %v1880
        %v1883 = vadd.f32 %v1871, %v1881
        %1884 = vset.pattern.permute.xlu0 13
        %1885 = vperm.xlu0 %1884, %v1800
        %v1886 = vpop.permute.xlu0 %1885
        %1888 = vset.pattern.permute.xlu0 13
        %1889 = vperm.xlu0 %1888, %v1801
        %v1890 = vpop.permute.xlu0 %1889
        %v1892 = vmul.f32 %v1886, %v480
        %v1893 = vmul.f32 %v1890, %v480
        %v1894 = vadd.f32 %v1882, %v1892
        %v1895 = vadd.f32 %v1883, %v1893
        %1896 = vset.pattern.permute.xlu0 13
        %1897 = vperm.xlu0 %1896, %v1816
        %v1898 = vpop.permute.xlu0 %1897
        %1900 = vset.pattern.permute.xlu0 13
        %1901 = vperm.xlu0 %1900, %v1817
        %v1902 = vpop.permute.xlu0 %1901
        %v1904 = vmul.f32 %v1898, %v496
        %v1905 = vmul.f32 %v1902, %v496
        %v1906 = vadd.f32 %v1894, %v1904
        %v1907 = vadd.f32 %v1895, %v1905
        %1908 = vset.pattern.permute.xlu0 13
        %1909 = vperm.xlu0 %1908, %v1832
        %v1910 = vpop.permute.xlu0 %1909
        %1912 = vset.pattern.permute.xlu0 13
        %1913 = vperm.xlu0 %1912, %v1833
        %v1914 = vpop.permute.xlu0 %1913
        %v1916 = vmul.f32 %v1910, %v512
        %v1917 = vmul.f32 %v1914, %v512
        %v1918 = vadd.f32 %v1906, %v1916
        %v1919 = vadd.f32 %v1907, %v1917
        %v1920 = vadd.f32 %v1918, %v521
        %v1921 = vadd.f32 %v1919, %v521
        %v1922 = vmax.f32 %v1920, 0.0
        %v1923 = vmax.f32 %v1921, 0.0
        %s1924 = scalar_lea.vmem [#allocation3], 176
        %1925 = vst.msk [vmem:[%s1924] sm:$0xff] %vm527, %v1922
        %1926 = vst.msk [vmem:[%s1924 + $0x8] sm:$0xff] %vm527, %v1923
        %v1927 = vld [vmem:[#allocation2] sm:$0xff]
        %v1928 = vld [vmem:[#allocation2 + $0x8] sm:$0xff]
        %1930 = vset.pattern.permute.xlu0 12
        %1931 = vperm.xlu0 %1930, %v1927
        %v1932 = vpop.permute.xlu0 %1931
        %1935 = vset.pattern.permute.xlu0 12
        %1936 = vperm.xlu0 %1935, %v1928
        %v1937 = vpop.permute.xlu0 %1936
        %v1939 = vmul.f32 %v1932, %v376
        %v1940 = vmul.f32 %v1937, %v376
        %v1941 = vadd.f32 %v1939, 0.0
        %v1942 = vadd.f32 %v1940, 0.0
        %v1943 = vld [vmem:[#allocation2 + $0x1] sm:$0xff]
        %v1944 = vld [vmem:[#allocation2 + $0x9] sm:$0xff]
        %1946 = vset.pattern.permute.xlu0 12
        %1947 = vperm.xlu0 %1946, %v1943
        %v1948 = vpop.permute.xlu0 %1947
        %1951 = vset.pattern.permute.xlu0 12
        %1952 = vperm.xlu0 %1951, %v1944
        %v1953 = vpop.permute.xlu0 %1952
        %v1955 = vmul.f32 %v1948, %v396
        %v1956 = vmul.f32 %v1953, %v396
        %v1957 = vadd.f32 %v1941, %v1955
        %v1958 = vadd.f32 %v1942, %v1956
        %v1959 = vld [vmem:[#allocation2 + $0x2] sm:$0xff]
        %v1960 = vld [vmem:[#allocation2 + $0xa] sm:$0xff]
        %1962 = vset.pattern.permute.xlu0 12
        %1963 = vperm.xlu0 %1962, %v1959
        %v1964 = vpop.permute.xlu0 %1963
        %1967 = vset.pattern.permute.xlu0 12
        %1968 = vperm.xlu0 %1967, %v1960
        %v1969 = vpop.permute.xlu0 %1968
        %v1971 = vmul.f32 %v1964, %v416
        %v1972 = vmul.f32 %v1969, %v416
        %v1973 = vadd.f32 %v1957, %v1971
        %v1974 = vadd.f32 %v1958, %v1972
        %1975 = vset.pattern.permute.xlu0 13
        %1976 = vperm.xlu0 %1975, %v1927
        %v1977 = vpop.permute.xlu0 %1976
        %1979 = vset.pattern.permute.xlu0 13
        %1980 = vperm.xlu0 %1979, %v1928
        %v1981 = vpop.permute.xlu0 %1980
        %v1983 = vmul.f32 %v1977, %v432
        %v1984 = vmul.f32 %v1981, %v432
        %v1985 = vadd.f32 %v1973, %v1983
        %v1986 = vadd.f32 %v1974, %v1984
        %1987 = vset.pattern.permute.xlu0 13
        %1988 = vperm.xlu0 %1987, %v1943
        %v1989 = vpop.permute.xlu0 %1988
        %1991 = vset.pattern.permute.xlu0 13
        %1992 = vperm.xlu0 %1991, %v1944
        %v1993 = vpop.permute.xlu0 %1992
        %v1995 = vmul.f32 %v1989, %v448
        %v1996 = vmul.f32 %v1993, %v448
        %v1997 = vadd.f32 %v1985, %v1995
        %v1998 = vadd.f32 %v1986, %v1996
        %1999 = vset.pattern.permute.xlu0 13
        %2000 = vperm.xlu0 %1999, %v1959
        %v2001 = vpop.permute.xlu0 %2000
        %2003 = vset.pattern.permute.xlu0 13
        %2004 = vperm.xlu0 %2003, %v1960
        %v2005 = vpop.permute.xlu0 %2004
        %v2007 = vmul.f32 %v2001, %v464
        %v2008 = vmul.f32 %v2005, %v464
        %v2009 = vadd.f32 %v1997, %v2007
        %v2010 = vadd.f32 %v1998, %v2008
        %2011 = vset.pattern.permute.xlu0 14
        %2012 = vperm.xlu0 %2011, %v1927
        %v2013 = vpop.permute.xlu0 %2012
        %2015 = vset.pattern.permute.xlu0 14
        %2016 = vperm.xlu0 %2015, %v1928
        %v2017 = vpop.permute.xlu0 %2016
        %v2019 = vmul.f32 %v2013, %v480
        %v2020 = vmul.f32 %v2017, %v480
        %v2021 = vadd.f32 %v2009, %v2019
        %v2022 = vadd.f32 %v2010, %v2020
        %2023 = vset.pattern.permute.xlu0 14
        %2024 = vperm.xlu0 %2023, %v1943
        %v2025 = vpop.permute.xlu0 %2024
        %2027 = vset.pattern.permute.xlu0 14
        %2028 = vperm.xlu0 %2027, %v1944
        %v2029 = vpop.permute.xlu0 %2028
        %v2031 = vmul.f32 %v2025, %v496
        %v2032 = vmul.f32 %v2029, %v496
        %v2033 = vadd.f32 %v2021, %v2031
        %v2034 = vadd.f32 %v2022, %v2032
        %2035 = vset.pattern.permute.xlu0 14
        %2036 = vperm.xlu0 %2035, %v1959
        %v2037 = vpop.permute.xlu0 %2036
        %2039 = vset.pattern.permute.xlu0 14
        %2040 = vperm.xlu0 %2039, %v1960
        %v2041 = vpop.permute.xlu0 %2040
        %v2043 = vmul.f32 %v2037, %v512
        %v2044 = vmul.f32 %v2041, %v512
        %v2045 = vadd.f32 %v2033, %v2043
        %v2046 = vadd.f32 %v2034, %v2044
        %v2047 = vadd.f32 %v2045, %v521
        %v2048 = vadd.f32 %v2046, %v521
        %v2049 = vmax.f32 %v2047, 0.0
        %v2050 = vmax.f32 %v2048, 0.0
        %s2051 = scalar_lea.vmem [#allocation3], 192
        %2052 = vst.msk [vmem:[%s2051] sm:$0xff] %vm527, %v2049
        %2053 = vst.msk [vmem:[%s2051 + $0x8] sm:$0xff] %vm527, %v2050
        %v2054 = vld [vmem:[#allocation2] sm:$0xff]
        %v2055 = vld [vmem:[#allocation2 + $0x8] sm:$0xff]
        %2057 = vset.pattern.permute.xlu0 13
        %2058 = vperm.xlu0 %2057, %v2054
        %v2059 = vpop.permute.xlu0 %2058
        %2062 = vset.pattern.permute.xlu0 13
        %2063 = vperm.xlu0 %2062, %v2055
        %v2064 = vpop.permute.xlu0 %2063
        %v2066 = vmul.f32 %v2059, %v376
        %v2067 = vmul.f32 %v2064, %v376
        %v2068 = vadd.f32 %v2066, 0.0
        %v2069 = vadd.f32 %v2067, 0.0
        %v2070 = vld [vmem:[#allocation2 + $0x1] sm:$0xff]
        %v2071 = vld [vmem:[#allocation2 + $0x9] sm:$0xff]
        %2073 = vset.pattern.permute.xlu0 13
        %2074 = vperm.xlu0 %2073, %v2070
        %v2075 = vpop.permute.xlu0 %2074
        %2078 = vset.pattern.permute.xlu0 13
        %2079 = vperm.xlu0 %2078, %v2071
        %v2080 = vpop.permute.xlu0 %2079
        %v2082 = vmul.f32 %v2075, %v396
        %v2083 = vmul.f32 %v2080, %v396
        %v2084 = vadd.f32 %v2068, %v2082
        %v2085 = vadd.f32 %v2069, %v2083
        %v2086 = vld [vmem:[#allocation2 + $0x2] sm:$0xff]
        %v2087 = vld [vmem:[#allocation2 + $0xa] sm:$0xff]
        %2089 = vset.pattern.permute.xlu0 13
        %2090 = vperm.xlu0 %2089, %v2086
        %v2091 = vpop.permute.xlu0 %2090
        %2094 = vset.pattern.permute.xlu0 13
        %2095 = vperm.xlu0 %2094, %v2087
        %v2096 = vpop.permute.xlu0 %2095
        %v2098 = vmul.f32 %v2091, %v416
        %v2099 = vmul.f32 %v2096, %v416
        %v2100 = vadd.f32 %v2084, %v2098
        %v2101 = vadd.f32 %v2085, %v2099
        %2102 = vset.pattern.permute.xlu0 14
        %2103 = vperm.xlu0 %2102, %v2054
        %v2104 = vpop.permute.xlu0 %2103
        %2106 = vset.pattern.permute.xlu0 14
        %2107 = vperm.xlu0 %2106, %v2055
        %v2108 = vpop.permute.xlu0 %2107
        %v2110 = vmul.f32 %v2104, %v432
        %v2111 = vmul.f32 %v2108, %v432
        %v2112 = vadd.f32 %v2100, %v2110
        %v2113 = vadd.f32 %v2101, %v2111
        %2114 = vset.pattern.permute.xlu0 14
        %2115 = vperm.xlu0 %2114, %v2070
        %v2116 = vpop.permute.xlu0 %2115
        %2118 = vset.pattern.permute.xlu0 14
        %2119 = vperm.xlu0 %2118, %v2071
        %v2120 = vpop.permute.xlu0 %2119
        %v2122 = vmul.f32 %v2116, %v448
        %v2123 = vmul.f32 %v2120, %v448
        %v2124 = vadd.f32 %v2112, %v2122
        %v2125 = vadd.f32 %v2113, %v2123
        %2126 = vset.pattern.permute.xlu0 14
        %2127 = vperm.xlu0 %2126, %v2086
        %v2128 = vpop.permute.xlu0 %2127
        %2130 = vset.pattern.permute.xlu0 14
        %2131 = vperm.xlu0 %2130, %v2087
        %v2132 = vpop.permute.xlu0 %2131
        %v2134 = vmul.f32 %v2128, %v464
        %v2135 = vmul.f32 %v2132, %v464
        %v2136 = vadd.f32 %v2124, %v2134
        %v2137 = vadd.f32 %v2125, %v2135
        %2138 = vset.pattern.permute.xlu0 15
        %2139 = vperm.xlu0 %2138, %v2054
        %v2140 = vpop.permute.xlu0 %2139
        %2142 = vset.pattern.permute.xlu0 15
        %2143 = vperm.xlu0 %2142, %v2055
        %v2144 = vpop.permute.xlu0 %2143
        %v2146 = vmul.f32 %v2140, %v480
        %v2147 = vmul.f32 %v2144, %v480
        %v2148 = vadd.f32 %v2136, %v2146
        %v2149 = vadd.f32 %v2137, %v2147
        %2150 = vset.pattern.permute.xlu0 15
        %2151 = vperm.xlu0 %2150, %v2070
        %v2152 = vpop.permute.xlu0 %2151
        %2154 = vset.pattern.permute.xlu0 15
        %2155 = vperm.xlu0 %2154, %v2071
        %v2156 = vpop.permute.xlu0 %2155
        %v2158 = vmul.f32 %v2152, %v496
        %v2159 = vmul.f32 %v2156, %v496
        %v2160 = vadd.f32 %v2148, %v2158
        %v2161 = vadd.f32 %v2149, %v2159
        %2162 = vset.pattern.permute.xlu0 15
        %2163 = vperm.xlu0 %2162, %v2086
        %v2164 = vpop.permute.xlu0 %2163
        %2166 = vset.pattern.permute.xlu0 15
        %2167 = vperm.xlu0 %2166, %v2087
        %v2168 = vpop.permute.xlu0 %2167
        %v2170 = vmul.f32 %v2164, %v512
        %v2171 = vmul.f32 %v2168, %v512
        %v2172 = vadd.f32 %v2160, %v2170
        %v2173 = vadd.f32 %v2161, %v2171
        %v2174 = vadd.f32 %v2172, %v521
        %v2175 = vadd.f32 %v2173, %v521
        %v2176 = vmax.f32 %v2174, 0.0
        %v2177 = vmax.f32 %v2175, 0.0
        %s2178 = scalar_lea.vmem [#allocation3], 208
        %2179 = vst.msk [vmem:[%s2178] sm:$0xff] %vm527, %v2176
        %2180 = vst.msk [vmem:[%s2178 + $0x8] sm:$0xff] %vm527, %v2177
        %v2181 = vld [vmem:[#allocation2] sm:$0xff]
        %v2182 = vld [vmem:[#allocation2 + $0x8] sm:$0xff]
        %2184 = vset.pattern.permute.xlu0 14
        %2185 = vperm.xlu0 %2184, %v2181
        %v2186 = vpop.permute.xlu0 %2185
        %2189 = vset.pattern.permute.xlu0 14
        %2190 = vperm.xlu0 %2189, %v2182
        %v2191 = vpop.permute.xlu0 %2190
        %v2193 = vmul.f32 %v2186, %v376
        %v2194 = vmul.f32 %v2191, %v376
        %v2195 = vadd.f32 %v2193, 0.0
        %v2196 = vadd.f32 %v2194, 0.0
        %v2197 = vld [vmem:[#allocation2 + $0x1] sm:$0xff]
        %v2198 = vld [vmem:[#allocation2 + $0x9] sm:$0xff]
        %2200 = vset.pattern.permute.xlu0 14
        %2201 = vperm.xlu0 %2200, %v2197
        %v2202 = vpop.permute.xlu0 %2201
        %2205 = vset.pattern.permute.xlu0 14
        %2206 = vperm.xlu0 %2205, %v2198
        %v2207 = vpop.permute.xlu0 %2206
        %v2209 = vmul.f32 %v2202, %v396
        %v2210 = vmul.f32 %v2207, %v396
        %v2211 = vadd.f32 %v2195, %v2209
        %v2212 = vadd.f32 %v2196, %v2210
        %v2213 = vld [vmem:[#allocation2 + $0x2] sm:$0xff]
        %v2214 = vld [vmem:[#allocation2 + $0xa] sm:$0xff]
        %2216 = vset.pattern.permute.xlu0 14
        %2217 = vperm.xlu0 %2216, %v2213
        %v2218 = vpop.permute.xlu0 %2217
        %2221 = vset.pattern.permute.xlu0 14
        %2222 = vperm.xlu0 %2221, %v2214
        %v2223 = vpop.permute.xlu0 %2222
        %v2225 = vmul.f32 %v2218, %v416
        %v2226 = vmul.f32 %v2223, %v416
        %v2227 = vadd.f32 %v2211, %v2225
        %v2228 = vadd.f32 %v2212, %v2226
        %2229 = vset.pattern.permute.xlu0 15
        %2230 = vperm.xlu0 %2229, %v2181
        %v2231 = vpop.permute.xlu0 %2230
        %2233 = vset.pattern.permute.xlu0 15
        %2234 = vperm.xlu0 %2233, %v2182
        %v2235 = vpop.permute.xlu0 %2234
        %v2237 = vmul.f32 %v2231, %v432
        %v2238 = vmul.f32 %v2235, %v432
        %v2239 = vadd.f32 %v2227, %v2237
        %v2240 = vadd.f32 %v2228, %v2238
        %2241 = vset.pattern.permute.xlu0 15
        %2242 = vperm.xlu0 %2241, %v2197
        %v2243 = vpop.permute.xlu0 %2242
        %2245 = vset.pattern.permute.xlu0 15
        %2246 = vperm.xlu0 %2245, %v2198
        %v2247 = vpop.permute.xlu0 %2246
        %v2249 = vmul.f32 %v2243, %v448
        %v2250 = vmul.f32 %v2247, %v448
        %v2251 = vadd.f32 %v2239, %v2249
        %v2252 = vadd.f32 %v2240, %v2250
        %2253 = vset.pattern.permute.xlu0 15
        %2254 = vperm.xlu0 %2253, %v2213
        %v2255 = vpop.permute.xlu0 %2254
        %2257 = vset.pattern.permute.xlu0 15
        %2258 = vperm.xlu0 %2257, %v2214
        %v2259 = vpop.permute.xlu0 %2258
        %v2261 = vmul.f32 %v2255, %v464
        %v2262 = vmul.f32 %v2259, %v464
        %v2263 = vadd.f32 %v2251, %v2261
        %v2264 = vadd.f32 %v2252, %v2262
        %2265 = vset.pattern.permute.xlu0 16
        %2266 = vperm.xlu0 %2265, %v2181
        %v2267 = vpop.permute.xlu0 %2266
        %2269 = vset.pattern.permute.xlu0 16
        %2270 = vperm.xlu0 %2269, %v2182
        %v2271 = vpop.permute.xlu0 %2270
        %v2273 = vmul.f32 %v2267, %v480
        %v2274 = vmul.f32 %v2271, %v480
        %v2275 = vadd.f32 %v2263, %v2273
        %v2276 = vadd.f32 %v2264, %v2274
        %2277 = vset.pattern.permute.xlu0 16
        %2278 = vperm.xlu0 %2277, %v2197
        %v2279 = vpop.permute.xlu0 %2278
        %2281 = vset.pattern.permute.xlu0 16
        %2282 = vperm.xlu0 %2281, %v2198
        %v2283 = vpop.permute.xlu0 %2282
        %v2285 = vmul.f32 %v2279, %v496
        %v2286 = vmul.f32 %v2283, %v496
        %v2287 = vadd.f32 %v2275, %v2285
        %v2288 = vadd.f32 %v2276, %v2286
        %2289 = vset.pattern.permute.xlu0 16
        %2290 = vperm.xlu0 %2289, %v2213
        %v2291 = vpop.permute.xlu0 %2290
        %2293 = vset.pattern.permute.xlu0 16
        %2294 = vperm.xlu0 %2293, %v2214
        %v2295 = vpop.permute.xlu0 %2294
        %v2297 = vmul.f32 %v2291, %v512
        %v2298 = vmul.f32 %v2295, %v512
        %v2299 = vadd.f32 %v2287, %v2297
        %v2300 = vadd.f32 %v2288, %v2298
        %v2301 = vadd.f32 %v2299, %v521
        %v2302 = vadd.f32 %v2300, %v521
        %v2303 = vmax.f32 %v2301, 0.0
        %v2304 = vmax.f32 %v2302, 0.0
        %s2305 = scalar_lea.vmem [#allocation3], 224
        %2306 = vst.msk [vmem:[%s2305] sm:$0xff] %vm527, %v2303
        %2307 = vst.msk [vmem:[%s2305 + $0x8] sm:$0xff] %vm527, %v2304
        %v2308 = vld [vmem:[#allocation2] sm:$0xff]
        %v2309 = vld [vmem:[#allocation2 + $0x8] sm:$0xff]
        %2311 = vset.pattern.permute.xlu0 15
        %2312 = vperm.xlu0 %2311, %v2308
        %v2313 = vpop.permute.xlu0 %2312
        %2316 = vset.pattern.permute.xlu0 15
        %2317 = vperm.xlu0 %2316, %v2309
        %v2318 = vpop.permute.xlu0 %2317
        %v2320 = vmul.f32 %v2313, %v376
        %v2321 = vmul.f32 %v2318, %v376
        %v2322 = vadd.f32 %v2320, 0.0
        %v2323 = vadd.f32 %v2321, 0.0
        %v2324 = vld [vmem:[#allocation2 + $0x1] sm:$0xff]
        %v2325 = vld [vmem:[#allocation2 + $0x9] sm:$0xff]
        %2327 = vset.pattern.permute.xlu0 15
        %2328 = vperm.xlu0 %2327, %v2324
        %v2329 = vpop.permute.xlu0 %2328
        %2332 = vset.pattern.permute.xlu0 15
        %2333 = vperm.xlu0 %2332, %v2325
        %v2334 = vpop.permute.xlu0 %2333
        %v2336 = vmul.f32 %v2329, %v396
        %v2337 = vmul.f32 %v2334, %v396
        %v2338 = vadd.f32 %v2322, %v2336
        %v2339 = vadd.f32 %v2323, %v2337
        %v2340 = vld [vmem:[#allocation2 + $0x2] sm:$0xff]
        %v2341 = vld [vmem:[#allocation2 + $0xa] sm:$0xff]
        %2343 = vset.pattern.permute.xlu0 15
        %2344 = vperm.xlu0 %2343, %v2340
        %v2345 = vpop.permute.xlu0 %2344
        %2348 = vset.pattern.permute.xlu0 15
        %2349 = vperm.xlu0 %2348, %v2341
        %v2350 = vpop.permute.xlu0 %2349
        %v2352 = vmul.f32 %v2345, %v416
        %v2353 = vmul.f32 %v2350, %v416
        %v2354 = vadd.f32 %v2338, %v2352
        %v2355 = vadd.f32 %v2339, %v2353
        %2356 = vset.pattern.permute.xlu0 16
        %2357 = vperm.xlu0 %2356, %v2308
        %v2358 = vpop.permute.xlu0 %2357
        %2360 = vset.pattern.permute.xlu0 16
        %2361 = vperm.xlu0 %2360, %v2309
        %v2362 = vpop.permute.xlu0 %2361
        %v2364 = vmul.f32 %v2358, %v432
        %v2365 = vmul.f32 %v2362, %v432
        %v2366 = vadd.f32 %v2354, %v2364
        %v2367 = vadd.f32 %v2355, %v2365
        %2368 = vset.pattern.permute.xlu0 16
        %2369 = vperm.xlu0 %2368, %v2324
        %v2370 = vpop.permute.xlu0 %2369
        %2372 = vset.pattern.permute.xlu0 16
        %2373 = vperm.xlu0 %2372, %v2325
        %v2374 = vpop.permute.xlu0 %2373
        %v2376 = vmul.f32 %v2370, %v448
        %v2377 = vmul.f32 %v2374, %v448
        %v2378 = vadd.f32 %v2366, %v2376
        %v2379 = vadd.f32 %v2367, %v2377
        %2380 = vset.pattern.permute.xlu0 16
        %2381 = vperm.xlu0 %2380, %v2340
        %v2382 = vpop.permute.xlu0 %2381
        %2384 = vset.pattern.permute.xlu0 16
        %2385 = vperm.xlu0 %2384, %v2341
        %v2386 = vpop.permute.xlu0 %2385
        %v2388 = vmul.f32 %v2382, %v464
        %v2389 = vmul.f32 %v2386, %v464
        %v2390 = vadd.f32 %v2378, %v2388
        %v2391 = vadd.f32 %v2379, %v2389
        %2392 = vset.pattern.permute.xlu0 17
        %2393 = vperm.xlu0 %2392, %v2308
        %v2394 = vpop.permute.xlu0 %2393
        %2396 = vset.pattern.permute.xlu0 17
        %2397 = vperm.xlu0 %2396, %v2309
        %v2398 = vpop.permute.xlu0 %2397
        %v2400 = vmul.f32 %v2394, %v480
        %v2401 = vmul.f32 %v2398, %v480
        %v2402 = vadd.f32 %v2390, %v2400
        %v2403 = vadd.f32 %v2391, %v2401
        %2404 = vset.pattern.permute.xlu0 17
        %2405 = vperm.xlu0 %2404, %v2324
        %v2406 = vpop.permute.xlu0 %2405
        %2408 = vset.pattern.permute.xlu0 17
        %2409 = vperm.xlu0 %2408, %v2325
        %v2410 = vpop.permute.xlu0 %2409
        %v2412 = vmul.f32 %v2406, %v496
        %v2413 = vmul.f32 %v2410, %v496
        %v2414 = vadd.f32 %v2402, %v2412
        %v2415 = vadd.f32 %v2403, %v2413
        %2416 = vset.pattern.permute.xlu0 17
        %2417 = vperm.xlu0 %2416, %v2340
        %v2418 = vpop.permute.xlu0 %2417
        %2420 = vset.pattern.permute.xlu0 17
        %2421 = vperm.xlu0 %2420, %v2341
        %v2422 = vpop.permute.xlu0 %2421
        %v2424 = vmul.f32 %v2418, %v512
        %v2425 = vmul.f32 %v2422, %v512
        %v2426 = vadd.f32 %v2414, %v2424
        %v2427 = vadd.f32 %v2415, %v2425
        %v2428 = vadd.f32 %v2426, %v521
        %v2429 = vadd.f32 %v2427, %v521
        %v2430 = vmax.f32 %v2428, 0.0
        %v2431 = vmax.f32 %v2429, 0.0
        %s2432 = scalar_lea.vmem [#allocation3], 240
        %2433 = vst.msk [vmem:[%s2432] sm:$0xff] %vm527, %v2430
        %2434 = vst.msk [vmem:[%s2432 + $0x8] sm:$0xff] %vm527, %v2431
        %v2435 = vld [vmem:[#allocation3] ss:$2 sm:$0xff]
        %s2436 = scalar_lea.vmem [#allocation3], 32
        %v2437 = vld [vmem:[%s2436] ss:$2 sm:$0xff]
        %s2438 = scalar_lea.vmem [#allocation3], 64
        %v2439 = vld [vmem:[%s2438] ss:$2 sm:$0xff]
        %s2440 = scalar_lea.vmem [#allocation3], 96
        %v2441 = vld [vmem:[%s2440] ss:$2 sm:$0xff]
        %s2442 = scalar_lea.vmem [#allocation3], 128
        %v2443 = vld [vmem:[%s2442] ss:$2 sm:$0xff]
        %s2444 = scalar_lea.vmem [#allocation3], 160
        %v2445 = vld [vmem:[%s2444] ss:$2 sm:$0xff]
        %s2446 = scalar_lea.vmem [#allocation3], 192
        %v2447 = vld [vmem:[%s2446] ss:$2 sm:$0xff]
        %s2448 = scalar_lea.vmem [#allocation3], 224
        %v2449 = vld [vmem:[%s2448] ss:$2 sm:$0xff]
        %s2450 = scalar_lea.vmem [#allocation3], 1
        %v2451 = vld [vmem:[%s2450] ss:$2 sm:$0xff]
        %s2452 = scalar_lea.vmem [#allocation3], 33
        %v2453 = vld [vmem:[%s2452] ss:$2 sm:$0xff]
        %s2454 = scalar_lea.vmem [#allocation3], 65
        %v2455 = vld [vmem:[%s2454] ss:$2 sm:$0xff]
        %s2456 = scalar_lea.vmem [#allocation3], 97
        %v2457 = vld [vmem:[%s2456] ss:$2 sm:$0xff]
        %s2458 = scalar_lea.vmem [#allocation3], 129
        %v2459 = vld [vmem:[%s2458] ss:$2 sm:$0xff]
        %s2460 = scalar_lea.vmem [#allocation3], 161
        %v2461 = vld [vmem:[%s2460] ss:$2 sm:$0xff]
        %s2462 = scalar_lea.vmem [#allocation3], 193
        %v2463 = vld [vmem:[%s2462] ss:$2 sm:$0xff]
        %s2464 = scalar_lea.vmem [#allocation3], 225
        %v2465 = vld [vmem:[%s2464] ss:$2 sm:$0xff]
        %v2466 = vld [vmem:[%s654] ss:$2 sm:$0xff]
        %s2467 = scalar_lea.vmem %s654, 32 [#allocation3]
        %v2468 = vld [vmem:[%s2467] ss:$2 sm:$0xff]
        %s2469 = scalar_lea.vmem %s654, 64 [#allocation3]
        %v2470 = vld [vmem:[%s2469] ss:$2 sm:$0xff]
        %s2471 = scalar_lea.vmem %s654, 96 [#allocation3]
        %v2472 = vld [vmem:[%s2471] ss:$2 sm:$0xff]
        %s2473 = scalar_lea.vmem %s654, 128 [#allocation3]
        %v2474 = vld [vmem:[%s2473] ss:$2 sm:$0xff]
        %s2475 = scalar_lea.vmem %s654, 160 [#allocation3]
        %v2476 = vld [vmem:[%s2475] ss:$2 sm:$0xff]
        %s2477 = scalar_lea.vmem %s654, 192 [#allocation3]
        %v2478 = vld [vmem:[%s2477] ss:$2 sm:$0xff]
        %s2479 = scalar_lea.vmem %s654, 224 [#allocation3]
        %v2480 = vld [vmem:[%s2479] ss:$2 sm:$0xff]
        %s2481 = scalar_lea.vmem %s654, 1 [#allocation3]
        %v2482 = vld [vmem:[%s2481] ss:$2 sm:$0xff]
        %s2483 = scalar_lea.vmem %s654, 33 [#allocation3]
        %v2484 = vld [vmem:[%s2483] ss:$2 sm:$0xff]
        %s2485 = scalar_lea.vmem %s654, 65 [#allocation3]
        %v2486 = vld [vmem:[%s2485] ss:$2 sm:$0xff]
        %s2487 = scalar_lea.vmem %s654, 97 [#allocation3]
        %v2488 = vld [vmem:[%s2487] ss:$2 sm:$0xff]
        %s2489 = scalar_lea.vmem %s654, 129 [#allocation3]
        %v2490 = vld [vmem:[%s2489] ss:$2 sm:$0xff]
        %s2491 = scalar_lea.vmem %s654, 161 [#allocation3]
        %v2492 = vld [vmem:[%s2491] ss:$2 sm:$0xff]
        %s2493 = scalar_lea.vmem %s654, 193 [#allocation3]
        %v2494 = vld [vmem:[%s2493] ss:$2 sm:$0xff]
        %s2495 = scalar_lea.vmem %s654, 225 [#allocation3]
        %v2496 = vld [vmem:[%s2495] ss:$2 sm:$0xff]
        %v2497 = vmax.f32 %v2435, %v2451
        %v2498 = vmax.f32 %v2437, %v2453
        %v2499 = vmax.f32 %v2439, %v2455
        %v2500 = vmax.f32 %v2441, %v2457
        %v2501 = vmax.f32 %v2443, %v2459
        %v2502 = vmax.f32 %v2445, %v2461
        %v2503 = vmax.f32 %v2447, %v2463
        %v2504 = vmax.f32 %v2449, %v2465
        %v2505 = vmax.f32 %v2466, %v2482
        %v2506 = vmax.f32 %v2468, %v2484
        %v2507 = vmax.f32 %v2470, %v2486
        %v2508 = vmax.f32 %v2472, %v2488
        %v2509 = vmax.f32 %v2474, %v2490
        %v2510 = vmax.f32 %v2476, %v2492
        %v2511 = vmax.f32 %v2478, %v2494
        %v2512 = vmax.f32 %v2480, %v2496
        %v2513 = vmax.f32 %v2497, %v2505
        %v2514 = vmax.f32 %v2498, %v2506
        %v2515 = vmax.f32 %v2499, %v2507
        %v2516 = vmax.f32 %v2500, %v2508
        %v2517 = vmax.f32 %v2501, %v2509
        %v2518 = vmax.f32 %v2502, %v2510
        %v2519 = vmax.f32 %v2503, %v2511
        %v2520 = vmax.f32 %v2504, %v2512
        %2521 = vst.msk [vmem:[#allocation4] sm:$0xff] %vm527, 0.0
        %vm2522 = vcmask 254976
        %2523 = vst.msk [vmem:[#allocation4 + $0x8] sm:$0x3] %vm2522, 0.0
        %s2524 = scalar_lea.vmem [#allocation4], 144
        %2525 = vst.msk [vmem:[%s2524] sm:$0xff] %vm527, 0.0
        %2526 = vst.msk [vmem:[%s2524 + $0x8] sm:$0x3] %vm2522, 0.0
        %vm2527 = vcmask 253952
        %2528 = vst.msk [vmem:[#allocation4] sm:$0x1] %vm2527, 0.0
        %2529 = vst.msk [vmem:[#allocation4 + $0x10] sm:$0x1] %vm2527, 0.0
        %2530 = vst.msk [vmem:[#allocation4 + $0x20] sm:$0x1] %vm2527, 0.0
        %2531 = vst.msk [vmem:[#allocation4 + $0x30] sm:$0x1] %vm2527, 0.0
        %2532 = vst.msk [vmem:[#allocation4 + $0x40] sm:$0x1] %vm2527, 0.0
        %2533 = vst.msk [vmem:[#allocation4 + $0x50] sm:$0x1] %vm2527, 0.0
        %2534 = vst.msk [vmem:[#allocation4 + $0x60] sm:$0x1] %vm2527, 0.0
        %2535 = vst.msk [vmem:[#allocation4 + $0x70] sm:$0x1] %vm2527, 0.0
        %2536 = vst.msk [vmem:[#allocation4 + $0x80] sm:$0x1] %vm2527, 0.0
        %2537 = vst.msk [vmem:[#allocation4 + $0x90] sm:$0x1] %vm2527, 0.0
        %2538 = vst.msk [vmem:[#allocation4 + $0x9] sm:$0x1] %vm2527, 0.0
        %2539 = vst.msk [vmem:[#allocation4 + $0x19] sm:$0x1] %vm2527, 0.0
        %2540 = vst.msk [vmem:[#allocation4 + $0x29] sm:$0x1] %vm2527, 0.0
        %2541 = vst.msk [vmem:[#allocation4 + $0x39] sm:$0x1] %vm2527, 0.0
        %2542 = vst.msk [vmem:[#allocation4 + $0x49] sm:$0x1] %vm2527, 0.0
        %2543 = vst.msk [vmem:[#allocation4 + $0x59] sm:$0x1] %vm2527, 0.0
        %2544 = vst.msk [vmem:[#allocation4 + $0x69] sm:$0x1] %vm2527, 0.0
        %2545 = vst.msk [vmem:[#allocation4 + $0x79] sm:$0x1] %vm2527, 0.0
        %2546 = vst.msk [vmem:[#allocation4 + $0x89] sm:$0x1] %vm2527, 0.0
        %2547 = vst.msk [vmem:[#allocation4 + $0x99] sm:$0x1] %vm2527, 0.0
        %s2548 = scalar_lea.vmem [#allocation4], 16
        %2549 = vst.msk [vmem:[%s2548 + $0x1] sm:$0xff] %vm527, %v2513
        %2550 = vst.msk [vmem:[%s2548 + $0x11] sm:$0xff] %vm527, %v2514
        %2551 = vst.msk [vmem:[%s2548 + $0x21] sm:$0xff] %vm527, %v2515
        %2552 = vst.msk [vmem:[%s2548 + $0x31] sm:$0xff] %vm527, %v2516
        %2553 = vst.msk [vmem:[%s2548 + $0x41] sm:$0xff] %vm527, %v2517
        %2554 = vst.msk [vmem:[%s2548 + $0x51] sm:$0xff] %vm527, %v2518
        %2555 = vst.msk [vmem:[%s2548 + $0x61] sm:$0xff] %vm527, %v2519
        %2556 = vst.msk [vmem:[%s2548 + $0x71] sm:$0xff] %vm527, %v2520
        %v2557 = vld [vmem:[#allocation4] sm:$0xff]
        %v2558 = vld [vmem:[#allocation4 + $0x10] sm:$0xff]
        %v2559 = vld [vmem:[#allocation4 + $0x20] sm:$0xff]
        %v2560 = vld [vmem:[#allocation4 + $0x30] sm:$0xff]
        %v2561 = vld [vmem:[#allocation4 + $0x40] sm:$0xff]
        %v2562 = vld [vmem:[#allocation4 + $0x50] sm:$0xff]
        %v2563 = vld [vmem:[#allocation4 + $0x60] sm:$0xff]
        %v2564 = vld [vmem:[#allocation4 + $0x70] sm:$0xff]
        %v2565 = vld [vmem:[%s3] sm:$0xff]
        %v2566 = vld [vmem:[%s3 + $0x8] sm:$0xff]
        %v2567 = vld [vmem:[%s3 + $0x10] sm:$0xff]
        %v2568 = vld [vmem:[%s3 + $0x18] sm:$0xff]
        %v2569 = vld [vmem:[#allocation4 + $0x1] sm:$0xff]
        %v2570 = vld [vmem:[#allocation4 + $0x11] sm:$0xff]
        %v2571 = vld [vmem:[#allocation4 + $0x21] sm:$0xff]
        %v2572 = vld [vmem:[#allocation4 + $0x31] sm:$0xff]
        %v2573 = vld [vmem:[#allocation4 + $0x41] sm:$0xff]
        %v2574 = vld [vmem:[#allocation4 + $0x51] sm:$0xff]
        %v2575 = vld [vmem:[#allocation4 + $0x61] sm:$0xff]
        %v2576 = vld [vmem:[#allocation4 + $0x71] sm:$0xff]
        %s2577 = scalar_lea.vmem %s3, 32
        %v2578 = vld [vmem:[%s2577] sm:$0xff]
        %v2579 = vld [vmem:[%s2577 + $0x8] sm:$0xff]
        %v2580 = vld [vmem:[%s2577 + $0x10] sm:$0xff]
        %v2581 = vld [vmem:[%s2577 + $0x18] sm:$0xff]
        %v2583 = vsel %vm527, %v2569, 0
        %v2586 = vsel %vm527, %v2570, 0
        %v2589 = vsel %vm527, %v2571, 0
        %v2592 = vsel %vm527, %v2572, 0
        %v2595 = vsel %vm527, %v2573, 0
        %v2598 = vsel %vm527, %v2574, 0
        %v2601 = vsel %vm527, %v2575, 0
        %v2604 = vsel %vm527, %v2576, 0
        %2606 = vmatprep.subr.mxu0 0.0
        %2607 = vmatpush1.msra.mxu0 0.0
        %2608 = vmatprep.subr.mxu0 0.0
        %2609 = vmatpush1.msra.mxu0 0.0
        %2610 = vmatprep.subr.mxu0 0.0
        %2611 = vmatpush1.msra.mxu0 0.0
        %2612 = vmatprep.subr.mxu0 0.0
        %2613 = vmatpush1.msra.mxu0 0.0
        %2614 = vmatprep.subr.mxu0 0.0
        %2615 = vmatpush1.msra.mxu0 0.0
        %2616 = vmatprep.subr.mxu0 0.0
        %2617 = vmatpush1.msra.mxu0 0.0
        %2618 = vmatprep.subr.mxu0 0.0
        %2619 = vmatpush1.msra.mxu0 0.0
        %2620 = vmatprep.subr.mxu0 0.0
        %2621 = vmatpush1.msra.mxu0 0.0
        %2622 = vmatprep.subr.mxu0 0.0
        %2623 = vmatpush1.msra.mxu0 0.0
        %2624 = vmatprep.subr.mxu0 0.0
        %2625 = vmatpush1.msra.mxu0 0.0
        %2626 = vmatprep.subr.mxu0 0.0
        %2627 = vmatpush1.msra.mxu0 0.0
        %2628 = vmatprep.subr.mxu0 0.0
        %2629 = vmatpush1.msra.mxu0 0.0
        %2630 = vmatprep.subr.mxu0 0.0
        %2631 = vmatpush1.msra.mxu0 %v2581
        %2632 = vmatprep.subr.mxu0 0.0
        %2633 = vmatpush1.msra.mxu0 %v2580
        %2634 = vmatprep.subr.mxu0 0.0
        %2635 = vmatpush1.msra.mxu0 %v2579
        %2636 = vmatprep.subr.mxu0 0.0
        %2637 = vmatpush1.msra.mxu0 %v2578
        %2638 = vmatprep.subr.mxu0 0.0
        %2639 = vmatpush2.msra.mxu0 0.0
        %2640 = vmatprep.subr.mxu0 0.0
        %2641 = vmatpush2.msra.mxu0 0.0
        %2642 = vmatprep.subr.mxu0 0.0
        %2643 = vmatpush2.msra.mxu0 0.0
        %2644 = vmatprep.subr.mxu0 0.0
        %2645 = vmatpush2.msra.mxu0 0.0
        %2646 = vmatprep.subr.mxu0 0.0
        %2647 = vmatpush2.msra.mxu0 0.0
        %2648 = vmatprep.subr.mxu0 0.0
        %2649 = vmatpush2.msra.mxu0 0.0
        %2650 = vmatprep.subr.mxu0 0.0
        %2651 = vmatpush2.msra.mxu0 0.0
        %2652 = vmatprep.subr.mxu0 0.0
        %2653 = vmatpush2.msra.mxu0 0.0
        %2654 = vmatprep.subr.mxu0 0.0
        %2655 = vmatpush2.msra.mxu0 0.0
        %2656 = vmatprep.subr.mxu0 0.0
        %2657 = vmatpush2.msra.mxu0 0.0
        %2658 = vmatprep.subr.mxu0 0.0
        %2659 = vmatpush2.msra.mxu0 0.0
        %2660 = vmatprep.subr.mxu0 0.0
        %2661 = vmatpush2.msra.mxu0 0.0
        %2662 = vmatprep.subr.mxu0 0.0
        %2663 = vmatpush2.msra.mxu0 0.0
        %2664 = vmatprep.subr.mxu0 0.0
        %2665 = vmatpush2.msra.mxu0 0.0
        %2666 = vmatprep.subr.mxu0 0.0
        %2667 = vmatpush2.msra.mxu0 0.0
        %2668 = vmatprep.subr.mxu0 0.0
        %2669 = vmatpush2.msra.mxu0 0.0
        %2670 = vmatprep.mubr.f32.mxu0 0.0
        %2671 = vmatmul.mubr.f32.gmra.mxu0 %v2583
        %v2672 = vpop.f32.mrf.mxu0
        %v2673 = vadd.f32 0.0, %v2672
        %v2674 = vpop.f32.mrf.mxu0
        %2675 = vmatprep.mubr.f32.mxu0 0.0
        %2676 = vmatmul.mubr.f32.gmra.mxu0 %v2586
        %v2677 = vpop.f32.mrf.mxu0
        %v2678 = vadd.f32 0.0, %v2677
        %v2679 = vpop.f32.mrf.mxu0
        %2680 = vmatprep.mubr.f32.mxu0 0.0
        %2681 = vmatmul.mubr.f32.gmra.mxu0 %v2589
        %v2682 = vpop.f32.mrf.mxu0
        %v2683 = vadd.f32 0.0, %v2682
        %v2684 = vpop.f32.mrf.mxu0
        %2685 = vmatprep.mubr.f32.mxu0 0.0
        %2686 = vmatmul.mubr.f32.gmra.mxu0 %v2592
        %v2687 = vpop.f32.mrf.mxu0
        %v2688 = vadd.f32 0.0, %v2687
        %v2689 = vpop.f32.mrf.mxu0
        %2690 = vmatprep.mubr.f32.mxu0 0.0
        %2691 = vmatmul.mubr.f32.gmra.mxu0 %v2595
        %v2692 = vpop.f32.mrf.mxu0
        %v2693 = vadd.f32 0.0, %v2692
        %v2694 = vpop.f32.mrf.mxu0
        %2695 = vmatprep.mubr.f32.mxu0 0.0
        %2696 = vmatmul.mubr.f32.gmra.mxu0 %v2598
        %v2697 = vpop.f32.mrf.mxu0
        %v2698 = vadd.f32 0.0, %v2697
        %v2699 = vpop.f32.mrf.mxu0
        %2700 = vmatprep.mubr.f32.mxu0 0.0
        %2701 = vmatmul.mubr.f32.gmra.mxu0 %v2601
        %v2702 = vpop.f32.mrf.mxu0
        %v2703 = vadd.f32 0.0, %v2702
        %v2704 = vpop.f32.mrf.mxu0
        %2705 = vmatprep.mubr.f32.mxu0 0.0
        %2706 = vmatmul.mubr.f32.gmra.mxu0 %v2604
        %v2707 = vpop.f32.mrf.mxu0
        %v2708 = vadd.f32 0.0, %v2707
        %v2709 = vpop.f32.mrf.mxu0
        %2710 = vdwg.mxu0
        %v2712 = vsel %vm527, %v2557, 0
        %v2715 = vsel %vm527, %v2558, 0
        %v2718 = vsel %vm527, %v2559, 0
        %v2721 = vsel %vm527, %v2560, 0
        %v2724 = vsel %vm527, %v2561, 0
        %v2727 = vsel %vm527, %v2562, 0
        %v2730 = vsel %vm527, %v2563, 0
        %v2733 = vsel %vm527, %v2564, 0
        %2735 = vmatprep.subr.mxu0 0.0
        %2736 = vmatpush1.msra.mxu0 0.0
        %2737 = vmatprep.subr.mxu0 0.0
        %2738 = vmatpush1.msra.mxu0 0.0
        %2739 = vmatprep.subr.mxu0 0.0
        %2740 = vmatpush1.msra.mxu0 0.0
        %2741 = vmatprep.subr.mxu0 0.0
        %2742 = vmatpush1.msra.mxu0 0.0
        %2743 = vmatprep.subr.mxu0 0.0
        %2744 = vmatpush1.msra.mxu0 0.0
        %2745 = vmatprep.subr.mxu0 0.0
        %2746 = vmatpush1.msra.mxu0 0.0
        %2747 = vmatprep.subr.mxu0 0.0
        %2748 = vmatpush1.msra.mxu0 0.0
        %2749 = vmatprep.subr.mxu0 0.0
        %2750 = vmatpush1.msra.mxu0 0.0
        %2751 = vmatprep.subr.mxu0 0.0
        %2752 = vmatpush1.msra.mxu0 0.0
        %2753 = vmatprep.subr.mxu0 0.0
        %2754 = vmatpush1.msra.mxu0 0.0
        %2755 = vmatprep.subr.mxu0 0.0
        %2756 = vmatpush1.msra.mxu0 0.0
        %2757 = vmatprep.subr.mxu0 0.0
        %2758 = vmatpush1.msra.mxu0 0.0
        %2759 = vmatprep.subr.mxu0 0.0
        %2760 = vmatpush1.msra.mxu0 %v2568
        %2761 = vmatprep.subr.mxu0 0.0
        %2762 = vmatpush1.msra.mxu0 %v2567
        %2763 = vmatprep.subr.mxu0 0.0
        %2764 = vmatpush1.msra.mxu0 %v2566
        %2765 = vmatprep.subr.mxu0 0.0
        %2766 = vmatpush1.msra.mxu0 %v2565
        %2767 = vmatprep.subr.mxu0 0.0
        %2768 = vmatpush2.msra.mxu0 0.0
        %2769 = vmatprep.subr.mxu0 0.0
        %2770 = vmatpush2.msra.mxu0 0.0
        %2771 = vmatprep.subr.mxu0 0.0
        %2772 = vmatpush2.msra.mxu0 0.0
        %2773 = vmatprep.subr.mxu0 0.0
        %2774 = vmatpush2.msra.mxu0 0.0
        %2775 = vmatprep.subr.mxu0 0.0
        %2776 = vmatpush2.msra.mxu0 0.0
        %2777 = vmatprep.subr.mxu0 0.0
        %2778 = vmatpush2.msra.mxu0 0.0
        %2779 = vmatprep.subr.mxu0 0.0
        %2780 = vmatpush2.msra.mxu0 0.0
        %2781 = vmatprep.subr.mxu0 0.0
        %2782 = vmatpush2.msra.mxu0 0.0
        %2783 = vmatprep.subr.mxu0 0.0
        %2784 = vmatpush2.msra.mxu0 0.0
        %2785 = vmatprep.subr.mxu0 0.0
        %2786 = vmatpush2.msra.mxu0 0.0
        %2787 = vmatprep.subr.mxu0 0.0
        %2788 = vmatpush2.msra.mxu0 0.0
        %2789 = vmatprep.subr.mxu0 0.0
        %2790 = vmatpush2.msra.mxu0 0.0
        %2791 = vmatprep.subr.mxu0 0.0
        %2792 = vmatpush2.msra.mxu0 0.0
        %2793 = vmatprep.subr.mxu0 0.0
        %2794 = vmatpush2.msra.mxu0 0.0
        %2795 = vmatprep.subr.mxu0 0.0
        %2796 = vmatpush2.msra.mxu0 0.0
        %2797 = vmatprep.subr.mxu0 0.0
        %2798 = vmatpush2.msra.mxu0 0.0
        %2799 = vmatprep.mubr.f32.mxu0 0.0
        %2800 = vmatmul.mubr.f32.gmra.mxu0 %v2712
        %v2801 = vpop.f32.mrf.mxu0
        %v2802 = vadd.f32 %v2673, %v2801
        %v2803 = vpop.f32.mrf.mxu0
        %2804 = vmatprep.mubr.f32.mxu0 0.0
        %2805 = vmatmul.mubr.f32.gmra.mxu0 %v2715
        %v2806 = vpop.f32.mrf.mxu0
        %v2807 = vadd.f32 %v2678, %v2806
        %v2808 = vpop.f32.mrf.mxu0
        %2809 = vmatprep.mubr.f32.mxu0 0.0
        %2810 = vmatmul.mubr.f32.gmra.mxu0 %v2718
        %v2811 = vpop.f32.mrf.mxu0
        %v2812 = vadd.f32 %v2683, %v2811
        %v2813 = vpop.f32.mrf.mxu0
        %2814 = vmatprep.mubr.f32.mxu0 0.0
        %2815 = vmatmul.mubr.f32.gmra.mxu0 %v2721
        %v2816 = vpop.f32.mrf.mxu0
        %v2817 = vadd.f32 %v2688, %v2816
        %v2818 = vpop.f32.mrf.mxu0
        %2819 = vmatprep.mubr.f32.mxu0 0.0
        %2820 = vmatmul.mubr.f32.gmra.mxu0 %v2724
        %v2821 = vpop.f32.mrf.mxu0
        %v2822 = vadd.f32 %v2693, %v2821
        %v2823 = vpop.f32.mrf.mxu0
        %2824 = vmatprep.mubr.f32.mxu0 0.0
        %2825 = vmatmul.mubr.f32.gmra.mxu0 %v2727
        %v2826 = vpop.f32.mrf.mxu0
        %v2827 = vadd.f32 %v2698, %v2826
        %v2828 = vpop.f32.mrf.mxu0
        %2829 = vmatprep.mubr.f32.mxu0 0.0
        %2830 = vmatmul.mubr.f32.gmra.mxu0 %v2730
        %v2831 = vpop.f32.mrf.mxu0
        %v2832 = vadd.f32 %v2703, %v2831
        %v2833 = vpop.f32.mrf.mxu0
        %2834 = vmatprep.mubr.f32.mxu0 0.0
        %2835 = vmatmul.mubr.f32.gmra.mxu0 %v2733
        %v2836 = vpop.f32.mrf.mxu0
        %v2837 = vadd.f32 %v2708, %v2836
        %v2838 = vpop.f32.mrf.mxu0
        %2839 = vdwg.mxu0
        %v2840 = vld [vmem:[#allocation4 + $0x2] sm:$0xff]
        %v2841 = vld [vmem:[#allocation4 + $0x12] sm:$0xff]
        %v2842 = vld [vmem:[#allocation4 + $0x22] sm:$0xff]
        %v2843 = vld [vmem:[#allocation4 + $0x32] sm:$0xff]
        %v2844 = vld [vmem:[#allocation4 + $0x42] sm:$0xff]
        %v2845 = vld [vmem:[#allocation4 + $0x52] sm:$0xff]
        %v2846 = vld [vmem:[#allocation4 + $0x62] sm:$0xff]
        %v2847 = vld [vmem:[#allocation4 + $0x72] sm:$0xff]
        %s2848 = scalar_lea.vmem %s3, 64
        %v2849 = vld [vmem:[%s2848] sm:$0xff]
        %v2850 = vld [vmem:[%s2848 + $0x8] sm:$0xff]
        %v2851 = vld [vmem:[%s2848 + $0x10] sm:$0xff]
        %v2852 = vld [vmem:[%s2848 + $0x18] sm:$0xff]
        %v2854 = vsel %vm527, %v2840, 0
        %v2857 = vsel %vm527, %v2841, 0
        %v2860 = vsel %vm527, %v2842, 0
        %v2863 = vsel %vm527, %v2843, 0
        %v2866 = vsel %vm527, %v2844, 0
        %v2869 = vsel %vm527, %v2845, 0
        %v2872 = vsel %vm527, %v2846, 0
        %v2875 = vsel %vm527, %v2847, 0
        %2877 = vmatprep.subr.mxu0 0.0
        %2878 = vmatpush1.msra.mxu0 0.0
        %2879 = vmatprep.subr.mxu0 0.0
        %2880 = vmatpush1.msra.mxu0 0.0
        %2881 = vmatprep.subr.mxu0 0.0
        %2882 = vmatpush1.msra.mxu0 0.0
        %2883 = vmatprep.subr.mxu0 0.0
        %2884 = vmatpush1.msra.mxu0 0.0
        %2885 = vmatprep.subr.mxu0 0.0
        %2886 = vmatpush1.msra.mxu0 0.0
        %2887 = vmatprep.subr.mxu0 0.0
        %2888 = vmatpush1.msra.mxu0 0.0
        %2889 = vmatprep.subr.mxu0 0.0
        %2890 = vmatpush1.msra.mxu0 0.0
        %2891 = vmatprep.subr.mxu0 0.0
        %2892 = vmatpush1.msra.mxu0 0.0
        %2893 = vmatprep.subr.mxu0 0.0
        %2894 = vmatpush1.msra.mxu0 0.0
        %2895 = vmatprep.subr.mxu0 0.0
        %2896 = vmatpush1.msra.mxu0 0.0
        %2897 = vmatprep.subr.mxu0 0.0
        %2898 = vmatpush1.msra.mxu0 0.0
        %2899 = vmatprep.subr.mxu0 0.0
        %2900 = vmatpush1.msra.mxu0 0.0
        %2901 = vmatprep.subr.mxu0 0.0
        %2902 = vmatpush1.msra.mxu0 %v2852
        %2903 = vmatprep.subr.mxu0 0.0
        %2904 = vmatpush1.msra.mxu0 %v2851
        %2905 = vmatprep.subr.mxu0 0.0
        %2906 = vmatpush1.msra.mxu0 %v2850
        %2907 = vmatprep.subr.mxu0 0.0
        %2908 = vmatpush1.msra.mxu0 %v2849
        %2909 = vmatprep.subr.mxu0 0.0
        %2910 = vmatpush2.msra.mxu0 0.0
        %2911 = vmatprep.subr.mxu0 0.0
        %2912 = vmatpush2.msra.mxu0 0.0
        %2913 = vmatprep.subr.mxu0 0.0
        %2914 = vmatpush2.msra.mxu0 0.0
        %2915 = vmatprep.subr.mxu0 0.0
        %2916 = vmatpush2.msra.mxu0 0.0
        %2917 = vmatprep.subr.mxu0 0.0
        %2918 = vmatpush2.msra.mxu0 0.0
        %2919 = vmatprep.subr.mxu0 0.0
        %2920 = vmatpush2.msra.mxu0 0.0
        %2921 = vmatprep.subr.mxu0 0.0
        %2922 = vmatpush2.msra.mxu0 0.0
        %2923 = vmatprep.subr.mxu0 0.0
        %2924 = vmatpush2.msra.mxu0 0.0
        %2925 = vmatprep.subr.mxu0 0.0
        %2926 = vmatpush2.msra.mxu0 0.0
        %2927 = vmatprep.subr.mxu0 0.0
        %2928 = vmatpush2.msra.mxu0 0.0
        %2929 = vmatprep.subr.mxu0 0.0
        %2930 = vmatpush2.msra.mxu0 0.0
        %2931 = vmatprep.subr.mxu0 0.0
        %2932 = vmatpush2.msra.mxu0 0.0
        %2933 = vmatprep.subr.mxu0 0.0
        %2934 = vmatpush2.msra.mxu0 0.0
        %2935 = vmatprep.subr.mxu0 0.0
        %2936 = vmatpush2.msra.mxu0 0.0
        %2937 = vmatprep.subr.mxu0 0.0
        %2938 = vmatpush2.msra.mxu0 0.0
        %2939 = vmatprep.subr.mxu0 0.0
        %2940 = vmatpush2.msra.mxu0 0.0
        %2941 = vmatprep.mubr.f32.mxu0 0.0
        %2942 = vmatmul.mubr.f32.gmra.mxu0 %v2854
        %v2943 = vpop.f32.mrf.mxu0
        %v2944 = vadd.f32 0.0, %v2943
        %v2945 = vpop.f32.mrf.mxu0
        %2946 = vmatprep.mubr.f32.mxu0 0.0
        %2947 = vmatmul.mubr.f32.gmra.mxu0 %v2857
        %v2948 = vpop.f32.mrf.mxu0
        %v2949 = vadd.f32 0.0, %v2948
        %v2950 = vpop.f32.mrf.mxu0
        %2951 = vmatprep.mubr.f32.mxu0 0.0
        %2952 = vmatmul.mubr.f32.gmra.mxu0 %v2860
        %v2953 = vpop.f32.mrf.mxu0
        %v2954 = vadd.f32 0.0, %v2953
        %v2955 = vpop.f32.mrf.mxu0
        %2956 = vmatprep.mubr.f32.mxu0 0.0
        %2957 = vmatmul.mubr.f32.gmra.mxu0 %v2863
        %v2958 = vpop.f32.mrf.mxu0
        %v2959 = vadd.f32 0.0, %v2958
        %v2960 = vpop.f32.mrf.mxu0
        %2961 = vmatprep.mubr.f32.mxu0 0.0
        %2962 = vmatmul.mubr.f32.gmra.mxu0 %v2866
        %v2963 = vpop.f32.mrf.mxu0
        %v2964 = vadd.f32 0.0, %v2963
        %v2965 = vpop.f32.mrf.mxu0
        %2966 = vmatprep.mubr.f32.mxu0 0.0
        %2967 = vmatmul.mubr.f32.gmra.mxu0 %v2869
        %v2968 = vpop.f32.mrf.mxu0
        %v2969 = vadd.f32 0.0, %v2968
        %v2970 = vpop.f32.mrf.mxu0
        %2971 = vmatprep.mubr.f32.mxu0 0.0
        %2972 = vmatmul.mubr.f32.gmra.mxu0 %v2872
        %v2973 = vpop.f32.mrf.mxu0
        %v2974 = vadd.f32 0.0, %v2973
        %v2975 = vpop.f32.mrf.mxu0
        %2976 = vmatprep.mubr.f32.mxu0 0.0
        %2977 = vmatmul.mubr.f32.gmra.mxu0 %v2875
        %v2978 = vpop.f32.mrf.mxu0
        %v2979 = vadd.f32 0.0, %v2978
        %v2980 = vpop.f32.mrf.mxu0
        %2981 = vdwg.mxu0
        %v2982 = vadd.f32 %v2802, %v2944
        %v2983 = vadd.f32 %v2807, %v2949
        %v2984 = vadd.f32 %v2812, %v2954
        %v2985 = vadd.f32 %v2817, %v2959
        %v2986 = vadd.f32 %v2822, %v2964
        %v2987 = vadd.f32 %v2827, %v2969
        %v2988 = vadd.f32 %v2832, %v2974
        %v2989 = vadd.f32 %v2837, %v2979
        %v2990 = vld [vmem:[%s2548] sm:$0xff]
        %v2991 = vld [vmem:[%s2548 + $0x10] sm:$0xff]
        %v2992 = vld [vmem:[%s2548 + $0x20] sm:$0xff]
        %v2993 = vld [vmem:[%s2548 + $0x30] sm:$0xff]
        %v2994 = vld [vmem:[%s2548 + $0x40] sm:$0xff]
        %v2995 = vld [vmem:[%s2548 + $0x50] sm:$0xff]
        %v2996 = vld [vmem:[%s2548 + $0x60] sm:$0xff]
        %v2997 = vld [vmem:[%s2548 + $0x70] sm:$0xff]
        %s2998 = scalar_lea.vmem %s3, 96
        %v2999 = vld [vmem:[%s2998] sm:$0xff]
        %v3000 = vld [vmem:[%s2998 + $0x8] sm:$0xff]
        %v3001 = vld [vmem:[%s2998 + $0x10] sm:$0xff]
        %v3002 = vld [vmem:[%s2998 + $0x18] sm:$0xff]
        %v3004 = vsel %vm527, %v2990, 0
        %v3007 = vsel %vm527, %v2991, 0
        %v3010 = vsel %vm527, %v2992, 0
        %v3013 = vsel %vm527, %v2993, 0
        %v3016 = vsel %vm527, %v2994, 0
        %v3019 = vsel %vm527, %v2995, 0
        %v3022 = vsel %vm527, %v2996, 0
        %v3025 = vsel %vm527, %v2997, 0
        %3027 = vmatprep.subr.mxu0 0.0
        %3028 = vmatpush1.msra.mxu0 0.0
        %3029 = vmatprep.subr.mxu0 0.0
        %3030 = vmatpush1.msra.mxu0 0.0
        %3031 = vmatprep.subr.mxu0 0.0
        %3032 = vmatpush1.msra.mxu0 0.0
        %3033 = vmatprep.subr.mxu0 0.0
        %3034 = vmatpush1.msra.mxu0 0.0
        %3035 = vmatprep.subr.mxu0 0.0
        %3036 = vmatpush1.msra.mxu0 0.0
        %3037 = vmatprep.subr.mxu0 0.0
        %3038 = vmatpush1.msra.mxu0 0.0
        %3039 = vmatprep.subr.mxu0 0.0
        %3040 = vmatpush1.msra.mxu0 0.0
        %3041 = vmatprep.subr.mxu0 0.0
        %3042 = vmatpush1.msra.mxu0 0.0
        %3043 = vmatprep.subr.mxu0 0.0
        %3044 = vmatpush1.msra.mxu0 0.0
        %3045 = vmatprep.subr.mxu0 0.0
        %3046 = vmatpush1.msra.mxu0 0.0
        %3047 = vmatprep.subr.mxu0 0.0
        %3048 = vmatpush1.msra.mxu0 0.0
        %3049 = vmatprep.subr.mxu0 0.0
        %3050 = vmatpush1.msra.mxu0 0.0
        %3051 = vmatprep.subr.mxu0 0.0
        %3052 = vmatpush1.msra.mxu0 %v3002
        %3053 = vmatprep.subr.mxu0 0.0
        %3054 = vmatpush1.msra.mxu0 %v3001
        %3055 = vmatprep.subr.mxu0 0.0
        %3056 = vmatpush1.msra.mxu0 %v3000
        %3057 = vmatprep.subr.mxu0 0.0
        %3058 = vmatpush1.msra.mxu0 %v2999
        %3059 = vmatprep.subr.mxu0 0.0
        %3060 = vmatpush2.msra.mxu0 0.0
        %3061 = vmatprep.subr.mxu0 0.0
        %3062 = vmatpush2.msra.mxu0 0.0
        %3063 = vmatprep.subr.mxu0 0.0
        %3064 = vmatpush2.msra.mxu0 0.0
        %3065 = vmatprep.subr.mxu0 0.0
        %3066 = vmatpush2.msra.mxu0 0.0
        %3067 = vmatprep.subr.mxu0 0.0
        %3068 = vmatpush2.msra.mxu0 0.0
        %3069 = vmatprep.subr.mxu0 0.0
        %3070 = vmatpush2.msra.mxu0 0.0
        %3071 = vmatprep.subr.mxu0 0.0
        %3072 = vmatpush2.msra.mxu0 0.0
        %3073 = vmatprep.subr.mxu0 0.0
        %3074 = vmatpush2.msra.mxu0 0.0
        %3075 = vmatprep.subr.mxu0 0.0
        %3076 = vmatpush2.msra.mxu0 0.0
        %3077 = vmatprep.subr.mxu0 0.0
        %3078 = vmatpush2.msra.mxu0 0.0
        %3079 = vmatprep.subr.mxu0 0.0
        %3080 = vmatpush2.msra.mxu0 0.0
        %3081 = vmatprep.subr.mxu0 0.0
        %3082 = vmatpush2.msra.mxu0 0.0
        %3083 = vmatprep.subr.mxu0 0.0
        %3084 = vmatpush2.msra.mxu0 0.0
        %3085 = vmatprep.subr.mxu0 0.0
        %3086 = vmatpush2.msra.mxu0 0.0
        %3087 = vmatprep.subr.mxu0 0.0
        %3088 = vmatpush2.msra.mxu0 0.0
        %3089 = vmatprep.subr.mxu0 0.0
        %3090 = vmatpush2.msra.mxu0 0.0
        %3091 = vmatprep.mubr.f32.mxu0 0.0
        %3092 = vmatmul.mubr.f32.gmra.mxu0 %v3004
        %v3093 = vpop.f32.mrf.mxu0
        %v3094 = vadd.f32 0.0, %v3093
        %v3095 = vpop.f32.mrf.mxu0
        %3096 = vmatprep.mubr.f32.mxu0 0.0
        %3097 = vmatmul.mubr.f32.gmra.mxu0 %v3007
        %v3098 = vpop.f32.mrf.mxu0
        %v3099 = vadd.f32 0.0, %v3098
        %v3100 = vpop.f32.mrf.mxu0
        %3101 = vmatprep.mubr.f32.mxu0 0.0
        %3102 = vmatmul.mubr.f32.gmra.mxu0 %v3010
        %v3103 = vpop.f32.mrf.mxu0
        %v3104 = vadd.f32 0.0, %v3103
        %v3105 = vpop.f32.mrf.mxu0
        %3106 = vmatprep.mubr.f32.mxu0 0.0
        %3107 = vmatmul.mubr.f32.gmra.mxu0 %v3013
        %v3108 = vpop.f32.mrf.mxu0
        %v3109 = vadd.f32 0.0, %v3108
        %v3110 = vpop.f32.mrf.mxu0
        %3111 = vmatprep.mubr.f32.mxu0 0.0
        %3112 = vmatmul.mubr.f32.gmra.mxu0 %v3016
        %v3113 = vpop.f32.mrf.mxu0
        %v3114 = vadd.f32 0.0, %v3113
        %v3115 = vpop.f32.mrf.mxu0
        %3116 = vmatprep.mubr.f32.mxu0 0.0
        %3117 = vmatmul.mubr.f32.gmra.mxu0 %v3019
        %v3118 = vpop.f32.mrf.mxu0
        %v3119 = vadd.f32 0.0, %v3118
        %v3120 = vpop.f32.mrf.mxu0
        %3121 = vmatprep.mubr.f32.mxu0 0.0
        %3122 = vmatmul.mubr.f32.gmra.mxu0 %v3022
        %v3123 = vpop.f32.mrf.mxu0
        %v3124 = vadd.f32 0.0, %v3123
        %v3125 = vpop.f32.mrf.mxu0
        %3126 = vmatprep.mubr.f32.mxu0 0.0
        %3127 = vmatmul.mubr.f32.gmra.mxu0 %v3025
        %v3128 = vpop.f32.mrf.mxu0
        %v3129 = vadd.f32 0.0, %v3128
        %v3130 = vpop.f32.mrf.mxu0
        %3131 = vdwg.mxu0
        %v3132 = vadd.f32 %v2982, %v3094
        %v3133 = vadd.f32 %v2983, %v3099
        %v3134 = vadd.f32 %v2984, %v3104
        %v3135 = vadd.f32 %v2985, %v3109
        %v3136 = vadd.f32 %v2986, %v3114
        %v3137 = vadd.f32 %v2987, %v3119
        %v3138 = vadd.f32 %v2988, %v3124
        %v3139 = vadd.f32 %v2989, %v3129
        %v3140 = vld [vmem:[%s2548 + $0x1] sm:$0xff]
        %v3141 = vld [vmem:[%s2548 + $0x11] sm:$0xff]
        %v3142 = vld [vmem:[%s2548 + $0x21] sm:$0xff]
        %v3143 = vld [vmem:[%s2548 + $0x31] sm:$0xff]
        %v3144 = vld [vmem:[%s2548 + $0x41] sm:$0xff]
        %v3145 = vld [vmem:[%s2548 + $0x51] sm:$0xff]
        %v3146 = vld [vmem:[%s2548 + $0x61] sm:$0xff]
        %v3147 = vld [vmem:[%s2548 + $0x71] sm:$0xff]
        %s3148 = scalar_lea.vmem %s3, 128
        %v3149 = vld [vmem:[%s3148] sm:$0xff]
        %v3150 = vld [vmem:[%s3148 + $0x8] sm:$0xff]
        %v3151 = vld [vmem:[%s3148 + $0x10] sm:$0xff]
        %v3152 = vld [vmem:[%s3148 + $0x18] sm:$0xff]
        %v3154 = vsel %vm527, %v3140, 0
        %v3157 = vsel %vm527, %v3141, 0
        %v3160 = vsel %vm527, %v3142, 0
        %v3163 = vsel %vm527, %v3143, 0
        %v3166 = vsel %vm527, %v3144, 0
        %v3169 = vsel %vm527, %v3145, 0
        %v3172 = vsel %vm527, %v3146, 0
        %v3175 = vsel %vm527, %v3147, 0
        %3177 = vmatprep.subr.mxu0 0.0
        %3178 = vmatpush1.msra.mxu0 0.0
        %3179 = vmatprep.subr.mxu0 0.0
        %3180 = vmatpush1.msra.mxu0 0.0
        %3181 = vmatprep.subr.mxu0 0.0
        %3182 = vmatpush1.msra.mxu0 0.0
        %3183 = vmatprep.subr.mxu0 0.0
        %3184 = vmatpush1.msra.mxu0 0.0
        %3185 = vmatprep.subr.mxu0 0.0
        %3186 = vmatpush1.msra.mxu0 0.0
        %3187 = vmatprep.subr.mxu0 0.0
        %3188 = vmatpush1.msra.mxu0 0.0
        %3189 = vmatprep.subr.mxu0 0.0
        %3190 = vmatpush1.msra.mxu0 0.0
        %3191 = vmatprep.subr.mxu0 0.0
        %3192 = vmatpush1.msra.mxu0 0.0
        %3193 = vmatprep.subr.mxu0 0.0
        %3194 = vmatpush1.msra.mxu0 0.0
        %3195 = vmatprep.subr.mxu0 0.0
        %3196 = vmatpush1.msra.mxu0 0.0
        %3197 = vmatprep.subr.mxu0 0.0
        %3198 = vmatpush1.msra.mxu0 0.0
        %3199 = vmatprep.subr.mxu0 0.0
        %3200 = vmatpush1.msra.mxu0 0.0
        %3201 = vmatprep.subr.mxu0 0.0
        %3202 = vmatpush1.msra.mxu0 %v3152
        %3203 = vmatprep.subr.mxu0 0.0
        %3204 = vmatpush1.msra.mxu0 %v3151
        %3205 = vmatprep.subr.mxu0 0.0
        %3206 = vmatpush1.msra.mxu0 %v3150
        %3207 = vmatprep.subr.mxu0 0.0
        %3208 = vmatpush1.msra.mxu0 %v3149
        %3209 = vmatprep.subr.mxu0 0.0
        %3210 = vmatpush2.msra.mxu0 0.0
        %3211 = vmatprep.subr.mxu0 0.0
        %3212 = vmatpush2.msra.mxu0 0.0
        %3213 = vmatprep.subr.mxu0 0.0
        %3214 = vmatpush2.msra.mxu0 0.0
        %3215 = vmatprep.subr.mxu0 0.0
        %3216 = vmatpush2.msra.mxu0 0.0
        %3217 = vmatprep.subr.mxu0 0.0
        %3218 = vmatpush2.msra.mxu0 0.0
        %3219 = vmatprep.subr.mxu0 0.0
        %3220 = vmatpush2.msra.mxu0 0.0
        %3221 = vmatprep.subr.mxu0 0.0
        %3222 = vmatpush2.msra.mxu0 0.0
        %3223 = vmatprep.subr.mxu0 0.0
        %3224 = vmatpush2.msra.mxu0 0.0
        %3225 = vmatprep.subr.mxu0 0.0
        %3226 = vmatpush2.msra.mxu0 0.0
        %3227 = vmatprep.subr.mxu0 0.0
        %3228 = vmatpush2.msra.mxu0 0.0
        %3229 = vmatprep.subr.mxu0 0.0
        %3230 = vmatpush2.msra.mxu0 0.0
        %3231 = vmatprep.subr.mxu0 0.0
        %3232 = vmatpush2.msra.mxu0 0.0
        %3233 = vmatprep.subr.mxu0 0.0
        %3234 = vmatpush2.msra.mxu0 0.0
        %3235 = vmatprep.subr.mxu0 0.0
        %3236 = vmatpush2.msra.mxu0 0.0
        %3237 = vmatprep.subr.mxu0 0.0
        %3238 = vmatpush2.msra.mxu0 0.0
        %3239 = vmatprep.subr.mxu0 0.0
        %3240 = vmatpush2.msra.mxu0 0.0
        %3241 = vmatprep.mubr.f32.mxu0 0.0
        %3242 = vmatmul.mubr.f32.gmra.mxu0 %v3154
        %v3243 = vpop.f32.mrf.mxu0
        %v3244 = vadd.f32 0.0, %v3243
        %v3245 = vpop.f32.mrf.mxu0
        %3246 = vmatprep.mubr.f32.mxu0 0.0
        %3247 = vmatmul.mubr.f32.gmra.mxu0 %v3157
        %v3248 = vpop.f32.mrf.mxu0
        %v3249 = vadd.f32 0.0, %v3248
        %v3250 = vpop.f32.mrf.mxu0
        %3251 = vmatprep.mubr.f32.mxu0 0.0
        %3252 = vmatmul.mubr.f32.gmra.mxu0 %v3160
        %v3253 = vpop.f32.mrf.mxu0
        %v3254 = vadd.f32 0.0, %v3253
        %v3255 = vpop.f32.mrf.mxu0
        %3256 = vmatprep.mubr.f32.mxu0 0.0
        %3257 = vmatmul.mubr.f32.gmra.mxu0 %v3163
        %v3258 = vpop.f32.mrf.mxu0
        %v3259 = vadd.f32 0.0, %v3258
        %v3260 = vpop.f32.mrf.mxu0
        %3261 = vmatprep.mubr.f32.mxu0 0.0
        %3262 = vmatmul.mubr.f32.gmra.mxu0 %v3166
        %v3263 = vpop.f32.mrf.mxu0
        %v3264 = vadd.f32 0.0, %v3263
        %v3265 = vpop.f32.mrf.mxu0
        %3266 = vmatprep.mubr.f32.mxu0 0.0
        %3267 = vmatmul.mubr.f32.gmra.mxu0 %v3169
        %v3268 = vpop.f32.mrf.mxu0
        %v3269 = vadd.f32 0.0, %v3268
        %v3270 = vpop.f32.mrf.mxu0
        %3271 = vmatprep.mubr.f32.mxu0 0.0
        %3272 = vmatmul.mubr.f32.gmra.mxu0 %v3172
        %v3273 = vpop.f32.mrf.mxu0
        %v3274 = vadd.f32 0.0, %v3273
        %v3275 = vpop.f32.mrf.mxu0
        %3276 = vmatprep.mubr.f32.mxu0 0.0
        %3277 = vmatmul.mubr.f32.gmra.mxu0 %v3175
        %v3278 = vpop.f32.mrf.mxu0
        %v3279 = vadd.f32 0.0, %v3278
        %v3280 = vpop.f32.mrf.mxu0
        %3281 = vdwg.mxu0
        %v3282 = vadd.f32 %v3132, %v3244
        %v3283 = vadd.f32 %v3133, %v3249
        %v3284 = vadd.f32 %v3134, %v3254
        %v3285 = vadd.f32 %v3135, %v3259
        %v3286 = vadd.f32 %v3136, %v3264
        %v3287 = vadd.f32 %v3137, %v3269
        %v3288 = vadd.f32 %v3138, %v3274
        %v3289 = vadd.f32 %v3139, %v3279
        %v3290 = vld [vmem:[%s2548 + $0x2] sm:$0xff]
        %v3291 = vld [vmem:[%s2548 + $0x12] sm:$0xff]
        %v3292 = vld [vmem:[%s2548 + $0x22] sm:$0xff]
        %v3293 = vld [vmem:[%s2548 + $0x32] sm:$0xff]
        %v3294 = vld [vmem:[%s2548 + $0x42] sm:$0xff]
        %v3295 = vld [vmem:[%s2548 + $0x52] sm:$0xff]
        %v3296 = vld [vmem:[%s2548 + $0x62] sm:$0xff]
        %v3297 = vld [vmem:[%s2548 + $0x72] sm:$0xff]
        %s3298 = scalar_lea.vmem %s3, 160
        %v3299 = vld [vmem:[%s3298] sm:$0xff]
        %v3300 = vld [vmem:[%s3298 + $0x8] sm:$0xff]
        %v3301 = vld [vmem:[%s3298 + $0x10] sm:$0xff]
        %v3302 = vld [vmem:[%s3298 + $0x18] sm:$0xff]
        %v3304 = vsel %vm527, %v3290, 0
        %v3307 = vsel %vm527, %v3291, 0
        %v3310 = vsel %vm527, %v3292, 0
        %v3313 = vsel %vm527, %v3293, 0
        %v3316 = vsel %vm527, %v3294, 0
        %v3319 = vsel %vm527, %v3295, 0
        %v3322 = vsel %vm527, %v3296, 0
        %v3325 = vsel %vm527, %v3297, 0
        %3327 = vmatprep.subr.mxu0 0.0
        %3328 = vmatpush1.msra.mxu0 0.0
        %3329 = vmatprep.subr.mxu0 0.0
        %3330 = vmatpush1.msra.mxu0 0.0
        %3331 = vmatprep.subr.mxu0 0.0
        %3332 = vmatpush1.msra.mxu0 0.0
        %3333 = vmatprep.subr.mxu0 0.0
        %3334 = vmatpush1.msra.mxu0 0.0
        %3335 = vmatprep.subr.mxu0 0.0
        %3336 = vmatpush1.msra.mxu0 0.0
        %3337 = vmatprep.subr.mxu0 0.0
        %3338 = vmatpush1.msra.mxu0 0.0
        %3339 = vmatprep.subr.mxu0 0.0
        %3340 = vmatpush1.msra.mxu0 0.0
        %3341 = vmatprep.subr.mxu0 0.0
        %3342 = vmatpush1.msra.mxu0 0.0
        %3343 = vmatprep.subr.mxu0 0.0
        %3344 = vmatpush1.msra.mxu0 0.0
        %3345 = vmatprep.subr.mxu0 0.0
        %3346 = vmatpush1.msra.mxu0 0.0
        %3347 = vmatprep.subr.mxu0 0.0
        %3348 = vmatpush1.msra.mxu0 0.0
        %3349 = vmatprep.subr.mxu0 0.0
        %3350 = vmatpush1.msra.mxu0 0.0
        %3351 = vmatprep.subr.mxu0 0.0
        %3352 = vmatpush1.msra.mxu0 %v3302
        %3353 = vmatprep.subr.mxu0 0.0
        %3354 = vmatpush1.msra.mxu0 %v3301
        %3355 = vmatprep.subr.mxu0 0.0
        %3356 = vmatpush1.msra.mxu0 %v3300
        %3357 = vmatprep.subr.mxu0 0.0
        %3358 = vmatpush1.msra.mxu0 %v3299
        %3359 = vmatprep.subr.mxu0 0.0
        %3360 = vmatpush2.msra.mxu0 0.0
        %3361 = vmatprep.subr.mxu0 0.0
        %3362 = vmatpush2.msra.mxu0 0.0
        %3363 = vmatprep.subr.mxu0 0.0
        %3364 = vmatpush2.msra.mxu0 0.0
        %3365 = vmatprep.subr.mxu0 0.0
        %3366 = vmatpush2.msra.mxu0 0.0
        %3367 = vmatprep.subr.mxu0 0.0
        %3368 = vmatpush2.msra.mxu0 0.0
        %3369 = vmatprep.subr.mxu0 0.0
        %3370 = vmatpush2.msra.mxu0 0.0
        %3371 = vmatprep.subr.mxu0 0.0
        %3372 = vmatpush2.msra.mxu0 0.0
        %3373 = vmatprep.subr.mxu0 0.0
        %3374 = vmatpush2.msra.mxu0 0.0
        %3375 = vmatprep.subr.mxu0 0.0
        %3376 = vmatpush2.msra.mxu0 0.0
        %3377 = vmatprep.subr.mxu0 0.0
        %3378 = vmatpush2.msra.mxu0 0.0
        %3379 = vmatprep.subr.mxu0 0.0
        %3380 = vmatpush2.msra.mxu0 0.0
        %3381 = vmatprep.subr.mxu0 0.0
        %3382 = vmatpush2.msra.mxu0 0.0
        %3383 = vmatprep.subr.mxu0 0.0
        %3384 = vmatpush2.msra.mxu0 0.0
        %3385 = vmatprep.subr.mxu0 0.0
        %3386 = vmatpush2.msra.mxu0 0.0
        %3387 = vmatprep.subr.mxu0 0.0
        %3388 = vmatpush2.msra.mxu0 0.0
        %3389 = vmatprep.subr.mxu0 0.0
        %3390 = vmatpush2.msra.mxu0 0.0
        %3391 = vmatprep.mubr.f32.mxu0 0.0
        %3392 = vmatmul.mubr.f32.gmra.mxu0 %v3304
        %v3393 = vpop.f32.mrf.mxu0
        %v3394 = vadd.f32 0.0, %v3393
        %v3395 = vpop.f32.mrf.mxu0
        %3396 = vmatprep.mubr.f32.mxu0 0.0
        %3397 = vmatmul.mubr.f32.gmra.mxu0 %v3307
        %v3398 = vpop.f32.mrf.mxu0
        %v3399 = vadd.f32 0.0, %v3398
        %v3400 = vpop.f32.mrf.mxu0
        %3401 = vmatprep.mubr.f32.mxu0 0.0
        %3402 = vmatmul.mubr.f32.gmra.mxu0 %v3310
        %v3403 = vpop.f32.mrf.mxu0
        %v3404 = vadd.f32 0.0, %v3403
        %v3405 = vpop.f32.mrf.mxu0
        %3406 = vmatprep.mubr.f32.mxu0 0.0
        %3407 = vmatmul.mubr.f32.gmra.mxu0 %v3313
        %v3408 = vpop.f32.mrf.mxu0
        %v3409 = vadd.f32 0.0, %v3408
        %v3410 = vpop.f32.mrf.mxu0
        %3411 = vmatprep.mubr.f32.mxu0 0.0
        %3412 = vmatmul.mubr.f32.gmra.mxu0 %v3316
        %v3413 = vpop.f32.mrf.mxu0
        %v3414 = vadd.f32 0.0, %v3413
        %v3415 = vpop.f32.mrf.mxu0
        %3416 = vmatprep.mubr.f32.mxu0 0.0
        %3417 = vmatmul.mubr.f32.gmra.mxu0 %v3319
        %v3418 = vpop.f32.mrf.mxu0
        %v3419 = vadd.f32 0.0, %v3418
        %v3420 = vpop.f32.mrf.mxu0
        %3421 = vmatprep.mubr.f32.mxu0 0.0
        %3422 = vmatmul.mubr.f32.gmra.mxu0 %v3322
        %v3423 = vpop.f32.mrf.mxu0
        %v3424 = vadd.f32 0.0, %v3423
        %v3425 = vpop.f32.mrf.mxu0
        %3426 = vmatprep.mubr.f32.mxu0 0.0
        %3427 = vmatmul.mubr.f32.gmra.mxu0 %v3325
        %v3428 = vpop.f32.mrf.mxu0
        %v3429 = vadd.f32 0.0, %v3428
        %v3430 = vpop.f32.mrf.mxu0
        %3431 = vdwg.mxu0
        %v3432 = vadd.f32 %v3282, %v3394
        %v3433 = vadd.f32 %v3283, %v3399
        %v3434 = vadd.f32 %v3284, %v3404
        %v3435 = vadd.f32 %v3285, %v3409
        %v3436 = vadd.f32 %v3286, %v3414
        %v3437 = vadd.f32 %v3287, %v3419
        %v3438 = vadd.f32 %v3288, %v3424
        %v3439 = vadd.f32 %v3289, %v3429
        %s3440 = scalar_lea.vmem [#allocation4], 32
        %v3441 = vld [vmem:[%s3440] sm:$0xff]
        %v3442 = vld [vmem:[%s3440 + $0x10] sm:$0xff]
        %v3443 = vld [vmem:[%s3440 + $0x20] sm:$0xff]
        %v3444 = vld [vmem:[%s3440 + $0x30] sm:$0xff]
        %v3445 = vld [vmem:[%s3440 + $0x40] sm:$0xff]
        %v3446 = vld [vmem:[%s3440 + $0x50] sm:$0xff]
        %v3447 = vld [vmem:[%s3440 + $0x60] sm:$0xff]
        %v3448 = vld [vmem:[%s3440 + $0x70] sm:$0xff]
        %s3449 = scalar_lea.vmem %s3, 192
        %v3450 = vld [vmem:[%s3449] sm:$0xff]
        %v3451 = vld [vmem:[%s3449 + $0x8] sm:$0xff]
        %v3452 = vld [vmem:[%s3449 + $0x10] sm:$0xff]
        %v3453 = vld [vmem:[%s3449 + $0x18] sm:$0xff]
        %v3455 = vsel %vm527, %v3441, 0
        %v3458 = vsel %vm527, %v3442, 0
        %v3461 = vsel %vm527, %v3443, 0
        %v3464 = vsel %vm527, %v3444, 0
        %v3467 = vsel %vm527, %v3445, 0
        %v3470 = vsel %vm527, %v3446, 0
        %v3473 = vsel %vm527, %v3447, 0
        %v3476 = vsel %vm527, %v3448, 0
        %3478 = vmatprep.subr.mxu0 0.0
        %3479 = vmatpush1.msra.mxu0 0.0
        %3480 = vmatprep.subr.mxu0 0.0
        %3481 = vmatpush1.msra.mxu0 0.0
        %3482 = vmatprep.subr.mxu0 0.0
        %3483 = vmatpush1.msra.mxu0 0.0
        %3484 = vmatprep.subr.mxu0 0.0
        %3485 = vmatpush1.msra.mxu0 0.0
        %3486 = vmatprep.subr.mxu0 0.0
        %3487 = vmatpush1.msra.mxu0 0.0
        %3488 = vmatprep.subr.mxu0 0.0
        %3489 = vmatpush1.msra.mxu0 0.0
        %3490 = vmatprep.subr.mxu0 0.0
        %3491 = vmatpush1.msra.mxu0 0.0
        %3492 = vmatprep.subr.mxu0 0.0
        %3493 = vmatpush1.msra.mxu0 0.0
        %3494 = vmatprep.subr.mxu0 0.0
        %3495 = vmatpush1.msra.mxu0 0.0
        %3496 = vmatprep.subr.mxu0 0.0
        %3497 = vmatpush1.msra.mxu0 0.0
        %3498 = vmatprep.subr.mxu0 0.0
        %3499 = vmatpush1.msra.mxu0 0.0
        %3500 = vmatprep.subr.mxu0 0.0
        %3501 = vmatpush1.msra.mxu0 0.0
        %3502 = vmatprep.subr.mxu0 0.0
        %3503 = vmatpush1.msra.mxu0 %v3453
        %3504 = vmatprep.subr.mxu0 0.0
        %3505 = vmatpush1.msra.mxu0 %v3452
        %3506 = vmatprep.subr.mxu0 0.0
        %3507 = vmatpush1.msra.mxu0 %v3451
        %3508 = vmatprep.subr.mxu0 0.0
        %3509 = vmatpush1.msra.mxu0 %v3450
        %3510 = vmatprep.subr.mxu0 0.0
        %3511 = vmatpush2.msra.mxu0 0.0
        %3512 = vmatprep.subr.mxu0 0.0
        %3513 = vmatpush2.msra.mxu0 0.0
        %3514 = vmatprep.subr.mxu0 0.0
        %3515 = vmatpush2.msra.mxu0 0.0
        %3516 = vmatprep.subr.mxu0 0.0
        %3517 = vmatpush2.msra.mxu0 0.0
        %3518 = vmatprep.subr.mxu0 0.0
        %3519 = vmatpush2.msra.mxu0 0.0
        %3520 = vmatprep.subr.mxu0 0.0
        %3521 = vmatpush2.msra.mxu0 0.0
        %3522 = vmatprep.subr.mxu0 0.0
        %3523 = vmatpush2.msra.mxu0 0.0
        %3524 = vmatprep.subr.mxu0 0.0
        %3525 = vmatpush2.msra.mxu0 0.0
        %3526 = vmatprep.subr.mxu0 0.0
        %3527 = vmatpush2.msra.mxu0 0.0
        %3528 = vmatprep.subr.mxu0 0.0
        %3529 = vmatpush2.msra.mxu0 0.0
        %3530 = vmatprep.subr.mxu0 0.0
        %3531 = vmatpush2.msra.mxu0 0.0
        %3532 = vmatprep.subr.mxu0 0.0
        %3533 = vmatpush2.msra.mxu0 0.0
        %3534 = vmatprep.subr.mxu0 0.0
        %3535 = vmatpush2.msra.mxu0 0.0
        %3536 = vmatprep.subr.mxu0 0.0
        %3537 = vmatpush2.msra.mxu0 0.0
        %3538 = vmatprep.subr.mxu0 0.0
        %3539 = vmatpush2.msra.mxu0 0.0
        %3540 = vmatprep.subr.mxu0 0.0
        %3541 = vmatpush2.msra.mxu0 0.0
        %3542 = vmatprep.mubr.f32.mxu0 0.0
        %3543 = vmatmul.mubr.f32.gmra.mxu0 %v3455
        %v3544 = vpop.f32.mrf.mxu0
        %v3545 = vadd.f32 0.0, %v3544
        %v3546 = vpop.f32.mrf.mxu0
        %3547 = vmatprep.mubr.f32.mxu0 0.0
        %3548 = vmatmul.mubr.f32.gmra.mxu0 %v3458
        %v3549 = vpop.f32.mrf.mxu0
        %v3550 = vadd.f32 0.0, %v3549
        %v3551 = vpop.f32.mrf.mxu0
        %3552 = vmatprep.mubr.f32.mxu0 0.0
        %3553 = vmatmul.mubr.f32.gmra.mxu0 %v3461
        %v3554 = vpop.f32.mrf.mxu0
        %v3555 = vadd.f32 0.0, %v3554
        %v3556 = vpop.f32.mrf.mxu0
        %3557 = vmatprep.mubr.f32.mxu0 0.0
        %3558 = vmatmul.mubr.f32.gmra.mxu0 %v3464
        %v3559 = vpop.f32.mrf.mxu0
        %v3560 = vadd.f32 0.0, %v3559
        %v3561 = vpop.f32.mrf.mxu0
        %3562 = vmatprep.mubr.f32.mxu0 0.0
        %3563 = vmatmul.mubr.f32.gmra.mxu0 %v3467
        %v3564 = vpop.f32.mrf.mxu0
        %v3565 = vadd.f32 0.0, %v3564
        %v3566 = vpop.f32.mrf.mxu0
        %3567 = vmatprep.mubr.f32.mxu0 0.0
        %3568 = vmatmul.mubr.f32.gmra.mxu0 %v3470
        %v3569 = vpop.f32.mrf.mxu0
        %v3570 = vadd.f32 0.0, %v3569
        %v3571 = vpop.f32.mrf.mxu0
        %3572 = vmatprep.mubr.f32.mxu0 0.0
        %3573 = vmatmul.mubr.f32.gmra.mxu0 %v3473
        %v3574 = vpop.f32.mrf.mxu0
        %v3575 = vadd.f32 0.0, %v3574
        %v3576 = vpop.f32.mrf.mxu0
        %3577 = vmatprep.mubr.f32.mxu0 0.0
        %3578 = vmatmul.mubr.f32.gmra.mxu0 %v3476
        %v3579 = vpop.f32.mrf.mxu0
        %v3580 = vadd.f32 0.0, %v3579
        %v3581 = vpop.f32.mrf.mxu0
        %3582 = vdwg.mxu0
        %v3583 = vadd.f32 %v3432, %v3545
        %v3584 = vadd.f32 %v3433, %v3550
        %v3585 = vadd.f32 %v3434, %v3555
        %v3586 = vadd.f32 %v3435, %v3560
        %v3587 = vadd.f32 %v3436, %v3565
        %v3588 = vadd.f32 %v3437, %v3570
        %v3589 = vadd.f32 %v3438, %v3575
        %v3590 = vadd.f32 %v3439, %v3580
        %v3591 = vld [vmem:[%s3440 + $0x1] sm:$0xff]
        %v3592 = vld [vmem:[%s3440 + $0x11] sm:$0xff]
        %v3593 = vld [vmem:[%s3440 + $0x21] sm:$0xff]
        %v3594 = vld [vmem:[%s3440 + $0x31] sm:$0xff]
        %v3595 = vld [vmem:[%s3440 + $0x41] sm:$0xff]
        %v3596 = vld [vmem:[%s3440 + $0x51] sm:$0xff]
        %v3597 = vld [vmem:[%s3440 + $0x61] sm:$0xff]
        %v3598 = vld [vmem:[%s3440 + $0x71] sm:$0xff]
        %s3599 = scalar_lea.vmem %s3, 224
        %v3600 = vld [vmem:[%s3599] sm:$0xff]
        %v3601 = vld [vmem:[%s3599 + $0x8] sm:$0xff]
        %v3602 = vld [vmem:[%s3599 + $0x10] sm:$0xff]
        %v3603 = vld [vmem:[%s3599 + $0x18] sm:$0xff]
        %v3605 = vsel %vm527, %v3591, 0
        %v3608 = vsel %vm527, %v3592, 0
        %v3611 = vsel %vm527, %v3593, 0
        %v3614 = vsel %vm527, %v3594, 0
        %v3617 = vsel %vm527, %v3595, 0
        %v3620 = vsel %vm527, %v3596, 0
        %v3623 = vsel %vm527, %v3597, 0
        %v3626 = vsel %vm527, %v3598, 0
        %3628 = vmatprep.subr.mxu0 0.0
        %3629 = vmatpush1.msra.mxu0 0.0
        %3630 = vmatprep.subr.mxu0 0.0
        %3631 = vmatpush1.msra.mxu0 0.0
        %3632 = vmatprep.subr.mxu0 0.0
        %3633 = vmatpush1.msra.mxu0 0.0
        %3634 = vmatprep.subr.mxu0 0.0
        %3635 = vmatpush1.msra.mxu0 0.0
        %3636 = vmatprep.subr.mxu0 0.0
        %3637 = vmatpush1.msra.mxu0 0.0
        %3638 = vmatprep.subr.mxu0 0.0
        %3639 = vmatpush1.msra.mxu0 0.0
        %3640 = vmatprep.subr.mxu0 0.0
        %3641 = vmatpush1.msra.mxu0 0.0
        %3642 = vmatprep.subr.mxu0 0.0
        %3643 = vmatpush1.msra.mxu0 0.0
        %3644 = vmatprep.subr.mxu0 0.0
        %3645 = vmatpush1.msra.mxu0 0.0
        %3646 = vmatprep.subr.mxu0 0.0
        %3647 = vmatpush1.msra.mxu0 0.0
        %3648 = vmatprep.subr.mxu0 0.0
        %3649 = vmatpush1.msra.mxu0 0.0
        %3650 = vmatprep.subr.mxu0 0.0
        %3651 = vmatpush1.msra.mxu0 0.0
        %3652 = vmatprep.subr.mxu0 0.0
        %3653 = vmatpush1.msra.mxu0 %v3603
        %3654 = vmatprep.subr.mxu0 0.0
        %3655 = vmatpush1.msra.mxu0 %v3602
        %3656 = vmatprep.subr.mxu0 0.0
        %3657 = vmatpush1.msra.mxu0 %v3601
        %3658 = vmatprep.subr.mxu0 0.0
        %3659 = vmatpush1.msra.mxu0 %v3600
        %3660 = vmatprep.subr.mxu0 0.0
        %3661 = vmatpush2.msra.mxu0 0.0
        %3662 = vmatprep.subr.mxu0 0.0
        %3663 = vmatpush2.msra.mxu0 0.0
        %3664 = vmatprep.subr.mxu0 0.0
        %3665 = vmatpush2.msra.mxu0 0.0
        %3666 = vmatprep.subr.mxu0 0.0
        %3667 = vmatpush2.msra.mxu0 0.0
        %3668 = vmatprep.subr.mxu0 0.0
        %3669 = vmatpush2.msra.mxu0 0.0
        %3670 = vmatprep.subr.mxu0 0.0
        %3671 = vmatpush2.msra.mxu0 0.0
        %3672 = vmatprep.subr.mxu0 0.0
        %3673 = vmatpush2.msra.mxu0 0.0
        %3674 = vmatprep.subr.mxu0 0.0
        %3675 = vmatpush2.msra.mxu0 0.0
        %3676 = vmatprep.subr.mxu0 0.0
        %3677 = vmatpush2.msra.mxu0 0.0
        %3678 = vmatprep.subr.mxu0 0.0
        %3679 = vmatpush2.msra.mxu0 0.0
        %3680 = vmatprep.subr.mxu0 0.0
        %3681 = vmatpush2.msra.mxu0 0.0
        %3682 = vmatprep.subr.mxu0 0.0
        %3683 = vmatpush2.msra.mxu0 0.0
        %3684 = vmatprep.subr.mxu0 0.0
        %3685 = vmatpush2.msra.mxu0 0.0
        %3686 = vmatprep.subr.mxu0 0.0
        %3687 = vmatpush2.msra.mxu0 0.0
        %3688 = vmatprep.subr.mxu0 0.0
        %3689 = vmatpush2.msra.mxu0 0.0
        %3690 = vmatprep.subr.mxu0 0.0
        %3691 = vmatpush2.msra.mxu0 0.0
        %3692 = vmatprep.mubr.f32.mxu0 0.0
        %3693 = vmatmul.mubr.f32.gmra.mxu0 %v3605
        %v3694 = vpop.f32.mrf.mxu0
        %v3695 = vadd.f32 0.0, %v3694
        %v3696 = vpop.f32.mrf.mxu0
        %3697 = vmatprep.mubr.f32.mxu0 0.0
        %3698 = vmatmul.mubr.f32.gmra.mxu0 %v3608
        %v3699 = vpop.f32.mrf.mxu0
        %v3700 = vadd.f32 0.0, %v3699
        %v3701 = vpop.f32.mrf.mxu0
        %3702 = vmatprep.mubr.f32.mxu0 0.0
        %3703 = vmatmul.mubr.f32.gmra.mxu0 %v3611
        %v3704 = vpop.f32.mrf.mxu0
        %v3705 = vadd.f32 0.0, %v3704
        %v3706 = vpop.f32.mrf.mxu0
        %3707 = vmatprep.mubr.f32.mxu0 0.0
        %3708 = vmatmul.mubr.f32.gmra.mxu0 %v3614
        %v3709 = vpop.f32.mrf.mxu0
        %v3710 = vadd.f32 0.0, %v3709
        %v3711 = vpop.f32.mrf.mxu0
        %3712 = vmatprep.mubr.f32.mxu0 0.0
        %3713 = vmatmul.mubr.f32.gmra.mxu0 %v3617
        %v3714 = vpop.f32.mrf.mxu0
        %v3715 = vadd.f32 0.0, %v3714
        %v3716 = vpop.f32.mrf.mxu0
        %3717 = vmatprep.mubr.f32.mxu0 0.0
        %3718 = vmatmul.mubr.f32.gmra.mxu0 %v3620
        %v3719 = vpop.f32.mrf.mxu0
        %v3720 = vadd.f32 0.0, %v3719
        %v3721 = vpop.f32.mrf.mxu0
        %3722 = vmatprep.mubr.f32.mxu0 0.0
        %3723 = vmatmul.mubr.f32.gmra.mxu0 %v3623
        %v3724 = vpop.f32.mrf.mxu0
        %v3725 = vadd.f32 0.0, %v3724
        %v3726 = vpop.f32.mrf.mxu0
        %3727 = vmatprep.mubr.f32.mxu0 0.0
        %3728 = vmatmul.mubr.f32.gmra.mxu0 %v3626
        %v3729 = vpop.f32.mrf.mxu0
        %v3730 = vadd.f32 0.0, %v3729
        %v3731 = vpop.f32.mrf.mxu0
        %3732 = vdwg.mxu0
        %v3733 = vadd.f32 %v3583, %v3695
        %v3734 = vadd.f32 %v3584, %v3700
        %v3735 = vadd.f32 %v3585, %v3705
        %v3736 = vadd.f32 %v3586, %v3710
        %v3737 = vadd.f32 %v3587, %v3715
        %v3738 = vadd.f32 %v3588, %v3720
        %v3739 = vadd.f32 %v3589, %v3725
        %v3740 = vadd.f32 %v3590, %v3730
        %v3741 = vld [vmem:[%s3440 + $0x2] sm:$0xff]
        %v3742 = vld [vmem:[%s3440 + $0x12] sm:$0xff]
        %v3743 = vld [vmem:[%s3440 + $0x22] sm:$0xff]
        %v3744 = vld [vmem:[%s3440 + $0x32] sm:$0xff]
        %v3745 = vld [vmem:[%s3440 + $0x42] sm:$0xff]
        %v3746 = vld [vmem:[%s3440 + $0x52] sm:$0xff]
        %v3747 = vld [vmem:[%s3440 + $0x62] sm:$0xff]
        %v3748 = vld [vmem:[%s3440 + $0x72] sm:$0xff]
        %s3749 = scalar_lea.vmem %s3, 256
        %v3750 = vld [vmem:[%s3749] sm:$0xff]
        %v3751 = vld [vmem:[%s3749 + $0x8] sm:$0xff]
        %v3752 = vld [vmem:[%s3749 + $0x10] sm:$0xff]
        %v3753 = vld [vmem:[%s3749 + $0x18] sm:$0xff]
        %v3755 = vsel %vm527, %v3741, 0
        %v3758 = vsel %vm527, %v3742, 0
        %v3761 = vsel %vm527, %v3743, 0
        %v3764 = vsel %vm527, %v3744, 0
        %v3767 = vsel %vm527, %v3745, 0
        %v3770 = vsel %vm527, %v3746, 0
        %v3773 = vsel %vm527, %v3747, 0
        %v3776 = vsel %vm527, %v3748, 0
        %3778 = vmatprep.subr.mxu0 0.0
        %3779 = vmatpush1.msra.mxu0 0.0
        %3780 = vmatprep.subr.mxu0 0.0
        %3781 = vmatpush1.msra.mxu0 0.0
        %3782 = vmatprep.subr.mxu0 0.0
        %3783 = vmatpush1.msra.mxu0 0.0
        %3784 = vmatprep.subr.mxu0 0.0
        %3785 = vmatpush1.msra.mxu0 0.0
        %3786 = vmatprep.subr.mxu0 0.0
        %3787 = vmatpush1.msra.mxu0 0.0
        %3788 = vmatprep.subr.mxu0 0.0
        %3789 = vmatpush1.msra.mxu0 0.0
        %3790 = vmatprep.subr.mxu0 0.0
        %3791 = vmatpush1.msra.mxu0 0.0
        %3792 = vmatprep.subr.mxu0 0.0
        %3793 = vmatpush1.msra.mxu0 0.0
        %3794 = vmatprep.subr.mxu0 0.0
        %3795 = vmatpush1.msra.mxu0 0.0
        %3796 = vmatprep.subr.mxu0 0.0
        %3797 = vmatpush1.msra.mxu0 0.0
        %3798 = vmatprep.subr.mxu0 0.0
        %3799 = vmatpush1.msra.mxu0 0.0
        %3800 = vmatprep.subr.mxu0 0.0
        %3801 = vmatpush1.msra.mxu0 0.0
        %3802 = vmatprep.subr.mxu0 0.0
        %3803 = vmatpush1.msra.mxu0 %v3753
        %3804 = vmatprep.subr.mxu0 0.0
        %3805 = vmatpush1.msra.mxu0 %v3752
        %3806 = vmatprep.subr.mxu0 0.0
        %3807 = vmatpush1.msra.mxu0 %v3751
        %3808 = vmatprep.subr.mxu0 0.0
        %3809 = vmatpush1.msra.mxu0 %v3750
        %3810 = vmatprep.subr.mxu0 0.0
        %3811 = vmatpush2.msra.mxu0 0.0
        %3812 = vmatprep.subr.mxu0 0.0
        %3813 = vmatpush2.msra.mxu0 0.0
        %3814 = vmatprep.subr.mxu0 0.0
        %3815 = vmatpush2.msra.mxu0 0.0
        %3816 = vmatprep.subr.mxu0 0.0
        %3817 = vmatpush2.msra.mxu0 0.0
        %3818 = vmatprep.subr.mxu0 0.0
        %3819 = vmatpush2.msra.mxu0 0.0
        %3820 = vmatprep.subr.mxu0 0.0
        %3821 = vmatpush2.msra.mxu0 0.0
        %3822 = vmatprep.subr.mxu0 0.0
        %3823 = vmatpush2.msra.mxu0 0.0
        %3824 = vmatprep.subr.mxu0 0.0
        %3825 = vmatpush2.msra.mxu0 0.0
        %3826 = vmatprep.subr.mxu0 0.0
        %3827 = vmatpush2.msra.mxu0 0.0
        %3828 = vmatprep.subr.mxu0 0.0
        %3829 = vmatpush2.msra.mxu0 0.0
        %3830 = vmatprep.subr.mxu0 0.0
        %3831 = vmatpush2.msra.mxu0 0.0
        %3832 = vmatprep.subr.mxu0 0.0
        %3833 = vmatpush2.msra.mxu0 0.0
        %3834 = vmatprep.subr.mxu0 0.0
        %3835 = vmatpush2.msra.mxu0 0.0
        %3836 = vmatprep.subr.mxu0 0.0
        %3837 = vmatpush2.msra.mxu0 0.0
        %3838 = vmatprep.subr.mxu0 0.0
        %3839 = vmatpush2.msra.mxu0 0.0
        %3840 = vmatprep.subr.mxu0 0.0
        %3841 = vmatpush2.msra.mxu0 0.0
        %3842 = vmatprep.mubr.f32.mxu0 0.0
        %3843 = vmatmul.mubr.f32.gmra.mxu0 %v3755
        %v3844 = vpop.f32.mrf.mxu0
        %v3845 = vadd.f32 0.0, %v3844
        %v3846 = vpop.f32.mrf.mxu0
        %3847 = vmatprep.mubr.f32.mxu0 0.0
        %3848 = vmatmul.mubr.f32.gmra.mxu0 %v3758
        %v3849 = vpop.f32.mrf.mxu0
        %v3850 = vadd.f32 0.0, %v3849
        %v3851 = vpop.f32.mrf.mxu0
        %3852 = vmatprep.mubr.f32.mxu0 0.0
        %3853 = vmatmul.mubr.f32.gmra.mxu0 %v3761
        %v3854 = vpop.f32.mrf.mxu0
        %v3855 = vadd.f32 0.0, %v3854
        %v3856 = vpop.f32.mrf.mxu0
        %3857 = vmatprep.mubr.f32.mxu0 0.0
        %3858 = vmatmul.mubr.f32.gmra.mxu0 %v3764
        %v3859 = vpop.f32.mrf.mxu0
        %v3860 = vadd.f32 0.0, %v3859
        %v3861 = vpop.f32.mrf.mxu0
        %3862 = vmatprep.mubr.f32.mxu0 0.0
        %3863 = vmatmul.mubr.f32.gmra.mxu0 %v3767
        %v3864 = vpop.f32.mrf.mxu0
        %v3865 = vadd.f32 0.0, %v3864
        %v3866 = vpop.f32.mrf.mxu0
        %3867 = vmatprep.mubr.f32.mxu0 0.0
        %3868 = vmatmul.mubr.f32.gmra.mxu0 %v3770
        %v3869 = vpop.f32.mrf.mxu0
        %v3870 = vadd.f32 0.0, %v3869
        %v3871 = vpop.f32.mrf.mxu0
        %3872 = vmatprep.mubr.f32.mxu0 0.0
        %3873 = vmatmul.mubr.f32.gmra.mxu0 %v3773
        %v3874 = vpop.f32.mrf.mxu0
        %v3875 = vadd.f32 0.0, %v3874
        %v3876 = vpop.f32.mrf.mxu0
        %3877 = vmatprep.mubr.f32.mxu0 0.0
        %3878 = vmatmul.mubr.f32.gmra.mxu0 %v3776
        %v3879 = vpop.f32.mrf.mxu0
        %v3880 = vadd.f32 0.0, %v3879
        %v3881 = vpop.f32.mrf.mxu0
        %3882 = vdwg.mxu0
        %v3883 = vadd.f32 %v3733, %v3845
        %v3884 = vadd.f32 %v3734, %v3850
        %v3885 = vadd.f32 %v3735, %v3855
        %v3886 = vadd.f32 %v3736, %v3860
        %v3887 = vadd.f32 %v3737, %v3865
        %v3888 = vadd.f32 %v3738, %v3870
        %v3889 = vadd.f32 %v3739, %v3875
        %v3890 = vadd.f32 %v3740, %v3880
        %v3891 = vld [vmem:[%s4] sm:$0x1]
        %v3893 = vlaneseq
        %v3894 = vshrl.u32 %v3893, 7
        %v3895 = vsub.s32 0, %v3894
        %v3896 = vrot.slane %v3891, %v3895
        %v3898 = vadd.f32 %v3883, %v3896
        %v3899 = vadd.f32 %v3884, %v3896
        %v3900 = vadd.f32 %v3885, %v3896
        %v3901 = vadd.f32 %v3886, %v3896
        %v3902 = vadd.f32 %v3887, %v3896
        %v3903 = vadd.f32 %v3888, %v3896
        %v3904 = vadd.f32 %v3889, %v3896
        %v3905 = vadd.f32 %v3890, %v3896
        %v3906 = vmax.f32 %v3898, 0.0
        %v3907 = vmax.f32 %v3899, 0.0
        %v3908 = vmax.f32 %v3900, 0.0
        %v3909 = vmax.f32 %v3901, 0.0
        %v3910 = vmax.f32 %v3902, 0.0
        %v3911 = vmax.f32 %v3903, 0.0
        %v3912 = vmax.f32 %v3904, 0.0
        %v3913 = vmax.f32 %v3905, 0.0
        %vm3914 = vcmask 523264
        %3915 = vst.msk [vmem:[#allocation5] sm:$0xff] %vm3914, 0.0
        %vm3916 = vcmask 517120
        %3917 = vst.msk [vmem:[#allocation5 + $0x8] sm:$0x3] %vm3916, 0.0
        %s3918 = scalar_lea.vmem [#allocation5], 144
        %3919 = vst.msk [vmem:[%s3918] sm:$0xff] %vm3914, 0.0
        %3920 = vst.msk [vmem:[%s3918 + $0x8] sm:$0x3] %vm3916, 0.0
        %vm3921 = vcmask 516096
        %3922 = vst.msk [vmem:[#allocation5] sm:$0x1] %vm3921, 0.0
        %3923 = vst.msk [vmem:[#allocation5 + $0x10] sm:$0x1] %vm3921, 0.0
        %3924 = vst.msk [vmem:[#allocation5 + $0x20] sm:$0x1] %vm3921, 0.0
        %3925 = vst.msk [vmem:[#allocation5 + $0x30] sm:$0x1] %vm3921, 0.0
        %3926 = vst.msk [vmem:[#allocation5 + $0x40] sm:$0x1] %vm3921, 0.0
        %3927 = vst.msk [vmem:[#allocation5 + $0x50] sm:$0x1] %vm3921, 0.0
        %3928 = vst.msk [vmem:[#allocation5 + $0x60] sm:$0x1] %vm3921, 0.0
        %3929 = vst.msk [vmem:[#allocation5 + $0x70] sm:$0x1] %vm3921, 0.0
        %3930 = vst.msk [vmem:[#allocation5 + $0x80] sm:$0x1] %vm3921, 0.0
        %3931 = vst.msk [vmem:[#allocation5 + $0x90] sm:$0x1] %vm3921, 0.0
        %3932 = vst.msk [vmem:[#allocation5 + $0x9] sm:$0x1] %vm3921, 0.0
        %3933 = vst.msk [vmem:[#allocation5 + $0x19] sm:$0x1] %vm3921, 0.0
        %3934 = vst.msk [vmem:[#allocation5 + $0x29] sm:$0x1] %vm3921, 0.0
        %3935 = vst.msk [vmem:[#allocation5 + $0x39] sm:$0x1] %vm3921, 0.0
        %3936 = vst.msk [vmem:[#allocation5 + $0x49] sm:$0x1] %vm3921, 0.0
        %3937 = vst.msk [vmem:[#allocation5 + $0x59] sm:$0x1] %vm3921, 0.0
        %3938 = vst.msk [vmem:[#allocation5 + $0x69] sm:$0x1] %vm3921, 0.0
        %3939 = vst.msk [vmem:[#allocation5 + $0x79] sm:$0x1] %vm3921, 0.0
        %3940 = vst.msk [vmem:[#allocation5 + $0x89] sm:$0x1] %vm3921, 0.0
        %3941 = vst.msk [vmem:[#allocation5 + $0x99] sm:$0x1] %vm3921, 0.0
        %s3942 = scalar_lea.vmem [#allocation5], 16
        %3943 = vst.msk [vmem:[%s3942 + $0x1] sm:$0xff] %vm3914, %v3906
        %3944 = vst.msk [vmem:[%s3942 + $0x11] sm:$0xff] %vm3914, %v3907
        %3945 = vst.msk [vmem:[%s3942 + $0x21] sm:$0xff] %vm3914, %v3908
        %3946 = vst.msk [vmem:[%s3942 + $0x31] sm:$0xff] %vm3914, %v3909
        %3947 = vst.msk [vmem:[%s3942 + $0x41] sm:$0xff] %vm3914, %v3910
        %3948 = vst.msk [vmem:[%s3942 + $0x51] sm:$0xff] %vm3914, %v3911
        %3949 = vst.msk [vmem:[%s3942 + $0x61] sm:$0xff] %vm3914, %v3912
        %3950 = vst.msk [vmem:[%s3942 + $0x71] sm:$0xff] %vm3914, %v3913
        %v3951 = vld [vmem:[#allocation5] sm:$0xff]
        %v3952 = vld [vmem:[#allocation5 + $0x10] sm:$0xff]
        %v3953 = vld [vmem:[#allocation5 + $0x20] sm:$0xff]
        %v3954 = vld [vmem:[#allocation5 + $0x30] sm:$0xff]
        %v3955 = vld [vmem:[#allocation5 + $0x40] sm:$0xff]
        %v3956 = vld [vmem:[#allocation5 + $0x50] sm:$0xff]
        %v3957 = vld [vmem:[#allocation5 + $0x60] sm:$0xff]
        %v3958 = vld [vmem:[#allocation5 + $0x70] sm:$0xff]
        %v3959 = vld [vmem:[%s5] sm:$0xff]
        %v3960 = vld [vmem:[%s5 + $0x8] sm:$0xff]
        %v3961 = vld [vmem:[%s5 + $0x10] sm:$0xff]
        %v3962 = vld [vmem:[%s5 + $0x18] sm:$0xff]
        %v3963 = vld [vmem:[%s5 + $0x20] sm:$0xff]
        %v3964 = vld [vmem:[%s5 + $0x28] sm:$0xff]
        %v3965 = vld [vmem:[%s5 + $0x30] sm:$0xff]
        %v3966 = vld [vmem:[%s5 + $0x38] sm:$0xff]
        %v3967 = vld [vmem:[#allocation5 + $0x1] sm:$0xff]
        %v3968 = vld [vmem:[#allocation5 + $0x11] sm:$0xff]
        %v3969 = vld [vmem:[#allocation5 + $0x21] sm:$0xff]
        %v3970 = vld [vmem:[#allocation5 + $0x31] sm:$0xff]
        %v3971 = vld [vmem:[#allocation5 + $0x41] sm:$0xff]
        %v3972 = vld [vmem:[#allocation5 + $0x51] sm:$0xff]
        %v3973 = vld [vmem:[#allocation5 + $0x61] sm:$0xff]
        %v3974 = vld [vmem:[#allocation5 + $0x71] sm:$0xff]
        %s3975 = scalar_lea.vmem %s5, 64
        %v3976 = vld [vmem:[%s3975] sm:$0xff]
        %v3977 = vld [vmem:[%s3975 + $0x8] sm:$0xff]
        %v3978 = vld [vmem:[%s3975 + $0x10] sm:$0xff]
        %v3979 = vld [vmem:[%s3975 + $0x18] sm:$0xff]
        %v3980 = vld [vmem:[%s3975 + $0x20] sm:$0xff]
        %v3981 = vld [vmem:[%s3975 + $0x28] sm:$0xff]
        %v3982 = vld [vmem:[%s3975 + $0x30] sm:$0xff]
        %v3983 = vld [vmem:[%s3975 + $0x38] sm:$0xff]
        %v3985 = vsel %vm3914, %v3967, 0
        %v3988 = vsel %vm3914, %v3968, 0
        %v3991 = vsel %vm3914, %v3969, 0
        %v3994 = vsel %vm3914, %v3970, 0
        %v3997 = vsel %vm3914, %v3971, 0
        %v4000 = vsel %vm3914, %v3972, 0
        %v4003 = vsel %vm3914, %v3973, 0
        %v4006 = vsel %vm3914, %v3974, 0
        %4008 = vmatprep.subr.mxu0 0.0
        %4009 = vmatpush1.msra.mxu0 0.0
        %4010 = vmatprep.subr.mxu0 0.0
        %4011 = vmatpush1.msra.mxu0 0.0
        %4012 = vmatprep.subr.mxu0 0.0
        %4013 = vmatpush1.msra.mxu0 0.0
        %4014 = vmatprep.subr.mxu0 0.0
        %4015 = vmatpush1.msra.mxu0 0.0
        %4016 = vmatprep.subr.mxu0 0.0
        %4017 = vmatpush1.msra.mxu0 0.0
        %4018 = vmatprep.subr.mxu0 0.0
        %4019 = vmatpush1.msra.mxu0 0.0
        %4020 = vmatprep.subr.mxu0 0.0
        %4021 = vmatpush1.msra.mxu0 0.0
        %4022 = vmatprep.subr.mxu0 0.0
        %4023 = vmatpush1.msra.mxu0 0.0
        %4024 = vmatprep.subr.mxu0 0.0
        %4025 = vmatpush1.msra.mxu0 %v3983
        %4026 = vmatprep.subr.mxu0 0.0
        %4027 = vmatpush1.msra.mxu0 %v3982
        %4028 = vmatprep.subr.mxu0 0.0
        %4029 = vmatpush1.msra.mxu0 %v3981
        %4030 = vmatprep.subr.mxu0 0.0
        %4031 = vmatpush1.msra.mxu0 %v3980
        %4032 = vmatprep.subr.mxu0 0.0
        %4033 = vmatpush1.msra.mxu0 %v3979
        %4034 = vmatprep.subr.mxu0 0.0
        %4035 = vmatpush1.msra.mxu0 %v3978
        %4036 = vmatprep.subr.mxu0 0.0
        %4037 = vmatpush1.msra.mxu0 %v3977
        %4038 = vmatprep.subr.mxu0 0.0
        %4039 = vmatpush1.msra.mxu0 %v3976
        %4040 = vmatprep.subr.mxu0 0.0
        %4041 = vmatpush2.msra.mxu0 0.0
        %4042 = vmatprep.subr.mxu0 0.0
        %4043 = vmatpush2.msra.mxu0 0.0
        %4044 = vmatprep.subr.mxu0 0.0
        %4045 = vmatpush2.msra.mxu0 0.0
        %4046 = vmatprep.subr.mxu0 0.0
        %4047 = vmatpush2.msra.mxu0 0.0
        %4048 = vmatprep.subr.mxu0 0.0
        %4049 = vmatpush2.msra.mxu0 0.0
        %4050 = vmatprep.subr.mxu0 0.0
        %4051 = vmatpush2.msra.mxu0 0.0
        %4052 = vmatprep.subr.mxu0 0.0
        %4053 = vmatpush2.msra.mxu0 0.0
        %4054 = vmatprep.subr.mxu0 0.0
        %4055 = vmatpush2.msra.mxu0 0.0
        %4056 = vmatprep.subr.mxu0 0.0
        %4057 = vmatpush2.msra.mxu0 0.0
        %4058 = vmatprep.subr.mxu0 0.0
        %4059 = vmatpush2.msra.mxu0 0.0
        %4060 = vmatprep.subr.mxu0 0.0
        %4061 = vmatpush2.msra.mxu0 0.0
        %4062 = vmatprep.subr.mxu0 0.0
        %4063 = vmatpush2.msra.mxu0 0.0
        %4064 = vmatprep.subr.mxu0 0.0
        %4065 = vmatpush2.msra.mxu0 0.0
        %4066 = vmatprep.subr.mxu0 0.0
        %4067 = vmatpush2.msra.mxu0 0.0
        %4068 = vmatprep.subr.mxu0 0.0
        %4069 = vmatpush2.msra.mxu0 0.0
        %4070 = vmatprep.subr.mxu0 0.0
        %4071 = vmatpush2.msra.mxu0 0.0
        %4072 = vmatprep.mubr.f32.mxu0 0.0
        %4073 = vmatmul.mubr.f32.gmra.mxu0 %v3985
        %v4074 = vpop.f32.mrf.mxu0
        %v4075 = vadd.f32 0.0, %v4074
        %v4076 = vpop.f32.mrf.mxu0
        %4077 = vmatprep.mubr.f32.mxu0 0.0
        %4078 = vmatmul.mubr.f32.gmra.mxu0 %v3988
        %v4079 = vpop.f32.mrf.mxu0
        %v4080 = vadd.f32 0.0, %v4079
        %v4081 = vpop.f32.mrf.mxu0
        %4082 = vmatprep.mubr.f32.mxu0 0.0
        %4083 = vmatmul.mubr.f32.gmra.mxu0 %v3991
        %v4084 = vpop.f32.mrf.mxu0
        %v4085 = vadd.f32 0.0, %v4084
        %v4086 = vpop.f32.mrf.mxu0
        %4087 = vmatprep.mubr.f32.mxu0 0.0
        %4088 = vmatmul.mubr.f32.gmra.mxu0 %v3994
        %v4089 = vpop.f32.mrf.mxu0
        %v4090 = vadd.f32 0.0, %v4089
        %v4091 = vpop.f32.mrf.mxu0
        %4092 = vmatprep.mubr.f32.mxu0 0.0
        %4093 = vmatmul.mubr.f32.gmra.mxu0 %v3997
        %v4094 = vpop.f32.mrf.mxu0
        %v4095 = vadd.f32 0.0, %v4094
        %v4096 = vpop.f32.mrf.mxu0
        %4097 = vmatprep.mubr.f32.mxu0 0.0
        %4098 = vmatmul.mubr.f32.gmra.mxu0 %v4000
        %v4099 = vpop.f32.mrf.mxu0
        %v4100 = vadd.f32 0.0, %v4099
        %v4101 = vpop.f32.mrf.mxu0
        %4102 = vmatprep.mubr.f32.mxu0 0.0
        %4103 = vmatmul.mubr.f32.gmra.mxu0 %v4003
        %v4104 = vpop.f32.mrf.mxu0
        %v4105 = vadd.f32 0.0, %v4104
        %v4106 = vpop.f32.mrf.mxu0
        %4107 = vmatprep.mubr.f32.mxu0 0.0
        %4108 = vmatmul.mubr.f32.gmra.mxu0 %v4006
        %v4109 = vpop.f32.mrf.mxu0
        %v4110 = vadd.f32 0.0, %v4109
        %v4111 = vpop.f32.mrf.mxu0
        %4112 = vdwg.mxu0
        %v4114 = vsel %vm3914, %v3951, 0
        %v4117 = vsel %vm3914, %v3952, 0
        %v4120 = vsel %vm3914, %v3953, 0
        %v4123 = vsel %vm3914, %v3954, 0
        %v4126 = vsel %vm3914, %v3955, 0
        %v4129 = vsel %vm3914, %v3956, 0
        %v4132 = vsel %vm3914, %v3957, 0
        %v4135 = vsel %vm3914, %v3958, 0
        %4137 = vmatprep.subr.mxu0 0.0
        %4138 = vmatpush1.msra.mxu0 0.0
        %4139 = vmatprep.subr.mxu0 0.0
        %4140 = vmatpush1.msra.mxu0 0.0
        %4141 = vmatprep.subr.mxu0 0.0
        %4142 = vmatpush1.msra.mxu0 0.0
        %4143 = vmatprep.subr.mxu0 0.0
        %4144 = vmatpush1.msra.mxu0 0.0
        %4145 = vmatprep.subr.mxu0 0.0
        %4146 = vmatpush1.msra.mxu0 0.0
        %4147 = vmatprep.subr.mxu0 0.0
        %4148 = vmatpush1.msra.mxu0 0.0
        %4149 = vmatprep.subr.mxu0 0.0
        %4150 = vmatpush1.msra.mxu0 0.0
        %4151 = vmatprep.subr.mxu0 0.0
        %4152 = vmatpush1.msra.mxu0 0.0
        %4153 = vmatprep.subr.mxu0 0.0
        %4154 = vmatpush1.msra.mxu0 %v3966
        %4155 = vmatprep.subr.mxu0 0.0
        %4156 = vmatpush1.msra.mxu0 %v3965
        %4157 = vmatprep.subr.mxu0 0.0
        %4158 = vmatpush1.msra.mxu0 %v3964
        %4159 = vmatprep.subr.mxu0 0.0
        %4160 = vmatpush1.msra.mxu0 %v3963
        %4161 = vmatprep.subr.mxu0 0.0
        %4162 = vmatpush1.msra.mxu0 %v3962
        %4163 = vmatprep.subr.mxu0 0.0
        %4164 = vmatpush1.msra.mxu0 %v3961
        %4165 = vmatprep.subr.mxu0 0.0
        %4166 = vmatpush1.msra.mxu0 %v3960
        %4167 = vmatprep.subr.mxu0 0.0
        %4168 = vmatpush1.msra.mxu0 %v3959
        %4169 = vmatprep.subr.mxu0 0.0
        %4170 = vmatpush2.msra.mxu0 0.0
        %4171 = vmatprep.subr.mxu0 0.0
        %4172 = vmatpush2.msra.mxu0 0.0
        %4173 = vmatprep.subr.mxu0 0.0
        %4174 = vmatpush2.msra.mxu0 0.0
        %4175 = vmatprep.subr.mxu0 0.0
        %4176 = vmatpush2.msra.mxu0 0.0
        %4177 = vmatprep.subr.mxu0 0.0
        %4178 = vmatpush2.msra.mxu0 0.0
        %4179 = vmatprep.subr.mxu0 0.0
        %4180 = vmatpush2.msra.mxu0 0.0
        %4181 = vmatprep.subr.mxu0 0.0
        %4182 = vmatpush2.msra.mxu0 0.0
        %4183 = vmatprep.subr.mxu0 0.0
        %4184 = vmatpush2.msra.mxu0 0.0
        %4185 = vmatprep.subr.mxu0 0.0
        %4186 = vmatpush2.msra.mxu0 0.0
        %4187 = vmatprep.subr.mxu0 0.0
        %4188 = vmatpush2.msra.mxu0 0.0
        %4189 = vmatprep.subr.mxu0 0.0
        %4190 = vmatpush2.msra.mxu0 0.0
        %4191 = vmatprep.subr.mxu0 0.0
        %4192 = vmatpush2.msra.mxu0 0.0
        %4193 = vmatprep.subr.mxu0 0.0
        %4194 = vmatpush2.msra.mxu0 0.0
        %4195 = vmatprep.subr.mxu0 0.0
        %4196 = vmatpush2.msra.mxu0 0.0
        %4197 = vmatprep.subr.mxu0 0.0
        %4198 = vmatpush2.msra.mxu0 0.0
        %4199 = vmatprep.subr.mxu0 0.0
        %4200 = vmatpush2.msra.mxu0 0.0
        %4201 = vmatprep.mubr.f32.mxu0 0.0
        %4202 = vmatmul.mubr.f32.gmra.mxu0 %v4114
        %v4203 = vpop.f32.mrf.mxu0
        %v4204 = vadd.f32 %v4075, %v4203
        %v4205 = vpop.f32.mrf.mxu0
        %4206 = vmatprep.mubr.f32.mxu0 0.0
        %4207 = vmatmul.mubr.f32.gmra.mxu0 %v4117
        %v4208 = vpop.f32.mrf.mxu0
        %v4209 = vadd.f32 %v4080, %v4208
        %v4210 = vpop.f32.mrf.mxu0
        %4211 = vmatprep.mubr.f32.mxu0 0.0
        %4212 = vmatmul.mubr.f32.gmra.mxu0 %v4120
        %v4213 = vpop.f32.mrf.mxu0
        %v4214 = vadd.f32 %v4085, %v4213
        %v4215 = vpop.f32.mrf.mxu0
        %4216 = vmatprep.mubr.f32.mxu0 0.0
        %4217 = vmatmul.mubr.f32.gmra.mxu0 %v4123
        %v4218 = vpop.f32.mrf.mxu0
        %v4219 = vadd.f32 %v4090, %v4218
        %v4220 = vpop.f32.mrf.mxu0
        %4221 = vmatprep.mubr.f32.mxu0 0.0
        %4222 = vmatmul.mubr.f32.gmra.mxu0 %v4126
        %v4223 = vpop.f32.mrf.mxu0
        %v4224 = vadd.f32 %v4095, %v4223
        %v4225 = vpop.f32.mrf.mxu0
        %4226 = vmatprep.mubr.f32.mxu0 0.0
        %4227 = vmatmul.mubr.f32.gmra.mxu0 %v4129
        %v4228 = vpop.f32.mrf.mxu0
        %v4229 = vadd.f32 %v4100, %v4228
        %v4230 = vpop.f32.mrf.mxu0
        %4231 = vmatprep.mubr.f32.mxu0 0.0
        %4232 = vmatmul.mubr.f32.gmra.mxu0 %v4132
        %v4233 = vpop.f32.mrf.mxu0
        %v4234 = vadd.f32 %v4105, %v4233
        %v4235 = vpop.f32.mrf.mxu0
        %4236 = vmatprep.mubr.f32.mxu0 0.0
        %4237 = vmatmul.mubr.f32.gmra.mxu0 %v4135
        %v4238 = vpop.f32.mrf.mxu0
        %v4239 = vadd.f32 %v4110, %v4238
        %v4240 = vpop.f32.mrf.mxu0
        %4241 = vdwg.mxu0
        %v4242 = vld [vmem:[#allocation5 + $0x2] sm:$0xff]
        %v4243 = vld [vmem:[#allocation5 + $0x12] sm:$0xff]
        %v4244 = vld [vmem:[#allocation5 + $0x22] sm:$0xff]
        %v4245 = vld [vmem:[#allocation5 + $0x32] sm:$0xff]
        %v4246 = vld [vmem:[#allocation5 + $0x42] sm:$0xff]
        %v4247 = vld [vmem:[#allocation5 + $0x52] sm:$0xff]
        %v4248 = vld [vmem:[#allocation5 + $0x62] sm:$0xff]
        %v4249 = vld [vmem:[#allocation5 + $0x72] sm:$0xff]
        %s4250 = scalar_lea.vmem %s5, 128
        %v4251 = vld [vmem:[%s4250] sm:$0xff]
        %v4252 = vld [vmem:[%s4250 + $0x8] sm:$0xff]
        %v4253 = vld [vmem:[%s4250 + $0x10] sm:$0xff]
        %v4254 = vld [vmem:[%s4250 + $0x18] sm:$0xff]
        %v4255 = vld [vmem:[%s4250 + $0x20] sm:$0xff]
        %v4256 = vld [vmem:[%s4250 + $0x28] sm:$0xff]
        %v4257 = vld [vmem:[%s4250 + $0x30] sm:$0xff]
        %v4258 = vld [vmem:[%s4250 + $0x38] sm:$0xff]
        %v4260 = vsel %vm3914, %v4242, 0
        %v4263 = vsel %vm3914, %v4243, 0
        %v4266 = vsel %vm3914, %v4244, 0
        %v4269 = vsel %vm3914, %v4245, 0
        %v4272 = vsel %vm3914, %v4246, 0
        %v4275 = vsel %vm3914, %v4247, 0
        %v4278 = vsel %vm3914, %v4248, 0
        %v4281 = vsel %vm3914, %v4249, 0
        %4283 = vmatprep.subr.mxu0 0.0
        %4284 = vmatpush1.msra.mxu0 0.0
        %4285 = vmatprep.subr.mxu0 0.0
        %4286 = vmatpush1.msra.mxu0 0.0
        %4287 = vmatprep.subr.mxu0 0.0
        %4288 = vmatpush1.msra.mxu0 0.0
        %4289 = vmatprep.subr.mxu0 0.0
        %4290 = vmatpush1.msra.mxu0 0.0
        %4291 = vmatprep.subr.mxu0 0.0
        %4292 = vmatpush1.msra.mxu0 0.0
        %4293 = vmatprep.subr.mxu0 0.0
        %4294 = vmatpush1.msra.mxu0 0.0
        %4295 = vmatprep.subr.mxu0 0.0
        %4296 = vmatpush1.msra.mxu0 0.0
        %4297 = vmatprep.subr.mxu0 0.0
        %4298 = vmatpush1.msra.mxu0 0.0
        %4299 = vmatprep.subr.mxu0 0.0
        %4300 = vmatpush1.msra.mxu0 %v4258
        %4301 = vmatprep.subr.mxu0 0.0
        %4302 = vmatpush1.msra.mxu0 %v4257
        %4303 = vmatprep.subr.mxu0 0.0
        %4304 = vmatpush1.msra.mxu0 %v4256
        %4305 = vmatprep.subr.mxu0 0.0
        %4306 = vmatpush1.msra.mxu0 %v4255
        %4307 = vmatprep.subr.mxu0 0.0
        %4308 = vmatpush1.msra.mxu0 %v4254
        %4309 = vmatprep.subr.mxu0 0.0
        %4310 = vmatpush1.msra.mxu0 %v4253
        %4311 = vmatprep.subr.mxu0 0.0
        %4312 = vmatpush1.msra.mxu0 %v4252
        %4313 = vmatprep.subr.mxu0 0.0
        %4314 = vmatpush1.msra.mxu0 %v4251
        %4315 = vmatprep.subr.mxu0 0.0
        %4316 = vmatpush2.msra.mxu0 0.0
        %4317 = vmatprep.subr.mxu0 0.0
        %4318 = vmatpush2.msra.mxu0 0.0
        %4319 = vmatprep.subr.mxu0 0.0
        %4320 = vmatpush2.msra.mxu0 0.0
        %4321 = vmatprep.subr.mxu0 0.0
        %4322 = vmatpush2.msra.mxu0 0.0
        %4323 = vmatprep.subr.mxu0 0.0
        %4324 = vmatpush2.msra.mxu0 0.0
        %4325 = vmatprep.subr.mxu0 0.0
        %4326 = vmatpush2.msra.mxu0 0.0
        %4327 = vmatprep.subr.mxu0 0.0
        %4328 = vmatpush2.msra.mxu0 0.0
        %4329 = vmatprep.subr.mxu0 0.0
        %4330 = vmatpush2.msra.mxu0 0.0
        %4331 = vmatprep.subr.mxu0 0.0
        %4332 = vmatpush2.msra.mxu0 0.0
        %4333 = vmatprep.subr.mxu0 0.0
        %4334 = vmatpush2.msra.mxu0 0.0
        %4335 = vmatprep.subr.mxu0 0.0
        %4336 = vmatpush2.msra.mxu0 0.0
        %4337 = vmatprep.subr.mxu0 0.0
        %4338 = vmatpush2.msra.mxu0 0.0
        %4339 = vmatprep.subr.mxu0 0.0
        %4340 = vmatpush2.msra.mxu0 0.0
        %4341 = vmatprep.subr.mxu0 0.0
        %4342 = vmatpush2.msra.mxu0 0.0
        %4343 = vmatprep.subr.mxu0 0.0
        %4344 = vmatpush2.msra.mxu0 0.0
        %4345 = vmatprep.subr.mxu0 0.0
        %4346 = vmatpush2.msra.mxu0 0.0
        %4347 = vmatprep.mubr.f32.mxu0 0.0
        %4348 = vmatmul.mubr.f32.gmra.mxu0 %v4260
        %v4349 = vpop.f32.mrf.mxu0
        %v4350 = vadd.f32 0.0, %v4349
        %v4351 = vpop.f32.mrf.mxu0
        %4352 = vmatprep.mubr.f32.mxu0 0.0
        %4353 = vmatmul.mubr.f32.gmra.mxu0 %v4263
        %v4354 = vpop.f32.mrf.mxu0
        %v4355 = vadd.f32 0.0, %v4354
        %v4356 = vpop.f32.mrf.mxu0
        %4357 = vmatprep.mubr.f32.mxu0 0.0
        %4358 = vmatmul.mubr.f32.gmra.mxu0 %v4266
        %v4359 = vpop.f32.mrf.mxu0
        %v4360 = vadd.f32 0.0, %v4359
        %v4361 = vpop.f32.mrf.mxu0
        %4362 = vmatprep.mubr.f32.mxu0 0.0
        %4363 = vmatmul.mubr.f32.gmra.mxu0 %v4269
        %v4364 = vpop.f32.mrf.mxu0
        %v4365 = vadd.f32 0.0, %v4364
        %v4366 = vpop.f32.mrf.mxu0
        %4367 = vmatprep.mubr.f32.mxu0 0.0
        %4368 = vmatmul.mubr.f32.gmra.mxu0 %v4272
        %v4369 = vpop.f32.mrf.mxu0
        %v4370 = vadd.f32 0.0, %v4369
        %v4371 = vpop.f32.mrf.mxu0
        %4372 = vmatprep.mubr.f32.mxu0 0.0
        %4373 = vmatmul.mubr.f32.gmra.mxu0 %v4275
        %v4374 = vpop.f32.mrf.mxu0
        %v4375 = vadd.f32 0.0, %v4374
        %v4376 = vpop.f32.mrf.mxu0
        %4377 = vmatprep.mubr.f32.mxu0 0.0
        %4378 = vmatmul.mubr.f32.gmra.mxu0 %v4278
        %v4379 = vpop.f32.mrf.mxu0
        %v4380 = vadd.f32 0.0, %v4379
        %v4381 = vpop.f32.mrf.mxu0
        %4382 = vmatprep.mubr.f32.mxu0 0.0
        %4383 = vmatmul.mubr.f32.gmra.mxu0 %v4281
        %v4384 = vpop.f32.mrf.mxu0
        %v4385 = vadd.f32 0.0, %v4384
        %v4386 = vpop.f32.mrf.mxu0
        %4387 = vdwg.mxu0
        %v4388 = vadd.f32 %v4204, %v4350
        %v4389 = vadd.f32 %v4209, %v4355
        %v4390 = vadd.f32 %v4214, %v4360
        %v4391 = vadd.f32 %v4219, %v4365
        %v4392 = vadd.f32 %v4224, %v4370
        %v4393 = vadd.f32 %v4229, %v4375
        %v4394 = vadd.f32 %v4234, %v4380
        %v4395 = vadd.f32 %v4239, %v4385
        %v4396 = vld [vmem:[%s3942] sm:$0xff]
        %v4397 = vld [vmem:[%s3942 + $0x10] sm:$0xff]
        %v4398 = vld [vmem:[%s3942 + $0x20] sm:$0xff]
        %v4399 = vld [vmem:[%s3942 + $0x30] sm:$0xff]
        %v4400 = vld [vmem:[%s3942 + $0x40] sm:$0xff]
        %v4401 = vld [vmem:[%s3942 + $0x50] sm:$0xff]
        %v4402 = vld [vmem:[%s3942 + $0x60] sm:$0xff]
        %v4403 = vld [vmem:[%s3942 + $0x70] sm:$0xff]
        %s4404 = scalar_lea.vmem %s5, 192
        %v4405 = vld [vmem:[%s4404] sm:$0xff]
        %v4406 = vld [vmem:[%s4404 + $0x8] sm:$0xff]
        %v4407 = vld [vmem:[%s4404 + $0x10] sm:$0xff]
        %v4408 = vld [vmem:[%s4404 + $0x18] sm:$0xff]
        %v4409 = vld [vmem:[%s4404 + $0x20] sm:$0xff]
        %v4410 = vld [vmem:[%s4404 + $0x28] sm:$0xff]
        %v4411 = vld [vmem:[%s4404 + $0x30] sm:$0xff]
        %v4412 = vld [vmem:[%s4404 + $0x38] sm:$0xff]
        %v4414 = vsel %vm3914, %v4396, 0
        %v4417 = vsel %vm3914, %v4397, 0
        %v4420 = vsel %vm3914, %v4398, 0
        %v4423 = vsel %vm3914, %v4399, 0
        %v4426 = vsel %vm3914, %v4400, 0
        %v4429 = vsel %vm3914, %v4401, 0
        %v4432 = vsel %vm3914, %v4402, 0
        %v4435 = vsel %vm3914, %v4403, 0
        %4437 = vmatprep.subr.mxu0 0.0
        %4438 = vmatpush1.msra.mxu0 0.0
        %4439 = vmatprep.subr.mxu0 0.0
        %4440 = vmatpush1.msra.mxu0 0.0
        %4441 = vmatprep.subr.mxu0 0.0
        %4442 = vmatpush1.msra.mxu0 0.0
        %4443 = vmatprep.subr.mxu0 0.0
        %4444 = vmatpush1.msra.mxu0 0.0
        %4445 = vmatprep.subr.mxu0 0.0
        %4446 = vmatpush1.msra.mxu0 0.0
        %4447 = vmatprep.subr.mxu0 0.0
        %4448 = vmatpush1.msra.mxu0 0.0
        %4449 = vmatprep.subr.mxu0 0.0
        %4450 = vmatpush1.msra.mxu0 0.0
        %4451 = vmatprep.subr.mxu0 0.0
        %4452 = vmatpush1.msra.mxu0 0.0
        %4453 = vmatprep.subr.mxu0 0.0
        %4454 = vmatpush1.msra.mxu0 %v4412
        %4455 = vmatprep.subr.mxu0 0.0
        %4456 = vmatpush1.msra.mxu0 %v4411
        %4457 = vmatprep.subr.mxu0 0.0
        %4458 = vmatpush1.msra.mxu0 %v4410
        %4459 = vmatprep.subr.mxu0 0.0
        %4460 = vmatpush1.msra.mxu0 %v4409
        %4461 = vmatprep.subr.mxu0 0.0
        %4462 = vmatpush1.msra.mxu0 %v4408
        %4463 = vmatprep.subr.mxu0 0.0
        %4464 = vmatpush1.msra.mxu0 %v4407
        %4465 = vmatprep.subr.mxu0 0.0
        %4466 = vmatpush1.msra.mxu0 %v4406
        %4467 = vmatprep.subr.mxu0 0.0
        %4468 = vmatpush1.msra.mxu0 %v4405
        %4469 = vmatprep.subr.mxu0 0.0
        %4470 = vmatpush2.msra.mxu0 0.0
        %4471 = vmatprep.subr.mxu0 0.0
        %4472 = vmatpush2.msra.mxu0 0.0
        %4473 = vmatprep.subr.mxu0 0.0
        %4474 = vmatpush2.msra.mxu0 0.0
        %4475 = vmatprep.subr.mxu0 0.0
        %4476 = vmatpush2.msra.mxu0 0.0
        %4477 = vmatprep.subr.mxu0 0.0
        %4478 = vmatpush2.msra.mxu0 0.0
        %4479 = vmatprep.subr.mxu0 0.0
        %4480 = vmatpush2.msra.mxu0 0.0
        %4481 = vmatprep.subr.mxu0 0.0
        %4482 = vmatpush2.msra.mxu0 0.0
        %4483 = vmatprep.subr.mxu0 0.0
        %4484 = vmatpush2.msra.mxu0 0.0
        %4485 = vmatprep.subr.mxu0 0.0
        %4486 = vmatpush2.msra.mxu0 0.0
        %4487 = vmatprep.subr.mxu0 0.0
        %4488 = vmatpush2.msra.mxu0 0.0
        %4489 = vmatprep.subr.mxu0 0.0
        %4490 = vmatpush2.msra.mxu0 0.0
        %4491 = vmatprep.subr.mxu0 0.0
        %4492 = vmatpush2.msra.mxu0 0.0
        %4493 = vmatprep.subr.mxu0 0.0
        %4494 = vmatpush2.msra.mxu0 0.0
        %4495 = vmatprep.subr.mxu0 0.0
        %4496 = vmatpush2.msra.mxu0 0.0
        %4497 = vmatprep.subr.mxu0 0.0
        %4498 = vmatpush2.msra.mxu0 0.0
        %4499 = vmatprep.subr.mxu0 0.0
        %4500 = vmatpush2.msra.mxu0 0.0
        %4501 = vmatprep.mubr.f32.mxu0 0.0
        %4502 = vmatmul.mubr.f32.gmra.mxu0 %v4414
        %v4503 = vpop.f32.mrf.mxu0
        %v4504 = vadd.f32 0.0, %v4503
        %v4505 = vpop.f32.mrf.mxu0
        %4506 = vmatprep.mubr.f32.mxu0 0.0
        %4507 = vmatmul.mubr.f32.gmra.mxu0 %v4417
        %v4508 = vpop.f32.mrf.mxu0
        %v4509 = vadd.f32 0.0, %v4508
        %v4510 = vpop.f32.mrf.mxu0
        %4511 = vmatprep.mubr.f32.mxu0 0.0
        %4512 = vmatmul.mubr.f32.gmra.mxu0 %v4420
        %v4513 = vpop.f32.mrf.mxu0
        %v4514 = vadd.f32 0.0, %v4513
        %v4515 = vpop.f32.mrf.mxu0
        %4516 = vmatprep.mubr.f32.mxu0 0.0
        %4517 = vmatmul.mubr.f32.gmra.mxu0 %v4423
        %v4518 = vpop.f32.mrf.mxu0
        %v4519 = vadd.f32 0.0, %v4518
        %v4520 = vpop.f32.mrf.mxu0
        %4521 = vmatprep.mubr.f32.mxu0 0.0
        %4522 = vmatmul.mubr.f32.gmra.mxu0 %v4426
        %v4523 = vpop.f32.mrf.mxu0
        %v4524 = vadd.f32 0.0, %v4523
        %v4525 = vpop.f32.mrf.mxu0
        %4526 = vmatprep.mubr.f32.mxu0 0.0
        %4527 = vmatmul.mubr.f32.gmra.mxu0 %v4429
        %v4528 = vpop.f32.mrf.mxu0
        %v4529 = vadd.f32 0.0, %v4528
        %v4530 = vpop.f32.mrf.mxu0
        %4531 = vmatprep.mubr.f32.mxu0 0.0
        %4532 = vmatmul.mubr.f32.gmra.mxu0 %v4432
        %v4533 = vpop.f32.mrf.mxu0
        %v4534 = vadd.f32 0.0, %v4533
        %v4535 = vpop.f32.mrf.mxu0
        %4536 = vmatprep.mubr.f32.mxu0 0.0
        %4537 = vmatmul.mubr.f32.gmra.mxu0 %v4435
        %v4538 = vpop.f32.mrf.mxu0
        %v4539 = vadd.f32 0.0, %v4538
        %v4540 = vpop.f32.mrf.mxu0
        %4541 = vdwg.mxu0
        %v4542 = vadd.f32 %v4388, %v4504
        %v4543 = vadd.f32 %v4389, %v4509
        %v4544 = vadd.f32 %v4390, %v4514
        %v4545 = vadd.f32 %v4391, %v4519
        %v4546 = vadd.f32 %v4392, %v4524
        %v4547 = vadd.f32 %v4393, %v4529
        %v4548 = vadd.f32 %v4394, %v4534
        %v4549 = vadd.f32 %v4395, %v4539
        %v4550 = vld [vmem:[%s3942 + $0x1] sm:$0xff]
        %v4551 = vld [vmem:[%s3942 + $0x11] sm:$0xff]
        %v4552 = vld [vmem:[%s3942 + $0x21] sm:$0xff]
        %v4553 = vld [vmem:[%s3942 + $0x31] sm:$0xff]
        %v4554 = vld [vmem:[%s3942 + $0x41] sm:$0xff]
        %v4555 = vld [vmem:[%s3942 + $0x51] sm:$0xff]
        %v4556 = vld [vmem:[%s3942 + $0x61] sm:$0xff]
        %v4557 = vld [vmem:[%s3942 + $0x71] sm:$0xff]
        %s4558 = scalar_lea.vmem %s5, 256
        %v4559 = vld [vmem:[%s4558] sm:$0xff]
        %v4560 = vld [vmem:[%s4558 + $0x8] sm:$0xff]
        %v4561 = vld [vmem:[%s4558 + $0x10] sm:$0xff]
        %v4562 = vld [vmem:[%s4558 + $0x18] sm:$0xff]
        %v4563 = vld [vmem:[%s4558 + $0x20] sm:$0xff]
        %v4564 = vld [vmem:[%s4558 + $0x28] sm:$0xff]
        %v4565 = vld [vmem:[%s4558 + $0x30] sm:$0xff]
        %v4566 = vld [vmem:[%s4558 + $0x38] sm:$0xff]
        %v4568 = vsel %vm3914, %v4550, 0
        %v4571 = vsel %vm3914, %v4551, 0
        %v4574 = vsel %vm3914, %v4552, 0
        %v4577 = vsel %vm3914, %v4553, 0
        %v4580 = vsel %vm3914, %v4554, 0
        %v4583 = vsel %vm3914, %v4555, 0
        %v4586 = vsel %vm3914, %v4556, 0
        %v4589 = vsel %vm3914, %v4557, 0
        %4591 = vmatprep.subr.mxu0 0.0
        %4592 = vmatpush1.msra.mxu0 0.0
        %4593 = vmatprep.subr.mxu0 0.0
        %4594 = vmatpush1.msra.mxu0 0.0
        %4595 = vmatprep.subr.mxu0 0.0
        %4596 = vmatpush1.msra.mxu0 0.0
        %4597 = vmatprep.subr.mxu0 0.0
        %4598 = vmatpush1.msra.mxu0 0.0
        %4599 = vmatprep.subr.mxu0 0.0
        %4600 = vmatpush1.msra.mxu0 0.0
        %4601 = vmatprep.subr.mxu0 0.0
        %4602 = vmatpush1.msra.mxu0 0.0
        %4603 = vmatprep.subr.mxu0 0.0
        %4604 = vmatpush1.msra.mxu0 0.0
        %4605 = vmatprep.subr.mxu0 0.0
        %4606 = vmatpush1.msra.mxu0 0.0
        %4607 = vmatprep.subr.mxu0 0.0
        %4608 = vmatpush1.msra.mxu0 %v4566
        %4609 = vmatprep.subr.mxu0 0.0
        %4610 = vmatpush1.msra.mxu0 %v4565
        %4611 = vmatprep.subr.mxu0 0.0
        %4612 = vmatpush1.msra.mxu0 %v4564
        %4613 = vmatprep.subr.mxu0 0.0
        %4614 = vmatpush1.msra.mxu0 %v4563
        %4615 = vmatprep.subr.mxu0 0.0
        %4616 = vmatpush1.msra.mxu0 %v4562
        %4617 = vmatprep.subr.mxu0 0.0
        %4618 = vmatpush1.msra.mxu0 %v4561
        %4619 = vmatprep.subr.mxu0 0.0
        %4620 = vmatpush1.msra.mxu0 %v4560
        %4621 = vmatprep.subr.mxu0 0.0
        %4622 = vmatpush1.msra.mxu0 %v4559
        %4623 = vmatprep.subr.mxu0 0.0
        %4624 = vmatpush2.msra.mxu0 0.0
        %4625 = vmatprep.subr.mxu0 0.0
        %4626 = vmatpush2.msra.mxu0 0.0
        %4627 = vmatprep.subr.mxu0 0.0
        %4628 = vmatpush2.msra.mxu0 0.0
        %4629 = vmatprep.subr.mxu0 0.0
        %4630 = vmatpush2.msra.mxu0 0.0
        %4631 = vmatprep.subr.mxu0 0.0
        %4632 = vmatpush2.msra.mxu0 0.0
        %4633 = vmatprep.subr.mxu0 0.0
        %4634 = vmatpush2.msra.mxu0 0.0
        %4635 = vmatprep.subr.mxu0 0.0
        %4636 = vmatpush2.msra.mxu0 0.0
        %4637 = vmatprep.subr.mxu0 0.0
        %4638 = vmatpush2.msra.mxu0 0.0
        %4639 = vmatprep.subr.mxu0 0.0
        %4640 = vmatpush2.msra.mxu0 0.0
        %4641 = vmatprep.subr.mxu0 0.0
        %4642 = vmatpush2.msra.mxu0 0.0
        %4643 = vmatprep.subr.mxu0 0.0
        %4644 = vmatpush2.msra.mxu0 0.0
        %4645 = vmatprep.subr.mxu0 0.0
        %4646 = vmatpush2.msra.mxu0 0.0
        %4647 = vmatprep.subr.mxu0 0.0
        %4648 = vmatpush2.msra.mxu0 0.0
        %4649 = vmatprep.subr.mxu0 0.0
        %4650 = vmatpush2.msra.mxu0 0.0
        %4651 = vmatprep.subr.mxu0 0.0
        %4652 = vmatpush2.msra.mxu0 0.0
        %4653 = vmatprep.subr.mxu0 0.0
        %4654 = vmatpush2.msra.mxu0 0.0
        %4655 = vmatprep.mubr.f32.mxu0 0.0
        %4656 = vmatmul.mubr.f32.gmra.mxu0 %v4568
        %v4657 = vpop.f32.mrf.mxu0
        %v4658 = vadd.f32 0.0, %v4657
        %v4659 = vpop.f32.mrf.mxu0
        %4660 = vmatprep.mubr.f32.mxu0 0.0
        %4661 = vmatmul.mubr.f32.gmra.mxu0 %v4571
        %v4662 = vpop.f32.mrf.mxu0
        %v4663 = vadd.f32 0.0, %v4662
        %v4664 = vpop.f32.mrf.mxu0
        %4665 = vmatprep.mubr.f32.mxu0 0.0
        %4666 = vmatmul.mubr.f32.gmra.mxu0 %v4574
        %v4667 = vpop.f32.mrf.mxu0
        %v4668 = vadd.f32 0.0, %v4667
        %v4669 = vpop.f32.mrf.mxu0
        %4670 = vmatprep.mubr.f32.mxu0 0.0
        %4671 = vmatmul.mubr.f32.gmra.mxu0 %v4577
        %v4672 = vpop.f32.mrf.mxu0
        %v4673 = vadd.f32 0.0, %v4672
        %v4674 = vpop.f32.mrf.mxu0
        %4675 = vmatprep.mubr.f32.mxu0 0.0
        %4676 = vmatmul.mubr.f32.gmra.mxu0 %v4580
        %v4677 = vpop.f32.mrf.mxu0
        %v4678 = vadd.f32 0.0, %v4677
        %v4679 = vpop.f32.mrf.mxu0
        %4680 = vmatprep.mubr.f32.mxu0 0.0
        %4681 = vmatmul.mubr.f32.gmra.mxu0 %v4583
        %v4682 = vpop.f32.mrf.mxu0
        %v4683 = vadd.f32 0.0, %v4682
        %v4684 = vpop.f32.mrf.mxu0
        %4685 = vmatprep.mubr.f32.mxu0 0.0
        %4686 = vmatmul.mubr.f32.gmra.mxu0 %v4586
        %v4687 = vpop.f32.mrf.mxu0
        %v4688 = vadd.f32 0.0, %v4687
        %v4689 = vpop.f32.mrf.mxu0
        %4690 = vmatprep.mubr.f32.mxu0 0.0
        %4691 = vmatmul.mubr.f32.gmra.mxu0 %v4589
        %v4692 = vpop.f32.mrf.mxu0
        %v4693 = vadd.f32 0.0, %v4692
        %v4694 = vpop.f32.mrf.mxu0
        %4695 = vdwg.mxu0
        %v4696 = vadd.f32 %v4542, %v4658
        %v4697 = vadd.f32 %v4543, %v4663
        %v4698 = vadd.f32 %v4544, %v4668
        %v4699 = vadd.f32 %v4545, %v4673
        %v4700 = vadd.f32 %v4546, %v4678
        %v4701 = vadd.f32 %v4547, %v4683
        %v4702 = vadd.f32 %v4548, %v4688
        %v4703 = vadd.f32 %v4549, %v4693
        %v4704 = vld [vmem:[%s3942 + $0x2] sm:$0xff]
        %v4705 = vld [vmem:[%s3942 + $0x12] sm:$0xff]
        %v4706 = vld [vmem:[%s3942 + $0x22] sm:$0xff]
        %v4707 = vld [vmem:[%s3942 + $0x32] sm:$0xff]
        %v4708 = vld [vmem:[%s3942 + $0x42] sm:$0xff]
        %v4709 = vld [vmem:[%s3942 + $0x52] sm:$0xff]
        %v4710 = vld [vmem:[%s3942 + $0x62] sm:$0xff]
        %v4711 = vld [vmem:[%s3942 + $0x72] sm:$0xff]
        %s4712 = scalar_lea.vmem %s5, 320
        %v4713 = vld [vmem:[%s4712] sm:$0xff]
        %v4714 = vld [vmem:[%s4712 + $0x8] sm:$0xff]
        %v4715 = vld [vmem:[%s4712 + $0x10] sm:$0xff]
        %v4716 = vld [vmem:[%s4712 + $0x18] sm:$0xff]
        %v4717 = vld [vmem:[%s4712 + $0x20] sm:$0xff]
        %v4718 = vld [vmem:[%s4712 + $0x28] sm:$0xff]
        %v4719 = vld [vmem:[%s4712 + $0x30] sm:$0xff]
        %v4720 = vld [vmem:[%s4712 + $0x38] sm:$0xff]
        %v4722 = vsel %vm3914, %v4704, 0
        %v4725 = vsel %vm3914, %v4705, 0
        %v4728 = vsel %vm3914, %v4706, 0
        %v4731 = vsel %vm3914, %v4707, 0
        %v4734 = vsel %vm3914, %v4708, 0
        %v4737 = vsel %vm3914, %v4709, 0
        %v4740 = vsel %vm3914, %v4710, 0
        %v4743 = vsel %vm3914, %v4711, 0
        %4745 = vmatprep.subr.mxu0 0.0
        %4746 = vmatpush1.msra.mxu0 0.0
        %4747 = vmatprep.subr.mxu0 0.0
        %4748 = vmatpush1.msra.mxu0 0.0
        %4749 = vmatprep.subr.mxu0 0.0
        %4750 = vmatpush1.msra.mxu0 0.0
        %4751 = vmatprep.subr.mxu0 0.0
        %4752 = vmatpush1.msra.mxu0 0.0
        %4753 = vmatprep.subr.mxu0 0.0
        %4754 = vmatpush1.msra.mxu0 0.0
        %4755 = vmatprep.subr.mxu0 0.0
        %4756 = vmatpush1.msra.mxu0 0.0
        %4757 = vmatprep.subr.mxu0 0.0
        %4758 = vmatpush1.msra.mxu0 0.0
        %4759 = vmatprep.subr.mxu0 0.0
        %4760 = vmatpush1.msra.mxu0 0.0
        %4761 = vmatprep.subr.mxu0 0.0
        %4762 = vmatpush1.msra.mxu0 %v4720
        %4763 = vmatprep.subr.mxu0 0.0
        %4764 = vmatpush1.msra.mxu0 %v4719
        %4765 = vmatprep.subr.mxu0 0.0
        %4766 = vmatpush1.msra.mxu0 %v4718
        %4767 = vmatprep.subr.mxu0 0.0
        %4768 = vmatpush1.msra.mxu0 %v4717
        %4769 = vmatprep.subr.mxu0 0.0
        %4770 = vmatpush1.msra.mxu0 %v4716
        %4771 = vmatprep.subr.mxu0 0.0
        %4772 = vmatpush1.msra.mxu0 %v4715
        %4773 = vmatprep.subr.mxu0 0.0
        %4774 = vmatpush1.msra.mxu0 %v4714
        %4775 = vmatprep.subr.mxu0 0.0
        %4776 = vmatpush1.msra.mxu0 %v4713
        %4777 = vmatprep.subr.mxu0 0.0
        %4778 = vmatpush2.msra.mxu0 0.0
        %4779 = vmatprep.subr.mxu0 0.0
        %4780 = vmatpush2.msra.mxu0 0.0
        %4781 = vmatprep.subr.mxu0 0.0
        %4782 = vmatpush2.msra.mxu0 0.0
        %4783 = vmatprep.subr.mxu0 0.0
        %4784 = vmatpush2.msra.mxu0 0.0
        %4785 = vmatprep.subr.mxu0 0.0
        %4786 = vmatpush2.msra.mxu0 0.0
        %4787 = vmatprep.subr.mxu0 0.0
        %4788 = vmatpush2.msra.mxu0 0.0
        %4789 = vmatprep.subr.mxu0 0.0
        %4790 = vmatpush2.msra.mxu0 0.0
        %4791 = vmatprep.subr.mxu0 0.0
        %4792 = vmatpush2.msra.mxu0 0.0
        %4793 = vmatprep.subr.mxu0 0.0
        %4794 = vmatpush2.msra.mxu0 0.0
        %4795 = vmatprep.subr.mxu0 0.0
        %4796 = vmatpush2.msra.mxu0 0.0
        %4797 = vmatprep.subr.mxu0 0.0
        %4798 = vmatpush2.msra.mxu0 0.0
        %4799 = vmatprep.subr.mxu0 0.0
        %4800 = vmatpush2.msra.mxu0 0.0
        %4801 = vmatprep.subr.mxu0 0.0
        %4802 = vmatpush2.msra.mxu0 0.0
        %4803 = vmatprep.subr.mxu0 0.0
        %4804 = vmatpush2.msra.mxu0 0.0
        %4805 = vmatprep.subr.mxu0 0.0
        %4806 = vmatpush2.msra.mxu0 0.0
        %4807 = vmatprep.subr.mxu0 0.0
        %4808 = vmatpush2.msra.mxu0 0.0
        %4809 = vmatprep.mubr.f32.mxu0 0.0
        %4810 = vmatmul.mubr.f32.gmra.mxu0 %v4722
        %v4811 = vpop.f32.mrf.mxu0
        %v4812 = vadd.f32 0.0, %v4811
        %v4813 = vpop.f32.mrf.mxu0
        %4814 = vmatprep.mubr.f32.mxu0 0.0
        %4815 = vmatmul.mubr.f32.gmra.mxu0 %v4725
        %v4816 = vpop.f32.mrf.mxu0
        %v4817 = vadd.f32 0.0, %v4816
        %v4818 = vpop.f32.mrf.mxu0
        %4819 = vmatprep.mubr.f32.mxu0 0.0
        %4820 = vmatmul.mubr.f32.gmra.mxu0 %v4728
        %v4821 = vpop.f32.mrf.mxu0
        %v4822 = vadd.f32 0.0, %v4821
        %v4823 = vpop.f32.mrf.mxu0
        %4824 = vmatprep.mubr.f32.mxu0 0.0
        %4825 = vmatmul.mubr.f32.gmra.mxu0 %v4731
        %v4826 = vpop.f32.mrf.mxu0
        %v4827 = vadd.f32 0.0, %v4826
        %v4828 = vpop.f32.mrf.mxu0
        %4829 = vmatprep.mubr.f32.mxu0 0.0
        %4830 = vmatmul.mubr.f32.gmra.mxu0 %v4734
        %v4831 = vpop.f32.mrf.mxu0
        %v4832 = vadd.f32 0.0, %v4831
        %v4833 = vpop.f32.mrf.mxu0
        %4834 = vmatprep.mubr.f32.mxu0 0.0
        %4835 = vmatmul.mubr.f32.gmra.mxu0 %v4737
        %v4836 = vpop.f32.mrf.mxu0
        %v4837 = vadd.f32 0.0, %v4836
        %v4838 = vpop.f32.mrf.mxu0
        %4839 = vmatprep.mubr.f32.mxu0 0.0
        %4840 = vmatmul.mubr.f32.gmra.mxu0 %v4740
        %v4841 = vpop.f32.mrf.mxu0
        %v4842 = vadd.f32 0.0, %v4841
        %v4843 = vpop.f32.mrf.mxu0
        %4844 = vmatprep.mubr.f32.mxu0 0.0
        %4845 = vmatmul.mubr.f32.gmra.mxu0 %v4743
        %v4846 = vpop.f32.mrf.mxu0
        %v4847 = vadd.f32 0.0, %v4846
        %v4848 = vpop.f32.mrf.mxu0
        %4849 = vdwg.mxu0
        %v4850 = vadd.f32 %v4696, %v4812
        %v4851 = vadd.f32 %v4697, %v4817
        %v4852 = vadd.f32 %v4698, %v4822
        %v4853 = vadd.f32 %v4699, %v4827
        %v4854 = vadd.f32 %v4700, %v4832
        %v4855 = vadd.f32 %v4701, %v4837
        %v4856 = vadd.f32 %v4702, %v4842
        %v4857 = vadd.f32 %v4703, %v4847
        %s4858 = scalar_lea.vmem [#allocation5], 32
        %v4859 = vld [vmem:[%s4858] sm:$0xff]
        %v4860 = vld [vmem:[%s4858 + $0x10] sm:$0xff]
        %v4861 = vld [vmem:[%s4858 + $0x20] sm:$0xff]
        %v4862 = vld [vmem:[%s4858 + $0x30] sm:$0xff]
        %v4863 = vld [vmem:[%s4858 + $0x40] sm:$0xff]
        %v4864 = vld [vmem:[%s4858 + $0x50] sm:$0xff]
        %v4865 = vld [vmem:[%s4858 + $0x60] sm:$0xff]
        %v4866 = vld [vmem:[%s4858 + $0x70] sm:$0xff]
        %s4867 = scalar_lea.vmem %s5, 384
        %v4868 = vld [vmem:[%s4867] sm:$0xff]
        %v4869 = vld [vmem:[%s4867 + $0x8] sm:$0xff]
        %v4870 = vld [vmem:[%s4867 + $0x10] sm:$0xff]
        %v4871 = vld [vmem:[%s4867 + $0x18] sm:$0xff]
        %v4872 = vld [vmem:[%s4867 + $0x20] sm:$0xff]
        %v4873 = vld [vmem:[%s4867 + $0x28] sm:$0xff]
        %v4874 = vld [vmem:[%s4867 + $0x30] sm:$0xff]
        %v4875 = vld [vmem:[%s4867 + $0x38] sm:$0xff]
        %v4877 = vsel %vm3914, %v4859, 0
        %v4880 = vsel %vm3914, %v4860, 0
        %v4883 = vsel %vm3914, %v4861, 0
        %v4886 = vsel %vm3914, %v4862, 0
        %v4889 = vsel %vm3914, %v4863, 0
        %v4892 = vsel %vm3914, %v4864, 0
        %v4895 = vsel %vm3914, %v4865, 0
        %v4898 = vsel %vm3914, %v4866, 0
        %4900 = vmatprep.subr.mxu0 0.0
        %4901 = vmatpush1.msra.mxu0 0.0
        %4902 = vmatprep.subr.mxu0 0.0
        %4903 = vmatpush1.msra.mxu0 0.0
        %4904 = vmatprep.subr.mxu0 0.0
        %4905 = vmatpush1.msra.mxu0 0.0
        %4906 = vmatprep.subr.mxu0 0.0
        %4907 = vmatpush1.msra.mxu0 0.0
        %4908 = vmatprep.subr.mxu0 0.0
        %4909 = vmatpush1.msra.mxu0 0.0
        %4910 = vmatprep.subr.mxu0 0.0
        %4911 = vmatpush1.msra.mxu0 0.0
        %4912 = vmatprep.subr.mxu0 0.0
        %4913 = vmatpush1.msra.mxu0 0.0
        %4914 = vmatprep.subr.mxu0 0.0
        %4915 = vmatpush1.msra.mxu0 0.0
        %4916 = vmatprep.subr.mxu0 0.0
        %4917 = vmatpush1.msra.mxu0 %v4875
        %4918 = vmatprep.subr.mxu0 0.0
        %4919 = vmatpush1.msra.mxu0 %v4874
        %4920 = vmatprep.subr.mxu0 0.0
        %4921 = vmatpush1.msra.mxu0 %v4873
        %4922 = vmatprep.subr.mxu0 0.0
        %4923 = vmatpush1.msra.mxu0 %v4872
        %4924 = vmatprep.subr.mxu0 0.0
        %4925 = vmatpush1.msra.mxu0 %v4871
        %4926 = vmatprep.subr.mxu0 0.0
        %4927 = vmatpush1.msra.mxu0 %v4870
        %4928 = vmatprep.subr.mxu0 0.0
        %4929 = vmatpush1.msra.mxu0 %v4869
        %4930 = vmatprep.subr.mxu0 0.0
        %4931 = vmatpush1.msra.mxu0 %v4868
        %4932 = vmatprep.subr.mxu0 0.0
        %4933 = vmatpush2.msra.mxu0 0.0
        %4934 = vmatprep.subr.mxu0 0.0
        %4935 = vmatpush2.msra.mxu0 0.0
        %4936 = vmatprep.subr.mxu0 0.0
        %4937 = vmatpush2.msra.mxu0 0.0
        %4938 = vmatprep.subr.mxu0 0.0
        %4939 = vmatpush2.msra.mxu0 0.0
        %4940 = vmatprep.subr.mxu0 0.0
        %4941 = vmatpush2.msra.mxu0 0.0
        %4942 = vmatprep.subr.mxu0 0.0
        %4943 = vmatpush2.msra.mxu0 0.0
        %4944 = vmatprep.subr.mxu0 0.0
        %4945 = vmatpush2.msra.mxu0 0.0
        %4946 = vmatprep.subr.mxu0 0.0
        %4947 = vmatpush2.msra.mxu0 0.0
        %4948 = vmatprep.subr.mxu0 0.0
        %4949 = vmatpush2.msra.mxu0 0.0
        %4950 = vmatprep.subr.mxu0 0.0
        %4951 = vmatpush2.msra.mxu0 0.0
        %4952 = vmatprep.subr.mxu0 0.0
        %4953 = vmatpush2.msra.mxu0 0.0
        %4954 = vmatprep.subr.mxu0 0.0
        %4955 = vmatpush2.msra.mxu0 0.0
        %4956 = vmatprep.subr.mxu0 0.0
        %4957 = vmatpush2.msra.mxu0 0.0
        %4958 = vmatprep.subr.mxu0 0.0
        %4959 = vmatpush2.msra.mxu0 0.0
        %4960 = vmatprep.subr.mxu0 0.0
        %4961 = vmatpush2.msra.mxu0 0.0
        %4962 = vmatprep.subr.mxu0 0.0
        %4963 = vmatpush2.msra.mxu0 0.0
        %4964 = vmatprep.mubr.f32.mxu0 0.0
        %4965 = vmatmul.mubr.f32.gmra.mxu0 %v4877
        %v4966 = vpop.f32.mrf.mxu0
        %v4967 = vadd.f32 0.0, %v4966
        %v4968 = vpop.f32.mrf.mxu0
        %4969 = vmatprep.mubr.f32.mxu0 0.0
        %4970 = vmatmul.mubr.f32.gmra.mxu0 %v4880
        %v4971 = vpop.f32.mrf.mxu0
        %v4972 = vadd.f32 0.0, %v4971
        %v4973 = vpop.f32.mrf.mxu0
        %4974 = vmatprep.mubr.f32.mxu0 0.0
        %4975 = vmatmul.mubr.f32.gmra.mxu0 %v4883
        %v4976 = vpop.f32.mrf.mxu0
        %v4977 = vadd.f32 0.0, %v4976
        %v4978 = vpop.f32.mrf.mxu0
        %4979 = vmatprep.mubr.f32.mxu0 0.0
        %4980 = vmatmul.mubr.f32.gmra.mxu0 %v4886
        %v4981 = vpop.f32.mrf.mxu0
        %v4982 = vadd.f32 0.0, %v4981
        %v4983 = vpop.f32.mrf.mxu0
        %4984 = vmatprep.mubr.f32.mxu0 0.0
        %4985 = vmatmul.mubr.f32.gmra.mxu0 %v4889
        %v4986 = vpop.f32.mrf.mxu0
        %v4987 = vadd.f32 0.0, %v4986
        %v4988 = vpop.f32.mrf.mxu0
        %4989 = vmatprep.mubr.f32.mxu0 0.0
        %4990 = vmatmul.mubr.f32.gmra.mxu0 %v4892
        %v4991 = vpop.f32.mrf.mxu0
        %v4992 = vadd.f32 0.0, %v4991
        %v4993 = vpop.f32.mrf.mxu0
        %4994 = vmatprep.mubr.f32.mxu0 0.0
        %4995 = vmatmul.mubr.f32.gmra.mxu0 %v4895
        %v4996 = vpop.f32.mrf.mxu0
        %v4997 = vadd.f32 0.0, %v4996
        %v4998 = vpop.f32.mrf.mxu0
        %4999 = vmatprep.mubr.f32.mxu0 0.0
        %5000 = vmatmul.mubr.f32.gmra.mxu0 %v4898
        %v5001 = vpop.f32.mrf.mxu0
        %v5002 = vadd.f32 0.0, %v5001
        %v5003 = vpop.f32.mrf.mxu0
        %5004 = vdwg.mxu0
        %v5005 = vadd.f32 %v4850, %v4967
        %v5006 = vadd.f32 %v4851, %v4972
        %v5007 = vadd.f32 %v4852, %v4977
        %v5008 = vadd.f32 %v4853, %v4982
        %v5009 = vadd.f32 %v4854, %v4987
        %v5010 = vadd.f32 %v4855, %v4992
        %v5011 = vadd.f32 %v4856, %v4997
        %v5012 = vadd.f32 %v4857, %v5002
        %v5013 = vld [vmem:[%s4858 + $0x1] sm:$0xff]
        %v5014 = vld [vmem:[%s4858 + $0x11] sm:$0xff]
        %v5015 = vld [vmem:[%s4858 + $0x21] sm:$0xff]
        %v5016 = vld [vmem:[%s4858 + $0x31] sm:$0xff]
        %v5017 = vld [vmem:[%s4858 + $0x41] sm:$0xff]
        %v5018 = vld [vmem:[%s4858 + $0x51] sm:$0xff]
        %v5019 = vld [vmem:[%s4858 + $0x61] sm:$0xff]
        %v5020 = vld [vmem:[%s4858 + $0x71] sm:$0xff]
        %s5021 = scalar_lea.vmem %s5, 448
        %v5022 = vld [vmem:[%s5021] sm:$0xff]
        %v5023 = vld [vmem:[%s5021 + $0x8] sm:$0xff]
        %v5024 = vld [vmem:[%s5021 + $0x10] sm:$0xff]
        %v5025 = vld [vmem:[%s5021 + $0x18] sm:$0xff]
        %v5026 = vld [vmem:[%s5021 + $0x20] sm:$0xff]
        %v5027 = vld [vmem:[%s5021 + $0x28] sm:$0xff]
        %v5028 = vld [vmem:[%s5021 + $0x30] sm:$0xff]
        %v5029 = vld [vmem:[%s5021 + $0x38] sm:$0xff]
        %v5031 = vsel %vm3914, %v5013, 0
        %v5034 = vsel %vm3914, %v5014, 0
        %v5037 = vsel %vm3914, %v5015, 0
        %v5040 = vsel %vm3914, %v5016, 0
        %v5043 = vsel %vm3914, %v5017, 0
        %v5046 = vsel %vm3914, %v5018, 0
        %v5049 = vsel %vm3914, %v5019, 0
        %v5052 = vsel %vm3914, %v5020, 0
        %5054 = vmatprep.subr.mxu0 0.0
        %5055 = vmatpush1.msra.mxu0 0.0
        %5056 = vmatprep.subr.mxu0 0.0
        %5057 = vmatpush1.msra.mxu0 0.0
        %5058 = vmatprep.subr.mxu0 0.0
        %5059 = vmatpush1.msra.mxu0 0.0
        %5060 = vmatprep.subr.mxu0 0.0
        %5061 = vmatpush1.msra.mxu0 0.0
        %5062 = vmatprep.subr.mxu0 0.0
        %5063 = vmatpush1.msra.mxu0 0.0
        %5064 = vmatprep.subr.mxu0 0.0
        %5065 = vmatpush1.msra.mxu0 0.0
        %5066 = vmatprep.subr.mxu0 0.0
        %5067 = vmatpush1.msra.mxu0 0.0
        %5068 = vmatprep.subr.mxu0 0.0
        %5069 = vmatpush1.msra.mxu0 0.0
        %5070 = vmatprep.subr.mxu0 0.0
        %5071 = vmatpush1.msra.mxu0 %v5029
        %5072 = vmatprep.subr.mxu0 0.0
        %5073 = vmatpush1.msra.mxu0 %v5028
        %5074 = vmatprep.subr.mxu0 0.0
        %5075 = vmatpush1.msra.mxu0 %v5027
        %5076 = vmatprep.subr.mxu0 0.0
        %5077 = vmatpush1.msra.mxu0 %v5026
        %5078 = vmatprep.subr.mxu0 0.0
        %5079 = vmatpush1.msra.mxu0 %v5025
        %5080 = vmatprep.subr.mxu0 0.0
        %5081 = vmatpush1.msra.mxu0 %v5024
        %5082 = vmatprep.subr.mxu0 0.0
        %5083 = vmatpush1.msra.mxu0 %v5023
        %5084 = vmatprep.subr.mxu0 0.0
        %5085 = vmatpush1.msra.mxu0 %v5022
        %5086 = vmatprep.subr.mxu0 0.0
        %5087 = vmatpush2.msra.mxu0 0.0
        %5088 = vmatprep.subr.mxu0 0.0
        %5089 = vmatpush2.msra.mxu0 0.0
        %5090 = vmatprep.subr.mxu0 0.0
        %5091 = vmatpush2.msra.mxu0 0.0
        %5092 = vmatprep.subr.mxu0 0.0
        %5093 = vmatpush2.msra.mxu0 0.0
        %5094 = vmatprep.subr.mxu0 0.0
        %5095 = vmatpush2.msra.mxu0 0.0
        %5096 = vmatprep.subr.mxu0 0.0
        %5097 = vmatpush2.msra.mxu0 0.0
        %5098 = vmatprep.subr.mxu0 0.0
        %5099 = vmatpush2.msra.mxu0 0.0
        %5100 = vmatprep.subr.mxu0 0.0
        %5101 = vmatpush2.msra.mxu0 0.0
        %5102 = vmatprep.subr.mxu0 0.0
        %5103 = vmatpush2.msra.mxu0 0.0
        %5104 = vmatprep.subr.mxu0 0.0
        %5105 = vmatpush2.msra.mxu0 0.0
        %5106 = vmatprep.subr.mxu0 0.0
        %5107 = vmatpush2.msra.mxu0 0.0
        %5108 = vmatprep.subr.mxu0 0.0
        %5109 = vmatpush2.msra.mxu0 0.0
        %5110 = vmatprep.subr.mxu0 0.0
        %5111 = vmatpush2.msra.mxu0 0.0
        %5112 = vmatprep.subr.mxu0 0.0
        %5113 = vmatpush2.msra.mxu0 0.0
        %5114 = vmatprep.subr.mxu0 0.0
        %5115 = vmatpush2.msra.mxu0 0.0
        %5116 = vmatprep.subr.mxu0 0.0
        %5117 = vmatpush2.msra.mxu0 0.0
        %5118 = vmatprep.mubr.f32.mxu0 0.0
        %5119 = vmatmul.mubr.f32.gmra.mxu0 %v5031
        %v5120 = vpop.f32.mrf.mxu0
        %v5121 = vadd.f32 0.0, %v5120
        %v5122 = vpop.f32.mrf.mxu0
        %5123 = vmatprep.mubr.f32.mxu0 0.0
        %5124 = vmatmul.mubr.f32.gmra.mxu0 %v5034
        %v5125 = vpop.f32.mrf.mxu0
        %v5126 = vadd.f32 0.0, %v5125
        %v5127 = vpop.f32.mrf.mxu0
        %5128 = vmatprep.mubr.f32.mxu0 0.0
        %5129 = vmatmul.mubr.f32.gmra.mxu0 %v5037
        %v5130 = vpop.f32.mrf.mxu0
        %v5131 = vadd.f32 0.0, %v5130
        %v5132 = vpop.f32.mrf.mxu0
        %5133 = vmatprep.mubr.f32.mxu0 0.0
        %5134 = vmatmul.mubr.f32.gmra.mxu0 %v5040
        %v5135 = vpop.f32.mrf.mxu0
        %v5136 = vadd.f32 0.0, %v5135
        %v5137 = vpop.f32.mrf.mxu0
        %5138 = vmatprep.mubr.f32.mxu0 0.0
        %5139 = vmatmul.mubr.f32.gmra.mxu0 %v5043
        %v5140 = vpop.f32.mrf.mxu0
        %v5141 = vadd.f32 0.0, %v5140
        %v5142 = vpop.f32.mrf.mxu0
        %5143 = vmatprep.mubr.f32.mxu0 0.0
        %5144 = vmatmul.mubr.f32.gmra.mxu0 %v5046
        %v5145 = vpop.f32.mrf.mxu0
        %v5146 = vadd.f32 0.0, %v5145
        %v5147 = vpop.f32.mrf.mxu0
        %5148 = vmatprep.mubr.f32.mxu0 0.0
        %5149 = vmatmul.mubr.f32.gmra.mxu0 %v5049
        %v5150 = vpop.f32.mrf.mxu0
        %v5151 = vadd.f32 0.0, %v5150
        %v5152 = vpop.f32.mrf.mxu0
        %5153 = vmatprep.mubr.f32.mxu0 0.0
        %5154 = vmatmul.mubr.f32.gmra.mxu0 %v5052
        %v5155 = vpop.f32.mrf.mxu0
        %v5156 = vadd.f32 0.0, %v5155
        %v5157 = vpop.f32.mrf.mxu0
        %5158 = vdwg.mxu0
        %v5159 = vadd.f32 %v5005, %v5121
        %v5160 = vadd.f32 %v5006, %v5126
        %v5161 = vadd.f32 %v5007, %v5131
        %v5162 = vadd.f32 %v5008, %v5136
        %v5163 = vadd.f32 %v5009, %v5141
        %v5164 = vadd.f32 %v5010, %v5146
        %v5165 = vadd.f32 %v5011, %v5151
        %v5166 = vadd.f32 %v5012, %v5156
        %v5167 = vld [vmem:[%s4858 + $0x2] sm:$0xff]
        %v5168 = vld [vmem:[%s4858 + $0x12] sm:$0xff]
        %v5169 = vld [vmem:[%s4858 + $0x22] sm:$0xff]
        %v5170 = vld [vmem:[%s4858 + $0x32] sm:$0xff]
        %v5171 = vld [vmem:[%s4858 + $0x42] sm:$0xff]
        %v5172 = vld [vmem:[%s4858 + $0x52] sm:$0xff]
        %v5173 = vld [vmem:[%s4858 + $0x62] sm:$0xff]
        %v5174 = vld [vmem:[%s4858 + $0x72] sm:$0xff]
        %s5175 = scalar_lea.vmem %s5, 512
        %v5176 = vld [vmem:[%s5175] sm:$0xff]
        %v5177 = vld [vmem:[%s5175 + $0x8] sm:$0xff]
        %v5178 = vld [vmem:[%s5175 + $0x10] sm:$0xff]
        %v5179 = vld [vmem:[%s5175 + $0x18] sm:$0xff]
        %v5180 = vld [vmem:[%s5175 + $0x20] sm:$0xff]
        %v5181 = vld [vmem:[%s5175 + $0x28] sm:$0xff]
        %v5182 = vld [vmem:[%s5175 + $0x30] sm:$0xff]
        %v5183 = vld [vmem:[%s5175 + $0x38] sm:$0xff]
        %v5185 = vsel %vm3914, %v5167, 0
        %v5188 = vsel %vm3914, %v5168, 0
        %v5191 = vsel %vm3914, %v5169, 0
        %v5194 = vsel %vm3914, %v5170, 0
        %v5197 = vsel %vm3914, %v5171, 0
        %v5200 = vsel %vm3914, %v5172, 0
        %v5203 = vsel %vm3914, %v5173, 0
        %v5206 = vsel %vm3914, %v5174, 0
        %5208 = vmatprep.subr.mxu0 0.0
        %5209 = vmatpush1.msra.mxu0 0.0
        %5210 = vmatprep.subr.mxu0 0.0
        %5211 = vmatpush1.msra.mxu0 0.0
        %5212 = vmatprep.subr.mxu0 0.0
        %5213 = vmatpush1.msra.mxu0 0.0
        %5214 = vmatprep.subr.mxu0 0.0
        %5215 = vmatpush1.msra.mxu0 0.0
        %5216 = vmatprep.subr.mxu0 0.0
        %5217 = vmatpush1.msra.mxu0 0.0
        %5218 = vmatprep.subr.mxu0 0.0
        %5219 = vmatpush1.msra.mxu0 0.0
        %5220 = vmatprep.subr.mxu0 0.0
        %5221 = vmatpush1.msra.mxu0 0.0
        %5222 = vmatprep.subr.mxu0 0.0
        %5223 = vmatpush1.msra.mxu0 0.0
        %5224 = vmatprep.subr.mxu0 0.0
        %5225 = vmatpush1.msra.mxu0 %v5183
        %5226 = vmatprep.subr.mxu0 0.0
        %5227 = vmatpush1.msra.mxu0 %v5182
        %5228 = vmatprep.subr.mxu0 0.0
        %5229 = vmatpush1.msra.mxu0 %v5181
        %5230 = vmatprep.subr.mxu0 0.0
        %5231 = vmatpush1.msra.mxu0 %v5180
        %5232 = vmatprep.subr.mxu0 0.0
        %5233 = vmatpush1.msra.mxu0 %v5179
        %5234 = vmatprep.subr.mxu0 0.0
        %5235 = vmatpush1.msra.mxu0 %v5178
        %5236 = vmatprep.subr.mxu0 0.0
        %5237 = vmatpush1.msra.mxu0 %v5177
        %5238 = vmatprep.subr.mxu0 0.0
        %5239 = vmatpush1.msra.mxu0 %v5176
        %5240 = vmatprep.subr.mxu0 0.0
        %5241 = vmatpush2.msra.mxu0 0.0
        %5242 = vmatprep.subr.mxu0 0.0
        %5243 = vmatpush2.msra.mxu0 0.0
        %5244 = vmatprep.subr.mxu0 0.0
        %5245 = vmatpush2.msra.mxu0 0.0
        %5246 = vmatprep.subr.mxu0 0.0
        %5247 = vmatpush2.msra.mxu0 0.0
        %5248 = vmatprep.subr.mxu0 0.0
        %5249 = vmatpush2.msra.mxu0 0.0
        %5250 = vmatprep.subr.mxu0 0.0
        %5251 = vmatpush2.msra.mxu0 0.0
        %5252 = vmatprep.subr.mxu0 0.0
        %5253 = vmatpush2.msra.mxu0 0.0
        %5254 = vmatprep.subr.mxu0 0.0
        %5255 = vmatpush2.msra.mxu0 0.0
        %5256 = vmatprep.subr.mxu0 0.0
        %5257 = vmatpush2.msra.mxu0 0.0
        %5258 = vmatprep.subr.mxu0 0.0
        %5259 = vmatpush2.msra.mxu0 0.0
        %5260 = vmatprep.subr.mxu0 0.0
        %5261 = vmatpush2.msra.mxu0 0.0
        %5262 = vmatprep.subr.mxu0 0.0
        %5263 = vmatpush2.msra.mxu0 0.0
        %5264 = vmatprep.subr.mxu0 0.0
        %5265 = vmatpush2.msra.mxu0 0.0
        %5266 = vmatprep.subr.mxu0 0.0
        %5267 = vmatpush2.msra.mxu0 0.0
        %5268 = vmatprep.subr.mxu0 0.0
        %5269 = vmatpush2.msra.mxu0 0.0
        %5270 = vmatprep.subr.mxu0 0.0
        %5271 = vmatpush2.msra.mxu0 0.0
        %5272 = vmatprep.mubr.f32.mxu0 0.0
        %5273 = vmatmul.mubr.f32.gmra.mxu0 %v5185
        %v5274 = vpop.f32.mrf.mxu0
        %v5275 = vadd.f32 0.0, %v5274
        %v5276 = vpop.f32.mrf.mxu0
        %5277 = vmatprep.mubr.f32.mxu0 0.0
        %5278 = vmatmul.mubr.f32.gmra.mxu0 %v5188
        %v5279 = vpop.f32.mrf.mxu0
        %v5280 = vadd.f32 0.0, %v5279
        %v5281 = vpop.f32.mrf.mxu0
        %5282 = vmatprep.mubr.f32.mxu0 0.0
        %5283 = vmatmul.mubr.f32.gmra.mxu0 %v5191
        %v5284 = vpop.f32.mrf.mxu0
        %v5285 = vadd.f32 0.0, %v5284
        %v5286 = vpop.f32.mrf.mxu0
        %5287 = vmatprep.mubr.f32.mxu0 0.0
        %5288 = vmatmul.mubr.f32.gmra.mxu0 %v5194
        %v5289 = vpop.f32.mrf.mxu0
        %v5290 = vadd.f32 0.0, %v5289
        %v5291 = vpop.f32.mrf.mxu0
        %5292 = vmatprep.mubr.f32.mxu0 0.0
        %5293 = vmatmul.mubr.f32.gmra.mxu0 %v5197
        %v5294 = vpop.f32.mrf.mxu0
        %v5295 = vadd.f32 0.0, %v5294
        %v5296 = vpop.f32.mrf.mxu0
        %5297 = vmatprep.mubr.f32.mxu0 0.0
        %5298 = vmatmul.mubr.f32.gmra.mxu0 %v5200
        %v5299 = vpop.f32.mrf.mxu0
        %v5300 = vadd.f32 0.0, %v5299
        %v5301 = vpop.f32.mrf.mxu0
        %5302 = vmatprep.mubr.f32.mxu0 0.0
        %5303 = vmatmul.mubr.f32.gmra.mxu0 %v5203
        %v5304 = vpop.f32.mrf.mxu0
        %v5305 = vadd.f32 0.0, %v5304
        %v5306 = vpop.f32.mrf.mxu0
        %5307 = vmatprep.mubr.f32.mxu0 0.0
        %5308 = vmatmul.mubr.f32.gmra.mxu0 %v5206
        %v5309 = vpop.f32.mrf.mxu0
        %v5310 = vadd.f32 0.0, %v5309
        %v5311 = vpop.f32.mrf.mxu0
        %5312 = vdwg.mxu0
        %v5313 = vadd.f32 %v5159, %v5275
        %v5314 = vadd.f32 %v5160, %v5280
        %v5315 = vadd.f32 %v5161, %v5285
        %v5316 = vadd.f32 %v5162, %v5290
        %v5317 = vadd.f32 %v5163, %v5295
        %v5318 = vadd.f32 %v5164, %v5300
        %v5319 = vadd.f32 %v5165, %v5305
        %v5320 = vadd.f32 %v5166, %v5310
        %v5321 = vld [vmem:[%s6] sm:$0x1]
        %v5323 = vlaneseq
        %v5324 = vshrl.u32 %v5323, 7
        %v5325 = vsub.s32 0, %v5324
        %v5326 = vrot.slane %v5321, %v5325
        %v5328 = vadd.f32 %v5313, %v5326
        %v5329 = vadd.f32 %v5314, %v5326
        %v5330 = vadd.f32 %v5315, %v5326
        %v5331 = vadd.f32 %v5316, %v5326
        %v5332 = vadd.f32 %v5317, %v5326
        %v5333 = vadd.f32 %v5318, %v5326
        %v5334 = vadd.f32 %v5319, %v5326
        %v5335 = vadd.f32 %v5320, %v5326
        %v5336 = vmax.f32 %v5328, 0.0
        %v5337 = vmax.f32 %v5329, 0.0
        %v5338 = vmax.f32 %v5330, 0.0
        %v5339 = vmax.f32 %v5331, 0.0
        %v5340 = vmax.f32 %v5332, 0.0
        %v5341 = vmax.f32 %v5333, 0.0
        %v5342 = vmax.f32 %v5334, 0.0
        %v5343 = vmax.f32 %v5335, 0.0
        %5344 = vst.msk [vmem:[#allocation6] sm:$0xff] %vm527, 0.0
        %5345 = vst.msk [vmem:[#allocation6 + $0x8] sm:$0xff] %vm527, 0.0
        %5346 = vst.msk [vmem:[#allocation6 + $0x10] sm:$0x3] %vm2522, 0.0
        %s5347 = scalar_lea.vmem [#allocation6], 408
        %5348 = vst.msk [vmem:[%s5347] sm:$0xff] %vm527, 0.0
        %5349 = vst.msk [vmem:[%s5347 + $0x8] sm:$0xff] %vm527, 0.0
        %5350 = vst.msk [vmem:[%s5347 + $0x10] sm:$0x3] %vm2522, 0.0
        %5351 = vst.msk [vmem:[#allocation6] sm:$0x1] %vm2527, 0.0
        %5352 = vst.msk [vmem:[#allocation6 + $0x18] sm:$0x1] %vm2527, 0.0
        %5353 = vst.msk [vmem:[#allocation6 + $0x30] sm:$0x1] %vm2527, 0.0
        %5354 = vst.msk [vmem:[#allocation6 + $0x48] sm:$0x1] %vm2527, 0.0
        %5355 = vst.msk [vmem:[#allocation6 + $0x60] sm:$0x1] %vm2527, 0.0
        %5356 = vst.msk [vmem:[#allocation6 + $0x78] sm:$0x1] %vm2527, 0.0
        %5357 = vst.msk [vmem:[#allocation6 + $0x90] sm:$0x1] %vm2527, 0.0
        %5358 = vst.msk [vmem:[#allocation6 + $0xa8] sm:$0x1] %vm2527, 0.0
        %5359 = vst.msk [vmem:[#allocation6 + $0xc0] sm:$0x1] %vm2527, 0.0
        %5360 = vst.msk [vmem:[#allocation6 + $0xd8] sm:$0x1] %vm2527, 0.0
        %5361 = vst.msk [vmem:[#allocation6 + $0xf0] sm:$0x1] %vm2527, 0.0
        %5362 = vst.msk [vmem:[#allocation6 + $0x108] sm:$0x1] %vm2527, 0.0
        %5363 = vst.msk [vmem:[#allocation6 + $0x120] sm:$0x1] %vm2527, 0.0
        %5364 = vst.msk [vmem:[#allocation6 + $0x138] sm:$0x1] %vm2527, 0.0
        %5365 = vst.msk [vmem:[#allocation6 + $0x150] sm:$0x1] %vm2527, 0.0
        %5366 = vst.msk [vmem:[#allocation6 + $0x168] sm:$0x1] %vm2527, 0.0
        %5367 = vst.msk [vmem:[#allocation6 + $0x180] sm:$0x1] %vm2527, 0.0
        %5368 = vst.msk [vmem:[#allocation6 + $0x198] sm:$0x1] %vm2527, 0.0
        %5369 = vst.msk [vmem:[#allocation6 + $0x11] sm:$0x1] %vm2527, 0.0
        %5370 = vst.msk [vmem:[#allocation6 + $0x29] sm:$0x1] %vm2527, 0.0
        %5371 = vst.msk [vmem:[#allocation6 + $0x41] sm:$0x1] %vm2527, 0.0
        %5372 = vst.msk [vmem:[#allocation6 + $0x59] sm:$0x1] %vm2527, 0.0
        %5373 = vst.msk [vmem:[#allocation6 + $0x71] sm:$0x1] %vm2527, 0.0
        %5374 = vst.msk [vmem:[#allocation6 + $0x89] sm:$0x1] %vm2527, 0.0
        %5375 = vst.msk [vmem:[#allocation6 + $0xa1] sm:$0x1] %vm2527, 0.0
        %5376 = vst.msk [vmem:[#allocation6 + $0xb9] sm:$0x1] %vm2527, 0.0
        %5377 = vst.msk [vmem:[#allocation6 + $0xd1] sm:$0x1] %vm2527, 0.0
        %5378 = vst.msk [vmem:[#allocation6 + $0xe9] sm:$0x1] %vm2527, 0.0
        %5379 = vst.msk [vmem:[#allocation6 + $0x101] sm:$0x1] %vm2527, 0.0
        %5380 = vst.msk [vmem:[#allocation6 + $0x119] sm:$0x1] %vm2527, 0.0
        %5381 = vst.msk [vmem:[#allocation6 + $0x131] sm:$0x1] %vm2527, 0.0
        %5382 = vst.msk [vmem:[#allocation6 + $0x149] sm:$0x1] %vm2527, 0.0
        %5383 = vst.msk [vmem:[#allocation6 + $0x161] sm:$0x1] %vm2527, 0.0
        %5384 = vst.msk [vmem:[#allocation6 + $0x179] sm:$0x1] %vm2527, 0.0
        %5385 = vst.msk [vmem:[#allocation6 + $0x191] sm:$0x1] %vm2527, 0.0
        %5386 = vst.msk [vmem:[#allocation6 + $0x1a9] sm:$0x1] %vm2527, 0.0
        %s5387 = scalar_lea.vmem [#allocation6], 24
        %s5388 = scalar_lea.vmem %s5387, 1 [#allocation6]
        %5389 = vst [vmem:[%s5388] ss:$2 sm:$0xff] %v5336
        %s5390 = scalar_lea.vmem %s5387, 25 [#allocation6]
        %5391 = vst [vmem:[%s5390] ss:$2 sm:$0xff] %v5336
        %s5392 = scalar_lea.vmem %s5387, 49 [#allocation6]
        %5393 = vst [vmem:[%s5392] ss:$2 sm:$0xff] %v5337
        %s5394 = scalar_lea.vmem %s5387, 73 [#allocation6]
        %5395 = vst [vmem:[%s5394] ss:$2 sm:$0xff] %v5337
        %s5396 = scalar_lea.vmem %s5387, 97 [#allocation6]
        %5397 = vst [vmem:[%s5396] ss:$2 sm:$0xff] %v5338
        %s5398 = scalar_lea.vmem %s5387, 121 [#allocation6]
        %5399 = vst [vmem:[%s5398] ss:$2 sm:$0xff] %v5338
        %s5400 = scalar_lea.vmem %s5387, 145 [#allocation6]
        %5401 = vst [vmem:[%s5400] ss:$2 sm:$0xff] %v5339
        %s5402 = scalar_lea.vmem %s5387, 169 [#allocation6]
        %5403 = vst [vmem:[%s5402] ss:$2 sm:$0xff] %v5339
        %s5404 = scalar_lea.vmem %s5387, 193 [#allocation6]
        %5405 = vst [vmem:[%s5404] ss:$2 sm:$0xff] %v5340
        %s5406 = scalar_lea.vmem %s5387, 217 [#allocation6]
        %5407 = vst [vmem:[%s5406] ss:$2 sm:$0xff] %v5340
        %s5408 = scalar_lea.vmem %s5387, 241 [#allocation6]
        %5409 = vst [vmem:[%s5408] ss:$2 sm:$0xff] %v5341
        %s5410 = scalar_lea.vmem %s5387, 265 [#allocation6]
        %5411 = vst [vmem:[%s5410] ss:$2 sm:$0xff] %v5341
        %s5412 = scalar_lea.vmem %s5387, 289 [#allocation6]
        %5413 = vst [vmem:[%s5412] ss:$2 sm:$0xff] %v5342
        %s5414 = scalar_lea.vmem %s5387, 313 [#allocation6]
        %5415 = vst [vmem:[%s5414] ss:$2 sm:$0xff] %v5342
        %s5416 = scalar_lea.vmem %s5387, 337 [#allocation6]
        %5417 = vst [vmem:[%s5416] ss:$2 sm:$0xff] %v5343
        %s5418 = scalar_lea.vmem %s5387, 361 [#allocation6]
        %5419 = vst [vmem:[%s5418] ss:$2 sm:$0xff] %v5343
        %s5420 = scalar_lea.vmem %s5387, 2 [#allocation6]
        %5421 = vst [vmem:[%s5420] ss:$2 sm:$0xff] %v5336
        %s5422 = scalar_lea.vmem %s5387, 26 [#allocation6]
        %5423 = vst [vmem:[%s5422] ss:$2 sm:$0xff] %v5336
        %s5424 = scalar_lea.vmem %s5387, 50 [#allocation6]
        %5425 = vst [vmem:[%s5424] ss:$2 sm:$0xff] %v5337
        %s5426 = scalar_lea.vmem %s5387, 74 [#allocation6]
        %5427 = vst [vmem:[%s5426] ss:$2 sm:$0xff] %v5337
        %s5428 = scalar_lea.vmem %s5387, 98 [#allocation6]
        %5429 = vst [vmem:[%s5428] ss:$2 sm:$0xff] %v5338
        %s5430 = scalar_lea.vmem %s5387, 122 [#allocation6]
        %5431 = vst [vmem:[%s5430] ss:$2 sm:$0xff] %v5338
        %s5432 = scalar_lea.vmem %s5387, 146 [#allocation6]
        %5433 = vst [vmem:[%s5432] ss:$2 sm:$0xff] %v5339
        %s5434 = scalar_lea.vmem %s5387, 170 [#allocation6]
        %5435 = vst [vmem:[%s5434] ss:$2 sm:$0xff] %v5339
        %s5436 = scalar_lea.vmem %s5387, 194 [#allocation6]
        %5437 = vst [vmem:[%s5436] ss:$2 sm:$0xff] %v5340
        %s5438 = scalar_lea.vmem %s5387, 218 [#allocation6]
        %5439 = vst [vmem:[%s5438] ss:$2 sm:$0xff] %v5340
        %s5440 = scalar_lea.vmem %s5387, 242 [#allocation6]
        %5441 = vst [vmem:[%s5440] ss:$2 sm:$0xff] %v5341
        %s5442 = scalar_lea.vmem %s5387, 266 [#allocation6]
        %5443 = vst [vmem:[%s5442] ss:$2 sm:$0xff] %v5341
        %s5444 = scalar_lea.vmem %s5387, 290 [#allocation6]
        %5445 = vst [vmem:[%s5444] ss:$2 sm:$0xff] %v5342
        %s5446 = scalar_lea.vmem %s5387, 314 [#allocation6]
        %5447 = vst [vmem:[%s5446] ss:$2 sm:$0xff] %v5342
        %s5448 = scalar_lea.vmem %s5387, 338 [#allocation6]
        %5449 = vst [vmem:[%s5448] ss:$2 sm:$0xff] %v5343
        %s5450 = scalar_lea.vmem %s5387, 362 [#allocation6]
        %5451 = vst [vmem:[%s5450] ss:$2 sm:$0xff] %v5343
        %v5452 = vld [vmem:[#allocation6] sm:$0xff]
        %v5453 = vld [vmem:[#allocation6 + $0x8] sm:$0xff]
        %v5454 = vld [vmem:[#allocation6 + $0x18] sm:$0xff]
        %v5455 = vld [vmem:[#allocation6 + $0x20] sm:$0xff]
        %v5456 = vld [vmem:[#allocation6 + $0x30] sm:$0xff]
        %v5457 = vld [vmem:[#allocation6 + $0x38] sm:$0xff]
        %v5458 = vld [vmem:[#allocation6 + $0x48] sm:$0xff]
        %v5459 = vld [vmem:[#allocation6 + $0x50] sm:$0xff]
        %v5460 = vld [vmem:[#allocation6 + $0x60] sm:$0xff]
        %v5461 = vld [vmem:[#allocation6 + $0x68] sm:$0xff]
        %v5462 = vld [vmem:[#allocation6 + $0x78] sm:$0xff]
        %v5463 = vld [vmem:[#allocation6 + $0x80] sm:$0xff]
        %v5464 = vld [vmem:[#allocation6 + $0x90] sm:$0xff]
        %v5465 = vld [vmem:[#allocation6 + $0x98] sm:$0xff]
        %v5466 = vld [vmem:[#allocation6 + $0xa8] sm:$0xff]
        %v5467 = vld [vmem:[#allocation6 + $0xb0] sm:$0xff]
        %v5468 = vld [vmem:[#allocation6 + $0xc0] sm:$0xff]
        %v5469 = vld [vmem:[#allocation6 + $0xc8] sm:$0xff]
        %v5470 = vld [vmem:[#allocation6 + $0xd8] sm:$0xff]
        %v5471 = vld [vmem:[#allocation6 + $0xe0] sm:$0xff]
        %v5472 = vld [vmem:[#allocation6 + $0xf0] sm:$0xff]
        %v5473 = vld [vmem:[#allocation6 + $0xf8] sm:$0xff]
        %v5474 = vld [vmem:[#allocation6 + $0x108] sm:$0xff]
        %v5475 = vld [vmem:[#allocation6 + $0x110] sm:$0xff]
        %v5476 = vld [vmem:[#allocation6 + $0x120] sm:$0xff]
        %v5477 = vld [vmem:[#allocation6 + $0x128] sm:$0xff]
        %v5478 = vld [vmem:[#allocation6 + $0x138] sm:$0xff]
        %v5479 = vld [vmem:[#allocation6 + $0x140] sm:$0xff]
        %v5480 = vld [vmem:[#allocation6 + $0x150] sm:$0xff]
        %v5481 = vld [vmem:[#allocation6 + $0x158] sm:$0xff]
        %v5482 = vld [vmem:[#allocation6 + $0x168] sm:$0xff]
        %v5483 = vld [vmem:[#allocation6 + $0x170] sm:$0xff]
        %v5484 = vld [vmem:[%s7] sm:$0x1]
        %v5485 = vlaneseq
        %v5486 = vshrl.u32 %v5485, 7
        %v5487 = vsub.s32 0, %v5486
        %v5488 = vrot.slane %v5484, %v5487
        %v5489 = vmul.f32 %v5452, %v5488
        %v5490 = vmul.f32 %v5453, %v5488
        %v5491 = vmul.f32 %v5454, %v5488
        %v5492 = vmul.f32 %v5455, %v5488
        %v5493 = vmul.f32 %v5456, %v5488
        %v5494 = vmul.f32 %v5457, %v5488
        %v5495 = vmul.f32 %v5458, %v5488
        %v5496 = vmul.f32 %v5459, %v5488
        %v5497 = vmul.f32 %v5460, %v5488
        %v5498 = vmul.f32 %v5461, %v5488
        %v5499 = vmul.f32 %v5462, %v5488
        %v5500 = vmul.f32 %v5463, %v5488
        %v5501 = vmul.f32 %v5464, %v5488
        %v5502 = vmul.f32 %v5465, %v5488
        %v5503 = vmul.f32 %v5466, %v5488
        %v5504 = vmul.f32 %v5467, %v5488
        %v5505 = vmul.f32 %v5468, %v5488
        %v5506 = vmul.f32 %v5469, %v5488
        %v5507 = vmul.f32 %v5470, %v5488
        %v5508 = vmul.f32 %v5471, %v5488
        %v5509 = vmul.f32 %v5472, %v5488
        %v5510 = vmul.f32 %v5473, %v5488
        %v5511 = vmul.f32 %v5474, %v5488
        %v5512 = vmul.f32 %v5475, %v5488
        %v5513 = vmul.f32 %v5476, %v5488
        %v5514 = vmul.f32 %v5477, %v5488
        %v5515 = vmul.f32 %v5478, %v5488
        %v5516 = vmul.f32 %v5479, %v5488
        %v5517 = vmul.f32 %v5480, %v5488
        %v5518 = vmul.f32 %v5481, %v5488
        %v5519 = vmul.f32 %v5482, %v5488
        %v5520 = vmul.f32 %v5483, %v5488
        %v5521 = vadd.f32 %v5489, 0.0
        %v5522 = vadd.f32 %v5490, 0.0
        %v5523 = vadd.f32 %v5491, 0.0
        %v5524 = vadd.f32 %v5492, 0.0
        %v5525 = vadd.f32 %v5493, 0.0
        %v5526 = vadd.f32 %v5494, 0.0
        %v5527 = vadd.f32 %v5495, 0.0
        %v5528 = vadd.f32 %v5496, 0.0
        %v5529 = vadd.f32 %v5497, 0.0
        %v5530 = vadd.f32 %v5498, 0.0
        %v5531 = vadd.f32 %v5499, 0.0
        %v5532 = vadd.f32 %v5500, 0.0
        %v5533 = vadd.f32 %v5501, 0.0
        %v5534 = vadd.f32 %v5502, 0.0
        %v5535 = vadd.f32 %v5503, 0.0
        %v5536 = vadd.f32 %v5504, 0.0
        %v5537 = vadd.f32 %v5505, 0.0
        %v5538 = vadd.f32 %v5506, 0.0
        %v5539 = vadd.f32 %v5507, 0.0
        %v5540 = vadd.f32 %v5508, 0.0
        %v5541 = vadd.f32 %v5509, 0.0
        %v5542 = vadd.f32 %v5510, 0.0
        %v5543 = vadd.f32 %v5511, 0.0
        %v5544 = vadd.f32 %v5512, 0.0
        %v5545 = vadd.f32 %v5513, 0.0
        %v5546 = vadd.f32 %v5514, 0.0
        %v5547 = vadd.f32 %v5515, 0.0
        %v5548 = vadd.f32 %v5516, 0.0
        %v5549 = vadd.f32 %v5517, 0.0
        %v5550 = vadd.f32 %v5518, 0.0
        %v5551 = vadd.f32 %v5519, 0.0
        %v5552 = vadd.f32 %v5520, 0.0
        %v5553 = vld [vmem:[#allocation6 + $0x1] sm:$0xff]
        %v5554 = vld [vmem:[#allocation6 + $0x9] sm:$0xff]
        %v5555 = vld [vmem:[#allocation6 + $0x19] sm:$0xff]
        %v5556 = vld [vmem:[#allocation6 + $0x21] sm:$0xff]
        %v5557 = vld [vmem:[#allocation6 + $0x31] sm:$0xff]
        %v5558 = vld [vmem:[#allocation6 + $0x39] sm:$0xff]
        %v5559 = vld [vmem:[#allocation6 + $0x49] sm:$0xff]
        %v5560 = vld [vmem:[#allocation6 + $0x51] sm:$0xff]
        %v5561 = vld [vmem:[#allocation6 + $0x61] sm:$0xff]
        %v5562 = vld [vmem:[#allocation6 + $0x69] sm:$0xff]
        %v5563 = vld [vmem:[#allocation6 + $0x79] sm:$0xff]
        %v5564 = vld [vmem:[#allocation6 + $0x81] sm:$0xff]
        %v5565 = vld [vmem:[#allocation6 + $0x91] sm:$0xff]
        %v5566 = vld [vmem:[#allocation6 + $0x99] sm:$0xff]
        %v5567 = vld [vmem:[#allocation6 + $0xa9] sm:$0xff]
        %v5568 = vld [vmem:[#allocation6 + $0xb1] sm:$0xff]
        %v5569 = vld [vmem:[#allocation6 + $0xc1] sm:$0xff]
        %v5570 = vld [vmem:[#allocation6 + $0xc9] sm:$0xff]
        %v5571 = vld [vmem:[#allocation6 + $0xd9] sm:$0xff]
        %v5572 = vld [vmem:[#allocation6 + $0xe1] sm:$0xff]
        %v5573 = vld [vmem:[#allocation6 + $0xf1] sm:$0xff]
        %v5574 = vld [vmem:[#allocation6 + $0xf9] sm:$0xff]
        %v5575 = vld [vmem:[#allocation6 + $0x109] sm:$0xff]
        %v5576 = vld [vmem:[#allocation6 + $0x111] sm:$0xff]
        %v5577 = vld [vmem:[#allocation6 + $0x121] sm:$0xff]
        %v5578 = vld [vmem:[#allocation6 + $0x129] sm:$0xff]
        %v5579 = vld [vmem:[#allocation6 + $0x139] sm:$0xff]
        %v5580 = vld [vmem:[#allocation6 + $0x141] sm:$0xff]
        %v5581 = vld [vmem:[#allocation6 + $0x151] sm:$0xff]
        %v5582 = vld [vmem:[#allocation6 + $0x159] sm:$0xff]
        %v5583 = vld [vmem:[#allocation6 + $0x169] sm:$0xff]
        %v5584 = vld [vmem:[#allocation6 + $0x171] sm:$0xff]
        %v5585 = vld [vmem:[%s7 + $0x1] sm:$0x1]
        %v5586 = vlaneseq
        %v5587 = vshrl.u32 %v5586, 7
        %v5588 = vsub.s32 0, %v5587
        %v5589 = vrot.slane %v5585, %v5588
        %v5590 = vmul.f32 %v5553, %v5589
        %v5591 = vmul.f32 %v5554, %v5589
        %v5592 = vmul.f32 %v5555, %v5589
        %v5593 = vmul.f32 %v5556, %v5589
        %v5594 = vmul.f32 %v5557, %v5589
        %v5595 = vmul.f32 %v5558, %v5589
        %v5596 = vmul.f32 %v5559, %v5589
        %v5597 = vmul.f32 %v5560, %v5589
        %v5598 = vmul.f32 %v5561, %v5589
        %v5599 = vmul.f32 %v5562, %v5589
        %v5600 = vmul.f32 %v5563, %v5589
        %v5601 = vmul.f32 %v5564, %v5589
        %v5602 = vmul.f32 %v5565, %v5589
        %v5603 = vmul.f32 %v5566, %v5589
        %v5604 = vmul.f32 %v5567, %v5589
        %v5605 = vmul.f32 %v5568, %v5589
        %v5606 = vmul.f32 %v5569, %v5589
        %v5607 = vmul.f32 %v5570, %v5589
        %v5608 = vmul.f32 %v5571, %v5589
        %v5609 = vmul.f32 %v5572, %v5589
        %v5610 = vmul.f32 %v5573, %v5589
        %v5611 = vmul.f32 %v5574, %v5589
        %v5612 = vmul.f32 %v5575, %v5589
        %v5613 = vmul.f32 %v5576, %v5589
        %v5614 = vmul.f32 %v5577, %v5589
        %v5615 = vmul.f32 %v5578, %v5589
        %v5616 = vmul.f32 %v5579, %v5589
        %v5617 = vmul.f32 %v5580, %v5589
        %v5618 = vmul.f32 %v5581, %v5589
        %v5619 = vmul.f32 %v5582, %v5589
        %v5620 = vmul.f32 %v5583, %v5589
        %v5621 = vmul.f32 %v5584, %v5589
        %v5622 = vadd.f32 %v5521, %v5590
        %v5623 = vadd.f32 %v5522, %v5591
        %v5624 = vadd.f32 %v5523, %v5592
        %v5625 = vadd.f32 %v5524, %v5593
        %v5626 = vadd.f32 %v5525, %v5594
        %v5627 = vadd.f32 %v5526, %v5595
        %v5628 = vadd.f32 %v5527, %v5596
        %v5629 = vadd.f32 %v5528, %v5597
        %v5630 = vadd.f32 %v5529, %v5598
        %v5631 = vadd.f32 %v5530, %v5599
        %v5632 = vadd.f32 %v5531, %v5600
        %v5633 = vadd.f32 %v5532, %v5601
        %v5634 = vadd.f32 %v5533, %v5602
        %v5635 = vadd.f32 %v5534, %v5603
        %v5636 = vadd.f32 %v5535, %v5604
        %v5637 = vadd.f32 %v5536, %v5605
        %v5638 = vadd.f32 %v5537, %v5606
        %v5639 = vadd.f32 %v5538, %v5607
        %v5640 = vadd.f32 %v5539, %v5608
        %v5641 = vadd.f32 %v5540, %v5609
        %v5642 = vadd.f32 %v5541, %v5610
        %v5643 = vadd.f32 %v5542, %v5611
        %v5644 = vadd.f32 %v5543, %v5612
        %v5645 = vadd.f32 %v5544, %v5613
        %v5646 = vadd.f32 %v5545, %v5614
        %v5647 = vadd.f32 %v5546, %v5615
        %v5648 = vadd.f32 %v5547, %v5616
        %v5649 = vadd.f32 %v5548, %v5617
        %v5650 = vadd.f32 %v5549, %v5618
        %v5651 = vadd.f32 %v5550, %v5619
        %v5652 = vadd.f32 %v5551, %v5620
        %v5653 = vadd.f32 %v5552, %v5621
        %v5654 = vld [vmem:[#allocation6 + $0x2] sm:$0xff]
        %v5655 = vld [vmem:[#allocation6 + $0xa] sm:$0xff]
        %v5656 = vld [vmem:[#allocation6 + $0x1a] sm:$0xff]
        %v5657 = vld [vmem:[#allocation6 + $0x22] sm:$0xff]
        %v5658 = vld [vmem:[#allocation6 + $0x32] sm:$0xff]
        %v5659 = vld [vmem:[#allocation6 + $0x3a] sm:$0xff]
        %v5660 = vld [vmem:[#allocation6 + $0x4a] sm:$0xff]
        %v5661 = vld [vmem:[#allocation6 + $0x52] sm:$0xff]
        %v5662 = vld [vmem:[#allocation6 + $0x62] sm:$0xff]
        %v5663 = vld [vmem:[#allocation6 + $0x6a] sm:$0xff]
        %v5664 = vld [vmem:[#allocation6 + $0x7a] sm:$0xff]
        %v5665 = vld [vmem:[#allocation6 + $0x82] sm:$0xff]
        %v5666 = vld [vmem:[#allocation6 + $0x92] sm:$0xff]
        %v5667 = vld [vmem:[#allocation6 + $0x9a] sm:$0xff]
        %v5668 = vld [vmem:[#allocation6 + $0xaa] sm:$0xff]
        %v5669 = vld [vmem:[#allocation6 + $0xb2] sm:$0xff]
        %v5670 = vld [vmem:[#allocation6 + $0xc2] sm:$0xff]
        %v5671 = vld [vmem:[#allocation6 + $0xca] sm:$0xff]
        %v5672 = vld [vmem:[#allocation6 + $0xda] sm:$0xff]
        %v5673 = vld [vmem:[#allocation6 + $0xe2] sm:$0xff]
        %v5674 = vld [vmem:[#allocation6 + $0xf2] sm:$0xff]
        %v5675 = vld [vmem:[#allocation6 + $0xfa] sm:$0xff]
        %v5676 = vld [vmem:[#allocation6 + $0x10a] sm:$0xff]
        %v5677 = vld [vmem:[#allocation6 + $0x112] sm:$0xff]
        %v5678 = vld [vmem:[#allocation6 + $0x122] sm:$0xff]
        %v5679 = vld [vmem:[#allocation6 + $0x12a] sm:$0xff]
        %v5680 = vld [vmem:[#allocation6 + $0x13a] sm:$0xff]
        %v5681 = vld [vmem:[#allocation6 + $0x142] sm:$0xff]
        %v5682 = vld [vmem:[#allocation6 + $0x152] sm:$0xff]
        %v5683 = vld [vmem:[#allocation6 + $0x15a] sm:$0xff]
        %v5684 = vld [vmem:[#allocation6 + $0x16a] sm:$0xff]
        %v5685 = vld [vmem:[#allocation6 + $0x172] sm:$0xff]
        %v5686 = vld [vmem:[%s7 + $0x2] sm:$0x1]
        %v5687 = vlaneseq
        %v5688 = vshrl.u32 %v5687, 7
        %v5689 = vsub.s32 0, %v5688
        %v5690 = vrot.slane %v5686, %v5689
        %v5691 = vmul.f32 %v5654, %v5690
        %v5692 = vmul.f32 %v5655, %v5690
        %v5693 = vmul.f32 %v5656, %v5690
        %v5694 = vmul.f32 %v5657, %v5690
        %v5695 = vmul.f32 %v5658, %v5690
        %v5696 = vmul.f32 %v5659, %v5690
        %v5697 = vmul.f32 %v5660, %v5690
        %v5698 = vmul.f32 %v5661, %v5690
        %v5699 = vmul.f32 %v5662, %v5690
        %v5700 = vmul.f32 %v5663, %v5690
        %v5701 = vmul.f32 %v5664, %v5690
        %v5702 = vmul.f32 %v5665, %v5690
        %v5703 = vmul.f32 %v5666, %v5690
        %v5704 = vmul.f32 %v5667, %v5690
        %v5705 = vmul.f32 %v5668, %v5690
        %v5706 = vmul.f32 %v5669, %v5690
        %v5707 = vmul.f32 %v5670, %v5690
        %v5708 = vmul.f32 %v5671, %v5690
        %v5709 = vmul.f32 %v5672, %v5690
        %v5710 = vmul.f32 %v5673, %v5690
        %v5711 = vmul.f32 %v5674, %v5690
        %v5712 = vmul.f32 %v5675, %v5690
        %v5713 = vmul.f32 %v5676, %v5690
        %v5714 = vmul.f32 %v5677, %v5690
        %v5715 = vmul.f32 %v5678, %v5690
        %v5716 = vmul.f32 %v5679, %v5690
        %v5717 = vmul.f32 %v5680, %v5690
        %v5718 = vmul.f32 %v5681, %v5690
        %v5719 = vmul.f32 %v5682, %v5690
        %v5720 = vmul.f32 %v5683, %v5690
        %v5721 = vmul.f32 %v5684, %v5690
        %v5722 = vmul.f32 %v5685, %v5690
        %v5723 = vadd.f32 %v5622, %v5691
        %v5724 = vadd.f32 %v5623, %v5692
        %v5725 = vadd.f32 %v5624, %v5693
        %v5726 = vadd.f32 %v5625, %v5694
        %v5727 = vadd.f32 %v5626, %v5695
        %v5728 = vadd.f32 %v5627, %v5696
        %v5729 = vadd.f32 %v5628, %v5697
        %v5730 = vadd.f32 %v5629, %v5698
        %v5731 = vadd.f32 %v5630, %v5699
        %v5732 = vadd.f32 %v5631, %v5700
        %v5733 = vadd.f32 %v5632, %v5701
        %v5734 = vadd.f32 %v5633, %v5702
        %v5735 = vadd.f32 %v5634, %v5703
        %v5736 = vadd.f32 %v5635, %v5704
        %v5737 = vadd.f32 %v5636, %v5705
        %v5738 = vadd.f32 %v5637, %v5706
        %v5739 = vadd.f32 %v5638, %v5707
        %v5740 = vadd.f32 %v5639, %v5708
        %v5741 = vadd.f32 %v5640, %v5709
        %v5742 = vadd.f32 %v5641, %v5710
        %v5743 = vadd.f32 %v5642, %v5711
        %v5744 = vadd.f32 %v5643, %v5712
        %v5745 = vadd.f32 %v5644, %v5713
        %v5746 = vadd.f32 %v5645, %v5714
        %v5747 = vadd.f32 %v5646, %v5715
        %v5748 = vadd.f32 %v5647, %v5716
        %v5749 = vadd.f32 %v5648, %v5717
        %v5750 = vadd.f32 %v5649, %v5718
        %v5751 = vadd.f32 %v5650, %v5719
        %v5752 = vadd.f32 %v5651, %v5720
        %v5753 = vadd.f32 %v5652, %v5721
        %v5754 = vadd.f32 %v5653, %v5722
        %v5755 = vld [vmem:[%s5387] sm:$0xff]
        %v5756 = vld [vmem:[%s5387 + $0x8] sm:$0xff]
        %v5757 = vld [vmem:[%s5387 + $0x18] sm:$0xff]
        %v5758 = vld [vmem:[%s5387 + $0x20] sm:$0xff]
        %v5759 = vld [vmem:[%s5387 + $0x30] sm:$0xff]
        %v5760 = vld [vmem:[%s5387 + $0x38] sm:$0xff]
        %v5761 = vld [vmem:[%s5387 + $0x48] sm:$0xff]
        %v5762 = vld [vmem:[%s5387 + $0x50] sm:$0xff]
        %v5763 = vld [vmem:[%s5387 + $0x60] sm:$0xff]
        %v5764 = vld [vmem:[%s5387 + $0x68] sm:$0xff]
        %v5765 = vld [vmem:[%s5387 + $0x78] sm:$0xff]
        %v5766 = vld [vmem:[%s5387 + $0x80] sm:$0xff]
        %v5767 = vld [vmem:[%s5387 + $0x90] sm:$0xff]
        %v5768 = vld [vmem:[%s5387 + $0x98] sm:$0xff]
        %v5769 = vld [vmem:[%s5387 + $0xa8] sm:$0xff]
        %v5770 = vld [vmem:[%s5387 + $0xb0] sm:$0xff]
        %v5771 = vld [vmem:[%s5387 + $0xc0] sm:$0xff]
        %v5772 = vld [vmem:[%s5387 + $0xc8] sm:$0xff]
        %v5773 = vld [vmem:[%s5387 + $0xd8] sm:$0xff]
        %v5774 = vld [vmem:[%s5387 + $0xe0] sm:$0xff]
        %v5775 = vld [vmem:[%s5387 + $0xf0] sm:$0xff]
        %v5776 = vld [vmem:[%s5387 + $0xf8] sm:$0xff]
        %v5777 = vld [vmem:[%s5387 + $0x108] sm:$0xff]
        %v5778 = vld [vmem:[%s5387 + $0x110] sm:$0xff]
        %v5779 = vld [vmem:[%s5387 + $0x120] sm:$0xff]
        %v5780 = vld [vmem:[%s5387 + $0x128] sm:$0xff]
        %v5781 = vld [vmem:[%s5387 + $0x138] sm:$0xff]
        %v5782 = vld [vmem:[%s5387 + $0x140] sm:$0xff]
        %v5783 = vld [vmem:[%s5387 + $0x150] sm:$0xff]
        %v5784 = vld [vmem:[%s5387 + $0x158] sm:$0xff]
        %v5785 = vld [vmem:[%s5387 + $0x168] sm:$0xff]
        %v5786 = vld [vmem:[%s5387 + $0x170] sm:$0xff]
        %v5787 = vld [vmem:[%s7 + $0x3] sm:$0x1]
        %v5788 = vlaneseq
        %v5789 = vshrl.u32 %v5788, 7
        %v5790 = vsub.s32 0, %v5789
        %v5791 = vrot.slane %v5787, %v5790
        %v5792 = vmul.f32 %v5755, %v5791
        %v5793 = vmul.f32 %v5756, %v5791
        %v5794 = vmul.f32 %v5757, %v5791
        %v5795 = vmul.f32 %v5758, %v5791
        %v5796 = vmul.f32 %v5759, %v5791
        %v5797 = vmul.f32 %v5760, %v5791
        %v5798 = vmul.f32 %v5761, %v5791
        %v5799 = vmul.f32 %v5762, %v5791
        %v5800 = vmul.f32 %v5763, %v5791
        %v5801 = vmul.f32 %v5764, %v5791
        %v5802 = vmul.f32 %v5765, %v5791
        %v5803 = vmul.f32 %v5766, %v5791
        %v5804 = vmul.f32 %v5767, %v5791
        %v5805 = vmul.f32 %v5768, %v5791
        %v5806 = vmul.f32 %v5769, %v5791
        %v5807 = vmul.f32 %v5770, %v5791
        %v5808 = vmul.f32 %v5771, %v5791
        %v5809 = vmul.f32 %v5772, %v5791
        %v5810 = vmul.f32 %v5773, %v5791
        %v5811 = vmul.f32 %v5774, %v5791
        %v5812 = vmul.f32 %v5775, %v5791
        %v5813 = vmul.f32 %v5776, %v5791
        %v5814 = vmul.f32 %v5777, %v5791
        %v5815 = vmul.f32 %v5778, %v5791
        %v5816 = vmul.f32 %v5779, %v5791
        %v5817 = vmul.f32 %v5780, %v5791
        %v5818 = vmul.f32 %v5781, %v5791
        %v5819 = vmul.f32 %v5782, %v5791
        %v5820 = vmul.f32 %v5783, %v5791
        %v5821 = vmul.f32 %v5784, %v5791
        %v5822 = vmul.f32 %v5785, %v5791
        %v5823 = vmul.f32 %v5786, %v5791
        %v5824 = vadd.f32 %v5723, %v5792
        %v5825 = vadd.f32 %v5724, %v5793
        %v5826 = vadd.f32 %v5725, %v5794
        %v5827 = vadd.f32 %v5726, %v5795
        %v5828 = vadd.f32 %v5727, %v5796
        %v5829 = vadd.f32 %v5728, %v5797
        %v5830 = vadd.f32 %v5729, %v5798
        %v5831 = vadd.f32 %v5730, %v5799
        %v5832 = vadd.f32 %v5731, %v5800
        %v5833 = vadd.f32 %v5732, %v5801
        %v5834 = vadd.f32 %v5733, %v5802
        %v5835 = vadd.f32 %v5734, %v5803
        %v5836 = vadd.f32 %v5735, %v5804
        %v5837 = vadd.f32 %v5736, %v5805
        %v5838 = vadd.f32 %v5737, %v5806
        %v5839 = vadd.f32 %v5738, %v5807
        %v5840 = vadd.f32 %v5739, %v5808
        %v5841 = vadd.f32 %v5740, %v5809
        %v5842 = vadd.f32 %v5741, %v5810
        %v5843 = vadd.f32 %v5742, %v5811
        %v5844 = vadd.f32 %v5743, %v5812
        %v5845 = vadd.f32 %v5744, %v5813
        %v5846 = vadd.f32 %v5745, %v5814
        %v5847 = vadd.f32 %v5746, %v5815
        %v5848 = vadd.f32 %v5747, %v5816
        %v5849 = vadd.f32 %v5748, %v5817
        %v5850 = vadd.f32 %v5749, %v5818
        %v5851 = vadd.f32 %v5750, %v5819
        %v5852 = vadd.f32 %v5751, %v5820
        %v5853 = vadd.f32 %v5752, %v5821
        %v5854 = vadd.f32 %v5753, %v5822
        %v5855 = vadd.f32 %v5754, %v5823
        %v5856 = vld [vmem:[%s5387 + $0x1] sm:$0xff]
        %v5857 = vld [vmem:[%s5387 + $0x9] sm:$0xff]
        %v5858 = vld [vmem:[%s5387 + $0x19] sm:$0xff]
        %v5859 = vld [vmem:[%s5387 + $0x21] sm:$0xff]
        %v5860 = vld [vmem:[%s5387 + $0x31] sm:$0xff]
        %v5861 = vld [vmem:[%s5387 + $0x39] sm:$0xff]
        %v5862 = vld [vmem:[%s5387 + $0x49] sm:$0xff]
        %v5863 = vld [vmem:[%s5387 + $0x51] sm:$0xff]
        %v5864 = vld [vmem:[%s5387 + $0x61] sm:$0xff]
        %v5865 = vld [vmem:[%s5387 + $0x69] sm:$0xff]
        %v5866 = vld [vmem:[%s5387 + $0x79] sm:$0xff]
        %v5867 = vld [vmem:[%s5387 + $0x81] sm:$0xff]
        %v5868 = vld [vmem:[%s5387 + $0x91] sm:$0xff]
        %v5869 = vld [vmem:[%s5387 + $0x99] sm:$0xff]
        %v5870 = vld [vmem:[%s5387 + $0xa9] sm:$0xff]
        %v5871 = vld [vmem:[%s5387 + $0xb1] sm:$0xff]
        %v5872 = vld [vmem:[%s5387 + $0xc1] sm:$0xff]
        %v5873 = vld [vmem:[%s5387 + $0xc9] sm:$0xff]
        %v5874 = vld [vmem:[%s5387 + $0xd9] sm:$0xff]
        %v5875 = vld [vmem:[%s5387 + $0xe1] sm:$0xff]
        %v5876 = vld [vmem:[%s5387 + $0xf1] sm:$0xff]
        %v5877 = vld [vmem:[%s5387 + $0xf9] sm:$0xff]
        %v5878 = vld [vmem:[%s5387 + $0x109] sm:$0xff]
        %v5879 = vld [vmem:[%s5387 + $0x111] sm:$0xff]
        %v5880 = vld [vmem:[%s5387 + $0x121] sm:$0xff]
        %v5881 = vld [vmem:[%s5387 + $0x129] sm:$0xff]
        %v5882 = vld [vmem:[%s5387 + $0x139] sm:$0xff]
        %v5883 = vld [vmem:[%s5387 + $0x141] sm:$0xff]
        %v5884 = vld [vmem:[%s5387 + $0x151] sm:$0xff]
        %v5885 = vld [vmem:[%s5387 + $0x159] sm:$0xff]
        %v5886 = vld [vmem:[%s5387 + $0x169] sm:$0xff]
        %v5887 = vld [vmem:[%s5387 + $0x171] sm:$0xff]
        %v5888 = vld [vmem:[%s7 + $0x4] sm:$0x1]
        %v5889 = vlaneseq
        %v5890 = vshrl.u32 %v5889, 7
        %v5891 = vsub.s32 0, %v5890
        %v5892 = vrot.slane %v5888, %v5891
        %v5893 = vmul.f32 %v5856, %v5892
        %v5894 = vmul.f32 %v5857, %v5892
        %v5895 = vmul.f32 %v5858, %v5892
        %v5896 = vmul.f32 %v5859, %v5892
        %v5897 = vmul.f32 %v5860, %v5892
        %v5898 = vmul.f32 %v5861, %v5892
        %v5899 = vmul.f32 %v5862, %v5892
        %v5900 = vmul.f32 %v5863, %v5892
        %v5901 = vmul.f32 %v5864, %v5892
        %v5902 = vmul.f32 %v5865, %v5892
        %v5903 = vmul.f32 %v5866, %v5892
        %v5904 = vmul.f32 %v5867, %v5892
        %v5905 = vmul.f32 %v5868, %v5892
        %v5906 = vmul.f32 %v5869, %v5892
        %v5907 = vmul.f32 %v5870, %v5892
        %v5908 = vmul.f32 %v5871, %v5892
        %v5909 = vmul.f32 %v5872, %v5892
        %v5910 = vmul.f32 %v5873, %v5892
        %v5911 = vmul.f32 %v5874, %v5892
        %v5912 = vmul.f32 %v5875, %v5892
        %v5913 = vmul.f32 %v5876, %v5892
        %v5914 = vmul.f32 %v5877, %v5892
        %v5915 = vmul.f32 %v5878, %v5892
        %v5916 = vmul.f32 %v5879, %v5892
        %v5917 = vmul.f32 %v5880, %v5892
        %v5918 = vmul.f32 %v5881, %v5892
        %v5919 = vmul.f32 %v5882, %v5892
        %v5920 = vmul.f32 %v5883, %v5892
        %v5921 = vmul.f32 %v5884, %v5892
        %v5922 = vmul.f32 %v5885, %v5892
        %v5923 = vmul.f32 %v5886, %v5892
        %v5924 = vmul.f32 %v5887, %v5892
        %v5925 = vadd.f32 %v5824, %v5893
        %v5926 = vadd.f32 %v5825, %v5894
        %v5927 = vadd.f32 %v5826, %v5895
        %v5928 = vadd.f32 %v5827, %v5896
        %v5929 = vadd.f32 %v5828, %v5897
        %v5930 = vadd.f32 %v5829, %v5898
        %v5931 = vadd.f32 %v5830, %v5899
        %v5932 = vadd.f32 %v5831, %v5900
        %v5933 = vadd.f32 %v5832, %v5901
        %v5934 = vadd.f32 %v5833, %v5902
        %v5935 = vadd.f32 %v5834, %v5903
        %v5936 = vadd.f32 %v5835, %v5904
        %v5937 = vadd.f32 %v5836, %v5905
        %v5938 = vadd.f32 %v5837, %v5906
        %v5939 = vadd.f32 %v5838, %v5907
        %v5940 = vadd.f32 %v5839, %v5908
        %v5941 = vadd.f32 %v5840, %v5909
        %v5942 = vadd.f32 %v5841, %v5910
        %v5943 = vadd.f32 %v5842, %v5911
        %v5944 = vadd.f32 %v5843, %v5912
        %v5945 = vadd.f32 %v5844, %v5913
        %v5946 = vadd.f32 %v5845, %v5914
        %v5947 = vadd.f32 %v5846, %v5915
        %v5948 = vadd.f32 %v5847, %v5916
        %v5949 = vadd.f32 %v5848, %v5917
        %v5950 = vadd.f32 %v5849, %v5918
        %v5951 = vadd.f32 %v5850, %v5919
        %v5952 = vadd.f32 %v5851, %v5920
        %v5953 = vadd.f32 %v5852, %v5921
        %v5954 = vadd.f32 %v5853, %v5922
        %v5955 = vadd.f32 %v5854, %v5923
        %v5956 = vadd.f32 %v5855, %v5924
        %v5957 = vld [vmem:[%s5387 + $0x2] sm:$0xff]
        %v5958 = vld [vmem:[%s5387 + $0xa] sm:$0xff]
        %v5959 = vld [vmem:[%s5387 + $0x1a] sm:$0xff]
        %v5960 = vld [vmem:[%s5387 + $0x22] sm:$0xff]
        %v5961 = vld [vmem:[%s5387 + $0x32] sm:$0xff]
        %v5962 = vld [vmem:[%s5387 + $0x3a] sm:$0xff]
        %v5963 = vld [vmem:[%s5387 + $0x4a] sm:$0xff]
        %v5964 = vld [vmem:[%s5387 + $0x52] sm:$0xff]
        %v5965 = vld [vmem:[%s5387 + $0x62] sm:$0xff]
        %v5966 = vld [vmem:[%s5387 + $0x6a] sm:$0xff]
        %v5967 = vld [vmem:[%s5387 + $0x7a] sm:$0xff]
        %v5968 = vld [vmem:[%s5387 + $0x82] sm:$0xff]
        %v5969 = vld [vmem:[%s5387 + $0x92] sm:$0xff]
        %v5970 = vld [vmem:[%s5387 + $0x9a] sm:$0xff]
        %v5971 = vld [vmem:[%s5387 + $0xaa] sm:$0xff]
        %v5972 = vld [vmem:[%s5387 + $0xb2] sm:$0xff]
        %v5973 = vld [vmem:[%s5387 + $0xc2] sm:$0xff]
        %v5974 = vld [vmem:[%s5387 + $0xca] sm:$0xff]
        %v5975 = vld [vmem:[%s5387 + $0xda] sm:$0xff]
        %v5976 = vld [vmem:[%s5387 + $0xe2] sm:$0xff]
        %v5977 = vld [vmem:[%s5387 + $0xf2] sm:$0xff]
        %v5978 = vld [vmem:[%s5387 + $0xfa] sm:$0xff]
        %v5979 = vld [vmem:[%s5387 + $0x10a] sm:$0xff]
        %v5980 = vld [vmem:[%s5387 + $0x112] sm:$0xff]
        %v5981 = vld [vmem:[%s5387 + $0x122] sm:$0xff]
        %v5982 = vld [vmem:[%s5387 + $0x12a] sm:$0xff]
        %v5983 = vld [vmem:[%s5387 + $0x13a] sm:$0xff]
        %v5984 = vld [vmem:[%s5387 + $0x142] sm:$0xff]
        %v5985 = vld [vmem:[%s5387 + $0x152] sm:$0xff]
        %v5986 = vld [vmem:[%s5387 + $0x15a] sm:$0xff]
        %v5987 = vld [vmem:[%s5387 + $0x16a] sm:$0xff]
        %v5988 = vld [vmem:[%s5387 + $0x172] sm:$0xff]
        %v5989 = vld [vmem:[%s7 + $0x5] sm:$0x1]
        %v5990 = vlaneseq
        %v5991 = vshrl.u32 %v5990, 7
        %v5992 = vsub.s32 0, %v5991
        %v5993 = vrot.slane %v5989, %v5992
        %v5994 = vmul.f32 %v5957, %v5993
        %v5995 = vmul.f32 %v5958, %v5993
        %v5996 = vmul.f32 %v5959, %v5993
        %v5997 = vmul.f32 %v5960, %v5993
        %v5998 = vmul.f32 %v5961, %v5993
        %v5999 = vmul.f32 %v5962, %v5993
        %v6000 = vmul.f32 %v5963, %v5993
        %v6001 = vmul.f32 %v5964, %v5993
        %v6002 = vmul.f32 %v5965, %v5993
        %v6003 = vmul.f32 %v5966, %v5993
        %v6004 = vmul.f32 %v5967, %v5993
        %v6005 = vmul.f32 %v5968, %v5993
        %v6006 = vmul.f32 %v5969, %v5993
        %v6007 = vmul.f32 %v5970, %v5993
        %v6008 = vmul.f32 %v5971, %v5993
        %v6009 = vmul.f32 %v5972, %v5993
        %v6010 = vmul.f32 %v5973, %v5993
        %v6011 = vmul.f32 %v5974, %v5993
        %v6012 = vmul.f32 %v5975, %v5993
        %v6013 = vmul.f32 %v5976, %v5993
        %v6014 = vmul.f32 %v5977, %v5993
        %v6015 = vmul.f32 %v5978, %v5993
        %v6016 = vmul.f32 %v5979, %v5993
        %v6017 = vmul.f32 %v5980, %v5993
        %v6018 = vmul.f32 %v5981, %v5993
        %v6019 = vmul.f32 %v5982, %v5993
        %v6020 = vmul.f32 %v5983, %v5993
        %v6021 = vmul.f32 %v5984, %v5993
        %v6022 = vmul.f32 %v5985, %v5993
        %v6023 = vmul.f32 %v5986, %v5993
        %v6024 = vmul.f32 %v5987, %v5993
        %v6025 = vmul.f32 %v5988, %v5993
        %v6026 = vadd.f32 %v5925, %v5994
        %v6027 = vadd.f32 %v5926, %v5995
        %v6028 = vadd.f32 %v5927, %v5996
        %v6029 = vadd.f32 %v5928, %v5997
        %v6030 = vadd.f32 %v5929, %v5998
        %v6031 = vadd.f32 %v5930, %v5999
        %v6032 = vadd.f32 %v5931, %v6000
        %v6033 = vadd.f32 %v5932, %v6001
        %v6034 = vadd.f32 %v5933, %v6002
        %v6035 = vadd.f32 %v5934, %v6003
        %v6036 = vadd.f32 %v5935, %v6004
        %v6037 = vadd.f32 %v5936, %v6005
        %v6038 = vadd.f32 %v5937, %v6006
        %v6039 = vadd.f32 %v5938, %v6007
        %v6040 = vadd.f32 %v5939, %v6008
        %v6041 = vadd.f32 %v5940, %v6009
        %v6042 = vadd.f32 %v5941, %v6010
        %v6043 = vadd.f32 %v5942, %v6011
        %v6044 = vadd.f32 %v5943, %v6012
        %v6045 = vadd.f32 %v5944, %v6013
        %v6046 = vadd.f32 %v5945, %v6014
        %v6047 = vadd.f32 %v5946, %v6015
        %v6048 = vadd.f32 %v5947, %v6016
        %v6049 = vadd.f32 %v5948, %v6017
        %v6050 = vadd.f32 %v5949, %v6018
        %v6051 = vadd.f32 %v5950, %v6019
        %v6052 = vadd.f32 %v5951, %v6020
        %v6053 = vadd.f32 %v5952, %v6021
        %v6054 = vadd.f32 %v5953, %v6022
        %v6055 = vadd.f32 %v5954, %v6023
        %v6056 = vadd.f32 %v5955, %v6024
        %v6057 = vadd.f32 %v5956, %v6025
        %s6058 = scalar_lea.vmem [#allocation6], 48
        %v6059 = vld [vmem:[%s6058] sm:$0xff]
        %v6060 = vld [vmem:[%s6058 + $0x8] sm:$0xff]
        %v6061 = vld [vmem:[%s6058 + $0x18] sm:$0xff]
        %v6062 = vld [vmem:[%s6058 + $0x20] sm:$0xff]
        %v6063 = vld [vmem:[%s6058 + $0x30] sm:$0xff]
        %v6064 = vld [vmem:[%s6058 + $0x38] sm:$0xff]
        %v6065 = vld [vmem:[%s6058 + $0x48] sm:$0xff]
        %v6066 = vld [vmem:[%s6058 + $0x50] sm:$0xff]
        %v6067 = vld [vmem:[%s6058 + $0x60] sm:$0xff]
        %v6068 = vld [vmem:[%s6058 + $0x68] sm:$0xff]
        %v6069 = vld [vmem:[%s6058 + $0x78] sm:$0xff]
        %v6070 = vld [vmem:[%s6058 + $0x80] sm:$0xff]
        %v6071 = vld [vmem:[%s6058 + $0x90] sm:$0xff]
        %v6072 = vld [vmem:[%s6058 + $0x98] sm:$0xff]
        %v6073 = vld [vmem:[%s6058 + $0xa8] sm:$0xff]
        %v6074 = vld [vmem:[%s6058 + $0xb0] sm:$0xff]
        %v6075 = vld [vmem:[%s6058 + $0xc0] sm:$0xff]
        %v6076 = vld [vmem:[%s6058 + $0xc8] sm:$0xff]
        %v6077 = vld [vmem:[%s6058 + $0xd8] sm:$0xff]
        %v6078 = vld [vmem:[%s6058 + $0xe0] sm:$0xff]
        %v6079 = vld [vmem:[%s6058 + $0xf0] sm:$0xff]
        %v6080 = vld [vmem:[%s6058 + $0xf8] sm:$0xff]
        %v6081 = vld [vmem:[%s6058 + $0x108] sm:$0xff]
        %v6082 = vld [vmem:[%s6058 + $0x110] sm:$0xff]
        %v6083 = vld [vmem:[%s6058 + $0x120] sm:$0xff]
        %v6084 = vld [vmem:[%s6058 + $0x128] sm:$0xff]
        %v6085 = vld [vmem:[%s6058 + $0x138] sm:$0xff]
        %v6086 = vld [vmem:[%s6058 + $0x140] sm:$0xff]
        %v6087 = vld [vmem:[%s6058 + $0x150] sm:$0xff]
        %v6088 = vld [vmem:[%s6058 + $0x158] sm:$0xff]
        %v6089 = vld [vmem:[%s6058 + $0x168] sm:$0xff]
        %v6090 = vld [vmem:[%s6058 + $0x170] sm:$0xff]
        %v6091 = vld [vmem:[%s7 + $0x6] sm:$0x1]
        %v6092 = vlaneseq
        %v6093 = vshrl.u32 %v6092, 7
        %v6094 = vsub.s32 0, %v6093
        %v6095 = vrot.slane %v6091, %v6094
        %v6096 = vmul.f32 %v6059, %v6095
        %v6097 = vmul.f32 %v6060, %v6095
        %v6098 = vmul.f32 %v6061, %v6095
        %v6099 = vmul.f32 %v6062, %v6095
        %v6100 = vmul.f32 %v6063, %v6095
        %v6101 = vmul.f32 %v6064, %v6095
        %v6102 = vmul.f32 %v6065, %v6095
        %v6103 = vmul.f32 %v6066, %v6095
        %v6104 = vmul.f32 %v6067, %v6095
        %v6105 = vmul.f32 %v6068, %v6095
        %v6106 = vmul.f32 %v6069, %v6095
        %v6107 = vmul.f32 %v6070, %v6095
        %v6108 = vmul.f32 %v6071, %v6095
        %v6109 = vmul.f32 %v6072, %v6095
        %v6110 = vmul.f32 %v6073, %v6095
        %v6111 = vmul.f32 %v6074, %v6095
        %v6112 = vmul.f32 %v6075, %v6095
        %v6113 = vmul.f32 %v6076, %v6095
        %v6114 = vmul.f32 %v6077, %v6095
        %v6115 = vmul.f32 %v6078, %v6095
        %v6116 = vmul.f32 %v6079, %v6095
        %v6117 = vmul.f32 %v6080, %v6095
        %v6118 = vmul.f32 %v6081, %v6095
        %v6119 = vmul.f32 %v6082, %v6095
        %v6120 = vmul.f32 %v6083, %v6095
        %v6121 = vmul.f32 %v6084, %v6095
        %v6122 = vmul.f32 %v6085, %v6095
        %v6123 = vmul.f32 %v6086, %v6095
        %v6124 = vmul.f32 %v6087, %v6095
        %v6125 = vmul.f32 %v6088, %v6095
        %v6126 = vmul.f32 %v6089, %v6095
        %v6127 = vmul.f32 %v6090, %v6095
        %v6128 = vadd.f32 %v6026, %v6096
        %v6129 = vadd.f32 %v6027, %v6097
        %v6130 = vadd.f32 %v6028, %v6098
        %v6131 = vadd.f32 %v6029, %v6099
        %v6132 = vadd.f32 %v6030, %v6100
        %v6133 = vadd.f32 %v6031, %v6101
        %v6134 = vadd.f32 %v6032, %v6102
        %v6135 = vadd.f32 %v6033, %v6103
        %v6136 = vadd.f32 %v6034, %v6104
        %v6137 = vadd.f32 %v6035, %v6105
        %v6138 = vadd.f32 %v6036, %v6106
        %v6139 = vadd.f32 %v6037, %v6107
        %v6140 = vadd.f32 %v6038, %v6108
        %v6141 = vadd.f32 %v6039, %v6109
        %v6142 = vadd.f32 %v6040, %v6110
        %v6143 = vadd.f32 %v6041, %v6111
        %v6144 = vadd.f32 %v6042, %v6112
        %v6145 = vadd.f32 %v6043, %v6113
        %v6146 = vadd.f32 %v6044, %v6114
        %v6147 = vadd.f32 %v6045, %v6115
        %v6148 = vadd.f32 %v6046, %v6116
        %v6149 = vadd.f32 %v6047, %v6117
        %v6150 = vadd.f32 %v6048, %v6118
        %v6151 = vadd.f32 %v6049, %v6119
        %v6152 = vadd.f32 %v6050, %v6120
        %v6153 = vadd.f32 %v6051, %v6121
        %v6154 = vadd.f32 %v6052, %v6122
        %v6155 = vadd.f32 %v6053, %v6123
        %v6156 = vadd.f32 %v6054, %v6124
        %v6157 = vadd.f32 %v6055, %v6125
        %v6158 = vadd.f32 %v6056, %v6126
        %v6159 = vadd.f32 %v6057, %v6127
        %v6160 = vld [vmem:[%s6058 + $0x1] sm:$0xff]
        %v6161 = vld [vmem:[%s6058 + $0x9] sm:$0xff]
        %v6162 = vld [vmem:[%s6058 + $0x19] sm:$0xff]
        %v6163 = vld [vmem:[%s6058 + $0x21] sm:$0xff]
        %v6164 = vld [vmem:[%s6058 + $0x31] sm:$0xff]
        %v6165 = vld [vmem:[%s6058 + $0x39] sm:$0xff]
        %v6166 = vld [vmem:[%s6058 + $0x49] sm:$0xff]
        %v6167 = vld [vmem:[%s6058 + $0x51] sm:$0xff]
        %v6168 = vld [vmem:[%s6058 + $0x61] sm:$0xff]
        %v6169 = vld [vmem:[%s6058 + $0x69] sm:$0xff]
        %v6170 = vld [vmem:[%s6058 + $0x79] sm:$0xff]
        %v6171 = vld [vmem:[%s6058 + $0x81] sm:$0xff]
        %v6172 = vld [vmem:[%s6058 + $0x91] sm:$0xff]
        %v6173 = vld [vmem:[%s6058 + $0x99] sm:$0xff]
        %v6174 = vld [vmem:[%s6058 + $0xa9] sm:$0xff]
        %v6175 = vld [vmem:[%s6058 + $0xb1] sm:$0xff]
        %v6176 = vld [vmem:[%s6058 + $0xc1] sm:$0xff]
        %v6177 = vld [vmem:[%s6058 + $0xc9] sm:$0xff]
        %v6178 = vld [vmem:[%s6058 + $0xd9] sm:$0xff]
        %v6179 = vld [vmem:[%s6058 + $0xe1] sm:$0xff]
        %v6180 = vld [vmem:[%s6058 + $0xf1] sm:$0xff]
        %v6181 = vld [vmem:[%s6058 + $0xf9] sm:$0xff]
        %v6182 = vld [vmem:[%s6058 + $0x109] sm:$0xff]
        %v6183 = vld [vmem:[%s6058 + $0x111] sm:$0xff]
        %v6184 = vld [vmem:[%s6058 + $0x121] sm:$0xff]
        %v6185 = vld [vmem:[%s6058 + $0x129] sm:$0xff]
        %v6186 = vld [vmem:[%s6058 + $0x139] sm:$0xff]
        %v6187 = vld [vmem:[%s6058 + $0x141] sm:$0xff]
        %v6188 = vld [vmem:[%s6058 + $0x151] sm:$0xff]
        %v6189 = vld [vmem:[%s6058 + $0x159] sm:$0xff]
        %v6190 = vld [vmem:[%s6058 + $0x169] sm:$0xff]
        %v6191 = vld [vmem:[%s6058 + $0x171] sm:$0xff]
        %v6192 = vld [vmem:[%s7 + $0x7] sm:$0x1]
        %v6193 = vlaneseq
        %v6194 = vshrl.u32 %v6193, 7
        %v6195 = vsub.s32 0, %v6194
        %v6196 = vrot.slane %v6192, %v6195
        %v6197 = vmul.f32 %v6160, %v6196
        %v6198 = vmul.f32 %v6161, %v6196
        %v6199 = vmul.f32 %v6162, %v6196
        %v6200 = vmul.f32 %v6163, %v6196
        %v6201 = vmul.f32 %v6164, %v6196
        %v6202 = vmul.f32 %v6165, %v6196
        %v6203 = vmul.f32 %v6166, %v6196
        %v6204 = vmul.f32 %v6167, %v6196
        %v6205 = vmul.f32 %v6168, %v6196
        %v6206 = vmul.f32 %v6169, %v6196
        %v6207 = vmul.f32 %v6170, %v6196
        %v6208 = vmul.f32 %v6171, %v6196
        %v6209 = vmul.f32 %v6172, %v6196
        %v6210 = vmul.f32 %v6173, %v6196
        %v6211 = vmul.f32 %v6174, %v6196
        %v6212 = vmul.f32 %v6175, %v6196
        %v6213 = vmul.f32 %v6176, %v6196
        %v6214 = vmul.f32 %v6177, %v6196
        %v6215 = vmul.f32 %v6178, %v6196
        %v6216 = vmul.f32 %v6179, %v6196
        %v6217 = vmul.f32 %v6180, %v6196
        %v6218 = vmul.f32 %v6181, %v6196
        %v6219 = vmul.f32 %v6182, %v6196
        %v6220 = vmul.f32 %v6183, %v6196
        %v6221 = vmul.f32 %v6184, %v6196
        %v6222 = vmul.f32 %v6185, %v6196
        %v6223 = vmul.f32 %v6186, %v6196
        %v6224 = vmul.f32 %v6187, %v6196
        %v6225 = vmul.f32 %v6188, %v6196
        %v6226 = vmul.f32 %v6189, %v6196
        %v6227 = vmul.f32 %v6190, %v6196
        %v6228 = vmul.f32 %v6191, %v6196
        %v6229 = vadd.f32 %v6128, %v6197
        %v6230 = vadd.f32 %v6129, %v6198
        %v6231 = vadd.f32 %v6130, %v6199
        %v6232 = vadd.f32 %v6131, %v6200
        %v6233 = vadd.f32 %v6132, %v6201
        %v6234 = vadd.f32 %v6133, %v6202
        %v6235 = vadd.f32 %v6134, %v6203
        %v6236 = vadd.f32 %v6135, %v6204
        %v6237 = vadd.f32 %v6136, %v6205
        %v6238 = vadd.f32 %v6137, %v6206
        %v6239 = vadd.f32 %v6138, %v6207
        %v6240 = vadd.f32 %v6139, %v6208
        %v6241 = vadd.f32 %v6140, %v6209
        %v6242 = vadd.f32 %v6141, %v6210
        %v6243 = vadd.f32 %v6142, %v6211
        %v6244 = vadd.f32 %v6143, %v6212
        %v6245 = vadd.f32 %v6144, %v6213
        %v6246 = vadd.f32 %v6145, %v6214
        %v6247 = vadd.f32 %v6146, %v6215
        %v6248 = vadd.f32 %v6147, %v6216
        %v6249 = vadd.f32 %v6148, %v6217
        %v6250 = vadd.f32 %v6149, %v6218
        %v6251 = vadd.f32 %v6150, %v6219
        %v6252 = vadd.f32 %v6151, %v6220
        %v6253 = vadd.f32 %v6152, %v6221
        %v6254 = vadd.f32 %v6153, %v6222
        %v6255 = vadd.f32 %v6154, %v6223
        %v6256 = vadd.f32 %v6155, %v6224
        %v6257 = vadd.f32 %v6156, %v6225
        %v6258 = vadd.f32 %v6157, %v6226
        %v6259 = vadd.f32 %v6158, %v6227
        %v6260 = vadd.f32 %v6159, %v6228
        %v6261 = vld [vmem:[%s6058 + $0x2] sm:$0xff]
        %v6262 = vld [vmem:[%s6058 + $0xa] sm:$0xff]
        %v6263 = vld [vmem:[%s6058 + $0x1a] sm:$0xff]
        %v6264 = vld [vmem:[%s6058 + $0x22] sm:$0xff]
        %v6265 = vld [vmem:[%s6058 + $0x32] sm:$0xff]
        %v6266 = vld [vmem:[%s6058 + $0x3a] sm:$0xff]
        %v6267 = vld [vmem:[%s6058 + $0x4a] sm:$0xff]
        %v6268 = vld [vmem:[%s6058 + $0x52] sm:$0xff]
        %v6269 = vld [vmem:[%s6058 + $0x62] sm:$0xff]
        %v6270 = vld [vmem:[%s6058 + $0x6a] sm:$0xff]
        %v6271 = vld [vmem:[%s6058 + $0x7a] sm:$0xff]
        %v6272 = vld [vmem:[%s6058 + $0x82] sm:$0xff]
        %v6273 = vld [vmem:[%s6058 + $0x92] sm:$0xff]
        %v6274 = vld [vmem:[%s6058 + $0x9a] sm:$0xff]
        %v6275 = vld [vmem:[%s6058 + $0xaa] sm:$0xff]
        %v6276 = vld [vmem:[%s6058 + $0xb2] sm:$0xff]
        %v6277 = vld [vmem:[%s6058 + $0xc2] sm:$0xff]
        %v6278 = vld [vmem:[%s6058 + $0xca] sm:$0xff]
        %v6279 = vld [vmem:[%s6058 + $0xda] sm:$0xff]
        %v6280 = vld [vmem:[%s6058 + $0xe2] sm:$0xff]
        %v6281 = vld [vmem:[%s6058 + $0xf2] sm:$0xff]
        %v6282 = vld [vmem:[%s6058 + $0xfa] sm:$0xff]
        %v6283 = vld [vmem:[%s6058 + $0x10a] sm:$0xff]
        %v6284 = vld [vmem:[%s6058 + $0x112] sm:$0xff]
        %v6285 = vld [vmem:[%s6058 + $0x122] sm:$0xff]
        %v6286 = vld [vmem:[%s6058 + $0x12a] sm:$0xff]
        %v6287 = vld [vmem:[%s6058 + $0x13a] sm:$0xff]
        %v6288 = vld [vmem:[%s6058 + $0x142] sm:$0xff]
        %v6289 = vld [vmem:[%s6058 + $0x152] sm:$0xff]
        %v6290 = vld [vmem:[%s6058 + $0x15a] sm:$0xff]
        %v6291 = vld [vmem:[%s6058 + $0x16a] sm:$0xff]
        %v6292 = vld [vmem:[%s6058 + $0x172] sm:$0xff]
        %v6293 = vld [vmem:[%s7 + $0x8] sm:$0x1]
        %v6294 = vlaneseq
        %v6295 = vshrl.u32 %v6294, 7
        %v6296 = vsub.s32 0, %v6295
        %v6297 = vrot.slane %v6293, %v6296
        %v6298 = vmul.f32 %v6261, %v6297
        %v6299 = vmul.f32 %v6262, %v6297
        %v6300 = vmul.f32 %v6263, %v6297
        %v6301 = vmul.f32 %v6264, %v6297
        %v6302 = vmul.f32 %v6265, %v6297
        %v6303 = vmul.f32 %v6266, %v6297
        %v6304 = vmul.f32 %v6267, %v6297
        %v6305 = vmul.f32 %v6268, %v6297
        %v6306 = vmul.f32 %v6269, %v6297
        %v6307 = vmul.f32 %v6270, %v6297
        %v6308 = vmul.f32 %v6271, %v6297
        %v6309 = vmul.f32 %v6272, %v6297
        %v6310 = vmul.f32 %v6273, %v6297
        %v6311 = vmul.f32 %v6274, %v6297
        %v6312 = vmul.f32 %v6275, %v6297
        %v6313 = vmul.f32 %v6276, %v6297
        %v6314 = vmul.f32 %v6277, %v6297
        %v6315 = vmul.f32 %v6278, %v6297
        %v6316 = vmul.f32 %v6279, %v6297
        %v6317 = vmul.f32 %v6280, %v6297
        %v6318 = vmul.f32 %v6281, %v6297
        %v6319 = vmul.f32 %v6282, %v6297
        %v6320 = vmul.f32 %v6283, %v6297
        %v6321 = vmul.f32 %v6284, %v6297
        %v6322 = vmul.f32 %v6285, %v6297
        %v6323 = vmul.f32 %v6286, %v6297
        %v6324 = vmul.f32 %v6287, %v6297
        %v6325 = vmul.f32 %v6288, %v6297
        %v6326 = vmul.f32 %v6289, %v6297
        %v6327 = vmul.f32 %v6290, %v6297
        %v6328 = vmul.f32 %v6291, %v6297
        %v6329 = vmul.f32 %v6292, %v6297
        %v6330 = vadd.f32 %v6229, %v6298
        %v6331 = vadd.f32 %v6230, %v6299
        %v6332 = vadd.f32 %v6231, %v6300
        %v6333 = vadd.f32 %v6232, %v6301
        %v6334 = vadd.f32 %v6233, %v6302
        %v6335 = vadd.f32 %v6234, %v6303
        %v6336 = vadd.f32 %v6235, %v6304
        %v6337 = vadd.f32 %v6236, %v6305
        %v6338 = vadd.f32 %v6237, %v6306
        %v6339 = vadd.f32 %v6238, %v6307
        %v6340 = vadd.f32 %v6239, %v6308
        %v6341 = vadd.f32 %v6240, %v6309
        %v6342 = vadd.f32 %v6241, %v6310
        %v6343 = vadd.f32 %v6242, %v6311
        %v6344 = vadd.f32 %v6243, %v6312
        %v6345 = vadd.f32 %v6244, %v6313
        %v6346 = vadd.f32 %v6245, %v6314
        %v6347 = vadd.f32 %v6246, %v6315
        %v6348 = vadd.f32 %v6247, %v6316
        %v6349 = vadd.f32 %v6248, %v6317
        %v6350 = vadd.f32 %v6249, %v6318
        %v6351 = vadd.f32 %v6250, %v6319
        %v6352 = vadd.f32 %v6251, %v6320
        %v6353 = vadd.f32 %v6252, %v6321
        %v6354 = vadd.f32 %v6253, %v6322
        %v6355 = vadd.f32 %v6254, %v6323
        %v6356 = vadd.f32 %v6255, %v6324
        %v6357 = vadd.f32 %v6256, %v6325
        %v6358 = vadd.f32 %v6257, %v6326
        %v6359 = vadd.f32 %v6258, %v6327
        %v6360 = vadd.f32 %v6259, %v6328
        %v6361 = vadd.f32 %v6260, %v6329
        %v6362 = vsel %vm527, %v6330, 0.0
        %6363 = vadd.xlane.f32.xlu0 %v6362
        %v6364 = vpop.xlane.xlu0 %6363
        %v6365 = vsel %vm527, %v6331, 0.0
        %6366 = vadd.xlane.f32.xlu0 %v6365
        %v6367 = vpop.xlane.xlu0 %6366
        %v6368 = vsel %vm527, %v6332, 0.0
        %6369 = vadd.xlane.f32.xlu0 %v6368
        %v6370 = vpop.xlane.xlu0 %6369
        %v6371 = vsel %vm527, %v6333, 0.0
        %6372 = vadd.xlane.f32.xlu0 %v6371
        %v6373 = vpop.xlane.xlu0 %6372
        %v6374 = vsel %vm527, %v6334, 0.0
        %6375 = vadd.xlane.f32.xlu0 %v6374
        %v6376 = vpop.xlane.xlu0 %6375
        %v6377 = vsel %vm527, %v6335, 0.0
        %6378 = vadd.xlane.f32.xlu0 %v6377
        %v6379 = vpop.xlane.xlu0 %6378
        %v6380 = vsel %vm527, %v6336, 0.0
        %6381 = vadd.xlane.f32.xlu0 %v6380
        %v6382 = vpop.xlane.xlu0 %6381
        %v6383 = vsel %vm527, %v6337, 0.0
        %6384 = vadd.xlane.f32.xlu0 %v6383
        %v6385 = vpop.xlane.xlu0 %6384
        %v6386 = vsel %vm527, %v6338, 0.0
        %6387 = vadd.xlane.f32.xlu0 %v6386
        %v6388 = vpop.xlane.xlu0 %6387
        %v6389 = vsel %vm527, %v6339, 0.0
        %6390 = vadd.xlane.f32.xlu0 %v6389
        %v6391 = vpop.xlane.xlu0 %6390
        %v6392 = vsel %vm527, %v6340, 0.0
        %6393 = vadd.xlane.f32.xlu0 %v6392
        %v6394 = vpop.xlane.xlu0 %6393
        %v6395 = vsel %vm527, %v6341, 0.0
        %6396 = vadd.xlane.f32.xlu0 %v6395
        %v6397 = vpop.xlane.xlu0 %6396
        %v6398 = vsel %vm527, %v6342, 0.0
        %6399 = vadd.xlane.f32.xlu0 %v6398
        %v6400 = vpop.xlane.xlu0 %6399
        %v6401 = vsel %vm527, %v6343, 0.0
        %6402 = vadd.xlane.f32.xlu0 %v6401
        %v6403 = vpop.xlane.xlu0 %6402
        %v6404 = vsel %vm527, %v6344, 0.0
        %6405 = vadd.xlane.f32.xlu0 %v6404
        %v6406 = vpop.xlane.xlu0 %6405
        %v6407 = vsel %vm527, %v6345, 0.0
        %6408 = vadd.xlane.f32.xlu0 %v6407
        %v6409 = vpop.xlane.xlu0 %6408
        %v6410 = vsel %vm527, %v6346, 0.0
        %6411 = vadd.xlane.f32.xlu0 %v6410
        %v6412 = vpop.xlane.xlu0 %6411
        %v6413 = vsel %vm527, %v6347, 0.0
        %6414 = vadd.xlane.f32.xlu0 %v6413
        %v6415 = vpop.xlane.xlu0 %6414
        %v6416 = vsel %vm527, %v6348, 0.0
        %6417 = vadd.xlane.f32.xlu0 %v6416
        %v6418 = vpop.xlane.xlu0 %6417
        %v6419 = vsel %vm527, %v6349, 0.0
        %6420 = vadd.xlane.f32.xlu0 %v6419
        %v6421 = vpop.xlane.xlu0 %6420
        %v6422 = vsel %vm527, %v6350, 0.0
        %6423 = vadd.xlane.f32.xlu0 %v6422
        %v6424 = vpop.xlane.xlu0 %6423
        %v6425 = vsel %vm527, %v6351, 0.0
        %6426 = vadd.xlane.f32.xlu0 %v6425
        %v6427 = vpop.xlane.xlu0 %6426
        %v6428 = vsel %vm527, %v6352, 0.0
        %6429 = vadd.xlane.f32.xlu0 %v6428
        %v6430 = vpop.xlane.xlu0 %6429
        %v6431 = vsel %vm527, %v6353, 0.0
        %6432 = vadd.xlane.f32.xlu0 %v6431
        %v6433 = vpop.xlane.xlu0 %6432
        %v6434 = vsel %vm527, %v6354, 0.0
        %6435 = vadd.xlane.f32.xlu0 %v6434
        %v6436 = vpop.xlane.xlu0 %6435
        %v6437 = vsel %vm527, %v6355, 0.0
        %6438 = vadd.xlane.f32.xlu0 %v6437
        %v6439 = vpop.xlane.xlu0 %6438
        %v6440 = vsel %vm527, %v6356, 0.0
        %6441 = vadd.xlane.f32.xlu0 %v6440
        %v6442 = vpop.xlane.xlu0 %6441
        %v6443 = vsel %vm527, %v6357, 0.0
        %6444 = vadd.xlane.f32.xlu0 %v6443
        %v6445 = vpop.xlane.xlu0 %6444
        %v6446 = vsel %vm527, %v6358, 0.0
        %6447 = vadd.xlane.f32.xlu0 %v6446
        %v6448 = vpop.xlane.xlu0 %6447
        %v6449 = vsel %vm527, %v6359, 0.0
        %6450 = vadd.xlane.f32.xlu0 %v6449
        %v6451 = vpop.xlane.xlu0 %6450
        %v6452 = vsel %vm527, %v6360, 0.0
        %6453 = vadd.xlane.f32.xlu0 %v6452
        %v6454 = vpop.xlane.xlu0 %6453
        %v6455 = vsel %vm527, %v6361, 0.0
        %6456 = vadd.xlane.f32.xlu0 %v6455
        %v6457 = vpop.xlane.xlu0 %6456
        %v6458 = vld [vmem:[#allocation7] sm:$0x1]
        %v6460 = vlaneseq
        %v6461 = vshrl.u32 %v6460, 7
        %v6462 = vsub.s32 0, %v6461
        %v6463 = vrot.slane %v6458, %v6462
        %6464 = vset.pattern.permute.xlu0 0
        %6465 = vperm.xlu0 %6464, %v6463
        %v6466 = vpop.permute.xlu0 %6465
        %v6468 = vadd.f32 %v6364, %v6466
        %v6469 = vadd.f32 %v6367, %v6466
        %v6470 = vadd.f32 %v6370, %v6466
        %v6471 = vadd.f32 %v6373, %v6466
        %v6472 = vadd.f32 %v6376, %v6466
        %v6473 = vadd.f32 %v6379, %v6466
        %v6474 = vadd.f32 %v6382, %v6466
        %v6475 = vadd.f32 %v6385, %v6466
        %v6476 = vadd.f32 %v6388, %v6466
        %v6477 = vadd.f32 %v6391, %v6466
        %v6478 = vadd.f32 %v6394, %v6466
        %v6479 = vadd.f32 %v6397, %v6466
        %v6480 = vadd.f32 %v6400, %v6466
        %v6481 = vadd.f32 %v6403, %v6466
        %v6482 = vadd.f32 %v6406, %v6466
        %v6483 = vadd.f32 %v6409, %v6466
        %v6484 = vadd.f32 %v6412, %v6466
        %v6485 = vadd.f32 %v6415, %v6466
        %v6486 = vadd.f32 %v6418, %v6466
        %v6487 = vadd.f32 %v6421, %v6466
        %v6488 = vadd.f32 %v6424, %v6466
        %v6489 = vadd.f32 %v6427, %v6466
        %v6490 = vadd.f32 %v6430, %v6466
        %v6491 = vadd.f32 %v6433, %v6466
        %v6492 = vadd.f32 %v6436, %v6466
        %v6493 = vadd.f32 %v6439, %v6466
        %v6494 = vadd.f32 %v6442, %v6466
        %v6495 = vadd.f32 %v6445, %v6466
        %v6496 = vadd.f32 %v6448, %v6466
        %v6497 = vadd.f32 %v6451, %v6466
        %v6498 = vadd.f32 %v6454, %v6466
        %v6499 = vadd.f32 %v6457, %v6466
        %v6500 = vmax.f32 %v6468, 0.0
        %v6501 = vmax.f32 %v6469, 0.0
        %v6502 = vmax.f32 %v6470, 0.0
        %v6503 = vmax.f32 %v6471, 0.0
        %v6504 = vmax.f32 %v6472, 0.0
        %v6505 = vmax.f32 %v6473, 0.0
        %v6506 = vmax.f32 %v6474, 0.0
        %v6507 = vmax.f32 %v6475, 0.0
        %v6508 = vmax.f32 %v6476, 0.0
        %v6509 = vmax.f32 %v6477, 0.0
        %v6510 = vmax.f32 %v6478, 0.0
        %v6511 = vmax.f32 %v6479, 0.0
        %v6512 = vmax.f32 %v6480, 0.0
        %v6513 = vmax.f32 %v6481, 0.0
        %v6514 = vmax.f32 %v6482, 0.0
        %v6515 = vmax.f32 %v6483, 0.0
        %v6516 = vmax.f32 %v6484, 0.0
        %v6517 = vmax.f32 %v6485, 0.0
        %v6518 = vmax.f32 %v6486, 0.0
        %v6519 = vmax.f32 %v6487, 0.0
        %v6520 = vmax.f32 %v6488, 0.0
        %v6521 = vmax.f32 %v6489, 0.0
        %v6522 = vmax.f32 %v6490, 0.0
        %v6523 = vmax.f32 %v6491, 0.0
        %v6524 = vmax.f32 %v6492, 0.0
        %v6525 = vmax.f32 %v6493, 0.0
        %v6526 = vmax.f32 %v6494, 0.0
        %v6527 = vmax.f32 %v6495, 0.0
        %v6528 = vmax.f32 %v6496, 0.0
        %v6529 = vmax.f32 %v6497, 0.0
        %v6530 = vmax.f32 %v6498, 0.0
        %v6531 = vmax.f32 %v6499, 0.0
        %v6564 = vlaneseq
        %v6565 = vand.u32 %v6564, 127
        %v6566 = vlaneseq
        %v6567 = vshrl.u32 %v6566, 7
        %v6568 = vsub.s32 %v6565, %v6567
        %v6569 = vrot.slane %v6500, %v6568
        %v6570 = vadd.s32 %v6565, 4294967288
        %v6571 = vlaneseq
        %v6572 = vshrl.u32 %v6571, 7
        %v6573 = vsub.s32 %v6570, %v6572
        %v6574 = vrot.slane %v6501, %v6573
        %vm6575 = vcmask 130112
        %v6576 = vsel %vm6575, %v6574, %v6569
        %v6577 = vlaneseq
        %v6578 = vshrl.u32 %v6577, 7
        %v6579 = vsub.s32 %v6565, %v6578
        %v6580 = vrot.slane %v6502, %v6579
        %v6581 = vlaneseq
        %v6582 = vshrl.u32 %v6581, 7
        %v6583 = vsub.s32 %v6570, %v6582
        %v6584 = vrot.slane %v6503, %v6583
        %v6585 = vsel %vm6575, %v6584, %v6580
        %v6586 = vlaneseq
        %v6587 = vshrl.u32 %v6586, 7
        %v6588 = vsub.s32 %v6565, %v6587
        %v6589 = vrot.slane %v6504, %v6588
        %v6590 = vlaneseq
        %v6591 = vshrl.u32 %v6590, 7
        %v6592 = vsub.s32 %v6570, %v6591
        %v6593 = vrot.slane %v6505, %v6592
        %v6594 = vsel %vm6575, %v6593, %v6589
        %v6595 = vlaneseq
        %v6596 = vshrl.u32 %v6595, 7
        %v6597 = vsub.s32 %v6565, %v6596
        %v6598 = vrot.slane %v6506, %v6597
        %v6599 = vlaneseq
        %v6600 = vshrl.u32 %v6599, 7
        %v6601 = vsub.s32 %v6570, %v6600
        %v6602 = vrot.slane %v6507, %v6601
        %v6603 = vsel %vm6575, %v6602, %v6598
        %v6604 = vlaneseq
        %v6605 = vshrl.u32 %v6604, 7
        %v6606 = vsub.s32 %v6565, %v6605
        %v6607 = vrot.slane %v6508, %v6606
        %v6608 = vlaneseq
        %v6609 = vshrl.u32 %v6608, 7
        %v6610 = vsub.s32 %v6570, %v6609
        %v6611 = vrot.slane %v6509, %v6610
        %v6612 = vsel %vm6575, %v6611, %v6607
        %v6613 = vlaneseq
        %v6614 = vshrl.u32 %v6613, 7
        %v6615 = vsub.s32 %v6565, %v6614
        %v6616 = vrot.slane %v6510, %v6615
        %v6617 = vlaneseq
        %v6618 = vshrl.u32 %v6617, 7
        %v6619 = vsub.s32 %v6570, %v6618
        %v6620 = vrot.slane %v6511, %v6619
        %v6621 = vsel %vm6575, %v6620, %v6616
        %v6622 = vlaneseq
        %v6623 = vshrl.u32 %v6622, 7
        %v6624 = vsub.s32 %v6565, %v6623
        %v6625 = vrot.slane %v6512, %v6624
        %v6626 = vlaneseq
        %v6627 = vshrl.u32 %v6626, 7
        %v6628 = vsub.s32 %v6570, %v6627
        %v6629 = vrot.slane %v6513, %v6628
        %v6630 = vsel %vm6575, %v6629, %v6625
        %v6631 = vlaneseq
        %v6632 = vshrl.u32 %v6631, 7
        %v6633 = vsub.s32 %v6565, %v6632
        %v6634 = vrot.slane %v6514, %v6633
        %v6635 = vlaneseq
        %v6636 = vshrl.u32 %v6635, 7
        %v6637 = vsub.s32 %v6570, %v6636
        %v6638 = vrot.slane %v6515, %v6637
        %v6639 = vsel %vm6575, %v6638, %v6634
        %v6640 = vlaneseq
        %v6641 = vshrl.u32 %v6640, 7
        %v6642 = vsub.s32 %v6565, %v6641
        %v6643 = vrot.slane %v6516, %v6642
        %v6644 = vlaneseq
        %v6645 = vshrl.u32 %v6644, 7
        %v6646 = vsub.s32 %v6570, %v6645
        %v6647 = vrot.slane %v6517, %v6646
        %v6648 = vsel %vm6575, %v6647, %v6643
        %v6649 = vlaneseq
        %v6650 = vshrl.u32 %v6649, 7
        %v6651 = vsub.s32 %v6565, %v6650
        %v6652 = vrot.slane %v6518, %v6651
        %v6653 = vlaneseq
        %v6654 = vshrl.u32 %v6653, 7
        %v6655 = vsub.s32 %v6570, %v6654
        %v6656 = vrot.slane %v6519, %v6655
        %v6657 = vsel %vm6575, %v6656, %v6652
        %v6658 = vlaneseq
        %v6659 = vshrl.u32 %v6658, 7
        %v6660 = vsub.s32 %v6565, %v6659
        %v6661 = vrot.slane %v6520, %v6660
        %v6662 = vlaneseq
        %v6663 = vshrl.u32 %v6662, 7
        %v6664 = vsub.s32 %v6570, %v6663
        %v6665 = vrot.slane %v6521, %v6664
        %v6666 = vsel %vm6575, %v6665, %v6661
        %v6667 = vlaneseq
        %v6668 = vshrl.u32 %v6667, 7
        %v6669 = vsub.s32 %v6565, %v6668
        %v6670 = vrot.slane %v6522, %v6669
        %v6671 = vlaneseq
        %v6672 = vshrl.u32 %v6671, 7
        %v6673 = vsub.s32 %v6570, %v6672
        %v6674 = vrot.slane %v6523, %v6673
        %v6675 = vsel %vm6575, %v6674, %v6670
        %v6676 = vlaneseq
        %v6677 = vshrl.u32 %v6676, 7
        %v6678 = vsub.s32 %v6565, %v6677
        %v6679 = vrot.slane %v6524, %v6678
        %v6680 = vlaneseq
        %v6681 = vshrl.u32 %v6680, 7
        %v6682 = vsub.s32 %v6570, %v6681
        %v6683 = vrot.slane %v6525, %v6682
        %v6684 = vsel %vm6575, %v6683, %v6679
        %v6685 = vlaneseq
        %v6686 = vshrl.u32 %v6685, 7
        %v6687 = vsub.s32 %v6565, %v6686
        %v6688 = vrot.slane %v6526, %v6687
        %v6689 = vlaneseq
        %v6690 = vshrl.u32 %v6689, 7
        %v6691 = vsub.s32 %v6570, %v6690
        %v6692 = vrot.slane %v6527, %v6691
        %v6693 = vsel %vm6575, %v6692, %v6688
        %v6694 = vlaneseq
        %v6695 = vshrl.u32 %v6694, 7
        %v6696 = vsub.s32 %v6565, %v6695
        %v6697 = vrot.slane %v6528, %v6696
        %v6698 = vlaneseq
        %v6699 = vshrl.u32 %v6698, 7
        %v6700 = vsub.s32 %v6570, %v6699
        %v6701 = vrot.slane %v6529, %v6700
        %v6702 = vsel %vm6575, %v6701, %v6697
        %v6703 = vlaneseq
        %v6704 = vshrl.u32 %v6703, 7
        %v6705 = vsub.s32 %v6565, %v6704
        %v6706 = vrot.slane %v6530, %v6705
        %v6707 = vlaneseq
        %v6708 = vshrl.u32 %v6707, 7
        %v6709 = vsub.s32 %v6570, %v6708
        %v6710 = vrot.slane %v6531, %v6709
        %v6711 = vsel %vm6575, %v6710, %v6706
        %vm6712 = vcmask 1041409
        %v6713 = vsel %vm6712, %v6585, %v6576
        %vm6714 = vcmask 1042434
        %v6715 = vsel %vm6714, %v6594, %v6713
        %vm6716 = vcmask 1043459
        %v6717 = vsel %vm6716, %v6603, %v6715
        %vm6718 = vcmask 1044484
        %v6719 = vsel %vm6718, %v6612, %v6717
        %vm6720 = vcmask 1045509
        %v6721 = vsel %vm6720, %v6621, %v6719
        %vm6722 = vcmask 1046534
        %v6723 = vsel %vm6722, %v6630, %v6721
        %vm6724 = vcmask 1047559
        %v6725 = vsel %vm6724, %v6639, %v6723
        %v6726 = vsel %vm6712, %v6657, %v6648
        %v6727 = vsel %vm6714, %v6666, %v6726
        %v6728 = vsel %vm6716, %v6675, %v6727
        %v6729 = vsel %vm6718, %v6684, %v6728
        %v6730 = vsel %vm6720, %v6693, %v6729
        %v6731 = vsel %vm6722, %v6702, %v6730
        %v6732 = vsel %vm6724, %v6711, %v6731
        %vm6735 = vcmask 130048
        %6736 = vst.msk [vmem:[%s327] sm:$0xff] %vm6735, %v6725
        %6737 = vst.msk [vmem:[%s327 + $0x8] sm:$0xff] %vm6735, %v6732
        %s6738 = sand.u32 %s227, 1
        %s6739 = scalar_lea.sflag [#allocation9], %s6738
        %s6740 = sand.u32 %s227, 1
        %s6741 = smul.addr %s6740, 16
        %s6742 = scalar_lea.vmem [#allocation8], %s6741
        // Predicated region
        $region57: #{autoencoder_forward.1} parent=55 // pred_check
          %p6743 = pneg %p237
        $region58: #{autoencoder_forward.1} parent=55 // pred_check_branch
          %6745 = sbr.rel (%p6743) target = $region60
        $region59: #{autoencoder_forward.1} parent=55 // pred_region
          %s6747 = ssub.s32 256, 256
          %6748 = vsyncadd %s6739, %s6747
          %s6749 = smul.addr %s25, 2
          %s6750 = smul.addr %s6749, 128
          %s6751 = scalar_lea.hbm %s9, %s6750
          %s6752 = sshll.u32 %s6742, 4
          %s6753 = int_to_ptr.vmem [resolvable:$true] %s6752
          %6758 = dma.vmem_to_hbm [thread:$0]  %s6753, 256, %s6751, %s6739, 128, 128, 8
        $region60: #{autoencoder_forward.1} parent=55 // pred_fallthru
          _
      $region56: #{autoencoder_forward.1} parent=5 // pred_fallthru
        _
      %p6759 = scmp.le.s32.totalorder 2, %s20
      // Predicated region
      $region61: #{autoencoder_forward.1} parent=5 // pred_check
        %p6760 = pneg %p6759
      $region62: #{autoencoder_forward.1} parent=5 // pred_check_branch
        %6762 = sbr.rel (%p6760) target = $region64
      $region63: #{autoencoder_forward.1} parent=5 // pred_region
        %s6763 = ssub.s32 %s20, 2
        // Predicated region
        $region65: #{autoencoder_forward.1} parent=63 // pred_check
          %p6764 = pneg %p243
        $region66: #{autoencoder_forward.1} parent=63 // pred_check_branch
          %6766 = sbr.rel (%p6764) target = $region68
        $region67: #{autoencoder_forward.1} parent=63 // pred_region
          %s6767 = sand.u32 %s228, 1
          %s6768 = scalar_lea.sflag [#allocation9], %s6767
          %s6769 = sand.u32 %s228, 1
          %s6770 = smul.addr %s6769, 16
          %s6771 = scalar_lea.vmem [#allocation8], %s6770
          %6772 = dma.done %s6768, 256
        $region68: #{autoencoder_forward.1} parent=63 // pred_fallthru
          _
      $region64: #{autoencoder_forward.1} parent=5 // pred_fallthru
        _
    $region6: #{autoencoder_forward.1} parent=1 // loop_footer
      %s24 = sadd.s32 1, %s20
    $region7: #{autoencoder_forward.1} parent=1 // loop_footer_branch
      %19 = sbr.rel target = $region3
    $region8: #{autoencoder_forward.1} parent=1 // loop_exit
      _
    %6773 = vsyncpa [#allocation9], 1
    %s6774 = scalar_lea.sflag [#allocation9], 1
    %6775 = vsyncpa %s6774, 1

</llo_original>
